<compile_context>
chip_gen: v7x
topology: tpu7x:2x2x1
jax: 0.10.0
libtpu: 0.0.40
codegen_flags: <defaults>
</compile_context>

<pallas_src>
import functools
import math

import numpy as np
import jax
import jax.numpy as jnp
from jax import lax
from jax.experimental import pallas as pl
from jax.experimental.pallas import tpu as pltpu


# ------------------------------- Pallas kernel ------------------------------ #
def _aspp_kernel(x_ref, pooled_ref,
                 w1_ref, b1_ref,
                 w2_ref, b2_ref, w3_ref, b3_ref, w4_ref, b4_ref,
                 wg_ref, bg_ref,
                 wp1_ref, wp2_ref, wp3_ref, wp4_ref, bp_ref,
                 wpg_ref, bpg_ref,
                 o_ref, *, H, W, TH, R, rates):
    i = pl.program_id(1)
    row0 = pl.multiple_of(i * TH, TH)        # first output row of this tile
    bf16 = jnp.bfloat16

    def dot32(a, w):
        # (rows, Cin) @ (Cin, Cout), contraction on last/first dims, fp32 acc.
        return lax.dot_general(a, w,
                               dimension_numbers=(((1,), (0,)), ((), ())),
                               preferred_element_type=jnp.float32)

    def window(dy, dx):
        # (TH, W, Cin) window of the zero-padded input, shifted by (dy, dx),
        # flattened to (TH*W, Cin). dy folds into a dynamic row offset,
        # dx is a static column slice.
        win = x_ref[pl.ds(row0 + (R + dy), TH), (R + dx):(R + dx + W), :]
        return win.reshape(TH * W, win.shape[-1])

    def branch_1x1(w_ref, b_ref):
        y = dot32(window(0, 0), w_ref[...]) + b_ref[...]
        return jnp.maximum(y, 0.0).astype(bf16)

    def branch_dilated(w_ref, b_ref, d):
        cout = w_ref.shape[-1]
        acc = jnp.zeros((TH * W, cout), jnp.float32)
        for ty in (-1, 0, 1):
            if abs(ty * d) >= H:             # tap never touches real rows
                continue
            for tx in (-1, 0, 1):
                if abs(tx * d) >= W:         # tap never touches real cols
                    continue
                acc = acc + dot32(window(ty * d, tx * d), w_ref[ty + 1, tx + 1])
        return jnp.maximum(acc + b_ref[...], 0.0).astype(bf16)

    # --- pyramid branches, projected immediately (small live set) ------------
    c = branch_1x1(w1_ref, b1_ref)
    proj = dot32(c, wp1_ref[...])
    c = branch_dilated(w2_ref, b2_ref, rates[0])
    proj = proj + dot32(c, wp2_ref[...])
    c = branch_dilated(w3_ref, b3_ref, rates[1])
    proj = proj + dot32(c, wp3_ref[...])
    c = branch_dilated(w4_ref, b4_ref, rates[2])
    proj = proj + dot32(c, wp4_ref[...])
    proj = jnp.maximum(proj + bp_ref[...], 0.0)              # (TH*W, Cout)

    # --- global-pool branch: (1, Cin) -> cg -> projectg, broadcast over pixels
    cg = jnp.maximum(dot32(pooled_ref[...], wg_ref[...]) + bg_ref[...], 0.0)
    cg = jnp.maximum(dot32(cg.astype(bf16), wpg_ref[...]) + bpg_ref[...], 0.0)

    out = proj + cg                                          # broadcast (1, Cout)
    o_ref[...] = out.reshape(TH, W, out.shape[-1]).astype(o_ref.dtype)


# --------------------------------- wrapper ---------------------------------- #
def aspp_forward(x_nchw, params, *, rates=(12, 24, 36), tile_rows=8,
                 out_dtype=jnp.float32):
    B, Cin, H, W = x_nchw.shape
    Cout = params["w1"].shape[-1]
    R = max(rates)
    TH = tile_rows
    assert H % TH == 0, "H must be divisible by the row tile"
    assert W % 8 == 0 and Cout % 128 == 0, "output block must be (8,128)-aligned"

    # NCHW -> NHWC (channels on the lane axis).
    x = jnp.transpose(x_nchw, (0, 2, 3, 1)).astype(jnp.float32)
    # Global average pool for the cg branch (fp32 reduction), shaped (B, 1, Cin).
    pooled = jnp.mean(x, axis=(1, 2))[:, None, :].astype(jnp.bfloat16)
    # Zero-pad so every dilated tap is a plain static window of the padded image.
    x_pad = jnp.pad(x, ((0, 0), (R, R), (R, R), (0, 0))).astype(jnp.bfloat16)
    Hp, Wp = H + 2 * R, W + 2 * R

    bf = lambda a: a.astype(jnp.bfloat16)
    f32 = lambda a: a.astype(jnp.float32)
    weight_list = [
        bf(params["w1"]), f32(params["b1"]),
        bf(params["w2"]), f32(params["b2"]),
        bf(params["w3"]), f32(params["b3"]),
        bf(params["w4"]), f32(params["b4"]),
        bf(params["wg"]), f32(params["bg"]),
        bf(params["wp1"]), bf(params["wp2"]), bf(params["wp3"]), bf(params["wp4"]),
        f32(params["bp"]),
        bf(params["wpg"]), f32(params["bpg"]),
    ]

    def full_spec(arr):
        nd = arr.ndim
        return pl.BlockSpec(arr.shape, lambda b, i, _nd=nd: (0,) * _nd)

    in_specs = [
        pl.BlockSpec((None, Hp, Wp, Cin), lambda b, i: (b, 0, 0, 0)),
        pl.BlockSpec((None, 1, Cin), lambda b, i: (b, 0, 0)),
    ] + [full_spec(w) for w in weight_list]

    # Advisory cost estimate for XLA scheduling.
    taps = lambda d: (3 if d < H else 1) * (3 if d < W else 1)
    n_taps = 1 + sum(taps(d) for d in rates)
    flops = 2 * B * H * W * Cin * Cout * n_taps + 2 * B * H * W * (4 * Cout) * Cout
    bytes_accessed = (x_pad.size * x_pad.dtype.itemsize
                      + B * H * W * Cout * np.dtype(out_dtype).itemsize
                      + sum(int(w.size) * w.dtype.itemsize for w in weight_list))

    out_nhwc = pl.pallas_call(
        functools.partial(_aspp_kernel, H=H, W=W, TH=TH, R=R, rates=tuple(rates)),
        out_shape=jax.ShapeDtypeStruct((B, H, W, Cout), out_dtype),
        grid=(B, H // TH),
        in_specs=in_specs,
        out_specs=pl.BlockSpec((None, TH, W, Cout), lambda b, i: (b, i, 0, 0)),
        compiler_params=pltpu.CompilerParams(
            dimension_semantics=("parallel", "parallel")),
        cost_estimate=pl.CostEstimate(flops=int(flops), transcendentals=0,
                                      bytes_accessed=int(bytes_accessed)),
    )(x_pad, pooled, *weight_list)

    # NHWC -> NCHW to match the PyTorch-facing layout.
    # TODO(synk): Dropout(0.5) is treated as inference-mode identity (no RNG drop).
    return jnp.transpose(out_nhwc, (0, 3, 1, 2))


# --------------------------- parameter construction ------------------------- #
def _folded_conv_bn(key, cin, cout, k, eps=1e-5):
    """Conv2d(kxk, bias=False) + BatchNorm2d (eval mode), BN folded into the conv."""
    kw, kg, kb, km, kv = jax.random.split(key, 5)
    fan_in = cin * k * k
    w = jax.random.normal(kw, (k, k, cin, cout), jnp.float32) / math.sqrt(fan_in)
    gamma = 1.0 + 0.1 * jax.random.normal(kg, (cout,), jnp.float32)
    beta = 0.1 * jax.random.normal(kb, (cout,), jnp.float32)
    mean = 0.1 * jax.random.normal(km, (cout,), jnp.float32)
    var = jnp.abs(jax.random.normal(kv, (cout,), jnp.float32)) + 0.5
    scale = gamma / jnp.sqrt(var + eps)
    w = w * scale                              # per-output-channel BN scale folded
    b = (beta - mean * scale)[None, :]         # (1, cout)
    if k == 1:
        w = w[0, 0]                            # (cin, cout)
    return w.astype(jnp.float32), b.astype(jnp.float32)


def make_params(key, cin, cout):
    ks = jax.random.split(key, 7)
    w1, b1 = _folded_conv_bn(ks[0], cin, cout, 1)
    w2, b2 = _folded_conv_bn(ks[1], cin, cout, 3)
    w3, b3 = _folded_conv_bn(ks[2], cin, cout, 3)
    w4, b4 = _folded_conv_bn(ks[3], cin, cout, 3)
    wg, bg = _folded_conv_bn(ks[4], cin, cout, 1)
    wp, bp = _folded_conv_bn(ks[5], 4 * cout, cout, 1)       # project
    wpg, bpg = _folded_conv_bn(ks[6], cout, cout, 1)         # projectg
    wp1, wp2, wp3, wp4 = jnp.split(wp, 4, axis=0)
    return dict(w1=w1, b1=b1, w2=w2, b2=b2, w3=w3, b3=b3, w4=w4, b4=b4,
                wg=wg, bg=bg, wp=wp, wp1=wp1, wp2=wp2, wp3=wp3, wp4=wp4, bp=bp,
                wpg=wpg, bpg=bpg)


# ----------------------------- pure-JAX reference ---------------------------- #
def reference(x_nchw, params, rates=(12, 24, 36)):
    """XLA-conv reference with the same bf16 quantization points as the kernel."""
    q = lambda a: a.astype(jnp.bfloat16).astype(jnp.float32)
    relu = lambda a: jnp.maximum(a, 0.0)
    x = jnp.transpose(x_nchw, (0, 2, 3, 1)).astype(jnp.float32)
    xq = q(x)

    def conv(inp, w, b, d=1):
        if w.ndim == 2:
            w = w[None, None]                  # 1x1
        pad = d if w.shape[0] == 3 else 0
        y = lax.conv_general_dilated(
            inp, q(w), window_strides=(1, 1),
            padding=((pad, pad), (pad, pad)), rhs_dilation=(d, d),
            dimension_numbers=("NHWC", "HWIO", "NHWC"),
            preferred_element_type=jnp.float32)
        return relu(y + b)

    c1 = conv(xq, params["w1"], params["b1"])
    c2 = conv(xq, params["w2"], params["b2"], rates[0])
    c3 = conv(xq, params["w3"], params["b3"], rates[1])
    c4 = conv(xq, params["w4"], params["b4"], rates[2])
    cat = q(jnp.concatenate([c1, c2, c3, c4], axis=-1))
    c14 = conv(cat, params["wp"], params["bp"])
    pooled = q(jnp.mean(x, axis=(1, 2), keepdims=True))       # (B,1,1,Cin)
    cg = conv(pooled, params["wg"], params["bg"])
    cg = conv(q(cg), params["wpg"], params["bpg"])
    out = c14 + cg                                            # broadcast over H, W
    return jnp.transpose(out, (0, 3, 1, 2))                   # NCHW


# ------------------------------------ main ----------------------------------- #
if __name__ == "__main__":
    B, Cin, Cout = 2, 64, 128
    H = W = 32
    rates = (12, 24, 36)

    root = jax.random.PRNGKey(0)
    kx, kp = jax.random.split(root)
    x = jax.random.normal(kx, (B, Cin, H, W), jnp.float32)    # NCHW, like PyTorch
    params = make_params(kp, Cin, Cout)

    out = aspp_forward(x, params, rates=rates, tile_rows=8)
    out = jax.block_until_ready(out)

    ref = reference(x, params, rates)
    assert out.shape == (B, Cout, H, W)
    err = float(jnp.max(jnp.abs(out - ref)))
    assert jnp.allclose(out, ref, rtol=2e-2, atol=2e-2), f"mismatch vs reference (max abs err {err})"

    print("KERNEL_OK")
</pallas_src>

<mosaic_0001>
module attributes {stable_mosaic.version = 11 : i64} {
  func.func @_aspp_kernel(%arg0: i32, %arg1: i32, %arg2: memref<1x104x104x64xbf16, #tpu.memory_space<vmem>>, %arg3: memref<1x1x64xbf16, #tpu.memory_space<vmem>>, %arg4: memref<64x128xbf16, #tpu.memory_space<vmem>>, %arg5: memref<1x128xf32, #tpu.memory_space<vmem>>, %arg6: memref<3x3x64x128xbf16, #tpu.memory_space<vmem>>, %arg7: memref<1x128xf32, #tpu.memory_space<vmem>>, %arg8: memref<3x3x64x128xbf16, #tpu.memory_space<vmem>>, %arg9: memref<1x128xf32, #tpu.memory_space<vmem>>, %arg10: memref<3x3x64x128xbf16, #tpu.memory_space<vmem>>, %arg11: memref<1x128xf32, #tpu.memory_space<vmem>>, %arg12: memref<64x128xbf16, #tpu.memory_space<vmem>>, %arg13: memref<1x128xf32, #tpu.memory_space<vmem>>, %arg14: memref<128x128xbf16, #tpu.memory_space<vmem>>, %arg15: memref<128x128xbf16, #tpu.memory_space<vmem>>, %arg16: memref<128x128xbf16, #tpu.memory_space<vmem>>, %arg17: memref<128x128xbf16, #tpu.memory_space<vmem>>, %arg18: memref<1x128xf32, #tpu.memory_space<vmem>>, %arg19: memref<128x128xbf16, #tpu.memory_space<vmem>>, %arg20: memref<1x128xf32, #tpu.memory_space<vmem>>, %arg21: memref<1x8x32x128xf32, #tpu.memory_space<vmem>>) attributes {dimension_semantics = [#tpu.dimension_semantics<parallel>, #tpu.dimension_semantics<parallel>], iteration_bounds = array<i64: 2, 4>, scalar_prefetch = 0 : i64, scratch_operands = 0 : i64, tpu.core_type = #tpu.core_type<tc>, window_params = [{transform_indices = @transform_0, window_bounds = array<i64: 1, 104, 104, 64>}, {transform_indices = @transform_1, window_bounds = array<i64: 1, 1, 64>}, {pipeline_mode = #tpu.pipeline_mode<synchronous>, transform_indices = @transform_2, window_bounds = array<i64: 64, 128>}, {pipeline_mode = #tpu.pipeline_mode<synchronous>, transform_indices = @transform_3, window_bounds = array<i64: 1, 128>}, {pipeline_mode = #tpu.pipeline_mode<synchronous>, transform_indices = @transform_4, window_bounds = array<i64: 3, 3, 64, 128>}, {pipeline_mode = #tpu.pipeline_mode<synchronous>, transform_indices = @transform_5, window_bounds = array<i64: 1, 128>}, {pipeline_mode = #tpu.pipeline_mode<synchronous>, transform_indices = @transform_6, window_bounds = array<i64: 3, 3, 64, 128>}, {pipeline_mode = #tpu.pipeline_mode<synchronous>, transform_indices = @transform_7, window_bounds = array<i64: 1, 128>}, {pipeline_mode = #tpu.pipeline_mode<synchronous>, transform_indices = @transform_8, window_bounds = array<i64: 3, 3, 64, 128>}, {pipeline_mode = #tpu.pipeline_mode<synchronous>, transform_indices = @transform_9, window_bounds = array<i64: 1, 128>}, {pipeline_mode = #tpu.pipeline_mode<synchronous>, transform_indices = @transform_10, window_bounds = array<i64: 64, 128>}, {pipeline_mode = #tpu.pipeline_mode<synchronous>, transform_indices = @transform_11, window_bounds = array<i64: 1, 128>}, {pipeline_mode = #tpu.pipeline_mode<synchronous>, transform_indices = @transform_12, window_bounds = array<i64: 128, 128>}, {pipeline_mode = #tpu.pipeline_mode<synchronous>, transform_indices = @transform_13, window_bounds = array<i64: 128, 128>}, {pipeline_mode = #tpu.pipeline_mode<synchronous>, transform_indices = @transform_14, window_bounds = array<i64: 128, 128>}, {pipeline_mode = #tpu.pipeline_mode<synchronous>, transform_indices = @transform_15, window_bounds = array<i64: 128, 128>}, {pipeline_mode = #tpu.pipeline_mode<synchronous>, transform_indices = @transform_16, window_bounds = array<i64: 1, 128>}, {pipeline_mode = #tpu.pipeline_mode<synchronous>, transform_indices = @transform_17, window_bounds = array<i64: 128, 128>}, {pipeline_mode = #tpu.pipeline_mode<synchronous>, transform_indices = @transform_18, window_bounds = array<i64: 1, 128>}, {transform_indices = @transform_19, window_bounds = array<i64: 1, 8, 32, 128>}]} {
    %c8_i32 = arith.constant 8 : i32
    %0 = arith.muli %arg1, %c8_i32 : i32
    %1 = tpu.assume_multiple %0, 8 : i32
    %c36_i32 = arith.constant 36 : i32
    %2 = arith.addi %1, %c36_i32 : i32
    %c0 = arith.constant 0 : index
    %3 = arith.index_cast %2 : i32 to index
    %c36 = arith.constant 36 : index
    %c0_0 = arith.constant 0 : index
    %4 = vector.load %arg2[%c0, %3, %c36, %c0_0] : memref<1x104x104x64xbf16, #tpu.memory_space<vmem>>, vector<1x8x32x64xbf16>
    %5 = vector.shape_cast %4 : vector<1x8x32x64xbf16> to vector<8x32x64xbf16>
    %6 = vector.shape_cast %5 : vector<8x32x64xbf16> to vector<256x64xbf16>
    %c0_1 = arith.constant 0 : index
    %c0_2 = arith.constant 0 : index
    %7 = vector.load %arg4[%c0_1, %c0_2] : memref<64x128xbf16, #tpu.memory_space<vmem>>, vector<64x128xbf16>
    %cst = arith.constant dense<0.000000e+00> : vector<256x128xf32>
    %8 = tpu.matmul %6, %7, %cst {dimension_numbers = #tpu.dot_dimension_numbers<[1], [0], [0], [1], [0, 0, 1, 1], [], []>} : vector<256x64xbf16>, vector<64x128xbf16>, vector<256x128xf32> -> vector<256x128xf32>
    %c0_3 = arith.constant 0 : index
    %c0_4 = arith.constant 0 : index
    %9 = vector.load %arg5[%c0_3, %c0_4] : memref<1x128xf32, #tpu.memory_space<vmem>>, vector<1x128xf32>
    %10 = vector.broadcast %9 : vector<1x128xf32> to vector<256x128xf32>
    %11 = arith.addf %8, %10 : vector<256x128xf32>
    %cst_5 = arith.constant 0.000000e+00 : f32
    %12 = vector.broadcast %cst_5 : f32 to vector<256x128xf32>
    %13 = arith.maximumf %11, %12 : vector<256x128xf32>
    %14 = arith.truncf %13 : vector<256x128xf32> to vector<256x128xbf16>
    %c0_6 = arith.constant 0 : index
    %c0_7 = arith.constant 0 : index
    %15 = vector.load %arg14[%c0_6, %c0_7] : memref<128x128xbf16, #tpu.memory_space<vmem>>, vector<128x128xbf16>
    %cst_8 = arith.constant dense<0.000000e+00> : vector<256x128xf32>
    %16 = tpu.matmul %14, %15, %cst_8 {dimension_numbers = #tpu.dot_dimension_numbers<[1], [0], [0], [1], [0, 0, 1, 1], [], []>} : vector<256x128xbf16>, vector<128x128xbf16>, vector<256x128xf32> -> vector<256x128xf32>
    %cst_9 = arith.constant 0.000000e+00 : f32
    %17 = vector.broadcast %cst_9 : f32 to vector<256x128xf32>
    %c24_i32 = arith.constant 24 : i32
    %18 = arith.addi %1, %c24_i32 : i32
    %c0_10 = arith.constant 0 : index
    %19 = arith.index_cast %18 : i32 to index
    %c24 = arith.constant 24 : index
    %c0_11 = arith.constant 0 : index
    %20 = vector.load %arg2[%c0_10, %19, %c24, %c0_11] : memref<1x104x104x64xbf16, #tpu.memory_space<vmem>>, vector<1x8x32x64xbf16>
    %21 = vector.shape_cast %20 : vector<1x8x32x64xbf16> to vector<8x32x64xbf16>
    %22 = vector.shape_cast %21 : vector<8x32x64xbf16> to vector<256x64xbf16>
    %c0_12 = arith.constant 0 : index
    %c0_13 = arith.constant 0 : index
    %c0_14 = arith.constant 0 : index
    %c0_15 = arith.constant 0 : index
    %23 = vector.load %arg6[%c0_12, %c0_13, %c0_14, %c0_15] : memref<3x3x64x128xbf16, #tpu.memory_space<vmem>>, vector<1x1x64x128xbf16>
    %24 = vector.shape_cast %23 : vector<1x1x64x128xbf16> to vector<64x128xbf16>
    %cst_16 = arith.constant dense<0.000000e+00> : vector<256x128xf32>
    %25 = tpu.matmul %22, %24, %cst_16 {dimension_numbers = #tpu.dot_dimension_numbers<[1], [0], [0], [1], [0, 0, 1, 1], [], []>} : vector<256x64xbf16>, vector<64x128xbf16>, vector<256x128xf32> -> vector<256x128xf32>
    %26 = arith.addf %17, %25 : vector<256x128xf32>
    %c24_i32_17 = arith.constant 24 : i32
    %27 = arith.addi %1, %c24_i32_17 : i32
    %c0_18 = arith.constant 0 : index
    %28 = arith.index_cast %27 : i32 to index
    %c36_19 = arith.constant 36 : index
    %c0_20 = arith.constant 0 : index
    %29 = vector.load %arg2[%c0_18, %28, %c36_19, %c0_20] : memref<1x104x104x64xbf16, #tpu.memory_space<vmem>>, vector<1x8x32x64xbf16>
    %30 = vector.shape_cast %29 : vector<1x8x32x64xbf16> to vector<8x32x64xbf16>
    %31 = vector.shape_cast %30 : vector<8x32x64xbf16> to vector<256x64xbf16>
    %c0_21 = arith.constant 0 : index
    %c1 = arith.constant 1 : index
    %c0_22 = arith.constant 0 : index
    %c0_23 = arith.constant 0 : index
    %32 = vector.load %arg6[%c0_21, %c1, %c0_22, %c0_23] : memref<3x3x64x128xbf16, #tpu.memory_space<vmem>>, vector<1x1x64x128xbf16>
    %33 = vector.shape_cast %32 : vector<1x1x64x128xbf16> to vector<64x128xbf16>
    %cst_24 = arith.constant dense<0.000000e+00> : vector<256x128xf32>
    %34 = tpu.matmul %31, %33, %cst_24 {dimension_numbers = #tpu.dot_dimension_numbers<[1], [0], [0], [1], [0, 0, 1, 1], [], []>} : vector<256x64xbf16>, vector<64x128xbf16>, vector<256x128xf32> -> vector<256x128xf32>
    %35 = arith.addf %26, %34 : vector<256x128xf32>
    %c24_i32_25 = arith.constant 24 : i32
    %36 = arith.addi %1, %c24_i32_25 : i32
    %c0_26 = arith.constant 0 : index
    %37 = arith.index_cast %36 : i32 to index
    %c48 = arith.constant 48 : index
    %c0_27 = arith.constant 0 : index
    %38 = vector.load %arg2[%c0_26, %37, %c48, %c0_27] : memref<1x104x104x64xbf16, #tpu.memory_space<vmem>>, vector<1x8x32x64xbf16>
    %39 = vector.shape_cast %38 : vector<1x8x32x64xbf16> to vector<8x32x64xbf16>
    %40 = vector.shape_cast %39 : vector<8x32x64xbf16> to vector<256x64xbf16>
    %c0_28 = arith.constant 0 : index
    %c2 = arith.constant 2 : index
    %c0_29 = arith.constant 0 : index
    %c0_30 = arith.constant 0 : index
    %41 = vector.load %arg6[%c0_28, %c2, %c0_29, %c0_30] : memref<3x3x64x128xbf16, #tpu.memory_space<vmem>>, vector<1x1x64x128xbf16>
    %42 = vector.shape_cast %41 : vector<1x1x64x128xbf16> to vector<64x128xbf16>
    %cst_31 = arith.constant dense<0.000000e+00> : vector<256x128xf32>
    %43 = tpu.matmul %40, %42, %cst_31 {dimension_numbers = #tpu.dot_dimension_numbers<[1], [0], [0], [1], [0, 0, 1, 1], [], []>} : vector<256x64xbf16>, vector<64x128xbf16>, vector<256x128xf32> -> vector<256x128xf32>
    %44 = arith.addf %35, %43 : vector<256x128xf32>
    %c36_i32_32 = arith.constant 36 : i32
    %45 = arith.addi %1, %c36_i32_32 : i32
    %c0_33 = arith.constant 0 : index
    %46 = arith.index_cast %45 : i32 to index
    %c24_34 = arith.constant 24 : index
    %c0_35 = arith.constant 0 : index
    %47 = vector.load %arg2[%c0_33, %46, %c24_34, %c0_35] : memref<1x104x104x64xbf16, #tpu.memory_space<vmem>>, vector<1x8x32x64xbf16>
    %48 = vector.shape_cast %47 : vector<1x8x32x64xbf16> to vector<8x32x64xbf16>
    %49 = vector.shape_cast %48 : vector<8x32x64xbf16> to vector<256x64xbf16>
    %c1_36 = arith.constant 1 : index
    %c0_37 = arith.constant 0 : index
    %c0_38 = arith.constant 0 : index
    %c0_39 = arith.constant 0 : index
    %50 = vector.load %arg6[%c1_36, %c0_37, %c0_38, %c0_39] : memref<3x3x64x128xbf16, #tpu.memory_space<vmem>>, vector<1x1x64x128xbf16>
    %51 = vector.shape_cast %50 : vector<1x1x64x128xbf16> to vector<64x128xbf16>
    %cst_40 = arith.constant dense<0.000000e+00> : vector<256x128xf32>
    %52 = tpu.matmul %49, %51, %cst_40 {dimension_numbers = #tpu.dot_dimension_numbers<[1], [0], [0], [1], [0, 0, 1, 1], [], []>} : vector<256x64xbf16>, vector<64x128xbf16>, vector<256x128xf32> -> vector<256x128xf32>
    %53 = arith.addf %44, %52 : vector<256x128xf32>
    %c36_i32_41 = arith.constant 36 : i32
    %54 = arith.addi %1, %c36_i32_41 : i32
    %c0_42 = arith.constant 0 : index
    %55 = arith.index_cast %54 : i32 to index
    %c36_43 = arith.constant 36 : index
    %c0_44 = arith.constant 0 : index
    %56 = vector.load %arg2[%c0_42, %55, %c36_43, %c0_44] : memref<1x104x104x64xbf16, #tpu.memory_space<vmem>>, vector<1x8x32x64xbf16>
    %57 = vector.shape_cast %56 : vector<1x8x32x64xbf16> to vector<8x32x64xbf16>
    %58 = vector.shape_cast %57 : vector<8x32x64xbf16> to vector<256x64xbf16>
    %c1_45 = arith.constant 1 : index
    %c1_46 = arith.constant 1 : index
    %c0_47 = arith.constant 0 : index
    %c0_48 = arith.constant 0 : index
    %59 = vector.load %arg6[%c1_45, %c1_46, %c0_47, %c0_48] : memref<3x3x64x128xbf16, #tpu.memory_space<vmem>>, vector<1x1x64x128xbf16>
    %60 = vector.shape_cast %59 : vector<1x1x64x128xbf16> to vector<64x128xbf16>
    %cst_49 = arith.constant dense<0.000000e+00> : vector<256x128xf32>
    %61 = tpu.matmul %58, %60, %cst_49 {dimension_numbers = #tpu.dot_dimension_numbers<[1], [0], [0], [1], [0, 0, 1, 1], [], []>} : vector<256x64xbf16>, vector<64x128xbf16>, vector<256x128xf32> -> vector<256x128xf32>
    %62 = arith.addf %53, %61 : vector<256x128xf32>
    %c36_i32_50 = arith.constant 36 : i32
    %63 = arith.addi %1, %c36_i32_50 : i32
    %c0_51 = arith.constant 0 : index
    %64 = arith.index_cast %63 : i32 to index
    %c48_52 = arith.constant 48 : index
    %c0_53 = arith.constant 0 : index
    %65 = vector.load %arg2[%c0_51, %64, %c48_52, %c0_53] : memref<1x104x104x64xbf16, #tpu.memory_space<vmem>>, vector<1x8x32x64xbf16>
    %66 = vector.shape_cast %65 : vector<1x8x32x64xbf16> to vector<8x32x64xbf16>
    %67 = vector.shape_cast %66 : vector<8x32x64xbf16> to vector<256x64xbf16>
    %c1_54 = arith.constant 1 : index
    %c2_55 = arith.constant 2 : index
    %c0_56 = arith.constant 0 : index
    %c0_57 = arith.constant 0 : index
    %68 = vector.load %arg6[%c1_54, %c2_55, %c0_56, %c0_57] : memref<3x3x64x128xbf16, #tpu.memory_space<vmem>>, vector<1x1x64x128xbf16>
    %69 = vector.shape_cast %68 : vector<1x1x64x128xbf16> to vector<64x128xbf16>
    %cst_58 = arith.constant dense<0.000000e+00> : vector<256x128xf32>
    %70 = tpu.matmul %67, %69, %cst_58 {dimension_numbers = #tpu.dot_dimension_numbers<[1], [0], [0], [1], [0, 0, 1, 1], [], []>} : vector<256x64xbf16>, vector<64x128xbf16>, vector<256x128xf32> -> vector<256x128xf32>
    %71 = arith.addf %62, %70 : vector<256x128xf32>
    %c48_i32 = arith.constant 48 : i32
    %72 = arith.addi %1, %c48_i32 : i32
    %c0_59 = arith.constant 0 : index
    %73 = arith.index_cast %72 : i32 to index
    %c24_60 = arith.constant 24 : index
    %c0_61 = arith.constant 0 : index
    %74 = vector.load %arg2[%c0_59, %73, %c24_60, %c0_61] : memref<1x104x104x64xbf16, #tpu.memory_space<vmem>>, vector<1x8x32x64xbf16>
    %75 = vector.shape_cast %74 : vector<1x8x32x64xbf16> to vector<8x32x64xbf16>
    %76 = vector.shape_cast %75 : vector<8x32x64xbf16> to vector<256x64xbf16>
    %c2_62 = arith.constant 2 : index
    %c0_63 = arith.constant 0 : index
    %c0_64 = arith.constant 0 : index
    %c0_65 = arith.constant 0 : index
    %77 = vector.load %arg6[%c2_62, %c0_63, %c0_64, %c0_65] : memref<3x3x64x128xbf16, #tpu.memory_space<vmem>>, vector<1x1x64x128xbf16>
    %78 = vector.shape_cast %77 : vector<1x1x64x128xbf16> to vector<64x128xbf16>
    %cst_66 = arith.constant dense<0.000000e+00> : vector<256x128xf32>
    %79 = tpu.matmul %76, %78, %cst_66 {dimension_numbers = #tpu.dot_dimension_numbers<[1], [0], [0], [1], [0, 0, 1, 1], [], []>} : vector<256x64xbf16>, vector<64x128xbf16>, vector<256x128xf32> -> vector<256x128xf32>
    %80 = arith.addf %71, %79 : vector<256x128xf32>
    %c48_i32_67 = arith.constant 48 : i32
    %81 = arith.addi %1, %c48_i32_67 : i32
    %c0_68 = arith.constant 0 : index
    %82 = arith.index_cast %81 : i32 to index
    %c36_69 = arith.constant 36 : index
    %c0_70 = arith.constant 0 : index
    %83 = vector.load %arg2[%c0_68, %82, %c36_69, %c0_70] : memref<1x104x104x64xbf16, #tpu.memory_space<vmem>>, vector<1x8x32x64xbf16>
    %84 = vector.shape_cast %83 : vector<1x8x32x64xbf16> to vector<8x32x64xbf16>
    %85 = vector.shape_cast %84 : vector<8x32x64xbf16> to vector<256x64xbf16>
    %c2_71 = arith.constant 2 : index
    %c1_72 = arith.constant 1 : index
    %c0_73 = arith.constant 0 : index
    %c0_74 = arith.constant 0 : index
    %86 = vector.load %arg6[%c2_71, %c1_72, %c0_73, %c0_74] : memref<3x3x64x128xbf16, #tpu.memory_space<vmem>>, vector<1x1x64x128xbf16>
    %87 = vector.shape_cast %86 : vector<1x1x64x128xbf16> to vector<64x128xbf16>
    %cst_75 = arith.constant dense<0.000000e+00> : vector<256x128xf32>
    %88 = tpu.matmul %85, %87, %cst_75 {dimension_numbers = #tpu.dot_dimension_numbers<[1], [0], [0], [1], [0, 0, 1, 1], [], []>} : vector<256x64xbf16>, vector<64x128xbf16>, vector<256x128xf32> -> vector<256x128xf32>
    %89 = arith.addf %80, %88 : vector<256x128xf32>
    %c48_i32_76 = arith.constant 48 : i32
    %90 = arith.addi %1, %c48_i32_76 : i32
    %c0_77 = arith.constant 0 : index
    %91 = arith.index_cast %90 : i32 to index
    %c48_78 = arith.constant 48 : index
    %c0_79 = arith.constant 0 : index
    %92 = vector.load %arg2[%c0_77, %91, %c48_78, %c0_79] : memref<1x104x104x64xbf16, #tpu.memory_space<vmem>>, vector<1x8x32x64xbf16>
    %93 = vector.shape_cast %92 : vector<1x8x32x64xbf16> to vector<8x32x64xbf16>
    %94 = vector.shape_cast %93 : vector<8x32x64xbf16> to vector<256x64xbf16>
    %c2_80 = arith.constant 2 : index
    %c2_81 = arith.constant 2 : index
    %c0_82 = arith.constant 0 : index
    %c0_83 = arith.constant 0 : index
    %95 = vector.load %arg6[%c2_80, %c2_81, %c0_82, %c0_83] : memref<3x3x64x128xbf16, #tpu.memory_space<vmem>>, vector<1x1x64x128xbf16>
    %96 = vector.shape_cast %95 : vector<1x1x64x128xbf16> to vector<64x128xbf16>
    %cst_84 = arith.constant dense<0.000000e+00> : vector<256x128xf32>
    %97 = tpu.matmul %94, %96, %cst_84 {dimension_numbers = #tpu.dot_dimension_numbers<[1], [0], [0], [1], [0, 0, 1, 1], [], []>} : vector<256x64xbf16>, vector<64x128xbf16>, vector<256x128xf32> -> vector<256x128xf32>
    %98 = arith.addf %89, %97 : vector<256x128xf32>
    %c0_85 = arith.constant 0 : index
    %c0_86 = arith.constant 0 : index
    %99 = vector.load %arg7[%c0_85, %c0_86] : memref<1x128xf32, #tpu.memory_space<vmem>>, vector<1x128xf32>
    %100 = vector.broadcast %99 : vector<1x128xf32> to vector<256x128xf32>
    %101 = arith.addf %98, %100 : vector<256x128xf32>
    %cst_87 = arith.constant 0.000000e+00 : f32
    %102 = vector.broadcast %cst_87 : f32 to vector<256x128xf32>
    %103 = arith.maximumf %101, %102 : vector<256x128xf32>
    %104 = arith.truncf %103 : vector<256x128xf32> to vector<256x128xbf16>
    %c0_88 = arith.constant 0 : index
    %c0_89 = arith.constant 0 : index
    %105 = vector.load %arg15[%c0_88, %c0_89] : memref<128x128xbf16, #tpu.memory_space<vmem>>, vector<128x128xbf16>
    %cst_90 = arith.constant dense<0.000000e+00> : vector<256x128xf32>
    %106 = tpu.matmul %104, %105, %cst_90 {dimension_numbers = #tpu.dot_dimension_numbers<[1], [0], [0], [1], [0, 0, 1, 1], [], []>} : vector<256x128xbf16>, vector<128x128xbf16>, vector<256x128xf32> -> vector<256x128xf32>
    %107 = arith.addf %16, %106 : vector<256x128xf32>
    %cst_91 = arith.constant 0.000000e+00 : f32
    %108 = vector.broadcast %cst_91 : f32 to vector<256x128xf32>
    %c12_i32 = arith.constant 12 : i32
    %109 = arith.addi %1, %c12_i32 : i32
    %c0_92 = arith.constant 0 : index
    %110 = arith.index_cast %109 : i32 to index
    %c12 = arith.constant 12 : index
    %c0_93 = arith.constant 0 : index
    %111 = vector.load %arg2[%c0_92, %110, %c12, %c0_93] : memref<1x104x104x64xbf16, #tpu.memory_space<vmem>>, vector<1x8x32x64xbf16>
    %112 = vector.shape_cast %111 : vector<1x8x32x64xbf16> to vector<8x32x64xbf16>
    %113 = vector.shape_cast %112 : vector<8x32x64xbf16> to vector<256x64xbf16>
    %c0_94 = arith.constant 0 : index
    %c0_95 = arith.constant 0 : index
    %c0_96 = arith.constant 0 : index
    %c0_97 = arith.constant 0 : index
    %114 = vector.load %arg8[%c0_94, %c0_95, %c0_96, %c0_97] : memref<3x3x64x128xbf16, #tpu.memory_space<vmem>>, vector<1x1x64x128xbf16>
    %115 = vector.shape_cast %114 : vector<1x1x64x128xbf16> to vector<64x128xbf16>
    %cst_98 = arith.constant dense<0.000000e+00> : vector<256x128xf32>
    %116 = tpu.matmul %113, %115, %cst_98 {dimension_numbers = #tpu.dot_dimension_numbers<[1], [0], [0], [1], [0, 0, 1, 1], [], []>} : vector<256x64xbf16>, vector<64x128xbf16>, vector<256x128xf32> -> vector<256x128xf32>
    %117 = arith.addf %108, %116 : vector<256x128xf32>
    %c12_i32_99 = arith.constant 12 : i32
    %118 = arith.addi %1, %c12_i32_99 : i32
    %c0_100 = arith.constant 0 : index
    %119 = arith.index_cast %118 : i32 to index
    %c36_101 = arith.constant 36 : index
    %c0_102 = arith.constant 0 : index
    %120 = vector.load %arg2[%c0_100, %119, %c36_101, %c0_102] : memref<1x104x104x64xbf16, #tpu.memory_space<vmem>>, vector<1x8x32x64xbf16>
    %121 = vector.shape_cast %120 : vector<1x8x32x64xbf16> to vector<8x32x64xbf16>
    %122 = vector.shape_cast %121 : vector<8x32x64xbf16> to vector<256x64xbf16>
    %c0_103 = arith.constant 0 : index
    %c1_104 = arith.constant 1 : index
    %c0_105 = arith.constant 0 : index
    %c0_106 = arith.constant 0 : index
    %123 = vector.load %arg8[%c0_103, %c1_104, %c0_105, %c0_106] : memref<3x3x64x128xbf16, #tpu.memory_space<vmem>>, vector<1x1x64x128xbf16>
    %124 = vector.shape_cast %123 : vector<1x1x64x128xbf16> to vector<64x128xbf16>
    %cst_107 = arith.constant dense<0.000000e+00> : vector<256x128xf32>
    %125 = tpu.matmul %122, %124, %cst_107 {dimension_numbers = #tpu.dot_dimension_numbers<[1], [0], [0], [1], [0, 0, 1, 1], [], []>} : vector<256x64xbf16>, vector<64x128xbf16>, vector<256x128xf32> -> vector<256x128xf32>
    %126 = arith.addf %117, %125 : vector<256x128xf32>
    %c12_i32_108 = arith.constant 12 : i32
    %127 = arith.addi %1, %c12_i32_108 : i32
    %c0_109 = arith.constant 0 : index
    %128 = arith.index_cast %127 : i32 to index
    %c60 = arith.constant 60 : index
    %c0_110 = arith.constant 0 : index
    %129 = vector.load %arg2[%c0_109, %128, %c60, %c0_110] : memref<1x104x104x64xbf16, #tpu.memory_space<vmem>>, vector<1x8x32x64xbf16>
    %130 = vector.shape_cast %129 : vector<1x8x32x64xbf16> to vector<8x32x64xbf16>
    %131 = vector.shape_cast %130 : vector<8x32x64xbf16> to vector<256x64xbf16>
    %c0_111 = arith.constant 0 : index
    %c2_112 = arith.constant 2 : index
    %c0_113 = arith.constant 0 : index
    %c0_114 = arith.constant 0 : index
    %132 = vector.load %arg8[%c0_111, %c2_112, %c0_113, %c0_114] : memref<3x3x64x128xbf16, #tpu.memory_space<vmem>>, vector<1x1x64x128xbf16>
    %133 = vector.shape_cast %132 : vector<1x1x64x128xbf16> to vector<64x128xbf16>
    %cst_115 = arith.constant dense<0.000000e+00> : vector<256x128xf32>
    %134 = tpu.matmul %131, %133, %cst_115 {dimension_numbers = #tpu.dot_dimension_numbers<[1], [0], [0], [1], [0, 0, 1, 1], [], []>} : vector<256x64xbf16>, vector<64x128xbf16>, vector<256x128xf32> -> vector<256x128xf32>
    %135 = arith.addf %126, %134 : vector<256x128xf32>
    %c36_i32_116 = arith.constant 36 : i32
    %136 = arith.addi %1, %c36_i32_116 : i32
    %c0_117 = arith.constant 0 : index
    %137 = arith.index_cast %136 : i32 to index
    %c12_118 = arith.constant 12 : index
    %c0_119 = arith.constant 0 : index
    %138 = vector.load %arg2[%c0_117, %137, %c12_118, %c0_119] : memref<1x104x104x64xbf16, #tpu.memory_space<vmem>>, vector<1x8x32x64xbf16>
    %139 = vector.shape_cast %138 : vector<1x8x32x64xbf16> to vector<8x32x64xbf16>
    %140 = vector.shape_cast %139 : vector<8x32x64xbf16> to vector<256x64xbf16>
    %c1_120 = arith.constant 1 : index
    %c0_121 = arith.constant 0 : index
    %c0_122 = arith.constant 0 : index
    %c0_123 = arith.constant 0 : index
    %141 = vector.load %arg8[%c1_120, %c0_121, %c0_122, %c0_123] : memref<3x3x64x128xbf16, #tpu.memory_space<vmem>>, vector<1x1x64x128xbf16>
    %142 = vector.shape_cast %141 : vector<1x1x64x128xbf16> to vector<64x128xbf16>
    %cst_124 = arith.constant dense<0.000000e+00> : vector<256x128xf32>
    %143 = tpu.matmul %140, %142, %cst_124 {dimension_numbers = #tpu.dot_dimension_numbers<[1], [0], [0], [1], [0, 0, 1, 1], [], []>} : vector<256x64xbf16>, vector<64x128xbf16>, vector<256x128xf32> -> vector<256x128xf32>
    %144 = arith.addf %135, %143 : vector<256x128xf32>
    %c36_i32_125 = arith.constant 36 : i32
    %145 = arith.addi %1, %c36_i32_125 : i32
    %c0_126 = arith.constant 0 : index
    %146 = arith.index_cast %145 : i32 to index
    %c36_127 = arith.constant 36 : index
    %c0_128 = arith.constant 0 : index
    %147 = vector.load %arg2[%c0_126, %146, %c36_127, %c0_128] : memref<1x104x104x64xbf16, #tpu.memory_space<vmem>>, vector<1x8x32x64xbf16>
    %148 = vector.shape_cast %147 : vector<1x8x32x64xbf16> to vector<8x32x64xbf16>
    %149 = vector.shape_cast %148 : vector<8x32x64xbf16> to vector<256x64xbf16>
    %c1_129 = arith.constant 1 : index
    %c1_130 = arith.constant 1 : index
    %c0_131 = arith.constant 0 : index
    %c0_132 = arith.constant 0 : index
    %150 = vector.load %arg8[%c1_129, %c1_130, %c0_131, %c0_132] : memref<3x3x64x128xbf16, #tpu.memory_space<vmem>>, vector<1x1x64x128xbf16>
    %151 = vector.shape_cast %150 : vector<1x1x64x128xbf16> to vector<64x128xbf16>
    %cst_133 = arith.constant dense<0.000000e+00> : vector<256x128xf32>
    %152 = tpu.matmul %149, %151, %cst_133 {dimension_numbers = #tpu.dot_dimension_numbers<[1], [0], [0], [1], [0, 0, 1, 1], [], []>} : vector<256x64xbf16>, vector<64x128xbf16>, vector<256x128xf32> -> vector<256x128xf32>
    %153 = arith.addf %144, %152 : vector<256x128xf32>
    %c36_i32_134 = arith.constant 36 : i32
    %154 = arith.addi %1, %c36_i32_134 : i32
    %c0_135 = arith.constant 0 : index
    %155 = arith.index_cast %154 : i32 to index
    %c60_136 = arith.constant 60 : index
    %c0_137 = arith.constant 0 : index
    %156 = vector.load %arg2[%c0_135, %155, %c60_136, %c0_137] : memref<1x104x104x64xbf16, #tpu.memory_space<vmem>>, vector<1x8x32x64xbf16>
    %157 = vector.shape_cast %156 : vector<1x8x32x64xbf16> to vector<8x32x64xbf16>
    %158 = vector.shape_cast %157 : vector<8x32x64xbf16> to vector<256x64xbf16>
    %c1_138 = arith.constant 1 : index
    %c2_139 = arith.constant 2 : index
    %c0_140 = arith.constant 0 : index
    %c0_141 = arith.constant 0 : index
    %159 = vector.load %arg8[%c1_138, %c2_139, %c0_140, %c0_141] : memref<3x3x64x128xbf16, #tpu.memory_space<vmem>>, vector<1x1x64x128xbf16>
    %160 = vector.shape_cast %159 : vector<1x1x64x128xbf16> to vector<64x128xbf16>
    %cst_142 = arith.constant dense<0.000000e+00> : vector<256x128xf32>
    %161 = tpu.matmul %158, %160, %cst_142 {dimension_numbers = #tpu.dot_dimension_numbers<[1], [0], [0], [1], [0, 0, 1, 1], [], []>} : vector<256x64xbf16>, vector<64x128xbf16>, vector<256x128xf32> -> vector<256x128xf32>
    %162 = arith.addf %153, %161 : vector<256x128xf32>
    %c60_i32 = arith.constant 60 : i32
    %163 = arith.addi %1, %c60_i32 : i32
    %c0_143 = arith.constant 0 : index
    %164 = arith.index_cast %163 : i32 to index
    %c12_144 = arith.constant 12 : index
    %c0_145 = arith.constant 0 : index
    %165 = vector.load %arg2[%c0_143, %164, %c12_144, %c0_145] : memref<1x104x104x64xbf16, #tpu.memory_space<vmem>>, vector<1x8x32x64xbf16>
    %166 = vector.shape_cast %165 : vector<1x8x32x64xbf16> to vector<8x32x64xbf16>
    %167 = vector.shape_cast %166 : vector<8x32x64xbf16> to vector<256x64xbf16>
    %c2_146 = arith.constant 2 : index
    %c0_147 = arith.constant 0 : index
    %c0_148 = arith.constant 0 : index
    %c0_149 = arith.constant 0 : index
    %168 = vector.load %arg8[%c2_146, %c0_147, %c0_148, %c0_149] : memref<3x3x64x128xbf16, #tpu.memory_space<vmem>>, vector<1x1x64x128xbf16>
    %169 = vector.shape_cast %168 : vector<1x1x64x128xbf16> to vector<64x128xbf16>
    %cst_150 = arith.constant dense<0.000000e+00> : vector<256x128xf32>
    %170 = tpu.matmul %167, %169, %cst_150 {dimension_numbers = #tpu.dot_dimension_numbers<[1], [0], [0], [1], [0, 0, 1, 1], [], []>} : vector<256x64xbf16>, vector<64x128xbf16>, vector<256x128xf32> -> vector<256x128xf32>
    %171 = arith.addf %162, %170 : vector<256x128xf32>
    %c60_i32_151 = arith.constant 60 : i32
    %172 = arith.addi %1, %c60_i32_151 : i32
    %c0_152 = arith.constant 0 : index
    %173 = arith.index_cast %172 : i32 to index
    %c36_153 = arith.constant 36 : index
    %c0_154 = arith.constant 0 : index
    %174 = vector.load %arg2[%c0_152, %173, %c36_153, %c0_154] : memref<1x104x104x64xbf16, #tpu.memory_space<vmem>>, vector<1x8x32x64xbf16>
    %175 = vector.shape_cast %174 : vector<1x8x32x64xbf16> to vector<8x32x64xbf16>
    %176 = vector.shape_cast %175 : vector<8x32x64xbf16> to vector<256x64xbf16>
    %c2_155 = arith.constant 2 : index
    %c1_156 = arith.constant 1 : index
    %c0_157 = arith.constant 0 : index
    %c0_158 = arith.constant 0 : index
    %177 = vector.load %arg8[%c2_155, %c1_156, %c0_157, %c0_158] : memref<3x3x64x128xbf16, #tpu.memory_space<vmem>>, vector<1x1x64x128xbf16>
    %178 = vector.shape_cast %177 : vector<1x1x64x128xbf16> to vector<64x128xbf16>
    %cst_159 = arith.constant dense<0.000000e+00> : vector<256x128xf32>
    %179 = tpu.matmul %176, %178, %cst_159 {dimension_numbers = #tpu.dot_dimension_numbers<[1], [0], [0], [1], [0, 0, 1, 1], [], []>} : vector<256x64xbf16>, vector<64x128xbf16>, vector<256x128xf32> -> vector<256x128xf32>
    %180 = arith.addf %171, %179 : vector<256x128xf32>
    %c60_i32_160 = arith.constant 60 : i32
    %181 = arith.addi %1, %c60_i32_160 : i32
    %c0_161 = arith.constant 0 : index
    %182 = arith.index_cast %181 : i32 to index
    %c60_162 = arith.constant 60 : index
    %c0_163 = arith.constant 0 : index
    %183 = vector.load %arg2[%c0_161, %182, %c60_162, %c0_163] : memref<1x104x104x64xbf16, #tpu.memory_space<vmem>>, vector<1x8x32x64xbf16>
    %184 = vector.shape_cast %183 : vector<1x8x32x64xbf16> to vector<8x32x64xbf16>
    %185 = vector.shape_cast %184 : vector<8x32x64xbf16> to vector<256x64xbf16>
    %c2_164 = arith.constant 2 : index
    %c2_165 = arith.constant 2 : index
    %c0_166 = arith.constant 0 : index
    %c0_167 = arith.constant 0 : index
    %186 = vector.load %arg8[%c2_164, %c2_165, %c0_166, %c0_167] : memref<3x3x64x128xbf16, #tpu.memory_space<vmem>>, vector<1x1x64x128xbf16>
    %187 = vector.shape_cast %186 : vector<1x1x64x128xbf16> to vector<64x128xbf16>
    %cst_168 = arith.constant dense<0.000000e+00> : vector<256x128xf32>
    %188 = tpu.matmul %185, %187, %cst_168 {dimension_numbers = #tpu.dot_dimension_numbers<[1], [0], [0], [1], [0, 0, 1, 1], [], []>} : vector<256x64xbf16>, vector<64x128xbf16>, vector<256x128xf32> -> vector<256x128xf32>
    %189 = arith.addf %180, %188 : vector<256x128xf32>
    %c0_169 = arith.constant 0 : index
    %c0_170 = arith.constant 0 : index
    %190 = vector.load %arg9[%c0_169, %c0_170] : memref<1x128xf32, #tpu.memory_space<vmem>>, vector<1x128xf32>
    %191 = vector.broadcast %190 : vector<1x128xf32> to vector<256x128xf32>
    %192 = arith.addf %189, %191 : vector<256x128xf32>
    %cst_171 = arith.constant 0.000000e+00 : f32
    %193 = vector.broadcast %cst_171 : f32 to vector<256x128xf32>
    %194 = arith.maximumf %192, %193 : vector<256x128xf32>
    %195 = arith.truncf %194 : vector<256x128xf32> to vector<256x128xbf16>
    %c0_172 = arith.constant 0 : index
    %c0_173 = arith.constant 0 : index
    %196 = vector.load %arg16[%c0_172, %c0_173] : memref<128x128xbf16, #tpu.memory_space<vmem>>, vector<128x128xbf16>
    %cst_174 = arith.constant dense<0.000000e+00> : vector<256x128xf32>
    %197 = tpu.matmul %195, %196, %cst_174 {dimension_numbers = #tpu.dot_dimension_numbers<[1], [0], [0], [1], [0, 0, 1, 1], [], []>} : vector<256x128xbf16>, vector<128x128xbf16>, vector<256x128xf32> -> vector<256x128xf32>
    %198 = arith.addf %107, %197 : vector<256x128xf32>
    %cst_175 = arith.constant 0.000000e+00 : f32
    %199 = vector.broadcast %cst_175 : f32 to vector<256x128xf32>
    %c36_i32_176 = arith.constant 36 : i32
    %200 = arith.addi %1, %c36_i32_176 : i32
    %c0_177 = arith.constant 0 : index
    %201 = arith.index_cast %200 : i32 to index
    %c36_178 = arith.constant 36 : index
    %c0_179 = arith.constant 0 : index
    %202 = vector.load %arg2[%c0_177, %201, %c36_178, %c0_179] : memref<1x104x104x64xbf16, #tpu.memory_space<vmem>>, vector<1x8x32x64xbf16>
    %203 = vector.shape_cast %202 : vector<1x8x32x64xbf16> to vector<8x32x64xbf16>
    %204 = vector.shape_cast %203 : vector<8x32x64xbf16> to vector<256x64xbf16>
    %c1_180 = arith.constant 1 : index
    %c1_181 = arith.constant 1 : index
    %c0_182 = arith.constant 0 : index
    %c0_183 = arith.constant 0 : index
    %205 = vector.load %arg10[%c1_180, %c1_181, %c0_182, %c0_183] : memref<3x3x64x128xbf16, #tpu.memory_space<vmem>>, vector<1x1x64x128xbf16>
    %206 = vector.shape_cast %205 : vector<1x1x64x128xbf16> to vector<64x128xbf16>
    %cst_184 = arith.constant dense<0.000000e+00> : vector<256x128xf32>
    %207 = tpu.matmul %204, %206, %cst_184 {dimension_numbers = #tpu.dot_dimension_numbers<[1], [0], [0], [1], [0, 0, 1, 1], [], []>} : vector<256x64xbf16>, vector<64x128xbf16>, vector<256x128xf32> -> vector<256x128xf32>
    %208 = arith.addf %199, %207 : vector<256x128xf32>
    %c0_185 = arith.constant 0 : index
    %c0_186 = arith.constant 0 : index
    %209 = vector.load %arg11[%c0_185, %c0_186] : memref<1x128xf32, #tpu.memory_space<vmem>>, vector<1x128xf32>
    %210 = vector.broadcast %209 : vector<1x128xf32> to vector<256x128xf32>
    %211 = arith.addf %208, %210 : vector<256x128xf32>
    %cst_187 = arith.constant 0.000000e+00 : f32
    %212 = vector.broadcast %cst_187 : f32 to vector<256x128xf32>
    %213 = arith.maximumf %211, %212 : vector<256x128xf32>
    %214 = arith.truncf %213 : vector<256x128xf32> to vector<256x128xbf16>
    %c0_188 = arith.constant 0 : index
    %c0_189 = arith.constant 0 : index
    %215 = vector.load %arg17[%c0_188, %c0_189] : memref<128x128xbf16, #tpu.memory_space<vmem>>, vector<128x128xbf16>
    %cst_190 = arith.constant dense<0.000000e+00> : vector<256x128xf32>
    %216 = tpu.matmul %214, %215, %cst_190 {dimension_numbers = #tpu.dot_dimension_numbers<[1], [0], [0], [1], [0, 0, 1, 1], [], []>} : vector<256x128xbf16>, vector<128x128xbf16>, vector<256x128xf32> -> vector<256x128xf32>
    %217 = arith.addf %198, %216 : vector<256x128xf32>
    %c0_191 = arith.constant 0 : index
    %c0_192 = arith.constant 0 : index
    %218 = vector.load %arg18[%c0_191, %c0_192] : memref<1x128xf32, #tpu.memory_space<vmem>>, vector<1x128xf32>
    %219 = vector.broadcast %218 : vector<1x128xf32> to vector<256x128xf32>
    %220 = arith.addf %217, %219 : vector<256x128xf32>
    %cst_193 = arith.constant 0.000000e+00 : f32
    %221 = vector.broadcast %cst_193 : f32 to vector<256x128xf32>
    %222 = arith.maximumf %220, %221 : vector<256x128xf32>
    %c0_194 = arith.constant 0 : index
    %c0_195 = arith.constant 0 : index
    %c0_196 = arith.constant 0 : index
    %223 = vector.load %arg3[%c0_194, %c0_195, %c0_196] : memref<1x1x64xbf16, #tpu.memory_space<vmem>>, vector<1x1x64xbf16>
    %224 = vector.shape_cast %223 : vector<1x1x64xbf16> to vector<1x64xbf16>
    %c0_197 = arith.constant 0 : index
    %c0_198 = arith.constant 0 : index
    %225 = vector.load %arg12[%c0_197, %c0_198] : memref<64x128xbf16, #tpu.memory_space<vmem>>, vector<64x128xbf16>
    %cst_199 = arith.constant dense<0.000000e+00> : vector<1x128xf32>
    %226 = tpu.matmul %224, %225, %cst_199 {dimension_numbers = #tpu.dot_dimension_numbers<[1], [0], [0], [1], [0, 0, 1, 1], [], []>} : vector<1x64xbf16>, vector<64x128xbf16>, vector<1x128xf32> -> vector<1x128xf32>
    %c0_200 = arith.constant 0 : index
    %c0_201 = arith.constant 0 : index
    %227 = vector.load %arg13[%c0_200, %c0_201] : memref<1x128xf32, #tpu.memory_space<vmem>>, vector<1x128xf32>
    %228 = arith.addf %226, %227 : vector<1x128xf32>
    %cst_202 = arith.constant 0.000000e+00 : f32
    %229 = vector.broadcast %cst_202 : f32 to vector<1x128xf32>
    %230 = arith.maximumf %228, %229 : vector<1x128xf32>
    %231 = arith.truncf %230 : vector<1x128xf32> to vector<1x128xbf16>
    %c0_203 = arith.constant 0 : index
    %c0_204 = arith.constant 0 : index
    %232 = vector.load %arg19[%c0_203, %c0_204] : memref<128x128xbf16, #tpu.memory_space<vmem>>, vector<128x128xbf16>
    %cst_205 = arith.constant dense<0.000000e+00> : vector<1x128xf32>
    %233 = tpu.matmul %231, %232, %cst_205 {dimension_numbers = #tpu.dot_dimension_numbers<[1], [0], [0], [1], [0, 0, 1, 1], [], []>} : vector<1x128xbf16>, vector<128x128xbf16>, vector<1x128xf32> -> vector<1x128xf32>
    %c0_206 = arith.constant 0 : index
    %c0_207 = arith.constant 0 : index
    %234 = vector.load %arg20[%c0_206, %c0_207] : memref<1x128xf32, #tpu.memory_space<vmem>>, vector<1x128xf32>
    %235 = arith.addf %233, %234 : vector<1x128xf32>
    %cst_208 = arith.constant 0.000000e+00 : f32
    %236 = vector.broadcast %cst_208 : f32 to vector<1x128xf32>
    %237 = arith.maximumf %235, %236 : vector<1x128xf32>
    %238 = vector.broadcast %237 : vector<1x128xf32> to vector<256x128xf32>
    %239 = arith.addf %222, %238 : vector<256x128xf32>
    %240 = vector.shape_cast %239 : vector<256x128xf32> to vector<8x32x128xf32>
    %c0_209 = arith.constant 0 : index
    %c0_210 = arith.constant 0 : index
    %c0_211 = arith.constant 0 : index
    %c0_212 = arith.constant 0 : index
    %241 = vector.load %arg21[%c0_209, %c0_210, %c0_211, %c0_212] : memref<1x8x32x128xf32, #tpu.memory_space<vmem>>, vector<1x8x32x128xf32>
    %242 = vector.shape_cast %241 : vector<1x8x32x128xf32> to vector<8x32x128xf32>
    %243 = vector.shape_cast %240 : vector<8x32x128xf32> to vector<1x8x32x128xf32>
    tpu.vector_store %arg21[%c0_209, %c0_210, %c0_211, %c0_212], %243 {strides = array<i32>} : memref<1x8x32x128xf32, #tpu.memory_space<vmem>>, vector<1x8x32x128xf32>,
    return
  }
  func.func @transform_0(%arg0: i32, %arg1: i32) -> (i32, i32, i32, i32) {
    %c0_i32 = arith.constant 0 : i32
    %c0_i32_0 = arith.constant 0 : i32
    %c0_i32_1 = arith.constant 0 : i32
    %c0_i32_2 = arith.constant 0 : i32
    return %arg0, %c0_i32, %c0_i32_0, %c0_i32_1 : i32, i32, i32, i32
  }
  func.func @transform_1(%arg0: i32, %arg1: i32) -> (i32, i32, i32) {
    %c0_i32 = arith.constant 0 : i32
    %c0_i32_0 = arith.constant 0 : i32
    %c0_i32_1 = arith.constant 0 : i32
    return %arg0, %c0_i32, %c0_i32_0 : i32, i32, i32
  }
  func.func @transform_2(%arg0: i32, %arg1: i32) -> (i32, i32) {
    %c0_i32 = arith.constant 0 : i32
    %c0_i32_0 = arith.constant 0 : i32
    %c0_i32_1 = arith.constant 0 : i32
    return %c0_i32, %c0_i32_0 : i32, i32
  }
  func.func @transform_3(%arg0: i32, %arg1: i32) -> (i32, i32) {
    %c0_i32 = arith.constant 0 : i32
    %c0_i32_0 = arith.constant 0 : i32
    %c0_i32_1 = arith.constant 0 : i32
    return %c0_i32, %c0_i32_0 : i32, i32
  }
  func.func @transform_4(%arg0: i32, %arg1: i32) -> (i32, i32, i32, i32) {
    %c0_i32 = arith.constant 0 : i32
    %c0_i32_0 = arith.constant 0 : i32
    %c0_i32_1 = arith.constant 0 : i32
    %c0_i32_2 = arith.constant 0 : i32
    %c0_i32_3 = arith.constant 0 : i32
    return %c0_i32, %c0_i32_0, %c0_i32_1, %c0_i32_2 : i32, i32, i32, i32
  }
  func.func @transform_5(%arg0: i32, %arg1: i32) -> (i32, i32) {
    %c0_i32 = arith.constant 0 : i32
    %c0_i32_0 = arith.constant 0 : i32
    %c0_i32_1 = arith.constant 0 : i32
    return %c0_i32, %c0_i32_0 : i32, i32
  }
  func.func @transform_6(%arg0: i32, %arg1: i32) -> (i32, i32, i32, i32) {
    %c0_i32 = arith.constant 0 : i32
    %c0_i32_0 = arith.constant 0 : i32
    %c0_i32_1 = arith.constant 0 : i32
    %c0_i32_2 = arith.constant 0 : i32
    %c0_i32_3 = arith.constant 0 : i32
    return %c0_i32, %c0_i32_0, %c0_i32_1, %c0_i32_2 : i32, i32, i32, i32
  }
  func.func @transform_7(%arg0: i32, %arg1: i32) -> (i32, i32) {
    %c0_i32 = arith.constant 0 : i32
    %c0_i32_0 = arith.constant 0 : i32
    %c0_i32_1 = arith.constant 0 : i32
    return %c0_i32, %c0_i32_0 : i32, i32
  }
  func.func @transform_8(%arg0: i32, %arg1: i32) -> (i32, i32, i32, i32) {
    %c0_i32 = arith.constant 0 : i32
    %c0_i32_0 = arith.constant 0 : i32
    %c0_i32_1 = arith.constant 0 : i32
    %c0_i32_2 = arith.constant 0 : i32
    %c0_i32_3 = arith.constant 0 : i32
    return %c0_i32, %c0_i32_0, %c0_i32_1, %c0_i32_2 : i32, i32, i32, i32
  }
  func.func @transform_9(%arg0: i32, %arg1: i32) -> (i32, i32) {
    %c0_i32 = arith.constant 0 : i32
    %c0_i32_0 = arith.constant 0 : i32
    %c0_i32_1 = arith.constant 0 : i32
    return %c0_i32, %c0_i32_0 : i32, i32
  }
  func.func @transform_10(%arg0: i32, %arg1: i32) -> (i32, i32) {
    %c0_i32 = arith.constant 0 : i32
    %c0_i32_0 = arith.constant 0 : i32
    %c0_i32_1 = arith.constant 0 : i32
    return %c0_i32, %c0_i32_0 : i32, i32
  }
  func.func @transform_11(%arg0: i32, %arg1: i32) -> (i32, i32) {
    %c0_i32 = arith.constant 0 : i32
    %c0_i32_0 = arith.constant 0 : i32
    %c0_i32_1 = arith.constant 0 : i32
    return %c0_i32, %c0_i32_0 : i32, i32
  }
  func.func @transform_12(%arg0: i32, %arg1: i32) -> (i32, i32) {
    %c0_i32 = arith.constant 0 : i32
    %c0_i32_0 = arith.constant 0 : i32
    %c0_i32_1 = arith.constant 0 : i32
    return %c0_i32, %c0_i32_0 : i32, i32
  }
  func.func @transform_13(%arg0: i32, %arg1: i32) -> (i32, i32) {
    %c0_i32 = arith.constant 0 : i32
    %c0_i32_0 = arith.constant 0 : i32
    %c0_i32_1 = arith.constant 0 : i32
    return %c0_i32, %c0_i32_0 : i32, i32
  }
  func.func @transform_14(%arg0: i32, %arg1: i32) -> (i32, i32) {
    %c0_i32 = arith.constant 0 : i32
    %c0_i32_0 = arith.constant 0 : i32
    %c0_i32_1 = arith.constant 0 : i32
    return %c0_i32, %c0_i32_0 : i32, i32
  }
  func.func @transform_15(%arg0: i32, %arg1: i32) -> (i32, i32) {
    %c0_i32 = arith.constant 0 : i32
    %c0_i32_0 = arith.constant 0 : i32
    %c0_i32_1 = arith.constant 0 : i32
    return %c0_i32, %c0_i32_0 : i32, i32
  }
  func.func @transform_16(%arg0: i32, %arg1: i32) -> (i32, i32) {
    %c0_i32 = arith.constant 0 : i32
    %c0_i32_0 = arith.constant 0 : i32
    %c0_i32_1 = arith.constant 0 : i32
    return %c0_i32, %c0_i32_0 : i32, i32
  }
  func.func @transform_17(%arg0: i32, %arg1: i32) -> (i32, i32) {
    %c0_i32 = arith.constant 0 : i32
    %c0_i32_0 = arith.constant 0 : i32
    %c0_i32_1 = arith.constant 0 : i32
    return %c0_i32, %c0_i32_0 : i32, i32
  }
  func.func @transform_18(%arg0: i32, %arg1: i32) -> (i32, i32) {
    %c0_i32 = arith.constant 0 : i32
    %c0_i32_0 = arith.constant 0 : i32
    %c0_i32_1 = arith.constant 0 : i32
    return %c0_i32, %c0_i32_0 : i32, i32
  }
  func.func @transform_19(%arg0: i32, %arg1: i32) -> (i32, i32, i32, i32) {
    %c0_i32 = arith.constant 0 : i32
    %c0_i32_0 = arith.constant 0 : i32
    %c0_i32_1 = arith.constant 0 : i32
    return %arg0, %arg1, %c0_i32, %c0_i32_0 : i32, i32, i32, i32
  }
}

</mosaic_0001>

<llo_original>
// kernel: tpu_custom_call.1
$region0: #{tpu_custom_call.1}
  #allocation0 [shape = 'u32[]', space=smem, size = 0x4, offset = 0x4, fixed_abs, tag = 'smem constant byte address 0x4 - core index']
  #allocation1 [shape = 'u32[144,128]{1,0:T(1,128)}', space=vmem, size = 0x12000, scoped, tag = 'internal scratch']
  %s0 = inlined_call_operand.vmem [shape: bf16[2,104,104,64], index: 0, kind: input, shape index: {}]
  %s1 = inlined_call_operand.vmem [shape: bf16[2,1,64], index: 1, kind: input, shape index: {}]
  %s2 = inlined_call_operand.vmem [shape: bf16[64,128], index: 2, kind: input, shape index: {}]
  %s3 = inlined_call_operand.vmem [shape: f32[1,128], index: 3, kind: input, shape index: {}]
  %s4 = inlined_call_operand.vmem [shape: bf16[3,3,64,128], index: 4, kind: input, shape index: {}]
  %s5 = inlined_call_operand.vmem [shape: f32[1,128], index: 5, kind: input, shape index: {}]
  %s6 = inlined_call_operand.vmem [shape: bf16[3,3,64,128], index: 6, kind: input, shape index: {}]
  %s7 = inlined_call_operand.vmem [shape: f32[1,128], index: 7, kind: input, shape index: {}]
  %s8 = inlined_call_operand.vmem [shape: bf16[3,3,64,128], index: 8, kind: input, shape index: {}]
  %s9 = inlined_call_operand.vmem [shape: f32[1,128], index: 9, kind: input, shape index: {}]
  %s10 = inlined_call_operand.vmem [shape: bf16[64,128], index: 10, kind: input, shape index: {}]
  %s11 = inlined_call_operand.vmem [shape: f32[1,128], index: 11, kind: input, shape index: {}]
  %s12 = inlined_call_operand.vmem [shape: bf16[128,128], index: 12, kind: input, shape index: {}]
  %s13 = inlined_call_operand.vmem [shape: bf16[128,128], index: 13, kind: input, shape index: {}]
  %s14 = inlined_call_operand.vmem [shape: bf16[128,128], index: 14, kind: input, shape index: {}]
  %s15 = inlined_call_operand.vmem [shape: bf16[128,128], index: 15, kind: input, shape index: {}]
  %s16 = inlined_call_operand.vmem [shape: f32[1,128], index: 16, kind: input, shape index: {}]
  %s17 = inlined_call_operand.vmem [shape: bf16[128,128], index: 17, kind: input, shape index: {}]
  %s18 = inlined_call_operand.vmem [shape: f32[1,128], index: 18, kind: input, shape index: {}]
  %s19 = inlined_call_operand.hbm [shape: f32[2,32,32,128], index: 19, kind: output, shape index: {}]
  %s20 = sld [smem:[#allocation0]]
  $region109: #{tpu_custom_call.1} parent=0
    _
  %s22 = ssub.s32 1, %s20
  %s23 = scalar_select 0, %s22, %s20
  $region1: #{tpu_custom_call.1} parent=0
    #allocation2 [shape = 'u8[262144]{0}', space=vmem, size = 0x40000, scoped, tag = 'output window, operand 0']
    #allocation3 [shape = 's32[2]{0}', space=sflag, size = 0x8, scoped, tag = 'scoped memory for tpu_custom_call.1']
    %24 = vsyncpa [#allocation3], 0
    %s25 = scalar_lea.sflag [#allocation3], 1
    %26 = vsyncpa %s25, 0
    loop: start=0, step=1, limit=10
    $region2: #{tpu_custom_call.1} parent=1 // loop_pre_header
      _
    $region3: #{tpu_custom_call.1} parent=1 // loop_header
      %s28 = sphi 0, %s32
      %p29 = scmp.ge.s32.totalorder %s28, 10
      %s35 = sphi 0, %s47
      %s36 = sphi 0, %s43
      %s37 = sphi 0, %s35
      %s38 = sphi 0, %s36
      %s39 = sphi 0, %s37
      %s40 = sphi 0, %s38
      %s50 = sphi 0, %s52
      %s53 = sphi 0, %s50
      %s54 = sphi 0, %s53
      %s70 = sphi 0, %s54
      %s76 = sphi 0, %s78
      %s79 = sphi 0, %s76
      %s80 = sphi 0, %s79
      %s96 = sphi 0, %s80
      %s100 = sphi 0, %s100
      %s102 = sphi 0, %s100
      %s103 = sphi 0, %s102
      %s117 = sphi 0, %s103
      %s121 = sphi 0, %s121
      %s123 = sphi 0, %s121
      %s124 = sphi 0, %s123
      %s138 = sphi 0, %s124
      %s142 = sphi 0, %s142
      %s144 = sphi 0, %s142
      %s145 = sphi 0, %s144
      %s159 = sphi 0, %s145
      %s163 = sphi 0, %s163
      %s165 = sphi 0, %s163
      %s166 = sphi 0, %s165
      %s180 = sphi 0, %s166
      %s184 = sphi 0, %s184
      %s186 = sphi 0, %s184
      %s187 = sphi 0, %s186
      %s201 = sphi 0, %s187
      %s205 = sphi 0, %s205
      %s207 = sphi 0, %s205
      %s208 = sphi 0, %s207
      %s222 = sphi 0, %s208
      %s226 = sphi 0, %s226
      %s228 = sphi 0, %s226
      %s229 = sphi 0, %s228
      %s243 = sphi 0, %s229
      %s247 = sphi 0, %s247
      %s249 = sphi 0, %s247
      %s250 = sphi 0, %s249
      %s264 = sphi 0, %s250
      %s268 = sphi 0, %s268
      %s270 = sphi 0, %s268
      %s271 = sphi 0, %s270
      %s285 = sphi 0, %s271
      %s289 = sphi 0, %s289
      %s291 = sphi 0, %s289
      %s292 = sphi 0, %s291
      %s306 = sphi 0, %s292
      %s310 = sphi 0, %s310
      %s312 = sphi 0, %s310
      %s313 = sphi 0, %s312
      %s327 = sphi 0, %s313
      %s331 = sphi 0, %s331
      %s333 = sphi 0, %s331
      %s334 = sphi 0, %s333
      %s348 = sphi 0, %s334
      %s352 = sphi 0, %s352
      %s354 = sphi 0, %s352
      %s355 = sphi 0, %s354
      %s369 = sphi 0, %s355
      %s373 = sphi 0, %s373
      %s375 = sphi 0, %s373
      %s376 = sphi 0, %s375
      %s390 = sphi 0, %s376
      %s394 = sphi 0, %s394
      %s396 = sphi 0, %s394
      %s397 = sphi 0, %s396
      %s411 = sphi 0, %s397
      %s415 = sphi 0, %s415
      %s417 = sphi 0, %s415
      %s418 = sphi 0, %s417
      %s432 = sphi 0, %s418
      %s436 = sphi 0, %s436
      %s438 = sphi 0, %s436
      %s439 = sphi 0, %s438
      %s453 = sphi 0, %s439
      %s461 = sphi 0, %s463
      %s464 = sphi 0, %s461
      %s465 = sphi 0, %s464
      %s481 = sphi 0, %s465
    $region4: #{tpu_custom_call.1} parent=1 // loop_header_branch
      %31 = sbr.rel (%p29) target = $region8
    $region5: #{tpu_custom_call.1} parent=1 // loop_body
      %s33 = ssub.s32 %s28, 1
      %s34 = ssub.s32 %s28, 2
      %s41 = sadd.s32 1, %s36
      %p42 = scmp.ge.s32.totalorder %s41, 4
      %s43 = scalar_select %p42, 0, %s41
      %s44 = sadd.s32 1, %s35
      %s45 = scalar_select %p42, %s44, %s35
      %p46 = scmp.ge.s32.totalorder %s45, 2
      %s47 = scalar_select %p46, 0, %s45
      %s48 = ssub.s32 %s35, %s47
      %p49 = scmp.eq.s32.totalorder %s48, 0
      %s51 = sadd.s32 %s50, 1
      %s52 = scalar_select %p49, %s50, %s51
      %p55 = pneg %p49
      %p56 = scmp.eq.s32.totalorder %s28, 7
      %p57 = por %p55, %p56
      %p58 = scmp.ne.s32.totalorder %s50, %s53
      %p59 = scmp.eq.s32.totalorder %s28, 0
      %p60 = por %p58, %p59
      %p61 = scmp.ne.s32.totalorder %s50, %s53
      %p62 = scmp.eq.s32.totalorder %s33, 7
      %p63 = por %p61, %p62
      %p64 = scmp.ne.s32.totalorder %s53, %s54
      %p65 = scmp.eq.s32.totalorder %s33, 0
      %p66 = por %p64, %p65
      %p67 = scmp.ne.s32.totalorder %s53, %s54
      %p68 = scmp.eq.s32.totalorder %s34, 7
      %p69 = por %p67, %p68
      %p71 = scmp.ne.s32.totalorder %s54, %s70
      %p72 = scmp.eq.s32.totalorder %s34, 0
      %p73 = por %p71, %p72
      %s74 = ssub.s32 %s35, %s47
      %p75 = scmp.eq.s32.totalorder %s74, 0
      %s77 = sadd.s32 %s76, 1
      %s78 = scalar_select %p75, %s76, %s77
      %p81 = pneg %p75
      %p82 = scmp.eq.s32.totalorder %s28, 7
      %p83 = por %p81, %p82
      %p84 = scmp.ne.s32.totalorder %s76, %s79
      %p85 = scmp.eq.s32.totalorder %s28, 0
      %p86 = por %p84, %p85
      %p87 = scmp.ne.s32.totalorder %s76, %s79
      %p88 = scmp.eq.s32.totalorder %s33, 7
      %p89 = por %p87, %p88
      %p90 = scmp.ne.s32.totalorder %s79, %s80
      %p91 = scmp.eq.s32.totalorder %s33, 0
      %p92 = por %p90, %p91
      %p93 = scmp.ne.s32.totalorder %s79, %s80
      %p94 = scmp.eq.s32.totalorder %s34, 7
      %p95 = por %p93, %p94
      %p97 = scmp.ne.s32.totalorder %s80, %s96
      %p98 = scmp.eq.s32.totalorder %s34, 0
      %p99 = por %p97, %p98
      %s101 = sadd.s32 %s100, 1
      %p104 = scmp.eq.s32.totalorder %s28, 7
      %p105 = scmp.ne.s32.totalorder %s100, %s102
      %p106 = scmp.eq.s32.totalorder %s28, 0
      %p107 = por %p105, %p106
      %p108 = scmp.ne.s32.totalorder %s100, %s102
      %p109 = scmp.eq.s32.totalorder %s33, 7
      %p110 = por %p108, %p109
      %p111 = scmp.ne.s32.totalorder %s102, %s103
      %p112 = scmp.eq.s32.totalorder %s33, 0
      %p113 = por %p111, %p112
      %p114 = scmp.ne.s32.totalorder %s102, %s103
      %p115 = scmp.eq.s32.totalorder %s34, 7
      %p116 = por %p114, %p115
      %p118 = scmp.ne.s32.totalorder %s103, %s117
      %p119 = scmp.eq.s32.totalorder %s34, 0
      %p120 = por %p118, %p119
      %s122 = sadd.s32 %s121, 1
      %p125 = scmp.eq.s32.totalorder %s28, 7
      %p126 = scmp.ne.s32.totalorder %s121, %s123
      %p127 = scmp.eq.s32.totalorder %s28, 0
      %p128 = por %p126, %p127
      %p129 = scmp.ne.s32.totalorder %s121, %s123
      %p130 = scmp.eq.s32.totalorder %s33, 7
      %p131 = por %p129, %p130
      %p132 = scmp.ne.s32.totalorder %s123, %s124
      %p133 = scmp.eq.s32.totalorder %s33, 0
      %p134 = por %p132, %p133
      %p135 = scmp.ne.s32.totalorder %s123, %s124
      %p136 = scmp.eq.s32.totalorder %s34, 7
      %p137 = por %p135, %p136
      %p139 = scmp.ne.s32.totalorder %s124, %s138
      %p140 = scmp.eq.s32.totalorder %s34, 0
      %p141 = por %p139, %p140
      %s143 = sadd.s32 %s142, 1
      %p146 = scmp.eq.s32.totalorder %s28, 7
      %p147 = scmp.ne.s32.totalorder %s142, %s144
      %p148 = scmp.eq.s32.totalorder %s28, 0
      %p149 = por %p147, %p148
      %p150 = scmp.ne.s32.totalorder %s142, %s144
      %p151 = scmp.eq.s32.totalorder %s33, 7
      %p152 = por %p150, %p151
      %p153 = scmp.ne.s32.totalorder %s144, %s145
      %p154 = scmp.eq.s32.totalorder %s33, 0
      %p155 = por %p153, %p154
      %p156 = scmp.ne.s32.totalorder %s144, %s145
      %p157 = scmp.eq.s32.totalorder %s34, 7
      %p158 = por %p156, %p157
      %p160 = scmp.ne.s32.totalorder %s145, %s159
      %p161 = scmp.eq.s32.totalorder %s34, 0
      %p162 = por %p160, %p161
      %s164 = sadd.s32 %s163, 1
      %p167 = scmp.eq.s32.totalorder %s28, 7
      %p168 = scmp.ne.s32.totalorder %s163, %s165
      %p169 = scmp.eq.s32.totalorder %s28, 0
      %p170 = por %p168, %p169
      %p171 = scmp.ne.s32.totalorder %s163, %s165
      %p172 = scmp.eq.s32.totalorder %s33, 7
      %p173 = por %p171, %p172
      %p174 = scmp.ne.s32.totalorder %s165, %s166
      %p175 = scmp.eq.s32.totalorder %s33, 0
      %p176 = por %p174, %p175
      %p177 = scmp.ne.s32.totalorder %s165, %s166
      %p178 = scmp.eq.s32.totalorder %s34, 7
      %p179 = por %p177, %p178
      %p181 = scmp.ne.s32.totalorder %s166, %s180
      %p182 = scmp.eq.s32.totalorder %s34, 0
      %p183 = por %p181, %p182
      %s185 = sadd.s32 %s184, 1
      %p188 = scmp.eq.s32.totalorder %s28, 7
      %p189 = scmp.ne.s32.totalorder %s184, %s186
      %p190 = scmp.eq.s32.totalorder %s28, 0
      %p191 = por %p189, %p190
      %p192 = scmp.ne.s32.totalorder %s184, %s186
      %p193 = scmp.eq.s32.totalorder %s33, 7
      %p194 = por %p192, %p193
      %p195 = scmp.ne.s32.totalorder %s186, %s187
      %p196 = scmp.eq.s32.totalorder %s33, 0
      %p197 = por %p195, %p196
      %p198 = scmp.ne.s32.totalorder %s186, %s187
      %p199 = scmp.eq.s32.totalorder %s34, 7
      %p200 = por %p198, %p199
      %p202 = scmp.ne.s32.totalorder %s187, %s201
      %p203 = scmp.eq.s32.totalorder %s34, 0
      %p204 = por %p202, %p203
      %s206 = sadd.s32 %s205, 1
      %p209 = scmp.eq.s32.totalorder %s28, 7
      %p210 = scmp.ne.s32.totalorder %s205, %s207
      %p211 = scmp.eq.s32.totalorder %s28, 0
      %p212 = por %p210, %p211
      %p213 = scmp.ne.s32.totalorder %s205, %s207
      %p214 = scmp.eq.s32.totalorder %s33, 7
      %p215 = por %p213, %p214
      %p216 = scmp.ne.s32.totalorder %s207, %s208
      %p217 = scmp.eq.s32.totalorder %s33, 0
      %p218 = por %p216, %p217
      %p219 = scmp.ne.s32.totalorder %s207, %s208
      %p220 = scmp.eq.s32.totalorder %s34, 7
      %p221 = por %p219, %p220
      %p223 = scmp.ne.s32.totalorder %s208, %s222
      %p224 = scmp.eq.s32.totalorder %s34, 0
      %p225 = por %p223, %p224
      %s227 = sadd.s32 %s226, 1
      %p230 = scmp.eq.s32.totalorder %s28, 7
      %p231 = scmp.ne.s32.totalorder %s226, %s228
      %p232 = scmp.eq.s32.totalorder %s28, 0
      %p233 = por %p231, %p232
      %p234 = scmp.ne.s32.totalorder %s226, %s228
      %p235 = scmp.eq.s32.totalorder %s33, 7
      %p236 = por %p234, %p235
      %p237 = scmp.ne.s32.totalorder %s228, %s229
      %p238 = scmp.eq.s32.totalorder %s33, 0
      %p239 = por %p237, %p238
      %p240 = scmp.ne.s32.totalorder %s228, %s229
      %p241 = scmp.eq.s32.totalorder %s34, 7
      %p242 = por %p240, %p241
      %p244 = scmp.ne.s32.totalorder %s229, %s243
      %p245 = scmp.eq.s32.totalorder %s34, 0
      %p246 = por %p244, %p245
      %s248 = sadd.s32 %s247, 1
      %p251 = scmp.eq.s32.totalorder %s28, 7
      %p252 = scmp.ne.s32.totalorder %s247, %s249
      %p253 = scmp.eq.s32.totalorder %s28, 0
      %p254 = por %p252, %p253
      %p255 = scmp.ne.s32.totalorder %s247, %s249
      %p256 = scmp.eq.s32.totalorder %s33, 7
      %p257 = por %p255, %p256
      %p258 = scmp.ne.s32.totalorder %s249, %s250
      %p259 = scmp.eq.s32.totalorder %s33, 0
      %p260 = por %p258, %p259
      %p261 = scmp.ne.s32.totalorder %s249, %s250
      %p262 = scmp.eq.s32.totalorder %s34, 7
      %p263 = por %p261, %p262
      %p265 = scmp.ne.s32.totalorder %s250, %s264
      %p266 = scmp.eq.s32.totalorder %s34, 0
      %p267 = por %p265, %p266
      %s269 = sadd.s32 %s268, 1
      %p272 = scmp.eq.s32.totalorder %s28, 7
      %p273 = scmp.ne.s32.totalorder %s268, %s270
      %p274 = scmp.eq.s32.totalorder %s28, 0
      %p275 = por %p273, %p274
      %p276 = scmp.ne.s32.totalorder %s268, %s270
      %p277 = scmp.eq.s32.totalorder %s33, 7
      %p278 = por %p276, %p277
      %p279 = scmp.ne.s32.totalorder %s270, %s271
      %p280 = scmp.eq.s32.totalorder %s33, 0
      %p281 = por %p279, %p280
      %p282 = scmp.ne.s32.totalorder %s270, %s271
      %p283 = scmp.eq.s32.totalorder %s34, 7
      %p284 = por %p282, %p283
      %p286 = scmp.ne.s32.totalorder %s271, %s285
      %p287 = scmp.eq.s32.totalorder %s34, 0
      %p288 = por %p286, %p287
      %s290 = sadd.s32 %s289, 1
      %p293 = scmp.eq.s32.totalorder %s28, 7
      %p294 = scmp.ne.s32.totalorder %s289, %s291
      %p295 = scmp.eq.s32.totalorder %s28, 0
      %p296 = por %p294, %p295
      %p297 = scmp.ne.s32.totalorder %s289, %s291
      %p298 = scmp.eq.s32.totalorder %s33, 7
      %p299 = por %p297, %p298
      %p300 = scmp.ne.s32.totalorder %s291, %s292
      %p301 = scmp.eq.s32.totalorder %s33, 0
      %p302 = por %p300, %p301
      %p303 = scmp.ne.s32.totalorder %s291, %s292
      %p304 = scmp.eq.s32.totalorder %s34, 7
      %p305 = por %p303, %p304
      %p307 = scmp.ne.s32.totalorder %s292, %s306
      %p308 = scmp.eq.s32.totalorder %s34, 0
      %p309 = por %p307, %p308
      %s311 = sadd.s32 %s310, 1
      %p314 = scmp.eq.s32.totalorder %s28, 7
      %p315 = scmp.ne.s32.totalorder %s310, %s312
      %p316 = scmp.eq.s32.totalorder %s28, 0
      %p317 = por %p315, %p316
      %p318 = scmp.ne.s32.totalorder %s310, %s312
      %p319 = scmp.eq.s32.totalorder %s33, 7
      %p320 = por %p318, %p319
      %p321 = scmp.ne.s32.totalorder %s312, %s313
      %p322 = scmp.eq.s32.totalorder %s33, 0
      %p323 = por %p321, %p322
      %p324 = scmp.ne.s32.totalorder %s312, %s313
      %p325 = scmp.eq.s32.totalorder %s34, 7
      %p326 = por %p324, %p325
      %p328 = scmp.ne.s32.totalorder %s313, %s327
      %p329 = scmp.eq.s32.totalorder %s34, 0
      %p330 = por %p328, %p329
      %s332 = sadd.s32 %s331, 1
      %p335 = scmp.eq.s32.totalorder %s28, 7
      %p336 = scmp.ne.s32.totalorder %s331, %s333
      %p337 = scmp.eq.s32.totalorder %s28, 0
      %p338 = por %p336, %p337
      %p339 = scmp.ne.s32.totalorder %s331, %s333
      %p340 = scmp.eq.s32.totalorder %s33, 7
      %p341 = por %p339, %p340
      %p342 = scmp.ne.s32.totalorder %s333, %s334
      %p343 = scmp.eq.s32.totalorder %s33, 0
      %p344 = por %p342, %p343
      %p345 = scmp.ne.s32.totalorder %s333, %s334
      %p346 = scmp.eq.s32.totalorder %s34, 7
      %p347 = por %p345, %p346
      %p349 = scmp.ne.s32.totalorder %s334, %s348
      %p350 = scmp.eq.s32.totalorder %s34, 0
      %p351 = por %p349, %p350
      %s353 = sadd.s32 %s352, 1
      %p356 = scmp.eq.s32.totalorder %s28, 7
      %p357 = scmp.ne.s32.totalorder %s352, %s354
      %p358 = scmp.eq.s32.totalorder %s28, 0
      %p359 = por %p357, %p358
      %p360 = scmp.ne.s32.totalorder %s352, %s354
      %p361 = scmp.eq.s32.totalorder %s33, 7
      %p362 = por %p360, %p361
      %p363 = scmp.ne.s32.totalorder %s354, %s355
      %p364 = scmp.eq.s32.totalorder %s33, 0
      %p365 = por %p363, %p364
      %p366 = scmp.ne.s32.totalorder %s354, %s355
      %p367 = scmp.eq.s32.totalorder %s34, 7
      %p368 = por %p366, %p367
      %p370 = scmp.ne.s32.totalorder %s355, %s369
      %p371 = scmp.eq.s32.totalorder %s34, 0
      %p372 = por %p370, %p371
      %s374 = sadd.s32 %s373, 1
      %p377 = scmp.eq.s32.totalorder %s28, 7
      %p378 = scmp.ne.s32.totalorder %s373, %s375
      %p379 = scmp.eq.s32.totalorder %s28, 0
      %p380 = por %p378, %p379
      %p381 = scmp.ne.s32.totalorder %s373, %s375
      %p382 = scmp.eq.s32.totalorder %s33, 7
      %p383 = por %p381, %p382
      %p384 = scmp.ne.s32.totalorder %s375, %s376
      %p385 = scmp.eq.s32.totalorder %s33, 0
      %p386 = por %p384, %p385
      %p387 = scmp.ne.s32.totalorder %s375, %s376
      %p388 = scmp.eq.s32.totalorder %s34, 7
      %p389 = por %p387, %p388
      %p391 = scmp.ne.s32.totalorder %s376, %s390
      %p392 = scmp.eq.s32.totalorder %s34, 0
      %p393 = por %p391, %p392
      %s395 = sadd.s32 %s394, 1
      %p398 = scmp.eq.s32.totalorder %s28, 7
      %p399 = scmp.ne.s32.totalorder %s394, %s396
      %p400 = scmp.eq.s32.totalorder %s28, 0
      %p401 = por %p399, %p400
      %p402 = scmp.ne.s32.totalorder %s394, %s396
      %p403 = scmp.eq.s32.totalorder %s33, 7
      %p404 = por %p402, %p403
      %p405 = scmp.ne.s32.totalorder %s396, %s397
      %p406 = scmp.eq.s32.totalorder %s33, 0
      %p407 = por %p405, %p406
      %p408 = scmp.ne.s32.totalorder %s396, %s397
      %p409 = scmp.eq.s32.totalorder %s34, 7
      %p410 = por %p408, %p409
      %p412 = scmp.ne.s32.totalorder %s397, %s411
      %p413 = scmp.eq.s32.totalorder %s34, 0
      %p414 = por %p412, %p413
      %s416 = sadd.s32 %s415, 1
      %p419 = scmp.eq.s32.totalorder %s28, 7
      %p420 = scmp.ne.s32.totalorder %s415, %s417
      %p421 = scmp.eq.s32.totalorder %s28, 0
      %p422 = por %p420, %p421
      %p423 = scmp.ne.s32.totalorder %s415, %s417
      %p424 = scmp.eq.s32.totalorder %s33, 7
      %p425 = por %p423, %p424
      %p426 = scmp.ne.s32.totalorder %s417, %s418
      %p427 = scmp.eq.s32.totalorder %s33, 0
      %p428 = por %p426, %p427
      %p429 = scmp.ne.s32.totalorder %s417, %s418
      %p430 = scmp.eq.s32.totalorder %s34, 7
      %p431 = por %p429, %p430
      %p433 = scmp.ne.s32.totalorder %s418, %s432
      %p434 = scmp.eq.s32.totalorder %s34, 0
      %p435 = por %p433, %p434
      %s437 = sadd.s32 %s436, 1
      %p440 = scmp.eq.s32.totalorder %s28, 7
      %p441 = scmp.ne.s32.totalorder %s436, %s438
      %p442 = scmp.eq.s32.totalorder %s28, 0
      %p443 = por %p441, %p442
      %p444 = scmp.ne.s32.totalorder %s436, %s438
      %p445 = scmp.eq.s32.totalorder %s33, 7
      %p446 = por %p444, %p445
      %p447 = scmp.ne.s32.totalorder %s438, %s439
      %p448 = scmp.eq.s32.totalorder %s33, 0
      %p449 = por %p447, %p448
      %p450 = scmp.ne.s32.totalorder %s438, %s439
      %p451 = scmp.eq.s32.totalorder %s34, 7
      %p452 = por %p450, %p451
      %p454 = scmp.ne.s32.totalorder %s439, %s453
      %p455 = scmp.eq.s32.totalorder %s34, 0
      %p456 = por %p454, %p455
      %s457 = ssub.s32 %s35, %s47
      %s458 = ssub.s32 %s36, %s43
      %s459 = sor.u32 %s457, %s458
      %p460 = scmp.eq.s32.totalorder %s459, 0
      %s462 = sadd.s32 %s461, 1
      %s463 = scalar_select %p460, %s461, %s462
      %p466 = pneg %p460
      %p467 = scmp.eq.s32.totalorder %s28, 7
      %p468 = por %p466, %p467
      %p469 = scmp.ne.s32.totalorder %s461, %s464
      %p470 = scmp.eq.s32.totalorder %s28, 0
      %p471 = por %p469, %p470
      %p472 = scmp.ne.s32.totalorder %s461, %s464
      %p473 = scmp.eq.s32.totalorder %s33, 7
      %p474 = por %p472, %p473
      %p475 = scmp.ne.s32.totalorder %s464, %s465
      %p476 = scmp.eq.s32.totalorder %s33, 0
      %p477 = por %p475, %p476
      %p478 = scmp.ne.s32.totalorder %s464, %s465
      %p479 = scmp.eq.s32.totalorder %s34, 7
      %p480 = por %p478, %p479
      %p482 = scmp.ne.s32.totalorder %s465, %s481
      %p483 = scmp.eq.s32.totalorder %s34, 0
      %p484 = por %p482, %p483
      %p485 = scmp.le.s32.totalorder 1, %s28
      %p486 = scmp.lt.s32.totalorder %s28, 9
      %p487 = pnand %p485, %p486
      %p488 = pneg %p487
      // Predicated region
      $region9: #{tpu_custom_call.1} parent=5 // pred_check
        _
      $region10: #{tpu_custom_call.1} parent=5 // pred_check_branch
        %490 = sbr.rel (%p487) target = $region12
      $region11: #{tpu_custom_call.1} parent=5 // pred_region
        %s491 = ssub.s32 %s28, 1
        // Predicated region
        $region13: #{tpu_custom_call.1} parent=11 // pred_check
          %p492 = pneg %p113
        $region14: #{tpu_custom_call.1} parent=11 // pred_check_branch
          %494 = sbr.rel (%p492) target = $region16
        $region15: #{tpu_custom_call.1} parent=11 // pred_region
          _
        $region16: #{tpu_custom_call.1} parent=11 // pred_fallthru
          _
        // Predicated region
        $region17: #{tpu_custom_call.1} parent=11 // pred_check
          %p495 = pneg %p134
        $region18: #{tpu_custom_call.1} parent=11 // pred_check_branch
          %497 = sbr.rel (%p495) target = $region20
        $region19: #{tpu_custom_call.1} parent=11 // pred_region
          _
        $region20: #{tpu_custom_call.1} parent=11 // pred_fallthru
          _
        // Predicated region
        $region21: #{tpu_custom_call.1} parent=11 // pred_check
          %p498 = pneg %p155
        $region22: #{tpu_custom_call.1} parent=11 // pred_check_branch
          %500 = sbr.rel (%p498) target = $region24
        $region23: #{tpu_custom_call.1} parent=11 // pred_region
          _
        $region24: #{tpu_custom_call.1} parent=11 // pred_fallthru
          _
        // Predicated region
        $region25: #{tpu_custom_call.1} parent=11 // pred_check
          %p501 = pneg %p176
        $region26: #{tpu_custom_call.1} parent=11 // pred_check_branch
          %503 = sbr.rel (%p501) target = $region28
        $region27: #{tpu_custom_call.1} parent=11 // pred_region
          _
        $region28: #{tpu_custom_call.1} parent=11 // pred_fallthru
          _
        // Predicated region
        $region29: #{tpu_custom_call.1} parent=11 // pred_check
          %p504 = pneg %p197
        $region30: #{tpu_custom_call.1} parent=11 // pred_check_branch
          %506 = sbr.rel (%p504) target = $region32
        $region31: #{tpu_custom_call.1} parent=11 // pred_region
          _
        $region32: #{tpu_custom_call.1} parent=11 // pred_fallthru
          _
        // Predicated region
        $region33: #{tpu_custom_call.1} parent=11 // pred_check
          %p507 = pneg %p218
        $region34: #{tpu_custom_call.1} parent=11 // pred_check_branch
          %509 = sbr.rel (%p507) target = $region36
        $region35: #{tpu_custom_call.1} parent=11 // pred_region
          _
        $region36: #{tpu_custom_call.1} parent=11 // pred_fallthru
          _
        // Predicated region
        $region37: #{tpu_custom_call.1} parent=11 // pred_check
          %p510 = pneg %p239
        $region38: #{tpu_custom_call.1} parent=11 // pred_check_branch
          %512 = sbr.rel (%p510) target = $region40
        $region39: #{tpu_custom_call.1} parent=11 // pred_region
          _
        $region40: #{tpu_custom_call.1} parent=11 // pred_fallthru
          _
        // Predicated region
        $region41: #{tpu_custom_call.1} parent=11 // pred_check
          %p513 = pneg %p260
        $region42: #{tpu_custom_call.1} parent=11 // pred_check_branch
          %515 = sbr.rel (%p513) target = $region44
        $region43: #{tpu_custom_call.1} parent=11 // pred_region
          _
        $region44: #{tpu_custom_call.1} parent=11 // pred_fallthru
          _
        // Predicated region
        $region45: #{tpu_custom_call.1} parent=11 // pred_check
          %p516 = pneg %p281
        $region46: #{tpu_custom_call.1} parent=11 // pred_check_branch
          %518 = sbr.rel (%p516) target = $region48
        $region47: #{tpu_custom_call.1} parent=11 // pred_region
          _
        $region48: #{tpu_custom_call.1} parent=11 // pred_fallthru
          _
        // Predicated region
        $region49: #{tpu_custom_call.1} parent=11 // pred_check
          %p519 = pneg %p302
        $region50: #{tpu_custom_call.1} parent=11 // pred_check_branch
          %521 = sbr.rel (%p519) target = $region52
        $region51: #{tpu_custom_call.1} parent=11 // pred_region
          _
        $region52: #{tpu_custom_call.1} parent=11 // pred_fallthru
          _
        // Predicated region
        $region53: #{tpu_custom_call.1} parent=11 // pred_check
          %p522 = pneg %p323
        $region54: #{tpu_custom_call.1} parent=11 // pred_check_branch
          %524 = sbr.rel (%p522) target = $region56
        $region55: #{tpu_custom_call.1} parent=11 // pred_region
          _
        $region56: #{tpu_custom_call.1} parent=11 // pred_fallthru
          _
        // Predicated region
        $region57: #{tpu_custom_call.1} parent=11 // pred_check
          %p525 = pneg %p344
        $region58: #{tpu_custom_call.1} parent=11 // pred_check_branch
          %527 = sbr.rel (%p525) target = $region60
        $region59: #{tpu_custom_call.1} parent=11 // pred_region
          _
        $region60: #{tpu_custom_call.1} parent=11 // pred_fallthru
          _
        // Predicated region
        $region61: #{tpu_custom_call.1} parent=11 // pred_check
          %p528 = pneg %p365
        $region62: #{tpu_custom_call.1} parent=11 // pred_check_branch
          %530 = sbr.rel (%p528) target = $region64
        $region63: #{tpu_custom_call.1} parent=11 // pred_region
          _
        $region64: #{tpu_custom_call.1} parent=11 // pred_fallthru
          _
        // Predicated region
        $region65: #{tpu_custom_call.1} parent=11 // pred_check
          %p531 = pneg %p386
        $region66: #{tpu_custom_call.1} parent=11 // pred_check_branch
          %533 = sbr.rel (%p531) target = $region68
        $region67: #{tpu_custom_call.1} parent=11 // pred_region
          _
        $region68: #{tpu_custom_call.1} parent=11 // pred_fallthru
          _
        // Predicated region
        $region69: #{tpu_custom_call.1} parent=11 // pred_check
          %p534 = pneg %p407
        $region70: #{tpu_custom_call.1} parent=11 // pred_check_branch
          %536 = sbr.rel (%p534) target = $region72
        $region71: #{tpu_custom_call.1} parent=11 // pred_region
          _
        $region72: #{tpu_custom_call.1} parent=11 // pred_fallthru
          _
        // Predicated region
        $region73: #{tpu_custom_call.1} parent=11 // pred_check
          %p537 = pneg %p428
        $region74: #{tpu_custom_call.1} parent=11 // pred_check_branch
          %539 = sbr.rel (%p537) target = $region76
        $region75: #{tpu_custom_call.1} parent=11 // pred_region
          _
        $region76: #{tpu_custom_call.1} parent=11 // pred_fallthru
          _
        // Predicated region
        $region77: #{tpu_custom_call.1} parent=11 // pred_check
          %p540 = pneg %p449
        $region78: #{tpu_custom_call.1} parent=11 // pred_check_branch
          %542 = sbr.rel (%p540) target = $region80
        $region79: #{tpu_custom_call.1} parent=11 // pred_region
          _
        $region80: #{tpu_custom_call.1} parent=11 // pred_fallthru
          _
      $region12: #{tpu_custom_call.1} parent=5 // pred_fallthru
        _
      %p543 = scmp.lt.s32.totalorder %s28, 8
      // Predicated region
      $region81: #{tpu_custom_call.1} parent=5 // pred_check
        %p544 = pneg %p543
      $region82: #{tpu_custom_call.1} parent=5 // pred_check_branch
        %546 = sbr.rel (%p544) target = $region84
      $region83: #{tpu_custom_call.1} parent=5 // pred_region
        // Predicated region
        $region85: #{tpu_custom_call.1} parent=83 // pred_check
          %p547 = pneg %p60
        $region86: #{tpu_custom_call.1} parent=83 // pred_check_branch
          %549 = sbr.rel (%p547) target = $region88
        $region87: #{tpu_custom_call.1} parent=83 // pred_region
          %p550 = scmp.lt.s32.totalorder %s35, 1
          %s551 = scalar_select %p550, %s35, 1
          %s552 = smul.addr %s551, 1352
          %s553 = smul.addr %s552, 4
          %s554 = scalar_lea.vmem %s0, %s553
        $region88: #{tpu_custom_call.1} parent=83 // pred_fallthru
          _
        // Predicated region
        $region89: #{tpu_custom_call.1} parent=83 // pred_check
          %p555 = pneg %p86
        $region90: #{tpu_custom_call.1} parent=83 // pred_check_branch
          %557 = sbr.rel (%p555) target = $region92
        $region91: #{tpu_custom_call.1} parent=83 // pred_region
          %p558 = scmp.lt.s32.totalorder %s35, 1
          %s559 = scalar_select %p558, %s35, 1
          %s560 = scalar_lea.vmem %s1, %s559
        $region92: #{tpu_custom_call.1} parent=83 // pred_fallthru
          _
      $region84: #{tpu_custom_call.1} parent=5 // pred_fallthru
        _
      %p561 = scmp.le.s32.totalorder 1, %s28
      %p562 = scmp.lt.s32.totalorder %s28, 9
      %p563 = pnand %p561, %p562
      %p564 = pneg %p563
      // Predicated region
      $region93: #{tpu_custom_call.1} parent=5 // pred_check
        _
      $region94: #{tpu_custom_call.1} parent=5 // pred_check_branch
        %566 = sbr.rel (%p563) target = $region96
      $region95: #{tpu_custom_call.1} parent=5 // pred_region
        %s567 = ssub.s32 %s28, 1
        %p568 = scmp.lt.s32.totalorder %s37, 1
        %s569 = scalar_select %p568, %s37, 1
        %s570 = smul.addr %s569, 1352
        %s571 = smul.addr %s570, 4
        %s572 = scalar_lea.vmem %s0, %s571
        %p573 = pneg %p66
        %p574 = pneg %p63
        %p575 = scmp.lt.s32.totalorder %s37, 1
        %s576 = scalar_select %p575, %s37, 1
        %s577 = scalar_lea.vmem %s1, %s576
        %p578 = pneg %p92
        %p579 = pneg %p89
        %p580 = pneg %p113
        %p581 = pneg %p110
        %p582 = pneg %p134
        %p583 = pneg %p131
        %p584 = pneg %p155
        %p585 = pneg %p152
        %p586 = pneg %p176
        %p587 = pneg %p173
        %p588 = pneg %p197
        %p589 = pneg %p194
        %p590 = pneg %p218
        %p591 = pneg %p215
        %p592 = pneg %p239
        %p593 = pneg %p236
        %p594 = pneg %p260
        %p595 = pneg %p257
        %p596 = pneg %p281
        %p597 = pneg %p278
        %p598 = pneg %p302
        %p599 = pneg %p299
        %p600 = pneg %p323
        %p601 = pneg %p320
        %p602 = pneg %p344
        %p603 = pneg %p341
        %p604 = pneg %p365
        %p605 = pneg %p362
        %p606 = pneg %p386
        %p607 = pneg %p383
        %p608 = pneg %p407
        %p609 = pneg %p404
        %p610 = pneg %p428
        %p611 = pneg %p425
        %p612 = pneg %p449
        %p613 = pneg %p446
        %p614 = pneg %p477
        %p615 = pneg %p474
        %s616 = sand.u32 %s464, 1
        %s617 = scalar_lea.sflag [#allocation3], %s616
        %s618 = sand.u32 %s464, 1
        %s619 = smul.addr %s618, 256
        %s620 = scalar_lea.vmem [#allocation2], %s619
        %p621 = scmp.lt.s32.totalorder %s37, 1
        %s622 = scalar_select %p621, %s37, 1
        %s623 = smul.addr %s622, 1352
        %s624 = smul.addr %s623, 4
        %s625 = scalar_lea.vmem %s0, %s624
        %p626 = scmp.lt.s32.totalorder %s37, 1
        %s627 = scalar_select %p626, %s37, 1
        %s628 = scalar_lea.vmem %s1, %s627
        %s629 = smul.u32 8, %s38
        %s631 = smul.u32 %s38, 8
        %s632 = sadd.s32 %s631, 36
        %s633 = smul.u32 %s632, 13
        %s634 = smul.addr %s633, 4
        %s635 = scalar_lea.vmem %s625, %s634
        %v636 = vld [vmem:[%s635 + $0x10] sm:$0xc]
        %v637 = vld [vmem:[%s635 + $0x14] sm:$0xf]
        %v638 = vld [vmem:[%s635 + $0x18] sm:$0xf]
        %v639 = vld [vmem:[%s635 + $0x1c] sm:$0xf]
        %v640 = vld [vmem:[%s635 + $0x20] sm:$0x3]
        %v641 = vld [vmem:[%s635 + $0x44] sm:$0xc]
        %v642 = vld [vmem:[%s635 + $0x48] sm:$0xf]
        %v643 = vld [vmem:[%s635 + $0x4c] sm:$0xf]
        %v644 = vld [vmem:[%s635 + $0x50] sm:$0xf]
        %v645 = vld [vmem:[%s635 + $0x54] sm:$0x3]
        %v646 = vld [vmem:[%s635 + $0x78] sm:$0xc]
        %v647 = vld [vmem:[%s635 + $0x7c] sm:$0xf]
        %v648 = vld [vmem:[%s635 + $0x80] sm:$0xf]
        %v649 = vld [vmem:[%s635 + $0x84] sm:$0xf]
        %v650 = vld [vmem:[%s635 + $0x88] sm:$0x3]
        %v651 = vld [vmem:[%s635 + $0xac] sm:$0xc]
        %v652 = vld [vmem:[%s635 + $0xb0] sm:$0xf]
        %v653 = vld [vmem:[%s635 + $0xb4] sm:$0xf]
        %v654 = vld [vmem:[%s635 + $0xb8] sm:$0xf]
        %v655 = vld [vmem:[%s635 + $0xbc] sm:$0x3]
        %v656 = vld [vmem:[%s635 + $0xe0] sm:$0xc]
        %v657 = vld [vmem:[%s635 + $0xe4] sm:$0xf]
        %v658 = vld [vmem:[%s635 + $0xe8] sm:$0xf]
        %v659 = vld [vmem:[%s635 + $0xec] sm:$0xf]
        %v660 = vld [vmem:[%s635 + $0xf0] sm:$0x3]
        %v661 = vld [vmem:[%s635 + $0x114] sm:$0xc]
        %v662 = vld [vmem:[%s635 + $0x118] sm:$0xf]
        %v663 = vld [vmem:[%s635 + $0x11c] sm:$0xf]
        %v664 = vld [vmem:[%s635 + $0x120] sm:$0xf]
        %v665 = vld [vmem:[%s635 + $0x124] sm:$0x3]
        %v666 = vld [vmem:[%s635 + $0x148] sm:$0xc]
        %v667 = vld [vmem:[%s635 + $0x14c] sm:$0xf]
        %v668 = vld [vmem:[%s635 + $0x150] sm:$0xf]
        %v669 = vld [vmem:[%s635 + $0x154] sm:$0xf]
        %v670 = vld [vmem:[%s635 + $0x158] sm:$0x3]
        %v671 = vld [vmem:[%s635 + $0x17c] sm:$0xc]
        %v672 = vld [vmem:[%s635 + $0x180] sm:$0xf]
        %v673 = vld [vmem:[%s635 + $0x184] sm:$0xf]
        %v674 = vld [vmem:[%s635 + $0x188] sm:$0xf]
        %v675 = vld [vmem:[%s635 + $0x18c] sm:$0x3]
        %vm716 = vcmask 1041408
        %vm717 = vcmask 1045508
        %vm718 = vmor %vm716, %vm717
        %v719 = vrot.slane %v636, 6
        %v720 = vrot.slane %v719, 4
        %v721 = vrot.slane %v637, 6
        %v722 = vsel %vm718, %v720, %v721
        %v723 = vrot.slane %v721, 4
        %v724 = vrot.slane %v638, 6
        %v725 = vsel %vm718, %v723, %v724
        %v726 = vrot.slane %v724, 4
        %v727 = vrot.slane %v639, 6
        %v728 = vsel %vm718, %v726, %v727
        %v729 = vrot.slane %v727, 4
        %v730 = vrot.slane %v640, 6
        %v731 = vsel %vm718, %v729, %v730
        %v732 = vrot.slane %v641, 6
        %v733 = vrot.slane %v732, 4
        %v734 = vrot.slane %v642, 6
        %v735 = vsel %vm718, %v733, %v734
        %v736 = vrot.slane %v734, 4
        %v737 = vrot.slane %v643, 6
        %v738 = vsel %vm718, %v736, %v737
        %v739 = vrot.slane %v737, 4
        %v740 = vrot.slane %v644, 6
        %v741 = vsel %vm718, %v739, %v740
        %v742 = vrot.slane %v740, 4
        %v743 = vrot.slane %v645, 6
        %v744 = vsel %vm718, %v742, %v743
        %v745 = vrot.slane %v646, 6
        %v746 = vrot.slane %v745, 4
        %v747 = vrot.slane %v647, 6
        %v748 = vsel %vm718, %v746, %v747
        %v749 = vrot.slane %v747, 4
        %v750 = vrot.slane %v648, 6
        %v751 = vsel %vm718, %v749, %v750
        %v752 = vrot.slane %v750, 4
        %v753 = vrot.slane %v649, 6
        %v754 = vsel %vm718, %v752, %v753
        %v755 = vrot.slane %v753, 4
        %v756 = vrot.slane %v650, 6
        %v757 = vsel %vm718, %v755, %v756
        %v758 = vrot.slane %v651, 6
        %v759 = vrot.slane %v758, 4
        %v760 = vrot.slane %v652, 6
        %v761 = vsel %vm718, %v759, %v760
        %v762 = vrot.slane %v760, 4
        %v763 = vrot.slane %v653, 6
        %v764 = vsel %vm718, %v762, %v763
        %v765 = vrot.slane %v763, 4
        %v766 = vrot.slane %v654, 6
        %v767 = vsel %vm718, %v765, %v766
        %v768 = vrot.slane %v766, 4
        %v769 = vrot.slane %v655, 6
        %v770 = vsel %vm718, %v768, %v769
        %v771 = vrot.slane %v656, 6
        %v772 = vrot.slane %v771, 4
        %v773 = vrot.slane %v657, 6
        %v774 = vsel %vm718, %v772, %v773
        %v775 = vrot.slane %v773, 4
        %v776 = vrot.slane %v658, 6
        %v777 = vsel %vm718, %v775, %v776
        %v778 = vrot.slane %v776, 4
        %v779 = vrot.slane %v659, 6
        %v780 = vsel %vm718, %v778, %v779
        %v781 = vrot.slane %v779, 4
        %v782 = vrot.slane %v660, 6
        %v783 = vsel %vm718, %v781, %v782
        %v784 = vrot.slane %v661, 6
        %v785 = vrot.slane %v784, 4
        %v786 = vrot.slane %v662, 6
        %v787 = vsel %vm718, %v785, %v786
        %v788 = vrot.slane %v786, 4
        %v789 = vrot.slane %v663, 6
        %v790 = vsel %vm718, %v788, %v789
        %v791 = vrot.slane %v789, 4
        %v792 = vrot.slane %v664, 6
        %v793 = vsel %vm718, %v791, %v792
        %v794 = vrot.slane %v792, 4
        %v795 = vrot.slane %v665, 6
        %v796 = vsel %vm718, %v794, %v795
        %v797 = vrot.slane %v666, 6
        %v798 = vrot.slane %v797, 4
        %v799 = vrot.slane %v667, 6
        %v800 = vsel %vm718, %v798, %v799
        %v801 = vrot.slane %v799, 4
        %v802 = vrot.slane %v668, 6
        %v803 = vsel %vm718, %v801, %v802
        %v804 = vrot.slane %v802, 4
        %v805 = vrot.slane %v669, 6
        %v806 = vsel %vm718, %v804, %v805
        %v807 = vrot.slane %v805, 4
        %v808 = vrot.slane %v670, 6
        %v809 = vsel %vm718, %v807, %v808
        %v810 = vrot.slane %v671, 6
        %v811 = vrot.slane %v810, 4
        %v812 = vrot.slane %v672, 6
        %v813 = vsel %vm718, %v811, %v812
        %v814 = vrot.slane %v812, 4
        %v815 = vrot.slane %v673, 6
        %v816 = vsel %vm718, %v814, %v815
        %v817 = vrot.slane %v815, 4
        %v818 = vrot.slane %v674, 6
        %v819 = vsel %vm718, %v817, %v818
        %v820 = vrot.slane %v818, 4
        %v821 = vrot.slane %v675, 6
        %v822 = vsel %vm718, %v820, %v821
        %v823 = vld [vmem:[%s2] sm:$0xf]
        %v824 = vld [vmem:[%s2 + $0x4] sm:$0xf]
        %v825 = vld [vmem:[%s2 + $0x8] sm:$0xf]
        %v826 = vld [vmem:[%s2 + $0xc] sm:$0xf]
        %v827 = vld [vmem:[%s2 + $0x10] sm:$0xf]
        %v828 = vld [vmem:[%s2 + $0x14] sm:$0xf]
        %v829 = vld [vmem:[%s2 + $0x18] sm:$0xf]
        %v830 = vld [vmem:[%s2 + $0x1c] sm:$0xf]
        %v831 = vld [vmem:[%s3] sm:$0x1]
        %v833 = vlaneseq
        %v834 = vshrl.u32 %v833, 7
        %v835 = vsub.s32 0, %v834
        %v836 = vrot.slane %v831, %v835
        %v838 = vunpack.c.l.b16 %v722
        %v839 = vunpack.c.l.b16 %v725
        %v840 = vunpack.c.l.b16 %v728
        %v841 = vunpack.c.l.b16 %v731
        %v842 = vunpack.c.l.b16 %v735
        %v843 = vunpack.c.l.b16 %v738
        %v844 = vunpack.c.l.b16 %v741
        %v845 = vunpack.c.l.b16 %v744
        %v846 = vunpack.c.l.b16 %v748
        %v847 = vunpack.c.l.b16 %v751
        %v848 = vunpack.c.l.b16 %v754
        %v849 = vunpack.c.l.b16 %v757
        %v850 = vunpack.c.l.b16 %v761
        %v851 = vunpack.c.l.b16 %v764
        %v852 = vunpack.c.l.b16 %v767
        %v853 = vunpack.c.l.b16 %v770
        %v854 = vunpack.c.l.b16 %v774
        %v855 = vunpack.c.l.b16 %v777
        %v856 = vunpack.c.l.b16 %v780
        %v857 = vunpack.c.l.b16 %v783
        %v858 = vunpack.c.l.b16 %v787
        %v859 = vunpack.c.l.b16 %v790
        %v860 = vunpack.c.l.b16 %v793
        %v861 = vunpack.c.l.b16 %v796
        %v862 = vunpack.c.l.b16 %v800
        %v863 = vunpack.c.l.b16 %v803
        %v864 = vunpack.c.l.b16 %v806
        %v865 = vunpack.c.l.b16 %v809
        %v866 = vunpack.c.l.b16 %v813
        %v867 = vunpack.c.l.b16 %v816
        %v868 = vunpack.c.l.b16 %v819
        %v869 = vunpack.c.l.b16 %v822
        %v870 = vpack.c.b16 %v839, %v838
        %v871 = vpack.c.b16 %v841, %v840
        %v872 = vpack.c.b16 %v843, %v842
        %v873 = vpack.c.b16 %v845, %v844
        %v874 = vpack.c.b16 %v847, %v846
        %v875 = vpack.c.b16 %v849, %v848
        %v876 = vpack.c.b16 %v851, %v850
        %v877 = vpack.c.b16 %v853, %v852
        %v878 = vpack.c.b16 %v855, %v854
        %v879 = vpack.c.b16 %v857, %v856
        %v880 = vpack.c.b16 %v859, %v858
        %v881 = vpack.c.b16 %v861, %v860
        %v882 = vpack.c.b16 %v863, %v862
        %v883 = vpack.c.b16 %v865, %v864
        %v884 = vpack.c.b16 %v867, %v866
        %v885 = vpack.c.b16 %v869, %v868
        %v894 = vunpack.c.l.b16 %v823
        %v895 = vunpack.c.l.b16 %v824
        %v896 = vunpack.c.l.b16 %v825
        %v897 = vunpack.c.l.b16 %v826
        %v898 = vunpack.c.l.b16 %v827
        %v899 = vunpack.c.l.b16 %v828
        %v900 = vunpack.c.l.b16 %v829
        %v901 = vunpack.c.l.b16 %v830
        %v902 = vpack.c.b16 %v895, %v894
        %v903 = vpack.c.b16 %v897, %v896
        %v904 = vpack.c.b16 %v899, %v898
        %v905 = vpack.c.b16 %v901, %v900
        %vm910 = vcmask 523264
        %v912 = vsel %vm910, %v870, 0
        %v915 = vsel %vm910, %v871, 0
        %v918 = vsel %vm910, %v872, 0
        %v921 = vsel %vm910, %v873, 0
        %v924 = vsel %vm910, %v874, 0
        %v927 = vsel %vm910, %v875, 0
        %v930 = vsel %vm910, %v876, 0
        %v933 = vsel %vm910, %v877, 0
        %v936 = vsel %vm910, %v878, 0
        %v939 = vsel %vm910, %v879, 0
        %v942 = vsel %vm910, %v880, 0
        %v945 = vsel %vm910, %v881, 0
        %v948 = vsel %vm910, %v882, 0
        %v951 = vsel %vm910, %v883, 0
        %v954 = vsel %vm910, %v884, 0
        %v957 = vsel %vm910, %v885, 0
        %959 = vmatprep.subr.bf16.mxu0 0
        %960 = vmatpush1.bf16.msra.mxu0 %v902
        %961 = vmatprep.subr.bf16.mxu0 0
        %962 = vmatpush1.bf16.msra.mxu0 %v903
        %963 = vmatprep.subr.bf16.mxu0 0
        %964 = vmatpush1.bf16.msra.mxu0 %v904
        %965 = vmatprep.subr.bf16.mxu0 0
        %966 = vmatpush1.bf16.msra.mxu0 %v905
        %967 = vmatprep.subr.bf16.mxu0 0
        %968 = vmatpush1.bf16.msra.mxu0 0
        %969 = vmatprep.subr.bf16.mxu0 0
        %970 = vmatpush1.bf16.msra.mxu0 0
        %971 = vmatprep.subr.bf16.mxu0 0
        %972 = vmatpush1.bf16.msra.mxu0 0
        %973 = vmatprep.subr.bf16.mxu0 0
        %974 = vmatpush1.bf16.msra.mxu0 0
        %975 = vmatprep.subr.bf16.mxu0 0
        %976 = vmatpush1.bf16.msra.mxu0 0
        %977 = vmatprep.subr.bf16.mxu0 0
        %978 = vmatpush1.bf16.msra.mxu0 0
        %979 = vmatprep.subr.bf16.mxu0 0
        %980 = vmatpush1.bf16.msra.mxu0 0
        %981 = vmatprep.subr.bf16.mxu0 0
        %982 = vmatpush1.bf16.msra.mxu0 0
        %983 = vmatprep.subr.bf16.mxu0 0
        %984 = vmatpush1.bf16.msra.mxu0 0
        %985 = vmatprep.subr.bf16.mxu0 0
        %986 = vmatpush1.bf16.msra.mxu0 0
        %987 = vmatprep.subr.bf16.mxu0 0
        %988 = vmatpush1.bf16.msra.mxu0 0
        %989 = vmatprep.subr.bf16.mxu0 0
        %990 = vmatpush1.bf16.msra.mxu0 0
        %991 = vmatprep.mubr.bf16.mxu0 0
        %992 = vmatmul.mubr.bf16.gmra.mrb[0].mxu0 %v912
        %v993 = vpop.f32.mrb[0].mxu0
        %v994 = vadd.f32 %v836, %v993
        %v995 = vpop.f32.mrb[0].mxu0
        %v996 = vpop.f32.mrb[0].mxu0
        %v997 = vadd.f32 %v836, %v996
        %v998 = vpop.f32.mrb[0].mxu0
        %999 = vmatprep.mubr.bf16.mxu0 0
        %1000 = vmatmul.mubr.bf16.gmra.mrb[0].mxu0 %v915
        %v1001 = vpop.f32.mrb[0].mxu0
        %v1002 = vadd.f32 %v836, %v1001
        %v1003 = vpop.f32.mrb[0].mxu0
        %v1004 = vpop.f32.mrb[0].mxu0
        %v1005 = vadd.f32 %v836, %v1004
        %v1006 = vpop.f32.mrb[0].mxu0
        %1007 = vmatprep.mubr.bf16.mxu0 0
        %1008 = vmatmul.mubr.bf16.gmra.mrb[0].mxu0 %v918
        %v1009 = vpop.f32.mrb[0].mxu0
        %v1010 = vadd.f32 %v836, %v1009
        %v1011 = vpop.f32.mrb[0].mxu0
        %v1012 = vpop.f32.mrb[0].mxu0
        %v1013 = vadd.f32 %v836, %v1012
        %v1014 = vpop.f32.mrb[0].mxu0
        %1015 = vmatprep.mubr.bf16.mxu0 0
        %1016 = vmatmul.mubr.bf16.gmra.mrb[0].mxu0 %v921
        %v1017 = vpop.f32.mrb[0].mxu0
        %v1018 = vadd.f32 %v836, %v1017
        %v1019 = vpop.f32.mrb[0].mxu0
        %v1020 = vpop.f32.mrb[0].mxu0
        %v1021 = vadd.f32 %v836, %v1020
        %v1022 = vpop.f32.mrb[0].mxu0
        %1023 = vmatprep.mubr.bf16.mxu0 0
        %1024 = vmatmul.mubr.bf16.gmra.mrb[0].mxu0 %v924
        %v1025 = vpop.f32.mrb[0].mxu0
        %v1026 = vadd.f32 %v836, %v1025
        %v1027 = vpop.f32.mrb[0].mxu0
        %v1028 = vpop.f32.mrb[0].mxu0
        %v1029 = vadd.f32 %v836, %v1028
        %v1030 = vpop.f32.mrb[0].mxu0
        %1031 = vmatprep.mubr.bf16.mxu0 0
        %1032 = vmatmul.mubr.bf16.gmra.mrb[0].mxu0 %v927
        %v1033 = vpop.f32.mrb[0].mxu0
        %v1034 = vadd.f32 %v836, %v1033
        %v1035 = vpop.f32.mrb[0].mxu0
        %v1036 = vpop.f32.mrb[0].mxu0
        %v1037 = vadd.f32 %v836, %v1036
        %v1038 = vpop.f32.mrb[0].mxu0
        %1039 = vmatprep.mubr.bf16.mxu0 0
        %1040 = vmatmul.mubr.bf16.gmra.mrb[0].mxu0 %v930
        %v1041 = vpop.f32.mrb[0].mxu0
        %v1042 = vadd.f32 %v836, %v1041
        %v1043 = vpop.f32.mrb[0].mxu0
        %v1044 = vpop.f32.mrb[0].mxu0
        %v1045 = vadd.f32 %v836, %v1044
        %v1046 = vpop.f32.mrb[0].mxu0
        %1047 = vmatprep.mubr.bf16.mxu0 0
        %1048 = vmatmul.mubr.bf16.gmra.mrb[0].mxu0 %v933
        %v1049 = vpop.f32.mrb[0].mxu0
        %v1050 = vadd.f32 %v836, %v1049
        %v1051 = vpop.f32.mrb[0].mxu0
        %v1052 = vpop.f32.mrb[0].mxu0
        %v1053 = vadd.f32 %v836, %v1052
        %v1054 = vpop.f32.mrb[0].mxu0
        %1055 = vmatprep.mubr.bf16.mxu0 0
        %1056 = vmatmul.mubr.bf16.gmra.mrb[0].mxu0 %v936
        %v1057 = vpop.f32.mrb[0].mxu0
        %v1058 = vadd.f32 %v836, %v1057
        %v1059 = vpop.f32.mrb[0].mxu0
        %v1060 = vpop.f32.mrb[0].mxu0
        %v1061 = vadd.f32 %v836, %v1060
        %v1062 = vpop.f32.mrb[0].mxu0
        %1063 = vmatprep.mubr.bf16.mxu0 0
        %1064 = vmatmul.mubr.bf16.gmra.mrb[0].mxu0 %v939
        %v1065 = vpop.f32.mrb[0].mxu0
        %v1066 = vadd.f32 %v836, %v1065
        %v1067 = vpop.f32.mrb[0].mxu0
        %v1068 = vpop.f32.mrb[0].mxu0
        %v1069 = vadd.f32 %v836, %v1068
        %v1070 = vpop.f32.mrb[0].mxu0
        %1071 = vmatprep.mubr.bf16.mxu0 0
        %1072 = vmatmul.mubr.bf16.gmra.mrb[0].mxu0 %v942
        %v1073 = vpop.f32.mrb[0].mxu0
        %v1074 = vadd.f32 %v836, %v1073
        %v1075 = vpop.f32.mrb[0].mxu0
        %v1076 = vpop.f32.mrb[0].mxu0
        %v1077 = vadd.f32 %v836, %v1076
        %v1078 = vpop.f32.mrb[0].mxu0
        %1079 = vmatprep.mubr.bf16.mxu0 0
        %1080 = vmatmul.mubr.bf16.gmra.mrb[0].mxu0 %v945
        %v1081 = vpop.f32.mrb[0].mxu0
        %v1082 = vadd.f32 %v836, %v1081
        %v1083 = vpop.f32.mrb[0].mxu0
        %v1084 = vpop.f32.mrb[0].mxu0
        %v1085 = vadd.f32 %v836, %v1084
        %v1086 = vpop.f32.mrb[0].mxu0
        %1087 = vmatprep.mubr.bf16.mxu0 0
        %1088 = vmatmul.mubr.bf16.gmra.mrb[0].mxu0 %v948
        %v1089 = vpop.f32.mrb[0].mxu0
        %v1090 = vadd.f32 %v836, %v1089
        %v1091 = vpop.f32.mrb[0].mxu0
        %v1092 = vpop.f32.mrb[0].mxu0
        %v1093 = vadd.f32 %v836, %v1092
        %v1094 = vpop.f32.mrb[0].mxu0
        %1095 = vmatprep.mubr.bf16.mxu0 0
        %1096 = vmatmul.mubr.bf16.gmra.mrb[0].mxu0 %v951
        %v1097 = vpop.f32.mrb[0].mxu0
        %v1098 = vadd.f32 %v836, %v1097
        %v1099 = vpop.f32.mrb[0].mxu0
        %v1100 = vpop.f32.mrb[0].mxu0
        %v1101 = vadd.f32 %v836, %v1100
        %v1102 = vpop.f32.mrb[0].mxu0
        %1103 = vmatprep.mubr.bf16.mxu0 0
        %1104 = vmatmul.mubr.bf16.gmra.mrb[0].mxu0 %v954
        %v1105 = vpop.f32.mrb[0].mxu0
        %v1106 = vadd.f32 %v836, %v1105
        %v1107 = vpop.f32.mrb[0].mxu0
        %v1108 = vpop.f32.mrb[0].mxu0
        %v1109 = vadd.f32 %v836, %v1108
        %v1110 = vpop.f32.mrb[0].mxu0
        %1111 = vmatprep.mubr.bf16.mxu0 0
        %1112 = vmatmul.mubr.bf16.gmra.mrb[0].mxu0 %v957
        %v1113 = vpop.f32.mrb[0].mxu0
        %v1114 = vadd.f32 %v836, %v1113
        %v1115 = vpop.f32.mrb[0].mxu0
        %v1116 = vpop.f32.mrb[0].mxu0
        %v1117 = vadd.f32 %v836, %v1116
        %v1118 = vpop.f32.mrb[0].mxu0
        %1119 = vdwg.mxu0
        %v1120 = vmax.f32 %v994, 0.0
        %v1121 = vmax.f32 %v997, 0.0
        %v1122 = vmax.f32 %v1002, 0.0
        %v1123 = vmax.f32 %v1005, 0.0
        %v1124 = vmax.f32 %v1010, 0.0
        %v1125 = vmax.f32 %v1013, 0.0
        %v1126 = vmax.f32 %v1018, 0.0
        %v1127 = vmax.f32 %v1021, 0.0
        %v1128 = vmax.f32 %v1026, 0.0
        %v1129 = vmax.f32 %v1029, 0.0
        %v1130 = vmax.f32 %v1034, 0.0
        %v1131 = vmax.f32 %v1037, 0.0
        %v1132 = vmax.f32 %v1042, 0.0
        %v1133 = vmax.f32 %v1045, 0.0
        %v1134 = vmax.f32 %v1050, 0.0
        %v1135 = vmax.f32 %v1053, 0.0
        %v1136 = vmax.f32 %v1058, 0.0
        %v1137 = vmax.f32 %v1061, 0.0
        %v1138 = vmax.f32 %v1066, 0.0
        %v1139 = vmax.f32 %v1069, 0.0
        %v1140 = vmax.f32 %v1074, 0.0
        %v1141 = vmax.f32 %v1077, 0.0
        %v1142 = vmax.f32 %v1082, 0.0
        %v1143 = vmax.f32 %v1085, 0.0
        %v1144 = vmax.f32 %v1090, 0.0
        %v1145 = vmax.f32 %v1093, 0.0
        %v1146 = vmax.f32 %v1098, 0.0
        %v1147 = vmax.f32 %v1101, 0.0
        %v1148 = vmax.f32 %v1106, 0.0
        %v1149 = vmax.f32 %v1109, 0.0
        %v1150 = vmax.f32 %v1114, 0.0
        %v1151 = vmax.f32 %v1117, 0.0
        %v1152 = vpack.c.bf16 %v1121, %v1120
        %v1153 = vpack.c.bf16 %v1123, %v1122
        %v1154 = vpack.c.bf16 %v1125, %v1124
        %v1155 = vpack.c.bf16 %v1127, %v1126
        %v1156 = vpack.c.bf16 %v1129, %v1128
        %v1157 = vpack.c.bf16 %v1131, %v1130
        %v1158 = vpack.c.bf16 %v1133, %v1132
        %v1159 = vpack.c.bf16 %v1135, %v1134
        %v1160 = vpack.c.bf16 %v1137, %v1136
        %v1161 = vpack.c.bf16 %v1139, %v1138
        %v1162 = vpack.c.bf16 %v1141, %v1140
        %v1163 = vpack.c.bf16 %v1143, %v1142
        %v1164 = vpack.c.bf16 %v1145, %v1144
        %v1165 = vpack.c.bf16 %v1147, %v1146
        %v1166 = vpack.c.bf16 %v1149, %v1148
        %v1167 = vpack.c.bf16 %v1151, %v1150
        %v1168 = vld [vmem:[%s12] sm:$0xf]
        %v1169 = vld [vmem:[%s12 + $0x4] sm:$0xf]
        %v1170 = vld [vmem:[%s12 + $0x8] sm:$0xf]
        %v1171 = vld [vmem:[%s12 + $0xc] sm:$0xf]
        %v1172 = vld [vmem:[%s12 + $0x10] sm:$0xf]
        %v1173 = vld [vmem:[%s12 + $0x14] sm:$0xf]
        %v1174 = vld [vmem:[%s12 + $0x18] sm:$0xf]
        %v1175 = vld [vmem:[%s12 + $0x1c] sm:$0xf]
        %v1176 = vld [vmem:[%s12 + $0x20] sm:$0xf]
        %v1177 = vld [vmem:[%s12 + $0x24] sm:$0xf]
        %v1178 = vld [vmem:[%s12 + $0x28] sm:$0xf]
        %v1179 = vld [vmem:[%s12 + $0x2c] sm:$0xf]
        %v1180 = vld [vmem:[%s12 + $0x30] sm:$0xf]
        %v1181 = vld [vmem:[%s12 + $0x34] sm:$0xf]
        %v1182 = vld [vmem:[%s12 + $0x38] sm:$0xf]
        %v1183 = vld [vmem:[%s12 + $0x3c] sm:$0xf]
        %s1184 = sadd.s32 %s631, 24
        %s1185 = smul.u32 %s1184, 13
        %s1186 = smul.addr %s1185, 4
        %s1187 = scalar_lea.vmem %s625, %s1186
        %v1188 = vld [vmem:[%s1187 + $0xc] sm:$0xf]
        %v1189 = vld [vmem:[%s1187 + $0x10] sm:$0xf]
        %v1190 = vld [vmem:[%s1187 + $0x14] sm:$0xf]
        %v1191 = vld [vmem:[%s1187 + $0x18] sm:$0xf]
        %v1192 = vld [vmem:[%s1187 + $0x40] sm:$0xf]
        %v1193 = vld [vmem:[%s1187 + $0x44] sm:$0xf]
        %v1194 = vld [vmem:[%s1187 + $0x48] sm:$0xf]
        %v1195 = vld [vmem:[%s1187 + $0x4c] sm:$0xf]
        %v1196 = vld [vmem:[%s1187 + $0x74] sm:$0xf]
        %v1197 = vld [vmem:[%s1187 + $0x78] sm:$0xf]
        %v1198 = vld [vmem:[%s1187 + $0x7c] sm:$0xf]
        %v1199 = vld [vmem:[%s1187 + $0x80] sm:$0xf]
        %v1200 = vld [vmem:[%s1187 + $0xa8] sm:$0xf]
        %v1201 = vld [vmem:[%s1187 + $0xac] sm:$0xf]
        %v1202 = vld [vmem:[%s1187 + $0xb0] sm:$0xf]
        %v1203 = vld [vmem:[%s1187 + $0xb4] sm:$0xf]
        %v1204 = vld [vmem:[%s1187 + $0xdc] sm:$0xf]
        %v1205 = vld [vmem:[%s1187 + $0xe0] sm:$0xf]
        %v1206 = vld [vmem:[%s1187 + $0xe4] sm:$0xf]
        %v1207 = vld [vmem:[%s1187 + $0xe8] sm:$0xf]
        %v1208 = vld [vmem:[%s1187 + $0x110] sm:$0xf]
        %v1209 = vld [vmem:[%s1187 + $0x114] sm:$0xf]
        %v1210 = vld [vmem:[%s1187 + $0x118] sm:$0xf]
        %v1211 = vld [vmem:[%s1187 + $0x11c] sm:$0xf]
        %v1212 = vld [vmem:[%s1187 + $0x144] sm:$0xf]
        %v1213 = vld [vmem:[%s1187 + $0x148] sm:$0xf]
        %v1214 = vld [vmem:[%s1187 + $0x14c] sm:$0xf]
        %v1215 = vld [vmem:[%s1187 + $0x150] sm:$0xf]
        %v1216 = vld [vmem:[%s1187 + $0x178] sm:$0xf]
        %v1217 = vld [vmem:[%s1187 + $0x17c] sm:$0xf]
        %v1218 = vld [vmem:[%s1187 + $0x180] sm:$0xf]
        %v1219 = vld [vmem:[%s1187 + $0x184] sm:$0xf]
        %v1220 = vld [vmem:[%s4] sm:$0xf]
        %v1221 = vld [vmem:[%s4 + $0x4] sm:$0xf]
        %v1222 = vld [vmem:[%s4 + $0x8] sm:$0xf]
        %v1223 = vld [vmem:[%s4 + $0xc] sm:$0xf]
        %v1224 = vld [vmem:[%s4 + $0x10] sm:$0xf]
        %v1225 = vld [vmem:[%s4 + $0x14] sm:$0xf]
        %v1226 = vld [vmem:[%s4 + $0x18] sm:$0xf]
        %v1227 = vld [vmem:[%s4 + $0x1c] sm:$0xf]
        %v1228 = vld [vmem:[%s1187 + $0x10] sm:$0xc]
        %v1229 = vld [vmem:[%s1187 + $0x1c] sm:$0xf]
        %v1230 = vld [vmem:[%s1187 + $0x20] sm:$0x3]
        %v1231 = vld [vmem:[%s1187 + $0x44] sm:$0xc]
        %v1232 = vld [vmem:[%s1187 + $0x50] sm:$0xf]
        %v1233 = vld [vmem:[%s1187 + $0x54] sm:$0x3]
        %v1234 = vld [vmem:[%s1187 + $0x78] sm:$0xc]
        %v1235 = vld [vmem:[%s1187 + $0x84] sm:$0xf]
        %v1236 = vld [vmem:[%s1187 + $0x88] sm:$0x3]
        %v1237 = vld [vmem:[%s1187 + $0xac] sm:$0xc]
        %v1238 = vld [vmem:[%s1187 + $0xb8] sm:$0xf]
        %v1239 = vld [vmem:[%s1187 + $0xbc] sm:$0x3]
        %v1240 = vld [vmem:[%s1187 + $0xe0] sm:$0xc]
        %v1241 = vld [vmem:[%s1187 + $0xec] sm:$0xf]
        %v1242 = vld [vmem:[%s1187 + $0xf0] sm:$0x3]
        %v1243 = vld [vmem:[%s1187 + $0x114] sm:$0xc]
        %v1244 = vld [vmem:[%s1187 + $0x120] sm:$0xf]
        %v1245 = vld [vmem:[%s1187 + $0x124] sm:$0x3]
        %v1246 = vld [vmem:[%s1187 + $0x148] sm:$0xc]
        %v1247 = vld [vmem:[%s1187 + $0x154] sm:$0xf]
        %v1248 = vld [vmem:[%s1187 + $0x158] sm:$0x3]
        %v1249 = vld [vmem:[%s1187 + $0x17c] sm:$0xc]
        %v1250 = vld [vmem:[%s1187 + $0x188] sm:$0xf]
        %v1251 = vld [vmem:[%s1187 + $0x18c] sm:$0x3]
        %v1292 = vrot.slane %v1228, 6
        %v1293 = vrot.slane %v1292, 4
        %v1294 = vrot.slane %v1190, 6
        %v1295 = vsel %vm718, %v1293, %v1294
        %v1296 = vrot.slane %v1294, 4
        %v1297 = vrot.slane %v1191, 6
        %v1298 = vsel %vm718, %v1296, %v1297
        %v1299 = vrot.slane %v1297, 4
        %v1300 = vrot.slane %v1229, 6
        %v1301 = vsel %vm718, %v1299, %v1300
        %v1302 = vrot.slane %v1300, 4
        %v1303 = vrot.slane %v1230, 6
        %v1304 = vsel %vm718, %v1302, %v1303
        %v1305 = vrot.slane %v1231, 6
        %v1306 = vrot.slane %v1305, 4
        %v1307 = vrot.slane %v1194, 6
        %v1308 = vsel %vm718, %v1306, %v1307
        %v1309 = vrot.slane %v1307, 4
        %v1310 = vrot.slane %v1195, 6
        %v1311 = vsel %vm718, %v1309, %v1310
        %v1312 = vrot.slane %v1310, 4
        %v1313 = vrot.slane %v1232, 6
        %v1314 = vsel %vm718, %v1312, %v1313
        %v1315 = vrot.slane %v1313, 4
        %v1316 = vrot.slane %v1233, 6
        %v1317 = vsel %vm718, %v1315, %v1316
        %v1318 = vrot.slane %v1234, 6
        %v1319 = vrot.slane %v1318, 4
        %v1320 = vrot.slane %v1198, 6
        %v1321 = vsel %vm718, %v1319, %v1320
        %v1322 = vrot.slane %v1320, 4
        %v1323 = vrot.slane %v1199, 6
        %v1324 = vsel %vm718, %v1322, %v1323
        %v1325 = vrot.slane %v1323, 4
        %v1326 = vrot.slane %v1235, 6
        %v1327 = vsel %vm718, %v1325, %v1326
        %v1328 = vrot.slane %v1326, 4
        %v1329 = vrot.slane %v1236, 6
        %v1330 = vsel %vm718, %v1328, %v1329
        %v1331 = vrot.slane %v1237, 6
        %v1332 = vrot.slane %v1331, 4
        %v1333 = vrot.slane %v1202, 6
        %v1334 = vsel %vm718, %v1332, %v1333
        %v1335 = vrot.slane %v1333, 4
        %v1336 = vrot.slane %v1203, 6
        %v1337 = vsel %vm718, %v1335, %v1336
        %v1338 = vrot.slane %v1336, 4
        %v1339 = vrot.slane %v1238, 6
        %v1340 = vsel %vm718, %v1338, %v1339
        %v1341 = vrot.slane %v1339, 4
        %v1342 = vrot.slane %v1239, 6
        %v1343 = vsel %vm718, %v1341, %v1342
        %v1344 = vrot.slane %v1240, 6
        %v1345 = vrot.slane %v1344, 4
        %v1346 = vrot.slane %v1206, 6
        %v1347 = vsel %vm718, %v1345, %v1346
        %v1348 = vrot.slane %v1346, 4
        %v1349 = vrot.slane %v1207, 6
        %v1350 = vsel %vm718, %v1348, %v1349
        %v1351 = vrot.slane %v1349, 4
        %v1352 = vrot.slane %v1241, 6
        %v1353 = vsel %vm718, %v1351, %v1352
        %v1354 = vrot.slane %v1352, 4
        %v1355 = vrot.slane %v1242, 6
        %v1356 = vsel %vm718, %v1354, %v1355
        %v1357 = vrot.slane %v1243, 6
        %v1358 = vrot.slane %v1357, 4
        %v1359 = vrot.slane %v1210, 6
        %v1360 = vsel %vm718, %v1358, %v1359
        %v1361 = vrot.slane %v1359, 4
        %v1362 = vrot.slane %v1211, 6
        %v1363 = vsel %vm718, %v1361, %v1362
        %v1364 = vrot.slane %v1362, 4
        %v1365 = vrot.slane %v1244, 6
        %v1366 = vsel %vm718, %v1364, %v1365
        %v1367 = vrot.slane %v1365, 4
        %v1368 = vrot.slane %v1245, 6
        %v1369 = vsel %vm718, %v1367, %v1368
        %v1370 = vrot.slane %v1246, 6
        %v1371 = vrot.slane %v1370, 4
        %v1372 = vrot.slane %v1214, 6
        %v1373 = vsel %vm718, %v1371, %v1372
        %v1374 = vrot.slane %v1372, 4
        %v1375 = vrot.slane %v1215, 6
        %v1376 = vsel %vm718, %v1374, %v1375
        %v1377 = vrot.slane %v1375, 4
        %v1378 = vrot.slane %v1247, 6
        %v1379 = vsel %vm718, %v1377, %v1378
        %v1380 = vrot.slane %v1378, 4
        %v1381 = vrot.slane %v1248, 6
        %v1382 = vsel %vm718, %v1380, %v1381
        %v1383 = vrot.slane %v1249, 6
        %v1384 = vrot.slane %v1383, 4
        %v1385 = vrot.slane %v1218, 6
        %v1386 = vsel %vm718, %v1384, %v1385
        %v1387 = vrot.slane %v1385, 4
        %v1388 = vrot.slane %v1219, 6
        %v1389 = vsel %vm718, %v1387, %v1388
        %v1390 = vrot.slane %v1388, 4
        %v1391 = vrot.slane %v1250, 6
        %v1392 = vsel %vm718, %v1390, %v1391
        %v1393 = vrot.slane %v1391, 4
        %v1394 = vrot.slane %v1251, 6
        %v1395 = vsel %vm718, %v1393, %v1394
        %s1396 = scalar_lea.vmem %s4, 32
        %v1397 = vld [vmem:[%s1396] sm:$0xf]
        %v1398 = vld [vmem:[%s1396 + $0x4] sm:$0xf]
        %v1399 = vld [vmem:[%s1396 + $0x8] sm:$0xf]
        %v1400 = vld [vmem:[%s1396 + $0xc] sm:$0xf]
        %v1401 = vld [vmem:[%s1396 + $0x10] sm:$0xf]
        %v1402 = vld [vmem:[%s1396 + $0x14] sm:$0xf]
        %v1403 = vld [vmem:[%s1396 + $0x18] sm:$0xf]
        %v1404 = vld [vmem:[%s1396 + $0x1c] sm:$0xf]
        %v1405 = vunpack.c.l.b16 %v1295
        %v1406 = vunpack.c.l.b16 %v1298
        %v1407 = vunpack.c.l.b16 %v1301
        %v1408 = vunpack.c.l.b16 %v1304
        %v1409 = vunpack.c.l.b16 %v1308
        %v1410 = vunpack.c.l.b16 %v1311
        %v1411 = vunpack.c.l.b16 %v1314
        %v1412 = vunpack.c.l.b16 %v1317
        %v1413 = vunpack.c.l.b16 %v1321
        %v1414 = vunpack.c.l.b16 %v1324
        %v1415 = vunpack.c.l.b16 %v1327
        %v1416 = vunpack.c.l.b16 %v1330
        %v1417 = vunpack.c.l.b16 %v1334
        %v1418 = vunpack.c.l.b16 %v1337
        %v1419 = vunpack.c.l.b16 %v1340
        %v1420 = vunpack.c.l.b16 %v1343
        %v1421 = vunpack.c.l.b16 %v1347
        %v1422 = vunpack.c.l.b16 %v1350
        %v1423 = vunpack.c.l.b16 %v1353
        %v1424 = vunpack.c.l.b16 %v1356
        %v1425 = vunpack.c.l.b16 %v1360
        %v1426 = vunpack.c.l.b16 %v1363
        %v1427 = vunpack.c.l.b16 %v1366
        %v1428 = vunpack.c.l.b16 %v1369
        %v1429 = vunpack.c.l.b16 %v1373
        %v1430 = vunpack.c.l.b16 %v1376
        %v1431 = vunpack.c.l.b16 %v1379
        %v1432 = vunpack.c.l.b16 %v1382
        %v1433 = vunpack.c.l.b16 %v1386
        %v1434 = vunpack.c.l.b16 %v1389
        %v1435 = vunpack.c.l.b16 %v1392
        %v1436 = vunpack.c.l.b16 %v1395
        %v1437 = vpack.c.b16 %v1406, %v1405
        %v1438 = vpack.c.b16 %v1408, %v1407
        %v1439 = vpack.c.b16 %v1410, %v1409
        %v1440 = vpack.c.b16 %v1412, %v1411
        %v1441 = vpack.c.b16 %v1414, %v1413
        %v1442 = vpack.c.b16 %v1416, %v1415
        %v1443 = vpack.c.b16 %v1418, %v1417
        %v1444 = vpack.c.b16 %v1420, %v1419
        %v1445 = vpack.c.b16 %v1422, %v1421
        %v1446 = vpack.c.b16 %v1424, %v1423
        %v1447 = vpack.c.b16 %v1426, %v1425
        %v1448 = vpack.c.b16 %v1428, %v1427
        %v1449 = vpack.c.b16 %v1430, %v1429
        %v1450 = vpack.c.b16 %v1432, %v1431
        %v1451 = vpack.c.b16 %v1434, %v1433
        %v1452 = vpack.c.b16 %v1436, %v1435
        %v1461 = vunpack.c.l.b16 %v1397
        %v1462 = vunpack.c.l.b16 %v1398
        %v1463 = vunpack.c.l.b16 %v1399
        %v1464 = vunpack.c.l.b16 %v1400
        %v1465 = vunpack.c.l.b16 %v1401
        %v1466 = vunpack.c.l.b16 %v1402
        %v1467 = vunpack.c.l.b16 %v1403
        %v1468 = vunpack.c.l.b16 %v1404
        %v1469 = vpack.c.b16 %v1462, %v1461
        %v1470 = vpack.c.b16 %v1464, %v1463
        %v1471 = vpack.c.b16 %v1466, %v1465
        %v1472 = vpack.c.b16 %v1468, %v1467
        %v1478 = vsel %vm910, %v1437, 0
        %v1481 = vsel %vm910, %v1438, 0
        %v1484 = vsel %vm910, %v1439, 0
        %v1487 = vsel %vm910, %v1440, 0
        %v1490 = vsel %vm910, %v1441, 0
        %v1493 = vsel %vm910, %v1442, 0
        %v1496 = vsel %vm910, %v1443, 0
        %v1499 = vsel %vm910, %v1444, 0
        %v1502 = vsel %vm910, %v1445, 0
        %v1505 = vsel %vm910, %v1446, 0
        %v1508 = vsel %vm910, %v1447, 0
        %v1511 = vsel %vm910, %v1448, 0
        %v1514 = vsel %vm910, %v1449, 0
        %v1517 = vsel %vm910, %v1450, 0
        %v1520 = vsel %vm910, %v1451, 0
        %v1523 = vsel %vm910, %v1452, 0
        %1525 = vmatprep.subr.bf16.mxu0 0
        %1526 = vmatpush1.bf16.msra.mxu0 %v1469
        %1527 = vmatprep.subr.bf16.mxu0 0
        %1528 = vmatpush1.bf16.msra.mxu0 %v1470
        %1529 = vmatprep.subr.bf16.mxu0 0
        %1530 = vmatpush1.bf16.msra.mxu0 %v1471
        %1531 = vmatprep.subr.bf16.mxu0 0
        %1532 = vmatpush1.bf16.msra.mxu0 %v1472
        %1533 = vmatprep.subr.bf16.mxu0 0
        %1534 = vmatpush1.bf16.msra.mxu0 0
        %1535 = vmatprep.subr.bf16.mxu0 0
        %1536 = vmatpush1.bf16.msra.mxu0 0
        %1537 = vmatprep.subr.bf16.mxu0 0
        %1538 = vmatpush1.bf16.msra.mxu0 0
        %1539 = vmatprep.subr.bf16.mxu0 0
        %1540 = vmatpush1.bf16.msra.mxu0 0
        %1541 = vmatprep.subr.bf16.mxu0 0
        %1542 = vmatpush1.bf16.msra.mxu0 0
        %1543 = vmatprep.subr.bf16.mxu0 0
        %1544 = vmatpush1.bf16.msra.mxu0 0
        %1545 = vmatprep.subr.bf16.mxu0 0
        %1546 = vmatpush1.bf16.msra.mxu0 0
        %1547 = vmatprep.subr.bf16.mxu0 0
        %1548 = vmatpush1.bf16.msra.mxu0 0
        %1549 = vmatprep.subr.bf16.mxu0 0
        %1550 = vmatpush1.bf16.msra.mxu0 0
        %1551 = vmatprep.subr.bf16.mxu0 0
        %1552 = vmatpush1.bf16.msra.mxu0 0
        %1553 = vmatprep.subr.bf16.mxu0 0
        %1554 = vmatpush1.bf16.msra.mxu0 0
        %1555 = vmatprep.subr.bf16.mxu0 0
        %1556 = vmatpush1.bf16.msra.mxu0 0
        %1557 = vmatprep.mubr.bf16.mxu0 0
        %1558 = vmatmul.mubr.bf16.gmra.mrb[0].mxu0 %v1478
        %v1559 = vpop.f32.mrb[0].mxu0
        %v1560 = vadd.f32 0.0, %v1559
        %v1561 = vpop.f32.mrb[0].mxu0
        %v1562 = vpop.f32.mrb[0].mxu0
        %v1563 = vadd.f32 0.0, %v1562
        %v1564 = vpop.f32.mrb[0].mxu0
        %1565 = vmatprep.mubr.bf16.mxu0 0
        %1566 = vmatmul.mubr.bf16.gmra.mrb[0].mxu0 %v1481
        %v1567 = vpop.f32.mrb[0].mxu0
        %v1568 = vadd.f32 0.0, %v1567
        %v1569 = vpop.f32.mrb[0].mxu0
        %v1570 = vpop.f32.mrb[0].mxu0
        %v1571 = vadd.f32 0.0, %v1570
        %v1572 = vpop.f32.mrb[0].mxu0
        %1573 = vmatprep.mubr.bf16.mxu0 0
        %1574 = vmatmul.mubr.bf16.gmra.mrb[0].mxu0 %v1484
        %v1575 = vpop.f32.mrb[0].mxu0
        %v1576 = vadd.f32 0.0, %v1575
        %v1577 = vpop.f32.mrb[0].mxu0
        %v1578 = vpop.f32.mrb[0].mxu0
        %v1579 = vadd.f32 0.0, %v1578
        %v1580 = vpop.f32.mrb[0].mxu0
        %1581 = vmatprep.mubr.bf16.mxu0 0
        %1582 = vmatmul.mubr.bf16.gmra.mrb[0].mxu0 %v1487
        %v1583 = vpop.f32.mrb[0].mxu0
        %v1584 = vadd.f32 0.0, %v1583
        %v1585 = vpop.f32.mrb[0].mxu0
        %v1586 = vpop.f32.mrb[0].mxu0
        %v1587 = vadd.f32 0.0, %v1586
        %v1588 = vpop.f32.mrb[0].mxu0
        %1589 = vmatprep.mubr.bf16.mxu0 0
        %1590 = vmatmul.mubr.bf16.gmra.mrb[0].mxu0 %v1490
        %v1591 = vpop.f32.mrb[0].mxu0
        %v1592 = vadd.f32 0.0, %v1591
        %v1593 = vpop.f32.mrb[0].mxu0
        %v1594 = vpop.f32.mrb[0].mxu0
        %v1595 = vadd.f32 0.0, %v1594
        %v1596 = vpop.f32.mrb[0].mxu0
        %1597 = vmatprep.mubr.bf16.mxu0 0
        %1598 = vmatmul.mubr.bf16.gmra.mrb[0].mxu0 %v1493
        %v1599 = vpop.f32.mrb[0].mxu0
        %v1600 = vadd.f32 0.0, %v1599
        %v1601 = vpop.f32.mrb[0].mxu0
        %v1602 = vpop.f32.mrb[0].mxu0
        %v1603 = vadd.f32 0.0, %v1602
        %v1604 = vpop.f32.mrb[0].mxu0
        %1605 = vmatprep.mubr.bf16.mxu0 0
        %1606 = vmatmul.mubr.bf16.gmra.mrb[0].mxu0 %v1496
        %v1607 = vpop.f32.mrb[0].mxu0
        %v1608 = vadd.f32 0.0, %v1607
        %v1609 = vpop.f32.mrb[0].mxu0
        %v1610 = vpop.f32.mrb[0].mxu0
        %v1611 = vadd.f32 0.0, %v1610
        %v1612 = vpop.f32.mrb[0].mxu0
        %1613 = vmatprep.mubr.bf16.mxu0 0
        %1614 = vmatmul.mubr.bf16.gmra.mrb[0].mxu0 %v1499
        %v1615 = vpop.f32.mrb[0].mxu0
        %v1616 = vadd.f32 0.0, %v1615
        %v1617 = vpop.f32.mrb[0].mxu0
        %v1618 = vpop.f32.mrb[0].mxu0
        %v1619 = vadd.f32 0.0, %v1618
        %v1620 = vpop.f32.mrb[0].mxu0
        %1621 = vmatprep.mubr.bf16.mxu0 0
        %1622 = vmatmul.mubr.bf16.gmra.mrb[0].mxu0 %v1502
        %v1623 = vpop.f32.mrb[0].mxu0
        %v1624 = vadd.f32 0.0, %v1623
        %v1625 = vpop.f32.mrb[0].mxu0
        %v1626 = vpop.f32.mrb[0].mxu0
        %v1627 = vadd.f32 0.0, %v1626
        %v1628 = vpop.f32.mrb[0].mxu0
        %1629 = vmatprep.mubr.bf16.mxu0 0
        %1630 = vmatmul.mubr.bf16.gmra.mrb[0].mxu0 %v1505
        %v1631 = vpop.f32.mrb[0].mxu0
        %v1632 = vadd.f32 0.0, %v1631
        %v1633 = vpop.f32.mrb[0].mxu0
        %v1634 = vpop.f32.mrb[0].mxu0
        %v1635 = vadd.f32 0.0, %v1634
        %v1636 = vpop.f32.mrb[0].mxu0
        %1637 = vmatprep.mubr.bf16.mxu0 0
        %1638 = vmatmul.mubr.bf16.gmra.mrb[0].mxu0 %v1508
        %v1639 = vpop.f32.mrb[0].mxu0
        %v1640 = vadd.f32 0.0, %v1639
        %v1641 = vpop.f32.mrb[0].mxu0
        %v1642 = vpop.f32.mrb[0].mxu0
        %v1643 = vadd.f32 0.0, %v1642
        %v1644 = vpop.f32.mrb[0].mxu0
        %1645 = vmatprep.mubr.bf16.mxu0 0
        %1646 = vmatmul.mubr.bf16.gmra.mrb[0].mxu0 %v1511
        %v1647 = vpop.f32.mrb[0].mxu0
        %v1648 = vadd.f32 0.0, %v1647
        %v1649 = vpop.f32.mrb[0].mxu0
        %v1650 = vpop.f32.mrb[0].mxu0
        %v1651 = vadd.f32 0.0, %v1650
        %v1652 = vpop.f32.mrb[0].mxu0
        %1653 = vmatprep.mubr.bf16.mxu0 0
        %1654 = vmatmul.mubr.bf16.gmra.mrb[0].mxu0 %v1514
        %v1655 = vpop.f32.mrb[0].mxu0
        %v1656 = vadd.f32 0.0, %v1655
        %v1657 = vpop.f32.mrb[0].mxu0
        %v1658 = vpop.f32.mrb[0].mxu0
        %v1659 = vadd.f32 0.0, %v1658
        %v1660 = vpop.f32.mrb[0].mxu0
        %1661 = vmatprep.mubr.bf16.mxu0 0
        %1662 = vmatmul.mubr.bf16.gmra.mrb[0].mxu0 %v1517
        %v1663 = vpop.f32.mrb[0].mxu0
        %v1664 = vadd.f32 0.0, %v1663
        %v1665 = vpop.f32.mrb[0].mxu0
        %v1666 = vpop.f32.mrb[0].mxu0
        %v1667 = vadd.f32 0.0, %v1666
        %v1668 = vpop.f32.mrb[0].mxu0
        %1669 = vmatprep.mubr.bf16.mxu0 0
        %1670 = vmatmul.mubr.bf16.gmra.mrb[0].mxu0 %v1520
        %v1671 = vpop.f32.mrb[0].mxu0
        %v1672 = vadd.f32 0.0, %v1671
        %v1673 = vpop.f32.mrb[0].mxu0
        %v1674 = vpop.f32.mrb[0].mxu0
        %v1675 = vadd.f32 0.0, %v1674
        %v1676 = vpop.f32.mrb[0].mxu0
        %1677 = vmatprep.mubr.bf16.mxu0 0
        %1678 = vmatmul.mubr.bf16.gmra.mrb[0].mxu0 %v1523
        %v1679 = vpop.f32.mrb[0].mxu0
        %v1680 = vadd.f32 0.0, %v1679
        %v1681 = vpop.f32.mrb[0].mxu0
        %v1682 = vpop.f32.mrb[0].mxu0
        %v1683 = vadd.f32 0.0, %v1682
        %v1684 = vpop.f32.mrb[0].mxu0
        %1685 = vdwg.mxu0
        %v1702 = vunpack.c.l.b16 %v1188
        %v1703 = vunpack.c.l.b16 %v1189
        %v1704 = vunpack.c.l.b16 %v1190
        %v1705 = vunpack.c.l.b16 %v1191
        %v1706 = vunpack.c.l.b16 %v1192
        %v1707 = vunpack.c.l.b16 %v1193
        %v1708 = vunpack.c.l.b16 %v1194
        %v1709 = vunpack.c.l.b16 %v1195
        %v1710 = vunpack.c.l.b16 %v1196
        %v1711 = vunpack.c.l.b16 %v1197
        %v1712 = vunpack.c.l.b16 %v1198
        %v1713 = vunpack.c.l.b16 %v1199
        %v1714 = vunpack.c.l.b16 %v1200
        %v1715 = vunpack.c.l.b16 %v1201
        %v1716 = vunpack.c.l.b16 %v1202
        %v1717 = vunpack.c.l.b16 %v1203
        %v1718 = vunpack.c.l.b16 %v1204
        %v1719 = vunpack.c.l.b16 %v1205
        %v1720 = vunpack.c.l.b16 %v1206
        %v1721 = vunpack.c.l.b16 %v1207
        %v1722 = vunpack.c.l.b16 %v1208
        %v1723 = vunpack.c.l.b16 %v1209
        %v1724 = vunpack.c.l.b16 %v1210
        %v1725 = vunpack.c.l.b16 %v1211
        %v1726 = vunpack.c.l.b16 %v1212
        %v1727 = vunpack.c.l.b16 %v1213
        %v1728 = vunpack.c.l.b16 %v1214
        %v1729 = vunpack.c.l.b16 %v1215
        %v1730 = vunpack.c.l.b16 %v1216
        %v1731 = vunpack.c.l.b16 %v1217
        %v1732 = vunpack.c.l.b16 %v1218
        %v1733 = vunpack.c.l.b16 %v1219
        %v1734 = vpack.c.b16 %v1703, %v1702
        %v1735 = vpack.c.b16 %v1705, %v1704
        %v1736 = vpack.c.b16 %v1707, %v1706
        %v1737 = vpack.c.b16 %v1709, %v1708
        %v1738 = vpack.c.b16 %v1711, %v1710
        %v1739 = vpack.c.b16 %v1713, %v1712
        %v1740 = vpack.c.b16 %v1715, %v1714
        %v1741 = vpack.c.b16 %v1717, %v1716
        %v1742 = vpack.c.b16 %v1719, %v1718
        %v1743 = vpack.c.b16 %v1721, %v1720
        %v1744 = vpack.c.b16 %v1723, %v1722
        %v1745 = vpack.c.b16 %v1725, %v1724
        %v1746 = vpack.c.b16 %v1727, %v1726
        %v1747 = vpack.c.b16 %v1729, %v1728
        %v1748 = vpack.c.b16 %v1731, %v1730
        %v1749 = vpack.c.b16 %v1733, %v1732
        %v1758 = vunpack.c.l.b16 %v1220
        %v1759 = vunpack.c.l.b16 %v1221
        %v1760 = vunpack.c.l.b16 %v1222
        %v1761 = vunpack.c.l.b16 %v1223
        %v1762 = vunpack.c.l.b16 %v1224
        %v1763 = vunpack.c.l.b16 %v1225
        %v1764 = vunpack.c.l.b16 %v1226
        %v1765 = vunpack.c.l.b16 %v1227
        %v1766 = vpack.c.b16 %v1759, %v1758
        %v1767 = vpack.c.b16 %v1761, %v1760
        %v1768 = vpack.c.b16 %v1763, %v1762
        %v1769 = vpack.c.b16 %v1765, %v1764
        %v1775 = vsel %vm910, %v1734, 0
        %v1778 = vsel %vm910, %v1735, 0
        %v1781 = vsel %vm910, %v1736, 0
        %v1784 = vsel %vm910, %v1737, 0
        %v1787 = vsel %vm910, %v1738, 0
        %v1790 = vsel %vm910, %v1739, 0
        %v1793 = vsel %vm910, %v1740, 0
        %v1796 = vsel %vm910, %v1741, 0
        %v1799 = vsel %vm910, %v1742, 0
        %v1802 = vsel %vm910, %v1743, 0
        %v1805 = vsel %vm910, %v1744, 0
        %v1808 = vsel %vm910, %v1745, 0
        %v1811 = vsel %vm910, %v1746, 0
        %v1814 = vsel %vm910, %v1747, 0
        %v1817 = vsel %vm910, %v1748, 0
        %v1820 = vsel %vm910, %v1749, 0
        %1822 = vmatprep.subr.bf16.mxu0 0
        %1823 = vmatpush1.bf16.msra.mxu0 %v1766
        %1824 = vmatprep.subr.bf16.mxu0 0
        %1825 = vmatpush1.bf16.msra.mxu0 %v1767
        %1826 = vmatprep.subr.bf16.mxu0 0
        %1827 = vmatpush1.bf16.msra.mxu0 %v1768
        %1828 = vmatprep.subr.bf16.mxu0 0
        %1829 = vmatpush1.bf16.msra.mxu0 %v1769
        %1830 = vmatprep.subr.bf16.mxu0 0
        %1831 = vmatpush1.bf16.msra.mxu0 0
        %1832 = vmatprep.subr.bf16.mxu0 0
        %1833 = vmatpush1.bf16.msra.mxu0 0
        %1834 = vmatprep.subr.bf16.mxu0 0
        %1835 = vmatpush1.bf16.msra.mxu0 0
        %1836 = vmatprep.subr.bf16.mxu0 0
        %1837 = vmatpush1.bf16.msra.mxu0 0
        %1838 = vmatprep.subr.bf16.mxu0 0
        %1839 = vmatpush1.bf16.msra.mxu0 0
        %1840 = vmatprep.subr.bf16.mxu0 0
        %1841 = vmatpush1.bf16.msra.mxu0 0
        %1842 = vmatprep.subr.bf16.mxu0 0
        %1843 = vmatpush1.bf16.msra.mxu0 0
        %1844 = vmatprep.subr.bf16.mxu0 0
        %1845 = vmatpush1.bf16.msra.mxu0 0
        %1846 = vmatprep.subr.bf16.mxu0 0
        %1847 = vmatpush1.bf16.msra.mxu0 0
        %1848 = vmatprep.subr.bf16.mxu0 0
        %1849 = vmatpush1.bf16.msra.mxu0 0
        %1850 = vmatprep.subr.bf16.mxu0 0
        %1851 = vmatpush1.bf16.msra.mxu0 0
        %1852 = vmatprep.subr.bf16.mxu0 0
        %1853 = vmatpush1.bf16.msra.mxu0 0
        %1854 = vmatprep.mubr.bf16.mxu0 0
        %1855 = vmatmul.mubr.bf16.gmra.mrb[0].mxu0 %v1775
        %v1856 = vpop.f32.mrb[0].mxu0
        %v1857 = vadd.f32 %v1560, %v1856
        %v1858 = vpop.f32.mrb[0].mxu0
        %v1859 = vpop.f32.mrb[0].mxu0
        %v1860 = vadd.f32 %v1563, %v1859
        %v1861 = vpop.f32.mrb[0].mxu0
        %1862 = vmatprep.mubr.bf16.mxu0 0
        %1863 = vmatmul.mubr.bf16.gmra.mrb[0].mxu0 %v1778
        %v1864 = vpop.f32.mrb[0].mxu0
        %v1865 = vadd.f32 %v1568, %v1864
        %v1866 = vpop.f32.mrb[0].mxu0
        %v1867 = vpop.f32.mrb[0].mxu0
        %v1868 = vadd.f32 %v1571, %v1867
        %v1869 = vpop.f32.mrb[0].mxu0
        %1870 = vmatprep.mubr.bf16.mxu0 0
        %1871 = vmatmul.mubr.bf16.gmra.mrb[0].mxu0 %v1781
        %v1872 = vpop.f32.mrb[0].mxu0
        %v1873 = vadd.f32 %v1576, %v1872
        %v1874 = vpop.f32.mrb[0].mxu0
        %v1875 = vpop.f32.mrb[0].mxu0
        %v1876 = vadd.f32 %v1579, %v1875
        %v1877 = vpop.f32.mrb[0].mxu0
        %1878 = vmatprep.mubr.bf16.mxu0 0
        %1879 = vmatmul.mubr.bf16.gmra.mrb[0].mxu0 %v1784
        %v1880 = vpop.f32.mrb[0].mxu0
        %v1881 = vadd.f32 %v1584, %v1880
        %v1882 = vpop.f32.mrb[0].mxu0
        %v1883 = vpop.f32.mrb[0].mxu0
        %v1884 = vadd.f32 %v1587, %v1883
        %v1885 = vpop.f32.mrb[0].mxu0
        %1886 = vmatprep.mubr.bf16.mxu0 0
        %1887 = vmatmul.mubr.bf16.gmra.mrb[0].mxu0 %v1787
        %v1888 = vpop.f32.mrb[0].mxu0
        %v1889 = vadd.f32 %v1592, %v1888
        %v1890 = vpop.f32.mrb[0].mxu0
        %v1891 = vpop.f32.mrb[0].mxu0
        %v1892 = vadd.f32 %v1595, %v1891
        %v1893 = vpop.f32.mrb[0].mxu0
        %1894 = vmatprep.mubr.bf16.mxu0 0
        %1895 = vmatmul.mubr.bf16.gmra.mrb[0].mxu0 %v1790
        %v1896 = vpop.f32.mrb[0].mxu0
        %v1897 = vadd.f32 %v1600, %v1896
        %v1898 = vpop.f32.mrb[0].mxu0
        %v1899 = vpop.f32.mrb[0].mxu0
        %v1900 = vadd.f32 %v1603, %v1899
        %v1901 = vpop.f32.mrb[0].mxu0
        %1902 = vmatprep.mubr.bf16.mxu0 0
        %1903 = vmatmul.mubr.bf16.gmra.mrb[0].mxu0 %v1793
        %v1904 = vpop.f32.mrb[0].mxu0
        %v1905 = vadd.f32 %v1608, %v1904
        %v1906 = vpop.f32.mrb[0].mxu0
        %v1907 = vpop.f32.mrb[0].mxu0
        %v1908 = vadd.f32 %v1611, %v1907
        %v1909 = vpop.f32.mrb[0].mxu0
        %1910 = vmatprep.mubr.bf16.mxu0 0
        %1911 = vmatmul.mubr.bf16.gmra.mrb[0].mxu0 %v1796
        %v1912 = vpop.f32.mrb[0].mxu0
        %v1913 = vadd.f32 %v1616, %v1912
        %v1914 = vpop.f32.mrb[0].mxu0
        %v1915 = vpop.f32.mrb[0].mxu0
        %v1916 = vadd.f32 %v1619, %v1915
        %v1917 = vpop.f32.mrb[0].mxu0
        %1918 = vmatprep.mubr.bf16.mxu0 0
        %1919 = vmatmul.mubr.bf16.gmra.mrb[0].mxu0 %v1799
        %v1920 = vpop.f32.mrb[0].mxu0
        %v1921 = vadd.f32 %v1624, %v1920
        %v1922 = vpop.f32.mrb[0].mxu0
        %v1923 = vpop.f32.mrb[0].mxu0
        %v1924 = vadd.f32 %v1627, %v1923
        %v1925 = vpop.f32.mrb[0].mxu0
        %1926 = vmatprep.mubr.bf16.mxu0 0
        %1927 = vmatmul.mubr.bf16.gmra.mrb[0].mxu0 %v1802
        %v1928 = vpop.f32.mrb[0].mxu0
        %v1929 = vadd.f32 %v1632, %v1928
        %v1930 = vpop.f32.mrb[0].mxu0
        %v1931 = vpop.f32.mrb[0].mxu0
        %v1932 = vadd.f32 %v1635, %v1931
        %v1933 = vpop.f32.mrb[0].mxu0
        %1934 = vmatprep.mubr.bf16.mxu0 0
        %1935 = vmatmul.mubr.bf16.gmra.mrb[0].mxu0 %v1805
        %v1936 = vpop.f32.mrb[0].mxu0
        %v1937 = vadd.f32 %v1640, %v1936
        %v1938 = vpop.f32.mrb[0].mxu0
        %v1939 = vpop.f32.mrb[0].mxu0
        %v1940 = vadd.f32 %v1643, %v1939
        %v1941 = vpop.f32.mrb[0].mxu0
        %1942 = vmatprep.mubr.bf16.mxu0 0
        %1943 = vmatmul.mubr.bf16.gmra.mrb[0].mxu0 %v1808
        %v1944 = vpop.f32.mrb[0].mxu0
        %v1945 = vadd.f32 %v1648, %v1944
        %v1946 = vpop.f32.mrb[0].mxu0
        %v1947 = vpop.f32.mrb[0].mxu0
        %v1948 = vadd.f32 %v1651, %v1947
        %v1949 = vpop.f32.mrb[0].mxu0
        %1950 = vmatprep.mubr.bf16.mxu0 0
        %1951 = vmatmul.mubr.bf16.gmra.mrb[0].mxu0 %v1811
        %v1952 = vpop.f32.mrb[0].mxu0
        %v1953 = vadd.f32 %v1656, %v1952
        %v1954 = vpop.f32.mrb[0].mxu0
        %v1955 = vpop.f32.mrb[0].mxu0
        %v1956 = vadd.f32 %v1659, %v1955
        %v1957 = vpop.f32.mrb[0].mxu0
        %1958 = vmatprep.mubr.bf16.mxu0 0
        %1959 = vmatmul.mubr.bf16.gmra.mrb[0].mxu0 %v1814
        %v1960 = vpop.f32.mrb[0].mxu0
        %v1961 = vadd.f32 %v1664, %v1960
        %v1962 = vpop.f32.mrb[0].mxu0
        %v1963 = vpop.f32.mrb[0].mxu0
        %v1964 = vadd.f32 %v1667, %v1963
        %v1965 = vpop.f32.mrb[0].mxu0
        %1966 = vmatprep.mubr.bf16.mxu0 0
        %1967 = vmatmul.mubr.bf16.gmra.mrb[0].mxu0 %v1817
        %v1968 = vpop.f32.mrb[0].mxu0
        %v1969 = vadd.f32 %v1672, %v1968
        %v1970 = vpop.f32.mrb[0].mxu0
        %v1971 = vpop.f32.mrb[0].mxu0
        %v1972 = vadd.f32 %v1675, %v1971
        %v1973 = vpop.f32.mrb[0].mxu0
        %1974 = vmatprep.mubr.bf16.mxu0 0
        %1975 = vmatmul.mubr.bf16.gmra.mrb[0].mxu0 %v1820
        %v1976 = vpop.f32.mrb[0].mxu0
        %v1977 = vadd.f32 %v1680, %v1976
        %v1978 = vpop.f32.mrb[0].mxu0
        %v1979 = vpop.f32.mrb[0].mxu0
        %v1980 = vadd.f32 %v1683, %v1979
        %v1981 = vpop.f32.mrb[0].mxu0
        %1982 = vdwg.mxu0
        %v1983 = vld [vmem:[%s1187 + $0x18] sm:$0xf]
        %v1984 = vld [vmem:[%s1187 + $0x1c] sm:$0xf]
        %v1985 = vld [vmem:[%s1187 + $0x20] sm:$0xf]
        %v1986 = vld [vmem:[%s1187 + $0x24] sm:$0xf]
        %v1987 = vld [vmem:[%s1187 + $0x4c] sm:$0xf]
        %v1988 = vld [vmem:[%s1187 + $0x50] sm:$0xf]
        %v1989 = vld [vmem:[%s1187 + $0x54] sm:$0xf]
        %v1990 = vld [vmem:[%s1187 + $0x58] sm:$0xf]
        %v1991 = vld [vmem:[%s1187 + $0x80] sm:$0xf]
        %v1992 = vld [vmem:[%s1187 + $0x84] sm:$0xf]
        %v1993 = vld [vmem:[%s1187 + $0x88] sm:$0xf]
        %v1994 = vld [vmem:[%s1187 + $0x8c] sm:$0xf]
        %v1995 = vld [vmem:[%s1187 + $0xb4] sm:$0xf]
        %v1996 = vld [vmem:[%s1187 + $0xb8] sm:$0xf]
        %v1997 = vld [vmem:[%s1187 + $0xbc] sm:$0xf]
        %v1998 = vld [vmem:[%s1187 + $0xc0] sm:$0xf]
        %v1999 = vld [vmem:[%s1187 + $0xe8] sm:$0xf]
        %v2000 = vld [vmem:[%s1187 + $0xec] sm:$0xf]
        %v2001 = vld [vmem:[%s1187 + $0xf0] sm:$0xf]
        %v2002 = vld [vmem:[%s1187 + $0xf4] sm:$0xf]
        %v2003 = vld [vmem:[%s1187 + $0x11c] sm:$0xf]
        %v2004 = vld [vmem:[%s1187 + $0x120] sm:$0xf]
        %v2005 = vld [vmem:[%s1187 + $0x124] sm:$0xf]
        %v2006 = vld [vmem:[%s1187 + $0x128] sm:$0xf]
        %v2007 = vld [vmem:[%s1187 + $0x150] sm:$0xf]
        %v2008 = vld [vmem:[%s1187 + $0x154] sm:$0xf]
        %v2009 = vld [vmem:[%s1187 + $0x158] sm:$0xf]
        %v2010 = vld [vmem:[%s1187 + $0x15c] sm:$0xf]
        %v2011 = vld [vmem:[%s1187 + $0x184] sm:$0xf]
        %v2012 = vld [vmem:[%s1187 + $0x188] sm:$0xf]
        %v2013 = vld [vmem:[%s1187 + $0x18c] sm:$0xf]
        %v2014 = vld [vmem:[%s1187 + $0x190] sm:$0xf]
        %s2015 = scalar_lea.vmem %s4, 64
        %v2016 = vld [vmem:[%s2015] sm:$0xf]
        %v2017 = vld [vmem:[%s2015 + $0x4] sm:$0xf]
        %v2018 = vld [vmem:[%s2015 + $0x8] sm:$0xf]
        %v2019 = vld [vmem:[%s2015 + $0xc] sm:$0xf]
        %v2020 = vld [vmem:[%s2015 + $0x10] sm:$0xf]
        %v2021 = vld [vmem:[%s2015 + $0x14] sm:$0xf]
        %v2022 = vld [vmem:[%s2015 + $0x18] sm:$0xf]
        %v2023 = vld [vmem:[%s2015 + $0x1c] sm:$0xf]
        %v2056 = vunpack.c.l.b16 %v1983
        %v2057 = vunpack.c.l.b16 %v1984
        %v2058 = vunpack.c.l.b16 %v1985
        %v2059 = vunpack.c.l.b16 %v1986
        %v2060 = vunpack.c.l.b16 %v1987
        %v2061 = vunpack.c.l.b16 %v1988
        %v2062 = vunpack.c.l.b16 %v1989
        %v2063 = vunpack.c.l.b16 %v1990
        %v2064 = vunpack.c.l.b16 %v1991
        %v2065 = vunpack.c.l.b16 %v1992
        %v2066 = vunpack.c.l.b16 %v1993
        %v2067 = vunpack.c.l.b16 %v1994
        %v2068 = vunpack.c.l.b16 %v1995
        %v2069 = vunpack.c.l.b16 %v1996
        %v2070 = vunpack.c.l.b16 %v1997
        %v2071 = vunpack.c.l.b16 %v1998
        %v2072 = vunpack.c.l.b16 %v1999
        %v2073 = vunpack.c.l.b16 %v2000
        %v2074 = vunpack.c.l.b16 %v2001
        %v2075 = vunpack.c.l.b16 %v2002
        %v2076 = vunpack.c.l.b16 %v2003
        %v2077 = vunpack.c.l.b16 %v2004
        %v2078 = vunpack.c.l.b16 %v2005
        %v2079 = vunpack.c.l.b16 %v2006
        %v2080 = vunpack.c.l.b16 %v2007
        %v2081 = vunpack.c.l.b16 %v2008
        %v2082 = vunpack.c.l.b16 %v2009
        %v2083 = vunpack.c.l.b16 %v2010
        %v2084 = vunpack.c.l.b16 %v2011
        %v2085 = vunpack.c.l.b16 %v2012
        %v2086 = vunpack.c.l.b16 %v2013
        %v2087 = vunpack.c.l.b16 %v2014
        %v2088 = vpack.c.b16 %v2057, %v2056
        %v2089 = vpack.c.b16 %v2059, %v2058
        %v2090 = vpack.c.b16 %v2061, %v2060
        %v2091 = vpack.c.b16 %v2063, %v2062
        %v2092 = vpack.c.b16 %v2065, %v2064
        %v2093 = vpack.c.b16 %v2067, %v2066
        %v2094 = vpack.c.b16 %v2069, %v2068
        %v2095 = vpack.c.b16 %v2071, %v2070
        %v2096 = vpack.c.b16 %v2073, %v2072
        %v2097 = vpack.c.b16 %v2075, %v2074
        %v2098 = vpack.c.b16 %v2077, %v2076
        %v2099 = vpack.c.b16 %v2079, %v2078
        %v2100 = vpack.c.b16 %v2081, %v2080
        %v2101 = vpack.c.b16 %v2083, %v2082
        %v2102 = vpack.c.b16 %v2085, %v2084
        %v2103 = vpack.c.b16 %v2087, %v2086
        %v2112 = vunpack.c.l.b16 %v2016
        %v2113 = vunpack.c.l.b16 %v2017
        %v2114 = vunpack.c.l.b16 %v2018
        %v2115 = vunpack.c.l.b16 %v2019
        %v2116 = vunpack.c.l.b16 %v2020
        %v2117 = vunpack.c.l.b16 %v2021
        %v2118 = vunpack.c.l.b16 %v2022
        %v2119 = vunpack.c.l.b16 %v2023
        %v2120 = vpack.c.b16 %v2113, %v2112
        %v2121 = vpack.c.b16 %v2115, %v2114
        %v2122 = vpack.c.b16 %v2117, %v2116
        %v2123 = vpack.c.b16 %v2119, %v2118
        %v2129 = vsel %vm910, %v2088, 0
        %v2132 = vsel %vm910, %v2089, 0
        %v2135 = vsel %vm910, %v2090, 0
        %v2138 = vsel %vm910, %v2091, 0
        %v2141 = vsel %vm910, %v2092, 0
        %v2144 = vsel %vm910, %v2093, 0
        %v2147 = vsel %vm910, %v2094, 0
        %v2150 = vsel %vm910, %v2095, 0
        %v2153 = vsel %vm910, %v2096, 0
        %v2156 = vsel %vm910, %v2097, 0
        %v2159 = vsel %vm910, %v2098, 0
        %v2162 = vsel %vm910, %v2099, 0
        %v2165 = vsel %vm910, %v2100, 0
        %v2168 = vsel %vm910, %v2101, 0
        %v2171 = vsel %vm910, %v2102, 0
        %v2174 = vsel %vm910, %v2103, 0
        %2176 = vmatprep.subr.bf16.mxu0 0
        %2177 = vmatpush1.bf16.msra.mxu0 %v2120
        %2178 = vmatprep.subr.bf16.mxu0 0
        %2179 = vmatpush1.bf16.msra.mxu0 %v2121
        %2180 = vmatprep.subr.bf16.mxu0 0
        %2181 = vmatpush1.bf16.msra.mxu0 %v2122
        %2182 = vmatprep.subr.bf16.mxu0 0
        %2183 = vmatpush1.bf16.msra.mxu0 %v2123
        %2184 = vmatprep.subr.bf16.mxu0 0
        %2185 = vmatpush1.bf16.msra.mxu0 0
        %2186 = vmatprep.subr.bf16.mxu0 0
        %2187 = vmatpush1.bf16.msra.mxu0 0
        %2188 = vmatprep.subr.bf16.mxu0 0
        %2189 = vmatpush1.bf16.msra.mxu0 0
        %2190 = vmatprep.subr.bf16.mxu0 0
        %2191 = vmatpush1.bf16.msra.mxu0 0
        %2192 = vmatprep.subr.bf16.mxu0 0
        %2193 = vmatpush1.bf16.msra.mxu0 0
        %2194 = vmatprep.subr.bf16.mxu0 0
        %2195 = vmatpush1.bf16.msra.mxu0 0
        %2196 = vmatprep.subr.bf16.mxu0 0
        %2197 = vmatpush1.bf16.msra.mxu0 0
        %2198 = vmatprep.subr.bf16.mxu0 0
        %2199 = vmatpush1.bf16.msra.mxu0 0
        %2200 = vmatprep.subr.bf16.mxu0 0
        %2201 = vmatpush1.bf16.msra.mxu0 0
        %2202 = vmatprep.subr.bf16.mxu0 0
        %2203 = vmatpush1.bf16.msra.mxu0 0
        %2204 = vmatprep.subr.bf16.mxu0 0
        %2205 = vmatpush1.bf16.msra.mxu0 0
        %2206 = vmatprep.subr.bf16.mxu0 0
        %2207 = vmatpush1.bf16.msra.mxu0 0
        %2208 = vmatprep.mubr.bf16.mxu0 0
        %2209 = vmatmul.mubr.bf16.gmra.mrb[0].mxu0 %v2129
        %v2210 = vpop.f32.mrb[0].mxu0
        %v2211 = vadd.f32 0.0, %v2210
        %v2212 = vpop.f32.mrb[0].mxu0
        %v2213 = vpop.f32.mrb[0].mxu0
        %v2214 = vadd.f32 0.0, %v2213
        %v2215 = vpop.f32.mrb[0].mxu0
        %2216 = vmatprep.mubr.bf16.mxu0 0
        %2217 = vmatmul.mubr.bf16.gmra.mrb[0].mxu0 %v2132
        %v2218 = vpop.f32.mrb[0].mxu0
        %v2219 = vadd.f32 0.0, %v2218
        %v2220 = vpop.f32.mrb[0].mxu0
        %v2221 = vpop.f32.mrb[0].mxu0
        %v2222 = vadd.f32 0.0, %v2221
        %v2223 = vpop.f32.mrb[0].mxu0
        %2224 = vmatprep.mubr.bf16.mxu0 0
        %2225 = vmatmul.mubr.bf16.gmra.mrb[0].mxu0 %v2135
        %v2226 = vpop.f32.mrb[0].mxu0
        %v2227 = vadd.f32 0.0, %v2226
        %v2228 = vpop.f32.mrb[0].mxu0
        %v2229 = vpop.f32.mrb[0].mxu0
        %v2230 = vadd.f32 0.0, %v2229
        %v2231 = vpop.f32.mrb[0].mxu0
        %2232 = vmatprep.mubr.bf16.mxu0 0
        %2233 = vmatmul.mubr.bf16.gmra.mrb[0].mxu0 %v2138
        %v2234 = vpop.f32.mrb[0].mxu0
        %v2235 = vadd.f32 0.0, %v2234
        %v2236 = vpop.f32.mrb[0].mxu0
        %v2237 = vpop.f32.mrb[0].mxu0
        %v2238 = vadd.f32 0.0, %v2237
        %v2239 = vpop.f32.mrb[0].mxu0
        %2240 = vmatprep.mubr.bf16.mxu0 0
        %2241 = vmatmul.mubr.bf16.gmra.mrb[0].mxu0 %v2141
        %v2242 = vpop.f32.mrb[0].mxu0
        %v2243 = vadd.f32 0.0, %v2242
        %v2244 = vpop.f32.mrb[0].mxu0
        %v2245 = vpop.f32.mrb[0].mxu0
        %v2246 = vadd.f32 0.0, %v2245
        %v2247 = vpop.f32.mrb[0].mxu0
        %2248 = vmatprep.mubr.bf16.mxu0 0
        %2249 = vmatmul.mubr.bf16.gmra.mrb[0].mxu0 %v2144
        %v2250 = vpop.f32.mrb[0].mxu0
        %v2251 = vadd.f32 0.0, %v2250
        %v2252 = vpop.f32.mrb[0].mxu0
        %v2253 = vpop.f32.mrb[0].mxu0
        %v2254 = vadd.f32 0.0, %v2253
        %v2255 = vpop.f32.mrb[0].mxu0
        %2256 = vmatprep.mubr.bf16.mxu0 0
        %2257 = vmatmul.mubr.bf16.gmra.mrb[0].mxu0 %v2147
        %v2258 = vpop.f32.mrb[0].mxu0
        %v2259 = vadd.f32 0.0, %v2258
        %v2260 = vpop.f32.mrb[0].mxu0
        %v2261 = vpop.f32.mrb[0].mxu0
        %v2262 = vadd.f32 0.0, %v2261
        %v2263 = vpop.f32.mrb[0].mxu0
        %2264 = vmatprep.mubr.bf16.mxu0 0
        %2265 = vmatmul.mubr.bf16.gmra.mrb[0].mxu0 %v2150
        %v2266 = vpop.f32.mrb[0].mxu0
        %v2267 = vadd.f32 0.0, %v2266
        %v2268 = vpop.f32.mrb[0].mxu0
        %v2269 = vpop.f32.mrb[0].mxu0
        %v2270 = vadd.f32 0.0, %v2269
        %v2271 = vpop.f32.mrb[0].mxu0
        %2272 = vmatprep.mubr.bf16.mxu0 0
        %2273 = vmatmul.mubr.bf16.gmra.mrb[0].mxu0 %v2153
        %v2274 = vpop.f32.mrb[0].mxu0
        %v2275 = vadd.f32 0.0, %v2274
        %v2276 = vpop.f32.mrb[0].mxu0
        %v2277 = vpop.f32.mrb[0].mxu0
        %v2278 = vadd.f32 0.0, %v2277
        %v2279 = vpop.f32.mrb[0].mxu0
        %2280 = vmatprep.mubr.bf16.mxu0 0
        %2281 = vmatmul.mubr.bf16.gmra.mrb[0].mxu0 %v2156
        %v2282 = vpop.f32.mrb[0].mxu0
        %v2283 = vadd.f32 0.0, %v2282
        %v2284 = vpop.f32.mrb[0].mxu0
        %v2285 = vpop.f32.mrb[0].mxu0
        %v2286 = vadd.f32 0.0, %v2285
        %v2287 = vpop.f32.mrb[0].mxu0
        %2288 = vmatprep.mubr.bf16.mxu0 0
        %2289 = vmatmul.mubr.bf16.gmra.mrb[0].mxu0 %v2159
        %v2290 = vpop.f32.mrb[0].mxu0
        %v2291 = vadd.f32 0.0, %v2290
        %v2292 = vpop.f32.mrb[0].mxu0
        %v2293 = vpop.f32.mrb[0].mxu0
        %v2294 = vadd.f32 0.0, %v2293
        %v2295 = vpop.f32.mrb[0].mxu0
        %2296 = vmatprep.mubr.bf16.mxu0 0
        %2297 = vmatmul.mubr.bf16.gmra.mrb[0].mxu0 %v2162
        %v2298 = vpop.f32.mrb[0].mxu0
        %v2299 = vadd.f32 0.0, %v2298
        %v2300 = vpop.f32.mrb[0].mxu0
        %v2301 = vpop.f32.mrb[0].mxu0
        %v2302 = vadd.f32 0.0, %v2301
        %v2303 = vpop.f32.mrb[0].mxu0
        %2304 = vmatprep.mubr.bf16.mxu0 0
        %2305 = vmatmul.mubr.bf16.gmra.mrb[0].mxu0 %v2165
        %v2306 = vpop.f32.mrb[0].mxu0
        %v2307 = vadd.f32 0.0, %v2306
        %v2308 = vpop.f32.mrb[0].mxu0
        %v2309 = vpop.f32.mrb[0].mxu0
        %v2310 = vadd.f32 0.0, %v2309
        %v2311 = vpop.f32.mrb[0].mxu0
        %2312 = vmatprep.mubr.bf16.mxu0 0
        %2313 = vmatmul.mubr.bf16.gmra.mrb[0].mxu0 %v2168
        %v2314 = vpop.f32.mrb[0].mxu0
        %v2315 = vadd.f32 0.0, %v2314
        %v2316 = vpop.f32.mrb[0].mxu0
        %v2317 = vpop.f32.mrb[0].mxu0
        %v2318 = vadd.f32 0.0, %v2317
        %v2319 = vpop.f32.mrb[0].mxu0
        %2320 = vmatprep.mubr.bf16.mxu0 0
        %2321 = vmatmul.mubr.bf16.gmra.mrb[0].mxu0 %v2171
        %v2322 = vpop.f32.mrb[0].mxu0
        %v2323 = vadd.f32 0.0, %v2322
        %v2324 = vpop.f32.mrb[0].mxu0
        %v2325 = vpop.f32.mrb[0].mxu0
        %v2326 = vadd.f32 0.0, %v2325
        %v2327 = vpop.f32.mrb[0].mxu0
        %2328 = vmatprep.mubr.bf16.mxu0 0
        %2329 = vmatmul.mubr.bf16.gmra.mrb[0].mxu0 %v2174
        %v2330 = vpop.f32.mrb[0].mxu0
        %v2331 = vadd.f32 0.0, %v2330
        %v2332 = vpop.f32.mrb[0].mxu0
        %v2333 = vpop.f32.mrb[0].mxu0
        %v2334 = vadd.f32 0.0, %v2333
        %v2335 = vpop.f32.mrb[0].mxu0
        %2336 = vdwg.mxu0
        %v2337 = vadd.f32 %v1857, %v2211
        %v2338 = vadd.f32 %v1860, %v2214
        %v2339 = vadd.f32 %v1865, %v2219
        %v2340 = vadd.f32 %v1868, %v2222
        %v2341 = vadd.f32 %v1873, %v2227
        %v2342 = vadd.f32 %v1876, %v2230
        %v2343 = vadd.f32 %v1881, %v2235
        %v2344 = vadd.f32 %v1884, %v2238
        %v2345 = vadd.f32 %v1889, %v2243
        %v2346 = vadd.f32 %v1892, %v2246
        %v2347 = vadd.f32 %v1897, %v2251
        %v2348 = vadd.f32 %v1900, %v2254
        %v2349 = vadd.f32 %v1905, %v2259
        %v2350 = vadd.f32 %v1908, %v2262
        %v2351 = vadd.f32 %v1913, %v2267
        %v2352 = vadd.f32 %v1916, %v2270
        %v2353 = vadd.f32 %v1921, %v2275
        %v2354 = vadd.f32 %v1924, %v2278
        %v2355 = vadd.f32 %v1929, %v2283
        %v2356 = vadd.f32 %v1932, %v2286
        %v2357 = vadd.f32 %v1937, %v2291
        %v2358 = vadd.f32 %v1940, %v2294
        %v2359 = vadd.f32 %v1945, %v2299
        %v2360 = vadd.f32 %v1948, %v2302
        %v2361 = vadd.f32 %v1953, %v2307
        %v2362 = vadd.f32 %v1956, %v2310
        %v2363 = vadd.f32 %v1961, %v2315
        %v2364 = vadd.f32 %v1964, %v2318
        %v2365 = vadd.f32 %v1969, %v2323
        %v2366 = vadd.f32 %v1972, %v2326
        %v2367 = vadd.f32 %v1977, %v2331
        %v2368 = vadd.f32 %v1980, %v2334
        %v2369 = vld [vmem:[%s635 + $0xc] sm:$0xf]
        %v2370 = vld [vmem:[%s635 + $0x10] sm:$0xf]
        %v2371 = vld [vmem:[%s635 + $0x14] sm:$0xf]
        %v2372 = vld [vmem:[%s635 + $0x18] sm:$0xf]
        %v2373 = vld [vmem:[%s635 + $0x40] sm:$0xf]
        %v2374 = vld [vmem:[%s635 + $0x44] sm:$0xf]
        %v2375 = vld [vmem:[%s635 + $0x48] sm:$0xf]
        %v2376 = vld [vmem:[%s635 + $0x4c] sm:$0xf]
        %v2377 = vld [vmem:[%s635 + $0x74] sm:$0xf]
        %v2378 = vld [vmem:[%s635 + $0x78] sm:$0xf]
        %v2379 = vld [vmem:[%s635 + $0x7c] sm:$0xf]
        %v2380 = vld [vmem:[%s635 + $0x80] sm:$0xf]
        %v2381 = vld [vmem:[%s635 + $0xa8] sm:$0xf]
        %v2382 = vld [vmem:[%s635 + $0xac] sm:$0xf]
        %v2383 = vld [vmem:[%s635 + $0xb0] sm:$0xf]
        %v2384 = vld [vmem:[%s635 + $0xb4] sm:$0xf]
        %v2385 = vld [vmem:[%s635 + $0xdc] sm:$0xf]
        %v2386 = vld [vmem:[%s635 + $0xe0] sm:$0xf]
        %v2387 = vld [vmem:[%s635 + $0xe4] sm:$0xf]
        %v2388 = vld [vmem:[%s635 + $0xe8] sm:$0xf]
        %v2389 = vld [vmem:[%s635 + $0x110] sm:$0xf]
        %v2390 = vld [vmem:[%s635 + $0x114] sm:$0xf]
        %v2391 = vld [vmem:[%s635 + $0x118] sm:$0xf]
        %v2392 = vld [vmem:[%s635 + $0x11c] sm:$0xf]
        %v2393 = vld [vmem:[%s635 + $0x144] sm:$0xf]
        %v2394 = vld [vmem:[%s635 + $0x148] sm:$0xf]
        %v2395 = vld [vmem:[%s635 + $0x14c] sm:$0xf]
        %v2396 = vld [vmem:[%s635 + $0x150] sm:$0xf]
        %v2397 = vld [vmem:[%s635 + $0x178] sm:$0xf]
        %v2398 = vld [vmem:[%s635 + $0x17c] sm:$0xf]
        %v2399 = vld [vmem:[%s635 + $0x180] sm:$0xf]
        %v2400 = vld [vmem:[%s635 + $0x184] sm:$0xf]
        %s2401 = scalar_lea.vmem %s4, 96
        %v2402 = vld [vmem:[%s2401] sm:$0xf]
        %v2403 = vld [vmem:[%s2401 + $0x4] sm:$0xf]
        %v2404 = vld [vmem:[%s2401 + $0x8] sm:$0xf]
        %v2405 = vld [vmem:[%s2401 + $0xc] sm:$0xf]
        %v2406 = vld [vmem:[%s2401 + $0x10] sm:$0xf]
        %v2407 = vld [vmem:[%s2401 + $0x14] sm:$0xf]
        %v2408 = vld [vmem:[%s2401 + $0x18] sm:$0xf]
        %v2409 = vld [vmem:[%s2401 + $0x1c] sm:$0xf]
        %v2442 = vunpack.c.l.b16 %v2369
        %v2443 = vunpack.c.l.b16 %v2370
        %v2444 = vunpack.c.l.b16 %v2371
        %v2445 = vunpack.c.l.b16 %v2372
        %v2446 = vunpack.c.l.b16 %v2373
        %v2447 = vunpack.c.l.b16 %v2374
        %v2448 = vunpack.c.l.b16 %v2375
        %v2449 = vunpack.c.l.b16 %v2376
        %v2450 = vunpack.c.l.b16 %v2377
        %v2451 = vunpack.c.l.b16 %v2378
        %v2452 = vunpack.c.l.b16 %v2379
        %v2453 = vunpack.c.l.b16 %v2380
        %v2454 = vunpack.c.l.b16 %v2381
        %v2455 = vunpack.c.l.b16 %v2382
        %v2456 = vunpack.c.l.b16 %v2383
        %v2457 = vunpack.c.l.b16 %v2384
        %v2458 = vunpack.c.l.b16 %v2385
        %v2459 = vunpack.c.l.b16 %v2386
        %v2460 = vunpack.c.l.b16 %v2387
        %v2461 = vunpack.c.l.b16 %v2388
        %v2462 = vunpack.c.l.b16 %v2389
        %v2463 = vunpack.c.l.b16 %v2390
        %v2464 = vunpack.c.l.b16 %v2391
        %v2465 = vunpack.c.l.b16 %v2392
        %v2466 = vunpack.c.l.b16 %v2393
        %v2467 = vunpack.c.l.b16 %v2394
        %v2468 = vunpack.c.l.b16 %v2395
        %v2469 = vunpack.c.l.b16 %v2396
        %v2470 = vunpack.c.l.b16 %v2397
        %v2471 = vunpack.c.l.b16 %v2398
        %v2472 = vunpack.c.l.b16 %v2399
        %v2473 = vunpack.c.l.b16 %v2400
        %v2474 = vpack.c.b16 %v2443, %v2442
        %v2475 = vpack.c.b16 %v2445, %v2444
        %v2476 = vpack.c.b16 %v2447, %v2446
        %v2477 = vpack.c.b16 %v2449, %v2448
        %v2478 = vpack.c.b16 %v2451, %v2450
        %v2479 = vpack.c.b16 %v2453, %v2452
        %v2480 = vpack.c.b16 %v2455, %v2454
        %v2481 = vpack.c.b16 %v2457, %v2456
        %v2482 = vpack.c.b16 %v2459, %v2458
        %v2483 = vpack.c.b16 %v2461, %v2460
        %v2484 = vpack.c.b16 %v2463, %v2462
        %v2485 = vpack.c.b16 %v2465, %v2464
        %v2486 = vpack.c.b16 %v2467, %v2466
        %v2487 = vpack.c.b16 %v2469, %v2468
        %v2488 = vpack.c.b16 %v2471, %v2470
        %v2489 = vpack.c.b16 %v2473, %v2472
        %v2498 = vunpack.c.l.b16 %v2402
        %v2499 = vunpack.c.l.b16 %v2403
        %v2500 = vunpack.c.l.b16 %v2404
        %v2501 = vunpack.c.l.b16 %v2405
        %v2502 = vunpack.c.l.b16 %v2406
        %v2503 = vunpack.c.l.b16 %v2407
        %v2504 = vunpack.c.l.b16 %v2408
        %v2505 = vunpack.c.l.b16 %v2409
        %v2506 = vpack.c.b16 %v2499, %v2498
        %v2507 = vpack.c.b16 %v2501, %v2500
        %v2508 = vpack.c.b16 %v2503, %v2502
        %v2509 = vpack.c.b16 %v2505, %v2504
        %v2515 = vsel %vm910, %v2474, 0
        %v2518 = vsel %vm910, %v2475, 0
        %v2521 = vsel %vm910, %v2476, 0
        %v2524 = vsel %vm910, %v2477, 0
        %v2527 = vsel %vm910, %v2478, 0
        %v2530 = vsel %vm910, %v2479, 0
        %v2533 = vsel %vm910, %v2480, 0
        %v2536 = vsel %vm910, %v2481, 0
        %v2539 = vsel %vm910, %v2482, 0
        %v2542 = vsel %vm910, %v2483, 0
        %v2545 = vsel %vm910, %v2484, 0
        %v2548 = vsel %vm910, %v2485, 0
        %v2551 = vsel %vm910, %v2486, 0
        %v2554 = vsel %vm910, %v2487, 0
        %v2557 = vsel %vm910, %v2488, 0
        %v2560 = vsel %vm910, %v2489, 0
        %2562 = vmatprep.subr.bf16.mxu0 0
        %2563 = vmatpush1.bf16.msra.mxu0 %v2506
        %2564 = vmatprep.subr.bf16.mxu0 0
        %2565 = vmatpush1.bf16.msra.mxu0 %v2507
        %2566 = vmatprep.subr.bf16.mxu0 0
        %2567 = vmatpush1.bf16.msra.mxu0 %v2508
        %2568 = vmatprep.subr.bf16.mxu0 0
        %2569 = vmatpush1.bf16.msra.mxu0 %v2509
        %2570 = vmatprep.subr.bf16.mxu0 0
        %2571 = vmatpush1.bf16.msra.mxu0 0
        %2572 = vmatprep.subr.bf16.mxu0 0
        %2573 = vmatpush1.bf16.msra.mxu0 0
        %2574 = vmatprep.subr.bf16.mxu0 0
        %2575 = vmatpush1.bf16.msra.mxu0 0
        %2576 = vmatprep.subr.bf16.mxu0 0
        %2577 = vmatpush1.bf16.msra.mxu0 0
        %2578 = vmatprep.subr.bf16.mxu0 0
        %2579 = vmatpush1.bf16.msra.mxu0 0
        %2580 = vmatprep.subr.bf16.mxu0 0
        %2581 = vmatpush1.bf16.msra.mxu0 0
        %2582 = vmatprep.subr.bf16.mxu0 0
        %2583 = vmatpush1.bf16.msra.mxu0 0
        %2584 = vmatprep.subr.bf16.mxu0 0
        %2585 = vmatpush1.bf16.msra.mxu0 0
        %2586 = vmatprep.subr.bf16.mxu0 0
        %2587 = vmatpush1.bf16.msra.mxu0 0
        %2588 = vmatprep.subr.bf16.mxu0 0
        %2589 = vmatpush1.bf16.msra.mxu0 0
        %2590 = vmatprep.subr.bf16.mxu0 0
        %2591 = vmatpush1.bf16.msra.mxu0 0
        %2592 = vmatprep.subr.bf16.mxu0 0
        %2593 = vmatpush1.bf16.msra.mxu0 0
        %2594 = vmatprep.mubr.bf16.mxu0 0
        %2595 = vmatmul.mubr.bf16.gmra.mrb[0].mxu0 %v2515
        %v2596 = vpop.f32.mrb[0].mxu0
        %v2597 = vadd.f32 0.0, %v2596
        %v2598 = vpop.f32.mrb[0].mxu0
        %v2599 = vpop.f32.mrb[0].mxu0
        %v2600 = vadd.f32 0.0, %v2599
        %v2601 = vpop.f32.mrb[0].mxu0
        %2602 = vmatprep.mubr.bf16.mxu0 0
        %2603 = vmatmul.mubr.bf16.gmra.mrb[0].mxu0 %v2518
        %v2604 = vpop.f32.mrb[0].mxu0
        %v2605 = vadd.f32 0.0, %v2604
        %v2606 = vpop.f32.mrb[0].mxu0
        %v2607 = vpop.f32.mrb[0].mxu0
        %v2608 = vadd.f32 0.0, %v2607
        %v2609 = vpop.f32.mrb[0].mxu0
        %2610 = vmatprep.mubr.bf16.mxu0 0
        %2611 = vmatmul.mubr.bf16.gmra.mrb[0].mxu0 %v2521
        %v2612 = vpop.f32.mrb[0].mxu0
        %v2613 = vadd.f32 0.0, %v2612
        %v2614 = vpop.f32.mrb[0].mxu0
        %v2615 = vpop.f32.mrb[0].mxu0
        %v2616 = vadd.f32 0.0, %v2615
        %v2617 = vpop.f32.mrb[0].mxu0
        %2618 = vmatprep.mubr.bf16.mxu0 0
        %2619 = vmatmul.mubr.bf16.gmra.mrb[0].mxu0 %v2524
        %v2620 = vpop.f32.mrb[0].mxu0
        %v2621 = vadd.f32 0.0, %v2620
        %v2622 = vpop.f32.mrb[0].mxu0
        %v2623 = vpop.f32.mrb[0].mxu0
        %v2624 = vadd.f32 0.0, %v2623
        %v2625 = vpop.f32.mrb[0].mxu0
        %2626 = vmatprep.mubr.bf16.mxu0 0
        %2627 = vmatmul.mubr.bf16.gmra.mrb[0].mxu0 %v2527
        %v2628 = vpop.f32.mrb[0].mxu0
        %v2629 = vadd.f32 0.0, %v2628
        %v2630 = vpop.f32.mrb[0].mxu0
        %v2631 = vpop.f32.mrb[0].mxu0
        %v2632 = vadd.f32 0.0, %v2631
        %v2633 = vpop.f32.mrb[0].mxu0
        %2634 = vmatprep.mubr.bf16.mxu0 0
        %2635 = vmatmul.mubr.bf16.gmra.mrb[0].mxu0 %v2530
        %v2636 = vpop.f32.mrb[0].mxu0
        %v2637 = vadd.f32 0.0, %v2636
        %v2638 = vpop.f32.mrb[0].mxu0
        %v2639 = vpop.f32.mrb[0].mxu0
        %v2640 = vadd.f32 0.0, %v2639
        %v2641 = vpop.f32.mrb[0].mxu0
        %2642 = vmatprep.mubr.bf16.mxu0 0
        %2643 = vmatmul.mubr.bf16.gmra.mrb[0].mxu0 %v2533
        %v2644 = vpop.f32.mrb[0].mxu0
        %v2645 = vadd.f32 0.0, %v2644
        %v2646 = vpop.f32.mrb[0].mxu0
        %v2647 = vpop.f32.mrb[0].mxu0
        %v2648 = vadd.f32 0.0, %v2647
        %v2649 = vpop.f32.mrb[0].mxu0
        %2650 = vmatprep.mubr.bf16.mxu0 0
        %2651 = vmatmul.mubr.bf16.gmra.mrb[0].mxu0 %v2536
        %v2652 = vpop.f32.mrb[0].mxu0
        %v2653 = vadd.f32 0.0, %v2652
        %v2654 = vpop.f32.mrb[0].mxu0
        %v2655 = vpop.f32.mrb[0].mxu0
        %v2656 = vadd.f32 0.0, %v2655
        %v2657 = vpop.f32.mrb[0].mxu0
        %2658 = vmatprep.mubr.bf16.mxu0 0
        %2659 = vmatmul.mubr.bf16.gmra.mrb[0].mxu0 %v2539
        %v2660 = vpop.f32.mrb[0].mxu0
        %v2661 = vadd.f32 0.0, %v2660
        %v2662 = vpop.f32.mrb[0].mxu0
        %v2663 = vpop.f32.mrb[0].mxu0
        %v2664 = vadd.f32 0.0, %v2663
        %v2665 = vpop.f32.mrb[0].mxu0
        %2666 = vmatprep.mubr.bf16.mxu0 0
        %2667 = vmatmul.mubr.bf16.gmra.mrb[0].mxu0 %v2542
        %v2668 = vpop.f32.mrb[0].mxu0
        %v2669 = vadd.f32 0.0, %v2668
        %v2670 = vpop.f32.mrb[0].mxu0
        %v2671 = vpop.f32.mrb[0].mxu0
        %v2672 = vadd.f32 0.0, %v2671
        %v2673 = vpop.f32.mrb[0].mxu0
        %2674 = vmatprep.mubr.bf16.mxu0 0
        %2675 = vmatmul.mubr.bf16.gmra.mrb[0].mxu0 %v2545
        %v2676 = vpop.f32.mrb[0].mxu0
        %v2677 = vadd.f32 0.0, %v2676
        %v2678 = vpop.f32.mrb[0].mxu0
        %v2679 = vpop.f32.mrb[0].mxu0
        %v2680 = vadd.f32 0.0, %v2679
        %v2681 = vpop.f32.mrb[0].mxu0
        %2682 = vmatprep.mubr.bf16.mxu0 0
        %2683 = vmatmul.mubr.bf16.gmra.mrb[0].mxu0 %v2548
        %v2684 = vpop.f32.mrb[0].mxu0
        %v2685 = vadd.f32 0.0, %v2684
        %v2686 = vpop.f32.mrb[0].mxu0
        %v2687 = vpop.f32.mrb[0].mxu0
        %v2688 = vadd.f32 0.0, %v2687
        %v2689 = vpop.f32.mrb[0].mxu0
        %2690 = vmatprep.mubr.bf16.mxu0 0
        %2691 = vmatmul.mubr.bf16.gmra.mrb[0].mxu0 %v2551
        %v2692 = vpop.f32.mrb[0].mxu0
        %v2693 = vadd.f32 0.0, %v2692
        %v2694 = vpop.f32.mrb[0].mxu0
        %v2695 = vpop.f32.mrb[0].mxu0
        %v2696 = vadd.f32 0.0, %v2695
        %v2697 = vpop.f32.mrb[0].mxu0
        %2698 = vmatprep.mubr.bf16.mxu0 0
        %2699 = vmatmul.mubr.bf16.gmra.mrb[0].mxu0 %v2554
        %v2700 = vpop.f32.mrb[0].mxu0
        %v2701 = vadd.f32 0.0, %v2700
        %v2702 = vpop.f32.mrb[0].mxu0
        %v2703 = vpop.f32.mrb[0].mxu0
        %v2704 = vadd.f32 0.0, %v2703
        %v2705 = vpop.f32.mrb[0].mxu0
        %2706 = vmatprep.mubr.bf16.mxu0 0
        %2707 = vmatmul.mubr.bf16.gmra.mrb[0].mxu0 %v2557
        %v2708 = vpop.f32.mrb[0].mxu0
        %v2709 = vadd.f32 0.0, %v2708
        %v2710 = vpop.f32.mrb[0].mxu0
        %v2711 = vpop.f32.mrb[0].mxu0
        %v2712 = vadd.f32 0.0, %v2711
        %v2713 = vpop.f32.mrb[0].mxu0
        %2714 = vmatprep.mubr.bf16.mxu0 0
        %2715 = vmatmul.mubr.bf16.gmra.mrb[0].mxu0 %v2560
        %v2716 = vpop.f32.mrb[0].mxu0
        %v2717 = vadd.f32 0.0, %v2716
        %v2718 = vpop.f32.mrb[0].mxu0
        %v2719 = vpop.f32.mrb[0].mxu0
        %v2720 = vadd.f32 0.0, %v2719
        %v2721 = vpop.f32.mrb[0].mxu0
        %2722 = vdwg.mxu0
        %v2723 = vadd.f32 %v2337, %v2597
        %v2724 = vadd.f32 %v2338, %v2600
        %v2725 = vadd.f32 %v2339, %v2605
        %v2726 = vadd.f32 %v2340, %v2608
        %v2727 = vadd.f32 %v2341, %v2613
        %v2728 = vadd.f32 %v2342, %v2616
        %v2729 = vadd.f32 %v2343, %v2621
        %v2730 = vadd.f32 %v2344, %v2624
        %v2731 = vadd.f32 %v2345, %v2629
        %v2732 = vadd.f32 %v2346, %v2632
        %v2733 = vadd.f32 %v2347, %v2637
        %v2734 = vadd.f32 %v2348, %v2640
        %v2735 = vadd.f32 %v2349, %v2645
        %v2736 = vadd.f32 %v2350, %v2648
        %v2737 = vadd.f32 %v2351, %v2653
        %v2738 = vadd.f32 %v2352, %v2656
        %v2739 = vadd.f32 %v2353, %v2661
        %v2740 = vadd.f32 %v2354, %v2664
        %v2741 = vadd.f32 %v2355, %v2669
        %v2742 = vadd.f32 %v2356, %v2672
        %v2743 = vadd.f32 %v2357, %v2677
        %v2744 = vadd.f32 %v2358, %v2680
        %v2745 = vadd.f32 %v2359, %v2685
        %v2746 = vadd.f32 %v2360, %v2688
        %v2747 = vadd.f32 %v2361, %v2693
        %v2748 = vadd.f32 %v2362, %v2696
        %v2749 = vadd.f32 %v2363, %v2701
        %v2750 = vadd.f32 %v2364, %v2704
        %v2751 = vadd.f32 %v2365, %v2709
        %v2752 = vadd.f32 %v2366, %v2712
        %v2753 = vadd.f32 %v2367, %v2717
        %v2754 = vadd.f32 %v2368, %v2720
        %s2755 = scalar_lea.vmem %s4, 128
        %v2756 = vld [vmem:[%s2755] sm:$0xf]
        %v2757 = vld [vmem:[%s2755 + $0x4] sm:$0xf]
        %v2758 = vld [vmem:[%s2755 + $0x8] sm:$0xf]
        %v2759 = vld [vmem:[%s2755 + $0xc] sm:$0xf]
        %v2760 = vld [vmem:[%s2755 + $0x10] sm:$0xf]
        %v2761 = vld [vmem:[%s2755 + $0x14] sm:$0xf]
        %v2762 = vld [vmem:[%s2755 + $0x18] sm:$0xf]
        %v2763 = vld [vmem:[%s2755 + $0x1c] sm:$0xf]
        %v2772 = vunpack.c.l.b16 %v2756
        %v2773 = vunpack.c.l.b16 %v2757
        %v2774 = vunpack.c.l.b16 %v2758
        %v2775 = vunpack.c.l.b16 %v2759
        %v2776 = vunpack.c.l.b16 %v2760
        %v2777 = vunpack.c.l.b16 %v2761
        %v2778 = vunpack.c.l.b16 %v2762
        %v2779 = vunpack.c.l.b16 %v2763
        %v2780 = vpack.c.b16 %v2773, %v2772
        %v2781 = vpack.c.b16 %v2775, %v2774
        %v2782 = vpack.c.b16 %v2777, %v2776
        %v2783 = vpack.c.b16 %v2779, %v2778
        %2788 = vmatprep.subr.bf16.mxu0 0
        %2789 = vmatpush1.bf16.msra.mxu0 %v2780
        %2790 = vmatprep.subr.bf16.mxu0 0
        %2791 = vmatpush1.bf16.msra.mxu0 %v2781
        %2792 = vmatprep.subr.bf16.mxu0 0
        %2793 = vmatpush1.bf16.msra.mxu0 %v2782
        %2794 = vmatprep.subr.bf16.mxu0 0
        %2795 = vmatpush1.bf16.msra.mxu0 %v2783
        %2796 = vmatprep.subr.bf16.mxu0 0
        %2797 = vmatpush1.bf16.msra.mxu0 0
        %2798 = vmatprep.subr.bf16.mxu0 0
        %2799 = vmatpush1.bf16.msra.mxu0 0
        %2800 = vmatprep.subr.bf16.mxu0 0
        %2801 = vmatpush1.bf16.msra.mxu0 0
        %2802 = vmatprep.subr.bf16.mxu0 0
        %2803 = vmatpush1.bf16.msra.mxu0 0
        %2804 = vmatprep.subr.bf16.mxu0 0
        %2805 = vmatpush1.bf16.msra.mxu0 0
        %2806 = vmatprep.subr.bf16.mxu0 0
        %2807 = vmatpush1.bf16.msra.mxu0 0
        %2808 = vmatprep.subr.bf16.mxu0 0
        %2809 = vmatpush1.bf16.msra.mxu0 0
        %2810 = vmatprep.subr.bf16.mxu0 0
        %2811 = vmatpush1.bf16.msra.mxu0 0
        %2812 = vmatprep.subr.bf16.mxu0 0
        %2813 = vmatpush1.bf16.msra.mxu0 0
        %2814 = vmatprep.subr.bf16.mxu0 0
        %2815 = vmatpush1.bf16.msra.mxu0 0
        %2816 = vmatprep.subr.bf16.mxu0 0
        %2817 = vmatpush1.bf16.msra.mxu0 0
        %2818 = vmatprep.subr.bf16.mxu0 0
        %2819 = vmatpush1.bf16.msra.mxu0 0
        %2820 = vmatprep.mubr.bf16.mxu0 0
        %2821 = vmatmul.mubr.bf16.gmra.mrb[0].mxu0 %v912
        %v2822 = vpop.f32.mrb[0].mxu0
        %v2823 = vadd.f32 0.0, %v2822
        %v2824 = vpop.f32.mrb[0].mxu0
        %v2825 = vpop.f32.mrb[0].mxu0
        %v2826 = vadd.f32 0.0, %v2825
        %v2827 = vpop.f32.mrb[0].mxu0
        %2828 = vmatprep.mubr.bf16.mxu0 0
        %2829 = vmatmul.mubr.bf16.gmra.mrb[0].mxu0 %v915
        %v2830 = vpop.f32.mrb[0].mxu0
        %v2831 = vadd.f32 0.0, %v2830
        %v2832 = vpop.f32.mrb[0].mxu0
        %v2833 = vpop.f32.mrb[0].mxu0
        %v2834 = vadd.f32 0.0, %v2833
        %v2835 = vpop.f32.mrb[0].mxu0
        %2836 = vmatprep.mubr.bf16.mxu0 0
        %2837 = vmatmul.mubr.bf16.gmra.mrb[0].mxu0 %v918
        %v2838 = vpop.f32.mrb[0].mxu0
        %v2839 = vadd.f32 0.0, %v2838
        %v2840 = vpop.f32.mrb[0].mxu0
        %v2841 = vpop.f32.mrb[0].mxu0
        %v2842 = vadd.f32 0.0, %v2841
        %v2843 = vpop.f32.mrb[0].mxu0
        %2844 = vmatprep.mubr.bf16.mxu0 0
        %2845 = vmatmul.mubr.bf16.gmra.mrb[0].mxu0 %v921
        %v2846 = vpop.f32.mrb[0].mxu0
        %v2847 = vadd.f32 0.0, %v2846
        %v2848 = vpop.f32.mrb[0].mxu0
        %v2849 = vpop.f32.mrb[0].mxu0
        %v2850 = vadd.f32 0.0, %v2849
        %v2851 = vpop.f32.mrb[0].mxu0
        %2852 = vmatprep.mubr.bf16.mxu0 0
        %2853 = vmatmul.mubr.bf16.gmra.mrb[0].mxu0 %v924
        %v2854 = vpop.f32.mrb[0].mxu0
        %v2855 = vadd.f32 0.0, %v2854
        %v2856 = vpop.f32.mrb[0].mxu0
        %v2857 = vpop.f32.mrb[0].mxu0
        %v2858 = vadd.f32 0.0, %v2857
        %v2859 = vpop.f32.mrb[0].mxu0
        %2860 = vmatprep.mubr.bf16.mxu0 0
        %2861 = vmatmul.mubr.bf16.gmra.mrb[0].mxu0 %v927
        %v2862 = vpop.f32.mrb[0].mxu0
        %v2863 = vadd.f32 0.0, %v2862
        %v2864 = vpop.f32.mrb[0].mxu0
        %v2865 = vpop.f32.mrb[0].mxu0
        %v2866 = vadd.f32 0.0, %v2865
        %v2867 = vpop.f32.mrb[0].mxu0
        %2868 = vmatprep.mubr.bf16.mxu0 0
        %2869 = vmatmul.mubr.bf16.gmra.mrb[0].mxu0 %v930
        %v2870 = vpop.f32.mrb[0].mxu0
        %v2871 = vadd.f32 0.0, %v2870
        %v2872 = vpop.f32.mrb[0].mxu0
        %v2873 = vpop.f32.mrb[0].mxu0
        %v2874 = vadd.f32 0.0, %v2873
        %v2875 = vpop.f32.mrb[0].mxu0
        %2876 = vmatprep.mubr.bf16.mxu0 0
        %2877 = vmatmul.mubr.bf16.gmra.mrb[0].mxu0 %v933
        %v2878 = vpop.f32.mrb[0].mxu0
        %v2879 = vadd.f32 0.0, %v2878
        %v2880 = vpop.f32.mrb[0].mxu0
        %v2881 = vpop.f32.mrb[0].mxu0
        %v2882 = vadd.f32 0.0, %v2881
        %v2883 = vpop.f32.mrb[0].mxu0
        %2884 = vmatprep.mubr.bf16.mxu0 0
        %2885 = vmatmul.mubr.bf16.gmra.mrb[0].mxu0 %v936
        %v2886 = vpop.f32.mrb[0].mxu0
        %v2887 = vadd.f32 0.0, %v2886
        %v2888 = vpop.f32.mrb[0].mxu0
        %v2889 = vpop.f32.mrb[0].mxu0
        %v2890 = vadd.f32 0.0, %v2889
        %v2891 = vpop.f32.mrb[0].mxu0
        %2892 = vmatprep.mubr.bf16.mxu0 0
        %2893 = vmatmul.mubr.bf16.gmra.mrb[0].mxu0 %v939
        %v2894 = vpop.f32.mrb[0].mxu0
        %v2895 = vadd.f32 0.0, %v2894
        %v2896 = vpop.f32.mrb[0].mxu0
        %v2897 = vpop.f32.mrb[0].mxu0
        %v2898 = vadd.f32 0.0, %v2897
        %v2899 = vpop.f32.mrb[0].mxu0
        %2900 = vmatprep.mubr.bf16.mxu0 0
        %2901 = vmatmul.mubr.bf16.gmra.mrb[0].mxu0 %v942
        %v2902 = vpop.f32.mrb[0].mxu0
        %v2903 = vadd.f32 0.0, %v2902
        %v2904 = vpop.f32.mrb[0].mxu0
        %v2905 = vpop.f32.mrb[0].mxu0
        %v2906 = vadd.f32 0.0, %v2905
        %v2907 = vpop.f32.mrb[0].mxu0
        %2908 = vmatprep.mubr.bf16.mxu0 0
        %2909 = vmatmul.mubr.bf16.gmra.mrb[0].mxu0 %v945
        %v2910 = vpop.f32.mrb[0].mxu0
        %v2911 = vadd.f32 0.0, %v2910
        %v2912 = vpop.f32.mrb[0].mxu0
        %v2913 = vpop.f32.mrb[0].mxu0
        %v2914 = vadd.f32 0.0, %v2913
        %v2915 = vpop.f32.mrb[0].mxu0
        %2916 = vmatprep.mubr.bf16.mxu0 0
        %2917 = vmatmul.mubr.bf16.gmra.mrb[0].mxu0 %v948
        %v2918 = vpop.f32.mrb[0].mxu0
        %v2919 = vadd.f32 0.0, %v2918
        %v2920 = vpop.f32.mrb[0].mxu0
        %v2921 = vpop.f32.mrb[0].mxu0
        %v2922 = vadd.f32 0.0, %v2921
        %v2923 = vpop.f32.mrb[0].mxu0
        %2924 = vmatprep.mubr.bf16.mxu0 0
        %2925 = vmatmul.mubr.bf16.gmra.mrb[0].mxu0 %v951
        %v2926 = vpop.f32.mrb[0].mxu0
        %v2927 = vadd.f32 0.0, %v2926
        %v2928 = vpop.f32.mrb[0].mxu0
        %v2929 = vpop.f32.mrb[0].mxu0
        %v2930 = vadd.f32 0.0, %v2929
        %v2931 = vpop.f32.mrb[0].mxu0
        %2932 = vmatprep.mubr.bf16.mxu0 0
        %2933 = vmatmul.mubr.bf16.gmra.mrb[0].mxu0 %v954
        %v2934 = vpop.f32.mrb[0].mxu0
        %v2935 = vadd.f32 0.0, %v2934
        %v2936 = vpop.f32.mrb[0].mxu0
        %v2937 = vpop.f32.mrb[0].mxu0
        %v2938 = vadd.f32 0.0, %v2937
        %v2939 = vpop.f32.mrb[0].mxu0
        %2940 = vmatprep.mubr.bf16.mxu0 0
        %2941 = vmatmul.mubr.bf16.gmra.mrb[0].mxu0 %v957
        %v2942 = vpop.f32.mrb[0].mxu0
        %v2943 = vadd.f32 0.0, %v2942
        %v2944 = vpop.f32.mrb[0].mxu0
        %v2945 = vpop.f32.mrb[0].mxu0
        %v2946 = vadd.f32 0.0, %v2945
        %v2947 = vpop.f32.mrb[0].mxu0
        %2948 = vdwg.mxu0
        %v2949 = vadd.f32 %v2723, %v2823
        %v2950 = vadd.f32 %v2724, %v2826
        %v2951 = vadd.f32 %v2725, %v2831
        %v2952 = vadd.f32 %v2726, %v2834
        %v2953 = vadd.f32 %v2727, %v2839
        %v2954 = vadd.f32 %v2728, %v2842
        %v2955 = vadd.f32 %v2729, %v2847
        %v2956 = vadd.f32 %v2730, %v2850
        %v2957 = vadd.f32 %v2731, %v2855
        %v2958 = vadd.f32 %v2732, %v2858
        %v2959 = vadd.f32 %v2733, %v2863
        %v2960 = vadd.f32 %v2734, %v2866
        %v2961 = vadd.f32 %v2735, %v2871
        %v2962 = vadd.f32 %v2736, %v2874
        %v2963 = vadd.f32 %v2737, %v2879
        %v2964 = vadd.f32 %v2738, %v2882
        %v2965 = vadd.f32 %v2739, %v2887
        %v2966 = vadd.f32 %v2740, %v2890
        %v2967 = vadd.f32 %v2741, %v2895
        %v2968 = vadd.f32 %v2742, %v2898
        %v2969 = vadd.f32 %v2743, %v2903
        %v2970 = vadd.f32 %v2744, %v2906
        %v2971 = vadd.f32 %v2745, %v2911
        %v2972 = vadd.f32 %v2746, %v2914
        %v2973 = vadd.f32 %v2747, %v2919
        %v2974 = vadd.f32 %v2748, %v2922
        %v2975 = vadd.f32 %v2749, %v2927
        %v2976 = vadd.f32 %v2750, %v2930
        %v2977 = vadd.f32 %v2751, %v2935
        %v2978 = vadd.f32 %v2752, %v2938
        %v2979 = vadd.f32 %v2753, %v2943
        %v2980 = vadd.f32 %v2754, %v2946
        %v2981 = vld [vmem:[%s635 + $0x18] sm:$0xf]
        %v2982 = vld [vmem:[%s635 + $0x1c] sm:$0xf]
        %v2983 = vld [vmem:[%s635 + $0x20] sm:$0xf]
        %v2984 = vld [vmem:[%s635 + $0x24] sm:$0xf]
        %v2985 = vld [vmem:[%s635 + $0x4c] sm:$0xf]
        %v2986 = vld [vmem:[%s635 + $0x50] sm:$0xf]
        %v2987 = vld [vmem:[%s635 + $0x54] sm:$0xf]
        %v2988 = vld [vmem:[%s635 + $0x58] sm:$0xf]
        %v2989 = vld [vmem:[%s635 + $0x80] sm:$0xf]
        %v2990 = vld [vmem:[%s635 + $0x84] sm:$0xf]
        %v2991 = vld [vmem:[%s635 + $0x88] sm:$0xf]
        %v2992 = vld [vmem:[%s635 + $0x8c] sm:$0xf]
        %v2993 = vld [vmem:[%s635 + $0xb4] sm:$0xf]
        %v2994 = vld [vmem:[%s635 + $0xb8] sm:$0xf]
        %v2995 = vld [vmem:[%s635 + $0xbc] sm:$0xf]
        %v2996 = vld [vmem:[%s635 + $0xc0] sm:$0xf]
        %v2997 = vld [vmem:[%s635 + $0xe8] sm:$0xf]
        %v2998 = vld [vmem:[%s635 + $0xec] sm:$0xf]
        %v2999 = vld [vmem:[%s635 + $0xf0] sm:$0xf]
        %v3000 = vld [vmem:[%s635 + $0xf4] sm:$0xf]
        %v3001 = vld [vmem:[%s635 + $0x11c] sm:$0xf]
        %v3002 = vld [vmem:[%s635 + $0x120] sm:$0xf]
        %v3003 = vld [vmem:[%s635 + $0x124] sm:$0xf]
        %v3004 = vld [vmem:[%s635 + $0x128] sm:$0xf]
        %v3005 = vld [vmem:[%s635 + $0x150] sm:$0xf]
        %v3006 = vld [vmem:[%s635 + $0x154] sm:$0xf]
        %v3007 = vld [vmem:[%s635 + $0x158] sm:$0xf]
        %v3008 = vld [vmem:[%s635 + $0x15c] sm:$0xf]
        %v3009 = vld [vmem:[%s635 + $0x184] sm:$0xf]
        %v3010 = vld [vmem:[%s635 + $0x188] sm:$0xf]
        %v3011 = vld [vmem:[%s635 + $0x18c] sm:$0xf]
        %v3012 = vld [vmem:[%s635 + $0x190] sm:$0xf]
        %s3013 = scalar_lea.vmem %s4, 160
        %v3014 = vld [vmem:[%s3013] sm:$0xf]
        %v3015 = vld [vmem:[%s3013 + $0x4] sm:$0xf]
        %v3016 = vld [vmem:[%s3013 + $0x8] sm:$0xf]
        %v3017 = vld [vmem:[%s3013 + $0xc] sm:$0xf]
        %v3018 = vld [vmem:[%s3013 + $0x10] sm:$0xf]
        %v3019 = vld [vmem:[%s3013 + $0x14] sm:$0xf]
        %v3020 = vld [vmem:[%s3013 + $0x18] sm:$0xf]
        %v3021 = vld [vmem:[%s3013 + $0x1c] sm:$0xf]
        %v3054 = vunpack.c.l.b16 %v2981
        %v3055 = vunpack.c.l.b16 %v2982
        %v3056 = vunpack.c.l.b16 %v2983
        %v3057 = vunpack.c.l.b16 %v2984
        %v3058 = vunpack.c.l.b16 %v2985
        %v3059 = vunpack.c.l.b16 %v2986
        %v3060 = vunpack.c.l.b16 %v2987
        %v3061 = vunpack.c.l.b16 %v2988
        %v3062 = vunpack.c.l.b16 %v2989
        %v3063 = vunpack.c.l.b16 %v2990
        %v3064 = vunpack.c.l.b16 %v2991
        %v3065 = vunpack.c.l.b16 %v2992
        %v3066 = vunpack.c.l.b16 %v2993
        %v3067 = vunpack.c.l.b16 %v2994
        %v3068 = vunpack.c.l.b16 %v2995
        %v3069 = vunpack.c.l.b16 %v2996
        %v3070 = vunpack.c.l.b16 %v2997
        %v3071 = vunpack.c.l.b16 %v2998
        %v3072 = vunpack.c.l.b16 %v2999
        %v3073 = vunpack.c.l.b16 %v3000
        %v3074 = vunpack.c.l.b16 %v3001
        %v3075 = vunpack.c.l.b16 %v3002
        %v3076 = vunpack.c.l.b16 %v3003
        %v3077 = vunpack.c.l.b16 %v3004
        %v3078 = vunpack.c.l.b16 %v3005
        %v3079 = vunpack.c.l.b16 %v3006
        %v3080 = vunpack.c.l.b16 %v3007
        %v3081 = vunpack.c.l.b16 %v3008
        %v3082 = vunpack.c.l.b16 %v3009
        %v3083 = vunpack.c.l.b16 %v3010
        %v3084 = vunpack.c.l.b16 %v3011
        %v3085 = vunpack.c.l.b16 %v3012
        %v3086 = vpack.c.b16 %v3055, %v3054
        %v3087 = vpack.c.b16 %v3057, %v3056
        %v3088 = vpack.c.b16 %v3059, %v3058
        %v3089 = vpack.c.b16 %v3061, %v3060
        %v3090 = vpack.c.b16 %v3063, %v3062
        %v3091 = vpack.c.b16 %v3065, %v3064
        %v3092 = vpack.c.b16 %v3067, %v3066
        %v3093 = vpack.c.b16 %v3069, %v3068
        %v3094 = vpack.c.b16 %v3071, %v3070
        %v3095 = vpack.c.b16 %v3073, %v3072
        %v3096 = vpack.c.b16 %v3075, %v3074
        %v3097 = vpack.c.b16 %v3077, %v3076
        %v3098 = vpack.c.b16 %v3079, %v3078
        %v3099 = vpack.c.b16 %v3081, %v3080
        %v3100 = vpack.c.b16 %v3083, %v3082
        %v3101 = vpack.c.b16 %v3085, %v3084
        %v3110 = vunpack.c.l.b16 %v3014
        %v3111 = vunpack.c.l.b16 %v3015
        %v3112 = vunpack.c.l.b16 %v3016
        %v3113 = vunpack.c.l.b16 %v3017
        %v3114 = vunpack.c.l.b16 %v3018
        %v3115 = vunpack.c.l.b16 %v3019
        %v3116 = vunpack.c.l.b16 %v3020
        %v3117 = vunpack.c.l.b16 %v3021
        %v3118 = vpack.c.b16 %v3111, %v3110
        %v3119 = vpack.c.b16 %v3113, %v3112
        %v3120 = vpack.c.b16 %v3115, %v3114
        %v3121 = vpack.c.b16 %v3117, %v3116
        %v3127 = vsel %vm910, %v3086, 0
        %v3130 = vsel %vm910, %v3087, 0
        %v3133 = vsel %vm910, %v3088, 0
        %v3136 = vsel %vm910, %v3089, 0
        %v3139 = vsel %vm910, %v3090, 0
        %v3142 = vsel %vm910, %v3091, 0
        %v3145 = vsel %vm910, %v3092, 0
        %v3148 = vsel %vm910, %v3093, 0
        %v3151 = vsel %vm910, %v3094, 0
        %v3154 = vsel %vm910, %v3095, 0
        %v3157 = vsel %vm910, %v3096, 0
        %v3160 = vsel %vm910, %v3097, 0
        %v3163 = vsel %vm910, %v3098, 0
        %v3166 = vsel %vm910, %v3099, 0
        %v3169 = vsel %vm910, %v3100, 0
        %v3172 = vsel %vm910, %v3101, 0
        %3174 = vmatprep.subr.bf16.mxu0 0
        %3175 = vmatpush1.bf16.msra.mxu0 %v3118
        %3176 = vmatprep.subr.bf16.mxu0 0
        %3177 = vmatpush1.bf16.msra.mxu0 %v3119
        %3178 = vmatprep.subr.bf16.mxu0 0
        %3179 = vmatpush1.bf16.msra.mxu0 %v3120
        %3180 = vmatprep.subr.bf16.mxu0 0
        %3181 = vmatpush1.bf16.msra.mxu0 %v3121
        %3182 = vmatprep.subr.bf16.mxu0 0
        %3183 = vmatpush1.bf16.msra.mxu0 0
        %3184 = vmatprep.subr.bf16.mxu0 0
        %3185 = vmatpush1.bf16.msra.mxu0 0
        %3186 = vmatprep.subr.bf16.mxu0 0
        %3187 = vmatpush1.bf16.msra.mxu0 0
        %3188 = vmatprep.subr.bf16.mxu0 0
        %3189 = vmatpush1.bf16.msra.mxu0 0
        %3190 = vmatprep.subr.bf16.mxu0 0
        %3191 = vmatpush1.bf16.msra.mxu0 0
        %3192 = vmatprep.subr.bf16.mxu0 0
        %3193 = vmatpush1.bf16.msra.mxu0 0
        %3194 = vmatprep.subr.bf16.mxu0 0
        %3195 = vmatpush1.bf16.msra.mxu0 0
        %3196 = vmatprep.subr.bf16.mxu0 0
        %3197 = vmatpush1.bf16.msra.mxu0 0
        %3198 = vmatprep.subr.bf16.mxu0 0
        %3199 = vmatpush1.bf16.msra.mxu0 0
        %3200 = vmatprep.subr.bf16.mxu0 0
        %3201 = vmatpush1.bf16.msra.mxu0 0
        %3202 = vmatprep.subr.bf16.mxu0 0
        %3203 = vmatpush1.bf16.msra.mxu0 0
        %3204 = vmatprep.subr.bf16.mxu0 0
        %3205 = vmatpush1.bf16.msra.mxu0 0
        %3206 = vmatprep.mubr.bf16.mxu0 0
        %3207 = vmatmul.mubr.bf16.gmra.mrb[0].mxu0 %v3127
        %v3208 = vpop.f32.mrb[0].mxu0
        %v3209 = vadd.f32 0.0, %v3208
        %v3210 = vpop.f32.mrb[0].mxu0
        %v3211 = vpop.f32.mrb[0].mxu0
        %v3212 = vadd.f32 0.0, %v3211
        %v3213 = vpop.f32.mrb[0].mxu0
        %3214 = vmatprep.mubr.bf16.mxu0 0
        %3215 = vmatmul.mubr.bf16.gmra.mrb[0].mxu0 %v3130
        %v3216 = vpop.f32.mrb[0].mxu0
        %v3217 = vadd.f32 0.0, %v3216
        %v3218 = vpop.f32.mrb[0].mxu0
        %v3219 = vpop.f32.mrb[0].mxu0
        %v3220 = vadd.f32 0.0, %v3219
        %v3221 = vpop.f32.mrb[0].mxu0
        %3222 = vmatprep.mubr.bf16.mxu0 0
        %3223 = vmatmul.mubr.bf16.gmra.mrb[0].mxu0 %v3133
        %v3224 = vpop.f32.mrb[0].mxu0
        %v3225 = vadd.f32 0.0, %v3224
        %v3226 = vpop.f32.mrb[0].mxu0
        %v3227 = vpop.f32.mrb[0].mxu0
        %v3228 = vadd.f32 0.0, %v3227
        %v3229 = vpop.f32.mrb[0].mxu0
        %3230 = vmatprep.mubr.bf16.mxu0 0
        %3231 = vmatmul.mubr.bf16.gmra.mrb[0].mxu0 %v3136
        %v3232 = vpop.f32.mrb[0].mxu0
        %v3233 = vadd.f32 0.0, %v3232
        %v3234 = vpop.f32.mrb[0].mxu0
        %v3235 = vpop.f32.mrb[0].mxu0
        %v3236 = vadd.f32 0.0, %v3235
        %v3237 = vpop.f32.mrb[0].mxu0
        %3238 = vmatprep.mubr.bf16.mxu0 0
        %3239 = vmatmul.mubr.bf16.gmra.mrb[0].mxu0 %v3139
        %v3240 = vpop.f32.mrb[0].mxu0
        %v3241 = vadd.f32 0.0, %v3240
        %v3242 = vpop.f32.mrb[0].mxu0
        %v3243 = vpop.f32.mrb[0].mxu0
        %v3244 = vadd.f32 0.0, %v3243
        %v3245 = vpop.f32.mrb[0].mxu0
        %3246 = vmatprep.mubr.bf16.mxu0 0
        %3247 = vmatmul.mubr.bf16.gmra.mrb[0].mxu0 %v3142
        %v3248 = vpop.f32.mrb[0].mxu0
        %v3249 = vadd.f32 0.0, %v3248
        %v3250 = vpop.f32.mrb[0].mxu0
        %v3251 = vpop.f32.mrb[0].mxu0
        %v3252 = vadd.f32 0.0, %v3251
        %v3253 = vpop.f32.mrb[0].mxu0
        %3254 = vmatprep.mubr.bf16.mxu0 0
        %3255 = vmatmul.mubr.bf16.gmra.mrb[0].mxu0 %v3145
        %v3256 = vpop.f32.mrb[0].mxu0
        %v3257 = vadd.f32 0.0, %v3256
        %v3258 = vpop.f32.mrb[0].mxu0
        %v3259 = vpop.f32.mrb[0].mxu0
        %v3260 = vadd.f32 0.0, %v3259
        %v3261 = vpop.f32.mrb[0].mxu0
        %3262 = vmatprep.mubr.bf16.mxu0 0
        %3263 = vmatmul.mubr.bf16.gmra.mrb[0].mxu0 %v3148
        %v3264 = vpop.f32.mrb[0].mxu0
        %v3265 = vadd.f32 0.0, %v3264
        %v3266 = vpop.f32.mrb[0].mxu0
        %v3267 = vpop.f32.mrb[0].mxu0
        %v3268 = vadd.f32 0.0, %v3267
        %v3269 = vpop.f32.mrb[0].mxu0
        %3270 = vmatprep.mubr.bf16.mxu0 0
        %3271 = vmatmul.mubr.bf16.gmra.mrb[0].mxu0 %v3151
        %v3272 = vpop.f32.mrb[0].mxu0
        %v3273 = vadd.f32 0.0, %v3272
        %v3274 = vpop.f32.mrb[0].mxu0
        %v3275 = vpop.f32.mrb[0].mxu0
        %v3276 = vadd.f32 0.0, %v3275
        %v3277 = vpop.f32.mrb[0].mxu0
        %3278 = vmatprep.mubr.bf16.mxu0 0
        %3279 = vmatmul.mubr.bf16.gmra.mrb[0].mxu0 %v3154
        %v3280 = vpop.f32.mrb[0].mxu0
        %v3281 = vadd.f32 0.0, %v3280
        %v3282 = vpop.f32.mrb[0].mxu0
        %v3283 = vpop.f32.mrb[0].mxu0
        %v3284 = vadd.f32 0.0, %v3283
        %v3285 = vpop.f32.mrb[0].mxu0
        %3286 = vmatprep.mubr.bf16.mxu0 0
        %3287 = vmatmul.mubr.bf16.gmra.mrb[0].mxu0 %v3157
        %v3288 = vpop.f32.mrb[0].mxu0
        %v3289 = vadd.f32 0.0, %v3288
        %v3290 = vpop.f32.mrb[0].mxu0
        %v3291 = vpop.f32.mrb[0].mxu0
        %v3292 = vadd.f32 0.0, %v3291
        %v3293 = vpop.f32.mrb[0].mxu0
        %3294 = vmatprep.mubr.bf16.mxu0 0
        %3295 = vmatmul.mubr.bf16.gmra.mrb[0].mxu0 %v3160
        %v3296 = vpop.f32.mrb[0].mxu0
        %v3297 = vadd.f32 0.0, %v3296
        %v3298 = vpop.f32.mrb[0].mxu0
        %v3299 = vpop.f32.mrb[0].mxu0
        %v3300 = vadd.f32 0.0, %v3299
        %v3301 = vpop.f32.mrb[0].mxu0
        %3302 = vmatprep.mubr.bf16.mxu0 0
        %3303 = vmatmul.mubr.bf16.gmra.mrb[0].mxu0 %v3163
        %v3304 = vpop.f32.mrb[0].mxu0
        %v3305 = vadd.f32 0.0, %v3304
        %v3306 = vpop.f32.mrb[0].mxu0
        %v3307 = vpop.f32.mrb[0].mxu0
        %v3308 = vadd.f32 0.0, %v3307
        %v3309 = vpop.f32.mrb[0].mxu0
        %3310 = vmatprep.mubr.bf16.mxu0 0
        %3311 = vmatmul.mubr.bf16.gmra.mrb[0].mxu0 %v3166
        %v3312 = vpop.f32.mrb[0].mxu0
        %v3313 = vadd.f32 0.0, %v3312
        %v3314 = vpop.f32.mrb[0].mxu0
        %v3315 = vpop.f32.mrb[0].mxu0
        %v3316 = vadd.f32 0.0, %v3315
        %v3317 = vpop.f32.mrb[0].mxu0
        %3318 = vmatprep.mubr.bf16.mxu0 0
        %3319 = vmatmul.mubr.bf16.gmra.mrb[0].mxu0 %v3169
        %v3320 = vpop.f32.mrb[0].mxu0
        %v3321 = vadd.f32 0.0, %v3320
        %v3322 = vpop.f32.mrb[0].mxu0
        %v3323 = vpop.f32.mrb[0].mxu0
        %v3324 = vadd.f32 0.0, %v3323
        %v3325 = vpop.f32.mrb[0].mxu0
        %3326 = vmatprep.mubr.bf16.mxu0 0
        %3327 = vmatmul.mubr.bf16.gmra.mrb[0].mxu0 %v3172
        %v3328 = vpop.f32.mrb[0].mxu0
        %v3329 = vadd.f32 0.0, %v3328
        %v3330 = vpop.f32.mrb[0].mxu0
        %v3331 = vpop.f32.mrb[0].mxu0
        %v3332 = vadd.f32 0.0, %v3331
        %v3333 = vpop.f32.mrb[0].mxu0
        %3334 = vdwg.mxu0
        %v3335 = vadd.f32 %v2949, %v3209
        %v3336 = vadd.f32 %v2950, %v3212
        %v3337 = vadd.f32 %v2951, %v3217
        %v3338 = vadd.f32 %v2952, %v3220
        %v3339 = vadd.f32 %v2953, %v3225
        %v3340 = vadd.f32 %v2954, %v3228
        %v3341 = vadd.f32 %v2955, %v3233
        %v3342 = vadd.f32 %v2956, %v3236
        %v3343 = vadd.f32 %v2957, %v3241
        %v3344 = vadd.f32 %v2958, %v3244
        %v3345 = vadd.f32 %v2959, %v3249
        %v3346 = vadd.f32 %v2960, %v3252
        %v3347 = vadd.f32 %v2961, %v3257
        %v3348 = vadd.f32 %v2962, %v3260
        %v3349 = vadd.f32 %v2963, %v3265
        %v3350 = vadd.f32 %v2964, %v3268
        %v3351 = vadd.f32 %v2965, %v3273
        %v3352 = vadd.f32 %v2966, %v3276
        %v3353 = vadd.f32 %v2967, %v3281
        %v3354 = vadd.f32 %v2968, %v3284
        %v3355 = vadd.f32 %v2969, %v3289
        %v3356 = vadd.f32 %v2970, %v3292
        %v3357 = vadd.f32 %v2971, %v3297
        %v3358 = vadd.f32 %v2972, %v3300
        %v3359 = vadd.f32 %v2973, %v3305
        %v3360 = vadd.f32 %v2974, %v3308
        %v3361 = vadd.f32 %v2975, %v3313
        %v3362 = vadd.f32 %v2976, %v3316
        %v3363 = vadd.f32 %v2977, %v3321
        %v3364 = vadd.f32 %v2978, %v3324
        %v3365 = vadd.f32 %v2979, %v3329
        %v3366 = vadd.f32 %v2980, %v3332
        %s3367 = sadd.s32 %s631, 48
        %s3368 = smul.u32 %s3367, 13
        %s3369 = smul.addr %s3368, 4
        %s3370 = scalar_lea.vmem %s625, %s3369
        %v3371 = vld [vmem:[%s3370 + $0xc] sm:$0xf]
        %v3372 = vld [vmem:[%s3370 + $0x10] sm:$0xf]
        %v3373 = vld [vmem:[%s3370 + $0x14] sm:$0xf]
        %v3374 = vld [vmem:[%s3370 + $0x18] sm:$0xf]
        %v3375 = vld [vmem:[%s3370 + $0x40] sm:$0xf]
        %v3376 = vld [vmem:[%s3370 + $0x44] sm:$0xf]
        %v3377 = vld [vmem:[%s3370 + $0x48] sm:$0xf]
        %v3378 = vld [vmem:[%s3370 + $0x4c] sm:$0xf]
        %v3379 = vld [vmem:[%s3370 + $0x74] sm:$0xf]
        %v3380 = vld [vmem:[%s3370 + $0x78] sm:$0xf]
        %v3381 = vld [vmem:[%s3370 + $0x7c] sm:$0xf]
        %v3382 = vld [vmem:[%s3370 + $0x80] sm:$0xf]
        %v3383 = vld [vmem:[%s3370 + $0xa8] sm:$0xf]
        %v3384 = vld [vmem:[%s3370 + $0xac] sm:$0xf]
        %v3385 = vld [vmem:[%s3370 + $0xb0] sm:$0xf]
        %v3386 = vld [vmem:[%s3370 + $0xb4] sm:$0xf]
        %v3387 = vld [vmem:[%s3370 + $0xdc] sm:$0xf]
        %v3388 = vld [vmem:[%s3370 + $0xe0] sm:$0xf]
        %v3389 = vld [vmem:[%s3370 + $0xe4] sm:$0xf]
        %v3390 = vld [vmem:[%s3370 + $0xe8] sm:$0xf]
        %v3391 = vld [vmem:[%s3370 + $0x110] sm:$0xf]
        %v3392 = vld [vmem:[%s3370 + $0x114] sm:$0xf]
        %v3393 = vld [vmem:[%s3370 + $0x118] sm:$0xf]
        %v3394 = vld [vmem:[%s3370 + $0x11c] sm:$0xf]
        %v3395 = vld [vmem:[%s3370 + $0x144] sm:$0xf]
        %v3396 = vld [vmem:[%s3370 + $0x148] sm:$0xf]
        %v3397 = vld [vmem:[%s3370 + $0x14c] sm:$0xf]
        %v3398 = vld [vmem:[%s3370 + $0x150] sm:$0xf]
        %v3399 = vld [vmem:[%s3370 + $0x178] sm:$0xf]
        %v3400 = vld [vmem:[%s3370 + $0x17c] sm:$0xf]
        %v3401 = vld [vmem:[%s3370 + $0x180] sm:$0xf]
        %v3402 = vld [vmem:[%s3370 + $0x184] sm:$0xf]
        %s3403 = scalar_lea.vmem %s4, 192
        %v3404 = vld [vmem:[%s3403] sm:$0xf]
        %v3405 = vld [vmem:[%s3403 + $0x4] sm:$0xf]
        %v3406 = vld [vmem:[%s3403 + $0x8] sm:$0xf]
        %v3407 = vld [vmem:[%s3403 + $0xc] sm:$0xf]
        %v3408 = vld [vmem:[%s3403 + $0x10] sm:$0xf]
        %v3409 = vld [vmem:[%s3403 + $0x14] sm:$0xf]
        %v3410 = vld [vmem:[%s3403 + $0x18] sm:$0xf]
        %v3411 = vld [vmem:[%s3403 + $0x1c] sm:$0xf]
        %v3444 = vunpack.c.l.b16 %v3371
        %v3445 = vunpack.c.l.b16 %v3372
        %v3446 = vunpack.c.l.b16 %v3373
        %v3447 = vunpack.c.l.b16 %v3374
        %v3448 = vunpack.c.l.b16 %v3375
        %v3449 = vunpack.c.l.b16 %v3376
        %v3450 = vunpack.c.l.b16 %v3377
        %v3451 = vunpack.c.l.b16 %v3378
        %v3452 = vunpack.c.l.b16 %v3379
        %v3453 = vunpack.c.l.b16 %v3380
        %v3454 = vunpack.c.l.b16 %v3381
        %v3455 = vunpack.c.l.b16 %v3382
        %v3456 = vunpack.c.l.b16 %v3383
        %v3457 = vunpack.c.l.b16 %v3384
        %v3458 = vunpack.c.l.b16 %v3385
        %v3459 = vunpack.c.l.b16 %v3386
        %v3460 = vunpack.c.l.b16 %v3387
        %v3461 = vunpack.c.l.b16 %v3388
        %v3462 = vunpack.c.l.b16 %v3389
        %v3463 = vunpack.c.l.b16 %v3390
        %v3464 = vunpack.c.l.b16 %v3391
        %v3465 = vunpack.c.l.b16 %v3392
        %v3466 = vunpack.c.l.b16 %v3393
        %v3467 = vunpack.c.l.b16 %v3394
        %v3468 = vunpack.c.l.b16 %v3395
        %v3469 = vunpack.c.l.b16 %v3396
        %v3470 = vunpack.c.l.b16 %v3397
        %v3471 = vunpack.c.l.b16 %v3398
        %v3472 = vunpack.c.l.b16 %v3399
        %v3473 = vunpack.c.l.b16 %v3400
        %v3474 = vunpack.c.l.b16 %v3401
        %v3475 = vunpack.c.l.b16 %v3402
        %v3476 = vpack.c.b16 %v3445, %v3444
        %v3477 = vpack.c.b16 %v3447, %v3446
        %v3478 = vpack.c.b16 %v3449, %v3448
        %v3479 = vpack.c.b16 %v3451, %v3450
        %v3480 = vpack.c.b16 %v3453, %v3452
        %v3481 = vpack.c.b16 %v3455, %v3454
        %v3482 = vpack.c.b16 %v3457, %v3456
        %v3483 = vpack.c.b16 %v3459, %v3458
        %v3484 = vpack.c.b16 %v3461, %v3460
        %v3485 = vpack.c.b16 %v3463, %v3462
        %v3486 = vpack.c.b16 %v3465, %v3464
        %v3487 = vpack.c.b16 %v3467, %v3466
        %v3488 = vpack.c.b16 %v3469, %v3468
        %v3489 = vpack.c.b16 %v3471, %v3470
        %v3490 = vpack.c.b16 %v3473, %v3472
        %v3491 = vpack.c.b16 %v3475, %v3474
        %v3500 = vunpack.c.l.b16 %v3404
        %v3501 = vunpack.c.l.b16 %v3405
        %v3502 = vunpack.c.l.b16 %v3406
        %v3503 = vunpack.c.l.b16 %v3407
        %v3504 = vunpack.c.l.b16 %v3408
        %v3505 = vunpack.c.l.b16 %v3409
        %v3506 = vunpack.c.l.b16 %v3410
        %v3507 = vunpack.c.l.b16 %v3411
        %v3508 = vpack.c.b16 %v3501, %v3500
        %v3509 = vpack.c.b16 %v3503, %v3502
        %v3510 = vpack.c.b16 %v3505, %v3504
        %v3511 = vpack.c.b16 %v3507, %v3506
        %v3517 = vsel %vm910, %v3476, 0
        %v3520 = vsel %vm910, %v3477, 0
        %v3523 = vsel %vm910, %v3478, 0
        %v3526 = vsel %vm910, %v3479, 0
        %v3529 = vsel %vm910, %v3480, 0
        %v3532 = vsel %vm910, %v3481, 0
        %v3535 = vsel %vm910, %v3482, 0
        %v3538 = vsel %vm910, %v3483, 0
        %v3541 = vsel %vm910, %v3484, 0
        %v3544 = vsel %vm910, %v3485, 0
        %v3547 = vsel %vm910, %v3486, 0
        %v3550 = vsel %vm910, %v3487, 0
        %v3553 = vsel %vm910, %v3488, 0
        %v3556 = vsel %vm910, %v3489, 0
        %v3559 = vsel %vm910, %v3490, 0
        %v3562 = vsel %vm910, %v3491, 0
        %3564 = vmatprep.subr.bf16.mxu0 0
        %3565 = vmatpush1.bf16.msra.mxu0 %v3508
        %3566 = vmatprep.subr.bf16.mxu0 0
        %3567 = vmatpush1.bf16.msra.mxu0 %v3509
        %3568 = vmatprep.subr.bf16.mxu0 0
        %3569 = vmatpush1.bf16.msra.mxu0 %v3510
        %3570 = vmatprep.subr.bf16.mxu0 0
        %3571 = vmatpush1.bf16.msra.mxu0 %v3511
        %3572 = vmatprep.subr.bf16.mxu0 0
        %3573 = vmatpush1.bf16.msra.mxu0 0
        %3574 = vmatprep.subr.bf16.mxu0 0
        %3575 = vmatpush1.bf16.msra.mxu0 0
        %3576 = vmatprep.subr.bf16.mxu0 0
        %3577 = vmatpush1.bf16.msra.mxu0 0
        %3578 = vmatprep.subr.bf16.mxu0 0
        %3579 = vmatpush1.bf16.msra.mxu0 0
        %3580 = vmatprep.subr.bf16.mxu0 0
        %3581 = vmatpush1.bf16.msra.mxu0 0
        %3582 = vmatprep.subr.bf16.mxu0 0
        %3583 = vmatpush1.bf16.msra.mxu0 0
        %3584 = vmatprep.subr.bf16.mxu0 0
        %3585 = vmatpush1.bf16.msra.mxu0 0
        %3586 = vmatprep.subr.bf16.mxu0 0
        %3587 = vmatpush1.bf16.msra.mxu0 0
        %3588 = vmatprep.subr.bf16.mxu0 0
        %3589 = vmatpush1.bf16.msra.mxu0 0
        %3590 = vmatprep.subr.bf16.mxu0 0
        %3591 = vmatpush1.bf16.msra.mxu0 0
        %3592 = vmatprep.subr.bf16.mxu0 0
        %3593 = vmatpush1.bf16.msra.mxu0 0
        %3594 = vmatprep.subr.bf16.mxu0 0
        %3595 = vmatpush1.bf16.msra.mxu0 0
        %3596 = vmatprep.mubr.bf16.mxu0 0
        %3597 = vmatmul.mubr.bf16.gmra.mrb[0].mxu0 %v3517
        %v3598 = vpop.f32.mrb[0].mxu0
        %v3599 = vadd.f32 0.0, %v3598
        %v3600 = vpop.f32.mrb[0].mxu0
        %v3601 = vpop.f32.mrb[0].mxu0
        %v3602 = vadd.f32 0.0, %v3601
        %v3603 = vpop.f32.mrb[0].mxu0
        %3604 = vmatprep.mubr.bf16.mxu0 0
        %3605 = vmatmul.mubr.bf16.gmra.mrb[0].mxu0 %v3520
        %v3606 = vpop.f32.mrb[0].mxu0
        %v3607 = vadd.f32 0.0, %v3606
        %v3608 = vpop.f32.mrb[0].mxu0
        %v3609 = vpop.f32.mrb[0].mxu0
        %v3610 = vadd.f32 0.0, %v3609
        %v3611 = vpop.f32.mrb[0].mxu0
        %3612 = vmatprep.mubr.bf16.mxu0 0
        %3613 = vmatmul.mubr.bf16.gmra.mrb[0].mxu0 %v3523
        %v3614 = vpop.f32.mrb[0].mxu0
        %v3615 = vadd.f32 0.0, %v3614
        %v3616 = vpop.f32.mrb[0].mxu0
        %v3617 = vpop.f32.mrb[0].mxu0
        %v3618 = vadd.f32 0.0, %v3617
        %v3619 = vpop.f32.mrb[0].mxu0
        %3620 = vmatprep.mubr.bf16.mxu0 0
        %3621 = vmatmul.mubr.bf16.gmra.mrb[0].mxu0 %v3526
        %v3622 = vpop.f32.mrb[0].mxu0
        %v3623 = vadd.f32 0.0, %v3622
        %v3624 = vpop.f32.mrb[0].mxu0
        %v3625 = vpop.f32.mrb[0].mxu0
        %v3626 = vadd.f32 0.0, %v3625
        %v3627 = vpop.f32.mrb[0].mxu0
        %3628 = vmatprep.mubr.bf16.mxu0 0
        %3629 = vmatmul.mubr.bf16.gmra.mrb[0].mxu0 %v3529
        %v3630 = vpop.f32.mrb[0].mxu0
        %v3631 = vadd.f32 0.0, %v3630
        %v3632 = vpop.f32.mrb[0].mxu0
        %v3633 = vpop.f32.mrb[0].mxu0
        %v3634 = vadd.f32 0.0, %v3633
        %v3635 = vpop.f32.mrb[0].mxu0
        %3636 = vmatprep.mubr.bf16.mxu0 0
        %3637 = vmatmul.mubr.bf16.gmra.mrb[0].mxu0 %v3532
        %v3638 = vpop.f32.mrb[0].mxu0
        %v3639 = vadd.f32 0.0, %v3638
        %v3640 = vpop.f32.mrb[0].mxu0
        %v3641 = vpop.f32.mrb[0].mxu0
        %v3642 = vadd.f32 0.0, %v3641
        %v3643 = vpop.f32.mrb[0].mxu0
        %3644 = vmatprep.mubr.bf16.mxu0 0
        %3645 = vmatmul.mubr.bf16.gmra.mrb[0].mxu0 %v3535
        %v3646 = vpop.f32.mrb[0].mxu0
        %v3647 = vadd.f32 0.0, %v3646
        %v3648 = vpop.f32.mrb[0].mxu0
        %v3649 = vpop.f32.mrb[0].mxu0
        %v3650 = vadd.f32 0.0, %v3649
        %v3651 = vpop.f32.mrb[0].mxu0
        %3652 = vmatprep.mubr.bf16.mxu0 0
        %3653 = vmatmul.mubr.bf16.gmra.mrb[0].mxu0 %v3538
        %v3654 = vpop.f32.mrb[0].mxu0
        %v3655 = vadd.f32 0.0, %v3654
        %v3656 = vpop.f32.mrb[0].mxu0
        %v3657 = vpop.f32.mrb[0].mxu0
        %v3658 = vadd.f32 0.0, %v3657
        %v3659 = vpop.f32.mrb[0].mxu0
        %3660 = vmatprep.mubr.bf16.mxu0 0
        %3661 = vmatmul.mubr.bf16.gmra.mrb[0].mxu0 %v3541
        %v3662 = vpop.f32.mrb[0].mxu0
        %v3663 = vadd.f32 0.0, %v3662
        %v3664 = vpop.f32.mrb[0].mxu0
        %v3665 = vpop.f32.mrb[0].mxu0
        %v3666 = vadd.f32 0.0, %v3665
        %v3667 = vpop.f32.mrb[0].mxu0
        %3668 = vmatprep.mubr.bf16.mxu0 0
        %3669 = vmatmul.mubr.bf16.gmra.mrb[0].mxu0 %v3544
        %v3670 = vpop.f32.mrb[0].mxu0
        %v3671 = vadd.f32 0.0, %v3670
        %v3672 = vpop.f32.mrb[0].mxu0
        %v3673 = vpop.f32.mrb[0].mxu0
        %v3674 = vadd.f32 0.0, %v3673
        %v3675 = vpop.f32.mrb[0].mxu0
        %3676 = vmatprep.mubr.bf16.mxu0 0
        %3677 = vmatmul.mubr.bf16.gmra.mrb[0].mxu0 %v3547
        %v3678 = vpop.f32.mrb[0].mxu0
        %v3679 = vadd.f32 0.0, %v3678
        %v3680 = vpop.f32.mrb[0].mxu0
        %v3681 = vpop.f32.mrb[0].mxu0
        %v3682 = vadd.f32 0.0, %v3681
        %v3683 = vpop.f32.mrb[0].mxu0
        %3684 = vmatprep.mubr.bf16.mxu0 0
        %3685 = vmatmul.mubr.bf16.gmra.mrb[0].mxu0 %v3550
        %v3686 = vpop.f32.mrb[0].mxu0
        %v3687 = vadd.f32 0.0, %v3686
        %v3688 = vpop.f32.mrb[0].mxu0
        %v3689 = vpop.f32.mrb[0].mxu0
        %v3690 = vadd.f32 0.0, %v3689
        %v3691 = vpop.f32.mrb[0].mxu0
        %3692 = vmatprep.mubr.bf16.mxu0 0
        %3693 = vmatmul.mubr.bf16.gmra.mrb[0].mxu0 %v3553
        %v3694 = vpop.f32.mrb[0].mxu0
        %v3695 = vadd.f32 0.0, %v3694
        %v3696 = vpop.f32.mrb[0].mxu0
        %v3697 = vpop.f32.mrb[0].mxu0
        %v3698 = vadd.f32 0.0, %v3697
        %v3699 = vpop.f32.mrb[0].mxu0
        %3700 = vmatprep.mubr.bf16.mxu0 0
        %3701 = vmatmul.mubr.bf16.gmra.mrb[0].mxu0 %v3556
        %v3702 = vpop.f32.mrb[0].mxu0
        %v3703 = vadd.f32 0.0, %v3702
        %v3704 = vpop.f32.mrb[0].mxu0
        %v3705 = vpop.f32.mrb[0].mxu0
        %v3706 = vadd.f32 0.0, %v3705
        %v3707 = vpop.f32.mrb[0].mxu0
        %3708 = vmatprep.mubr.bf16.mxu0 0
        %3709 = vmatmul.mubr.bf16.gmra.mrb[0].mxu0 %v3559
        %v3710 = vpop.f32.mrb[0].mxu0
        %v3711 = vadd.f32 0.0, %v3710
        %v3712 = vpop.f32.mrb[0].mxu0
        %v3713 = vpop.f32.mrb[0].mxu0
        %v3714 = vadd.f32 0.0, %v3713
        %v3715 = vpop.f32.mrb[0].mxu0
        %3716 = vmatprep.mubr.bf16.mxu0 0
        %3717 = vmatmul.mubr.bf16.gmra.mrb[0].mxu0 %v3562
        %v3718 = vpop.f32.mrb[0].mxu0
        %v3719 = vadd.f32 0.0, %v3718
        %v3720 = vpop.f32.mrb[0].mxu0
        %v3721 = vpop.f32.mrb[0].mxu0
        %v3722 = vadd.f32 0.0, %v3721
        %v3723 = vpop.f32.mrb[0].mxu0
        %3724 = vdwg.mxu0
        %v3725 = vadd.f32 %v3335, %v3599
        %v3726 = vadd.f32 %v3336, %v3602
        %v3727 = vadd.f32 %v3337, %v3607
        %v3728 = vadd.f32 %v3338, %v3610
        %v3729 = vadd.f32 %v3339, %v3615
        %v3730 = vadd.f32 %v3340, %v3618
        %v3731 = vadd.f32 %v3341, %v3623
        %v3732 = vadd.f32 %v3342, %v3626
        %v3733 = vadd.f32 %v3343, %v3631
        %v3734 = vadd.f32 %v3344, %v3634
        %v3735 = vadd.f32 %v3345, %v3639
        %v3736 = vadd.f32 %v3346, %v3642
        %v3737 = vadd.f32 %v3347, %v3647
        %v3738 = vadd.f32 %v3348, %v3650
        %v3739 = vadd.f32 %v3349, %v3655
        %v3740 = vadd.f32 %v3350, %v3658
        %v3741 = vadd.f32 %v3351, %v3663
        %v3742 = vadd.f32 %v3352, %v3666
        %v3743 = vadd.f32 %v3353, %v3671
        %v3744 = vadd.f32 %v3354, %v3674
        %v3745 = vadd.f32 %v3355, %v3679
        %v3746 = vadd.f32 %v3356, %v3682
        %v3747 = vadd.f32 %v3357, %v3687
        %v3748 = vadd.f32 %v3358, %v3690
        %v3749 = vadd.f32 %v3359, %v3695
        %v3750 = vadd.f32 %v3360, %v3698
        %v3751 = vadd.f32 %v3361, %v3703
        %v3752 = vadd.f32 %v3362, %v3706
        %v3753 = vadd.f32 %v3363, %v3711
        %v3754 = vadd.f32 %v3364, %v3714
        %v3755 = vadd.f32 %v3365, %v3719
        %v3756 = vadd.f32 %v3366, %v3722
        %v3757 = vld [vmem:[%s3370 + $0x10] sm:$0xc]
        %v3758 = vld [vmem:[%s3370 + $0x14] sm:$0xf]
        %v3759 = vld [vmem:[%s3370 + $0x18] sm:$0xf]
        %v3760 = vld [vmem:[%s3370 + $0x1c] sm:$0xf]
        %v3761 = vld [vmem:[%s3370 + $0x20] sm:$0x3]
        %v3762 = vld [vmem:[%s3370 + $0x44] sm:$0xc]
        %v3763 = vld [vmem:[%s3370 + $0x48] sm:$0xf]
        %v3764 = vld [vmem:[%s3370 + $0x4c] sm:$0xf]
        %v3765 = vld [vmem:[%s3370 + $0x50] sm:$0xf]
        %v3766 = vld [vmem:[%s3370 + $0x54] sm:$0x3]
        %v3767 = vld [vmem:[%s3370 + $0x78] sm:$0xc]
        %v3768 = vld [vmem:[%s3370 + $0x7c] sm:$0xf]
        %v3769 = vld [vmem:[%s3370 + $0x80] sm:$0xf]
        %v3770 = vld [vmem:[%s3370 + $0x84] sm:$0xf]
        %v3771 = vld [vmem:[%s3370 + $0x88] sm:$0x3]
        %v3772 = vld [vmem:[%s3370 + $0xac] sm:$0xc]
        %v3773 = vld [vmem:[%s3370 + $0xb0] sm:$0xf]
        %v3774 = vld [vmem:[%s3370 + $0xb4] sm:$0xf]
        %v3775 = vld [vmem:[%s3370 + $0xb8] sm:$0xf]
        %v3776 = vld [vmem:[%s3370 + $0xbc] sm:$0x3]
        %v3777 = vld [vmem:[%s3370 + $0xe0] sm:$0xc]
        %v3778 = vld [vmem:[%s3370 + $0xe4] sm:$0xf]
        %v3779 = vld [vmem:[%s3370 + $0xe8] sm:$0xf]
        %v3780 = vld [vmem:[%s3370 + $0xec] sm:$0xf]
        %v3781 = vld [vmem:[%s3370 + $0xf0] sm:$0x3]
        %v3782 = vld [vmem:[%s3370 + $0x114] sm:$0xc]
        %v3783 = vld [vmem:[%s3370 + $0x118] sm:$0xf]
        %v3784 = vld [vmem:[%s3370 + $0x11c] sm:$0xf]
        %v3785 = vld [vmem:[%s3370 + $0x120] sm:$0xf]
        %v3786 = vld [vmem:[%s3370 + $0x124] sm:$0x3]
        %v3787 = vld [vmem:[%s3370 + $0x148] sm:$0xc]
        %v3788 = vld [vmem:[%s3370 + $0x14c] sm:$0xf]
        %v3789 = vld [vmem:[%s3370 + $0x150] sm:$0xf]
        %v3790 = vld [vmem:[%s3370 + $0x154] sm:$0xf]
        %v3791 = vld [vmem:[%s3370 + $0x158] sm:$0x3]
        %v3792 = vld [vmem:[%s3370 + $0x17c] sm:$0xc]
        %v3793 = vld [vmem:[%s3370 + $0x180] sm:$0xf]
        %v3794 = vld [vmem:[%s3370 + $0x184] sm:$0xf]
        %v3795 = vld [vmem:[%s3370 + $0x188] sm:$0xf]
        %v3796 = vld [vmem:[%s3370 + $0x18c] sm:$0x3]
        %v3837 = vrot.slane %v3757, 6
        %v3838 = vrot.slane %v3837, 4
        %v3839 = vrot.slane %v3758, 6
        %v3840 = vsel %vm718, %v3838, %v3839
        %v3841 = vrot.slane %v3839, 4
        %v3842 = vrot.slane %v3759, 6
        %v3843 = vsel %vm718, %v3841, %v3842
        %v3844 = vrot.slane %v3842, 4
        %v3845 = vrot.slane %v3760, 6
        %v3846 = vsel %vm718, %v3844, %v3845
        %v3847 = vrot.slane %v3845, 4
        %v3848 = vrot.slane %v3761, 6
        %v3849 = vsel %vm718, %v3847, %v3848
        %v3850 = vrot.slane %v3762, 6
        %v3851 = vrot.slane %v3850, 4
        %v3852 = vrot.slane %v3763, 6
        %v3853 = vsel %vm718, %v3851, %v3852
        %v3854 = vrot.slane %v3852, 4
        %v3855 = vrot.slane %v3764, 6
        %v3856 = vsel %vm718, %v3854, %v3855
        %v3857 = vrot.slane %v3855, 4
        %v3858 = vrot.slane %v3765, 6
        %v3859 = vsel %vm718, %v3857, %v3858
        %v3860 = vrot.slane %v3858, 4
        %v3861 = vrot.slane %v3766, 6
        %v3862 = vsel %vm718, %v3860, %v3861
        %v3863 = vrot.slane %v3767, 6
        %v3864 = vrot.slane %v3863, 4
        %v3865 = vrot.slane %v3768, 6
        %v3866 = vsel %vm718, %v3864, %v3865
        %v3867 = vrot.slane %v3865, 4
        %v3868 = vrot.slane %v3769, 6
        %v3869 = vsel %vm718, %v3867, %v3868
        %v3870 = vrot.slane %v3868, 4
        %v3871 = vrot.slane %v3770, 6
        %v3872 = vsel %vm718, %v3870, %v3871
        %v3873 = vrot.slane %v3871, 4
        %v3874 = vrot.slane %v3771, 6
        %v3875 = vsel %vm718, %v3873, %v3874
        %v3876 = vrot.slane %v3772, 6
        %v3877 = vrot.slane %v3876, 4
        %v3878 = vrot.slane %v3773, 6
        %v3879 = vsel %vm718, %v3877, %v3878
        %v3880 = vrot.slane %v3878, 4
        %v3881 = vrot.slane %v3774, 6
        %v3882 = vsel %vm718, %v3880, %v3881
        %v3883 = vrot.slane %v3881, 4
        %v3884 = vrot.slane %v3775, 6
        %v3885 = vsel %vm718, %v3883, %v3884
        %v3886 = vrot.slane %v3884, 4
        %v3887 = vrot.slane %v3776, 6
        %v3888 = vsel %vm718, %v3886, %v3887
        %v3889 = vrot.slane %v3777, 6
        %v3890 = vrot.slane %v3889, 4
        %v3891 = vrot.slane %v3778, 6
        %v3892 = vsel %vm718, %v3890, %v3891
        %v3893 = vrot.slane %v3891, 4
        %v3894 = vrot.slane %v3779, 6
        %v3895 = vsel %vm718, %v3893, %v3894
        %v3896 = vrot.slane %v3894, 4
        %v3897 = vrot.slane %v3780, 6
        %v3898 = vsel %vm718, %v3896, %v3897
        %v3899 = vrot.slane %v3897, 4
        %v3900 = vrot.slane %v3781, 6
        %v3901 = vsel %vm718, %v3899, %v3900
        %v3902 = vrot.slane %v3782, 6
        %v3903 = vrot.slane %v3902, 4
        %v3904 = vrot.slane %v3783, 6
        %v3905 = vsel %vm718, %v3903, %v3904
        %v3906 = vrot.slane %v3904, 4
        %v3907 = vrot.slane %v3784, 6
        %v3908 = vsel %vm718, %v3906, %v3907
        %v3909 = vrot.slane %v3907, 4
        %v3910 = vrot.slane %v3785, 6
        %v3911 = vsel %vm718, %v3909, %v3910
        %v3912 = vrot.slane %v3910, 4
        %v3913 = vrot.slane %v3786, 6
        %v3914 = vsel %vm718, %v3912, %v3913
        %v3915 = vrot.slane %v3787, 6
        %v3916 = vrot.slane %v3915, 4
        %v3917 = vrot.slane %v3788, 6
        %v3918 = vsel %vm718, %v3916, %v3917
        %v3919 = vrot.slane %v3917, 4
        %v3920 = vrot.slane %v3789, 6
        %v3921 = vsel %vm718, %v3919, %v3920
        %v3922 = vrot.slane %v3920, 4
        %v3923 = vrot.slane %v3790, 6
        %v3924 = vsel %vm718, %v3922, %v3923
        %v3925 = vrot.slane %v3923, 4
        %v3926 = vrot.slane %v3791, 6
        %v3927 = vsel %vm718, %v3925, %v3926
        %v3928 = vrot.slane %v3792, 6
        %v3929 = vrot.slane %v3928, 4
        %v3930 = vrot.slane %v3793, 6
        %v3931 = vsel %vm718, %v3929, %v3930
        %v3932 = vrot.slane %v3930, 4
        %v3933 = vrot.slane %v3794, 6
        %v3934 = vsel %vm718, %v3932, %v3933
        %v3935 = vrot.slane %v3933, 4
        %v3936 = vrot.slane %v3795, 6
        %v3937 = vsel %vm718, %v3935, %v3936
        %v3938 = vrot.slane %v3936, 4
        %v3939 = vrot.slane %v3796, 6
        %v3940 = vsel %vm718, %v3938, %v3939
        %s3941 = scalar_lea.vmem %s4, 224
        %v3942 = vld [vmem:[%s3941] sm:$0xf]
        %v3943 = vld [vmem:[%s3941 + $0x4] sm:$0xf]
        %v3944 = vld [vmem:[%s3941 + $0x8] sm:$0xf]
        %v3945 = vld [vmem:[%s3941 + $0xc] sm:$0xf]
        %v3946 = vld [vmem:[%s3941 + $0x10] sm:$0xf]
        %v3947 = vld [vmem:[%s3941 + $0x14] sm:$0xf]
        %v3948 = vld [vmem:[%s3941 + $0x18] sm:$0xf]
        %v3949 = vld [vmem:[%s3941 + $0x1c] sm:$0xf]
        %v3950 = vunpack.c.l.b16 %v3840
        %v3951 = vunpack.c.l.b16 %v3843
        %v3952 = vunpack.c.l.b16 %v3846
        %v3953 = vunpack.c.l.b16 %v3849
        %v3954 = vunpack.c.l.b16 %v3853
        %v3955 = vunpack.c.l.b16 %v3856
        %v3956 = vunpack.c.l.b16 %v3859
        %v3957 = vunpack.c.l.b16 %v3862
        %v3958 = vunpack.c.l.b16 %v3866
        %v3959 = vunpack.c.l.b16 %v3869
        %v3960 = vunpack.c.l.b16 %v3872
        %v3961 = vunpack.c.l.b16 %v3875
        %v3962 = vunpack.c.l.b16 %v3879
        %v3963 = vunpack.c.l.b16 %v3882
        %v3964 = vunpack.c.l.b16 %v3885
        %v3965 = vunpack.c.l.b16 %v3888
        %v3966 = vunpack.c.l.b16 %v3892
        %v3967 = vunpack.c.l.b16 %v3895
        %v3968 = vunpack.c.l.b16 %v3898
        %v3969 = vunpack.c.l.b16 %v3901
        %v3970 = vunpack.c.l.b16 %v3905
        %v3971 = vunpack.c.l.b16 %v3908
        %v3972 = vunpack.c.l.b16 %v3911
        %v3973 = vunpack.c.l.b16 %v3914
        %v3974 = vunpack.c.l.b16 %v3918
        %v3975 = vunpack.c.l.b16 %v3921
        %v3976 = vunpack.c.l.b16 %v3924
        %v3977 = vunpack.c.l.b16 %v3927
        %v3978 = vunpack.c.l.b16 %v3931
        %v3979 = vunpack.c.l.b16 %v3934
        %v3980 = vunpack.c.l.b16 %v3937
        %v3981 = vunpack.c.l.b16 %v3940
        %v3982 = vpack.c.b16 %v3951, %v3950
        %v3983 = vpack.c.b16 %v3953, %v3952
        %v3984 = vpack.c.b16 %v3955, %v3954
        %v3985 = vpack.c.b16 %v3957, %v3956
        %v3986 = vpack.c.b16 %v3959, %v3958
        %v3987 = vpack.c.b16 %v3961, %v3960
        %v3988 = vpack.c.b16 %v3963, %v3962
        %v3989 = vpack.c.b16 %v3965, %v3964
        %v3990 = vpack.c.b16 %v3967, %v3966
        %v3991 = vpack.c.b16 %v3969, %v3968
        %v3992 = vpack.c.b16 %v3971, %v3970
        %v3993 = vpack.c.b16 %v3973, %v3972
        %v3994 = vpack.c.b16 %v3975, %v3974
        %v3995 = vpack.c.b16 %v3977, %v3976
        %v3996 = vpack.c.b16 %v3979, %v3978
        %v3997 = vpack.c.b16 %v3981, %v3980
        %v4006 = vunpack.c.l.b16 %v3942
        %v4007 = vunpack.c.l.b16 %v3943
        %v4008 = vunpack.c.l.b16 %v3944
        %v4009 = vunpack.c.l.b16 %v3945
        %v4010 = vunpack.c.l.b16 %v3946
        %v4011 = vunpack.c.l.b16 %v3947
        %v4012 = vunpack.c.l.b16 %v3948
        %v4013 = vunpack.c.l.b16 %v3949
        %v4014 = vpack.c.b16 %v4007, %v4006
        %v4015 = vpack.c.b16 %v4009, %v4008
        %v4016 = vpack.c.b16 %v4011, %v4010
        %v4017 = vpack.c.b16 %v4013, %v4012
        %v4023 = vsel %vm910, %v3982, 0
        %v4026 = vsel %vm910, %v3983, 0
        %v4029 = vsel %vm910, %v3984, 0
        %v4032 = vsel %vm910, %v3985, 0
        %v4035 = vsel %vm910, %v3986, 0
        %v4038 = vsel %vm910, %v3987, 0
        %v4041 = vsel %vm910, %v3988, 0
        %v4044 = vsel %vm910, %v3989, 0
        %v4047 = vsel %vm910, %v3990, 0
        %v4050 = vsel %vm910, %v3991, 0
        %v4053 = vsel %vm910, %v3992, 0
        %v4056 = vsel %vm910, %v3993, 0
        %v4059 = vsel %vm910, %v3994, 0
        %v4062 = vsel %vm910, %v3995, 0
        %v4065 = vsel %vm910, %v3996, 0
        %v4068 = vsel %vm910, %v3997, 0
        %4070 = vmatprep.subr.bf16.mxu0 0
        %4071 = vmatpush1.bf16.msra.mxu0 %v4014
        %4072 = vmatprep.subr.bf16.mxu0 0
        %4073 = vmatpush1.bf16.msra.mxu0 %v4015
        %4074 = vmatprep.subr.bf16.mxu0 0
        %4075 = vmatpush1.bf16.msra.mxu0 %v4016
        %4076 = vmatprep.subr.bf16.mxu0 0
        %4077 = vmatpush1.bf16.msra.mxu0 %v4017
        %4078 = vmatprep.subr.bf16.mxu0 0
        %4079 = vmatpush1.bf16.msra.mxu0 0
        %4080 = vmatprep.subr.bf16.mxu0 0
        %4081 = vmatpush1.bf16.msra.mxu0 0
        %4082 = vmatprep.subr.bf16.mxu0 0
        %4083 = vmatpush1.bf16.msra.mxu0 0
        %4084 = vmatprep.subr.bf16.mxu0 0
        %4085 = vmatpush1.bf16.msra.mxu0 0
        %4086 = vmatprep.subr.bf16.mxu0 0
        %4087 = vmatpush1.bf16.msra.mxu0 0
        %4088 = vmatprep.subr.bf16.mxu0 0
        %4089 = vmatpush1.bf16.msra.mxu0 0
        %4090 = vmatprep.subr.bf16.mxu0 0
        %4091 = vmatpush1.bf16.msra.mxu0 0
        %4092 = vmatprep.subr.bf16.mxu0 0
        %4093 = vmatpush1.bf16.msra.mxu0 0
        %4094 = vmatprep.subr.bf16.mxu0 0
        %4095 = vmatpush1.bf16.msra.mxu0 0
        %4096 = vmatprep.subr.bf16.mxu0 0
        %4097 = vmatpush1.bf16.msra.mxu0 0
        %4098 = vmatprep.subr.bf16.mxu0 0
        %4099 = vmatpush1.bf16.msra.mxu0 0
        %4100 = vmatprep.subr.bf16.mxu0 0
        %4101 = vmatpush1.bf16.msra.mxu0 0
        %4102 = vmatprep.mubr.bf16.mxu0 0
        %4103 = vmatmul.mubr.bf16.gmra.mrb[0].mxu0 %v4023
        %v4104 = vpop.f32.mrb[0].mxu0
        %v4105 = vadd.f32 0.0, %v4104
        %v4106 = vpop.f32.mrb[0].mxu0
        %v4107 = vpop.f32.mrb[0].mxu0
        %v4108 = vadd.f32 0.0, %v4107
        %v4109 = vpop.f32.mrb[0].mxu0
        %4110 = vmatprep.mubr.bf16.mxu0 0
        %4111 = vmatmul.mubr.bf16.gmra.mrb[0].mxu0 %v4026
        %v4112 = vpop.f32.mrb[0].mxu0
        %v4113 = vadd.f32 0.0, %v4112
        %v4114 = vpop.f32.mrb[0].mxu0
        %v4115 = vpop.f32.mrb[0].mxu0
        %v4116 = vadd.f32 0.0, %v4115
        %v4117 = vpop.f32.mrb[0].mxu0
        %4118 = vmatprep.mubr.bf16.mxu0 0
        %4119 = vmatmul.mubr.bf16.gmra.mrb[0].mxu0 %v4029
        %v4120 = vpop.f32.mrb[0].mxu0
        %v4121 = vadd.f32 0.0, %v4120
        %v4122 = vpop.f32.mrb[0].mxu0
        %v4123 = vpop.f32.mrb[0].mxu0
        %v4124 = vadd.f32 0.0, %v4123
        %v4125 = vpop.f32.mrb[0].mxu0
        %4126 = vmatprep.mubr.bf16.mxu0 0
        %4127 = vmatmul.mubr.bf16.gmra.mrb[0].mxu0 %v4032
        %v4128 = vpop.f32.mrb[0].mxu0
        %v4129 = vadd.f32 0.0, %v4128
        %v4130 = vpop.f32.mrb[0].mxu0
        %v4131 = vpop.f32.mrb[0].mxu0
        %v4132 = vadd.f32 0.0, %v4131
        %v4133 = vpop.f32.mrb[0].mxu0
        %4134 = vmatprep.mubr.bf16.mxu0 0
        %4135 = vmatmul.mubr.bf16.gmra.mrb[0].mxu0 %v4035
        %v4136 = vpop.f32.mrb[0].mxu0
        %v4137 = vadd.f32 0.0, %v4136
        %v4138 = vpop.f32.mrb[0].mxu0
        %v4139 = vpop.f32.mrb[0].mxu0
        %v4140 = vadd.f32 0.0, %v4139
        %v4141 = vpop.f32.mrb[0].mxu0
        %4142 = vmatprep.mubr.bf16.mxu0 0
        %4143 = vmatmul.mubr.bf16.gmra.mrb[0].mxu0 %v4038
        %v4144 = vpop.f32.mrb[0].mxu0
        %v4145 = vadd.f32 0.0, %v4144
        %v4146 = vpop.f32.mrb[0].mxu0
        %v4147 = vpop.f32.mrb[0].mxu0
        %v4148 = vadd.f32 0.0, %v4147
        %v4149 = vpop.f32.mrb[0].mxu0
        %4150 = vmatprep.mubr.bf16.mxu0 0
        %4151 = vmatmul.mubr.bf16.gmra.mrb[0].mxu0 %v4041
        %v4152 = vpop.f32.mrb[0].mxu0
        %v4153 = vadd.f32 0.0, %v4152
        %v4154 = vpop.f32.mrb[0].mxu0
        %v4155 = vpop.f32.mrb[0].mxu0
        %v4156 = vadd.f32 0.0, %v4155
        %v4157 = vpop.f32.mrb[0].mxu0
        %4158 = vmatprep.mubr.bf16.mxu0 0
        %4159 = vmatmul.mubr.bf16.gmra.mrb[0].mxu0 %v4044
        %v4160 = vpop.f32.mrb[0].mxu0
        %v4161 = vadd.f32 0.0, %v4160
        %v4162 = vpop.f32.mrb[0].mxu0
        %v4163 = vpop.f32.mrb[0].mxu0
        %v4164 = vadd.f32 0.0, %v4163
        %v4165 = vpop.f32.mrb[0].mxu0
        %4166 = vmatprep.mubr.bf16.mxu0 0
        %4167 = vmatmul.mubr.bf16.gmra.mrb[0].mxu0 %v4047
        %v4168 = vpop.f32.mrb[0].mxu0
        %v4169 = vadd.f32 0.0, %v4168
        %v4170 = vpop.f32.mrb[0].mxu0
        %v4171 = vpop.f32.mrb[0].mxu0
        %v4172 = vadd.f32 0.0, %v4171
        %v4173 = vpop.f32.mrb[0].mxu0
        %4174 = vmatprep.mubr.bf16.mxu0 0
        %4175 = vmatmul.mubr.bf16.gmra.mrb[0].mxu0 %v4050
        %v4176 = vpop.f32.mrb[0].mxu0
        %v4177 = vadd.f32 0.0, %v4176
        %v4178 = vpop.f32.mrb[0].mxu0
        %v4179 = vpop.f32.mrb[0].mxu0
        %v4180 = vadd.f32 0.0, %v4179
        %v4181 = vpop.f32.mrb[0].mxu0
        %4182 = vmatprep.mubr.bf16.mxu0 0
        %4183 = vmatmul.mubr.bf16.gmra.mrb[0].mxu0 %v4053
        %v4184 = vpop.f32.mrb[0].mxu0
        %v4185 = vadd.f32 0.0, %v4184
        %v4186 = vpop.f32.mrb[0].mxu0
        %v4187 = vpop.f32.mrb[0].mxu0
        %v4188 = vadd.f32 0.0, %v4187
        %v4189 = vpop.f32.mrb[0].mxu0
        %4190 = vmatprep.mubr.bf16.mxu0 0
        %4191 = vmatmul.mubr.bf16.gmra.mrb[0].mxu0 %v4056
        %v4192 = vpop.f32.mrb[0].mxu0
        %v4193 = vadd.f32 0.0, %v4192
        %v4194 = vpop.f32.mrb[0].mxu0
        %v4195 = vpop.f32.mrb[0].mxu0
        %v4196 = vadd.f32 0.0, %v4195
        %v4197 = vpop.f32.mrb[0].mxu0
        %4198 = vmatprep.mubr.bf16.mxu0 0
        %4199 = vmatmul.mubr.bf16.gmra.mrb[0].mxu0 %v4059
        %v4200 = vpop.f32.mrb[0].mxu0
        %v4201 = vadd.f32 0.0, %v4200
        %v4202 = vpop.f32.mrb[0].mxu0
        %v4203 = vpop.f32.mrb[0].mxu0
        %v4204 = vadd.f32 0.0, %v4203
        %v4205 = vpop.f32.mrb[0].mxu0
        %4206 = vmatprep.mubr.bf16.mxu0 0
        %4207 = vmatmul.mubr.bf16.gmra.mrb[0].mxu0 %v4062
        %v4208 = vpop.f32.mrb[0].mxu0
        %v4209 = vadd.f32 0.0, %v4208
        %v4210 = vpop.f32.mrb[0].mxu0
        %v4211 = vpop.f32.mrb[0].mxu0
        %v4212 = vadd.f32 0.0, %v4211
        %v4213 = vpop.f32.mrb[0].mxu0
        %4214 = vmatprep.mubr.bf16.mxu0 0
        %4215 = vmatmul.mubr.bf16.gmra.mrb[0].mxu0 %v4065
        %v4216 = vpop.f32.mrb[0].mxu0
        %v4217 = vadd.f32 0.0, %v4216
        %v4218 = vpop.f32.mrb[0].mxu0
        %v4219 = vpop.f32.mrb[0].mxu0
        %v4220 = vadd.f32 0.0, %v4219
        %v4221 = vpop.f32.mrb[0].mxu0
        %4222 = vmatprep.mubr.bf16.mxu0 0
        %4223 = vmatmul.mubr.bf16.gmra.mrb[0].mxu0 %v4068
        %v4224 = vpop.f32.mrb[0].mxu0
        %v4225 = vadd.f32 0.0, %v4224
        %v4226 = vpop.f32.mrb[0].mxu0
        %v4227 = vpop.f32.mrb[0].mxu0
        %v4228 = vadd.f32 0.0, %v4227
        %v4229 = vpop.f32.mrb[0].mxu0
        %4230 = vdwg.mxu0
        %v4231 = vadd.f32 %v3725, %v4105
        %v4232 = vadd.f32 %v3726, %v4108
        %v4233 = vadd.f32 %v3727, %v4113
        %v4234 = vadd.f32 %v3728, %v4116
        %v4235 = vadd.f32 %v3729, %v4121
        %v4236 = vadd.f32 %v3730, %v4124
        %v4237 = vadd.f32 %v3731, %v4129
        %v4238 = vadd.f32 %v3732, %v4132
        %v4239 = vadd.f32 %v3733, %v4137
        %v4240 = vadd.f32 %v3734, %v4140
        %v4241 = vadd.f32 %v3735, %v4145
        %v4242 = vadd.f32 %v3736, %v4148
        %v4243 = vadd.f32 %v3737, %v4153
        %v4244 = vadd.f32 %v3738, %v4156
        %v4245 = vadd.f32 %v3739, %v4161
        %v4246 = vadd.f32 %v3740, %v4164
        %v4247 = vadd.f32 %v3741, %v4169
        %v4248 = vadd.f32 %v3742, %v4172
        %v4249 = vadd.f32 %v3743, %v4177
        %v4250 = vadd.f32 %v3744, %v4180
        %v4251 = vadd.f32 %v3745, %v4185
        %v4252 = vadd.f32 %v3746, %v4188
        %v4253 = vadd.f32 %v3747, %v4193
        %v4254 = vadd.f32 %v3748, %v4196
        %v4255 = vadd.f32 %v3749, %v4201
        %v4256 = vadd.f32 %v3750, %v4204
        %v4257 = vadd.f32 %v3751, %v4209
        %v4258 = vadd.f32 %v3752, %v4212
        %v4259 = vadd.f32 %v3753, %v4217
        %v4260 = vadd.f32 %v3754, %v4220
        %v4261 = vadd.f32 %v3755, %v4225
        %v4262 = vadd.f32 %v3756, %v4228
        %v4263 = vld [vmem:[%s3370 + $0x18] sm:$0xf]
        %v4264 = vld [vmem:[%s3370 + $0x1c] sm:$0xf]
        %v4265 = vld [vmem:[%s3370 + $0x20] sm:$0xf]
        %v4266 = vld [vmem:[%s3370 + $0x24] sm:$0xf]
        %v4267 = vld [vmem:[%s3370 + $0x4c] sm:$0xf]
        %v4268 = vld [vmem:[%s3370 + $0x50] sm:$0xf]
        %v4269 = vld [vmem:[%s3370 + $0x54] sm:$0xf]
        %v4270 = vld [vmem:[%s3370 + $0x58] sm:$0xf]
        %v4271 = vld [vmem:[%s3370 + $0x80] sm:$0xf]
        %v4272 = vld [vmem:[%s3370 + $0x84] sm:$0xf]
        %v4273 = vld [vmem:[%s3370 + $0x88] sm:$0xf]
        %v4274 = vld [vmem:[%s3370 + $0x8c] sm:$0xf]
        %v4275 = vld [vmem:[%s3370 + $0xb4] sm:$0xf]
        %v4276 = vld [vmem:[%s3370 + $0xb8] sm:$0xf]
        %v4277 = vld [vmem:[%s3370 + $0xbc] sm:$0xf]
        %v4278 = vld [vmem:[%s3370 + $0xc0] sm:$0xf]
        %v4279 = vld [vmem:[%s3370 + $0xe8] sm:$0xf]
        %v4280 = vld [vmem:[%s3370 + $0xec] sm:$0xf]
        %v4281 = vld [vmem:[%s3370 + $0xf0] sm:$0xf]
        %v4282 = vld [vmem:[%s3370 + $0xf4] sm:$0xf]
        %v4283 = vld [vmem:[%s3370 + $0x11c] sm:$0xf]
        %v4284 = vld [vmem:[%s3370 + $0x120] sm:$0xf]
        %v4285 = vld [vmem:[%s3370 + $0x124] sm:$0xf]
        %v4286 = vld [vmem:[%s3370 + $0x128] sm:$0xf]
        %v4287 = vld [vmem:[%s3370 + $0x150] sm:$0xf]
        %v4288 = vld [vmem:[%s3370 + $0x154] sm:$0xf]
        %v4289 = vld [vmem:[%s3370 + $0x158] sm:$0xf]
        %v4290 = vld [vmem:[%s3370 + $0x15c] sm:$0xf]
        %v4291 = vld [vmem:[%s3370 + $0x184] sm:$0xf]
        %v4292 = vld [vmem:[%s3370 + $0x188] sm:$0xf]
        %v4293 = vld [vmem:[%s3370 + $0x18c] sm:$0xf]
        %v4294 = vld [vmem:[%s3370 + $0x190] sm:$0xf]
        %s4295 = scalar_lea.vmem %s4, 256
        %v4296 = vld [vmem:[%s4295] sm:$0xf]
        %v4297 = vld [vmem:[%s4295 + $0x4] sm:$0xf]
        %v4298 = vld [vmem:[%s4295 + $0x8] sm:$0xf]
        %v4299 = vld [vmem:[%s4295 + $0xc] sm:$0xf]
        %v4300 = vld [vmem:[%s4295 + $0x10] sm:$0xf]
        %v4301 = vld [vmem:[%s4295 + $0x14] sm:$0xf]
        %v4302 = vld [vmem:[%s4295 + $0x18] sm:$0xf]
        %v4303 = vld [vmem:[%s4295 + $0x1c] sm:$0xf]
        %v4336 = vunpack.c.l.b16 %v4263
        %v4337 = vunpack.c.l.b16 %v4264
        %v4338 = vunpack.c.l.b16 %v4265
        %v4339 = vunpack.c.l.b16 %v4266
        %v4340 = vunpack.c.l.b16 %v4267
        %v4341 = vunpack.c.l.b16 %v4268
        %v4342 = vunpack.c.l.b16 %v4269
        %v4343 = vunpack.c.l.b16 %v4270
        %v4344 = vunpack.c.l.b16 %v4271
        %v4345 = vunpack.c.l.b16 %v4272
        %v4346 = vunpack.c.l.b16 %v4273
        %v4347 = vunpack.c.l.b16 %v4274
        %v4348 = vunpack.c.l.b16 %v4275
        %v4349 = vunpack.c.l.b16 %v4276
        %v4350 = vunpack.c.l.b16 %v4277
        %v4351 = vunpack.c.l.b16 %v4278
        %v4352 = vunpack.c.l.b16 %v4279
        %v4353 = vunpack.c.l.b16 %v4280
        %v4354 = vunpack.c.l.b16 %v4281
        %v4355 = vunpack.c.l.b16 %v4282
        %v4356 = vunpack.c.l.b16 %v4283
        %v4357 = vunpack.c.l.b16 %v4284
        %v4358 = vunpack.c.l.b16 %v4285
        %v4359 = vunpack.c.l.b16 %v4286
        %v4360 = vunpack.c.l.b16 %v4287
        %v4361 = vunpack.c.l.b16 %v4288
        %v4362 = vunpack.c.l.b16 %v4289
        %v4363 = vunpack.c.l.b16 %v4290
        %v4364 = vunpack.c.l.b16 %v4291
        %v4365 = vunpack.c.l.b16 %v4292
        %v4366 = vunpack.c.l.b16 %v4293
        %v4367 = vunpack.c.l.b16 %v4294
        %v4368 = vpack.c.b16 %v4337, %v4336
        %v4369 = vpack.c.b16 %v4339, %v4338
        %v4370 = vpack.c.b16 %v4341, %v4340
        %v4371 = vpack.c.b16 %v4343, %v4342
        %v4372 = vpack.c.b16 %v4345, %v4344
        %v4373 = vpack.c.b16 %v4347, %v4346
        %v4374 = vpack.c.b16 %v4349, %v4348
        %v4375 = vpack.c.b16 %v4351, %v4350
        %v4376 = vpack.c.b16 %v4353, %v4352
        %v4377 = vpack.c.b16 %v4355, %v4354
        %v4378 = vpack.c.b16 %v4357, %v4356
        %v4379 = vpack.c.b16 %v4359, %v4358
        %v4380 = vpack.c.b16 %v4361, %v4360
        %v4381 = vpack.c.b16 %v4363, %v4362
        %v4382 = vpack.c.b16 %v4365, %v4364
        %v4383 = vpack.c.b16 %v4367, %v4366
        %v4392 = vunpack.c.l.b16 %v4296
        %v4393 = vunpack.c.l.b16 %v4297
        %v4394 = vunpack.c.l.b16 %v4298
        %v4395 = vunpack.c.l.b16 %v4299
        %v4396 = vunpack.c.l.b16 %v4300
        %v4397 = vunpack.c.l.b16 %v4301
        %v4398 = vunpack.c.l.b16 %v4302
        %v4399 = vunpack.c.l.b16 %v4303
        %v4400 = vpack.c.b16 %v4393, %v4392
        %v4401 = vpack.c.b16 %v4395, %v4394
        %v4402 = vpack.c.b16 %v4397, %v4396
        %v4403 = vpack.c.b16 %v4399, %v4398
        %v4409 = vsel %vm910, %v4368, 0
        %v4412 = vsel %vm910, %v4369, 0
        %v4415 = vsel %vm910, %v4370, 0
        %v4418 = vsel %vm910, %v4371, 0
        %v4421 = vsel %vm910, %v4372, 0
        %v4424 = vsel %vm910, %v4373, 0
        %v4427 = vsel %vm910, %v4374, 0
        %v4430 = vsel %vm910, %v4375, 0
        %v4433 = vsel %vm910, %v4376, 0
        %v4436 = vsel %vm910, %v4377, 0
        %v4439 = vsel %vm910, %v4378, 0
        %v4442 = vsel %vm910, %v4379, 0
        %v4445 = vsel %vm910, %v4380, 0
        %v4448 = vsel %vm910, %v4381, 0
        %v4451 = vsel %vm910, %v4382, 0
        %v4454 = vsel %vm910, %v4383, 0
        %4456 = vmatprep.subr.bf16.mxu0 0
        %4457 = vmatpush1.bf16.msra.mxu0 %v4400
        %4458 = vmatprep.subr.bf16.mxu0 0
        %4459 = vmatpush1.bf16.msra.mxu0 %v4401
        %4460 = vmatprep.subr.bf16.mxu0 0
        %4461 = vmatpush1.bf16.msra.mxu0 %v4402
        %4462 = vmatprep.subr.bf16.mxu0 0
        %4463 = vmatpush1.bf16.msra.mxu0 %v4403
        %4464 = vmatprep.subr.bf16.mxu0 0
        %4465 = vmatpush1.bf16.msra.mxu0 0
        %4466 = vmatprep.subr.bf16.mxu0 0
        %4467 = vmatpush1.bf16.msra.mxu0 0
        %4468 = vmatprep.subr.bf16.mxu0 0
        %4469 = vmatpush1.bf16.msra.mxu0 0
        %4470 = vmatprep.subr.bf16.mxu0 0
        %4471 = vmatpush1.bf16.msra.mxu0 0
        %4472 = vmatprep.subr.bf16.mxu0 0
        %4473 = vmatpush1.bf16.msra.mxu0 0
        %4474 = vmatprep.subr.bf16.mxu0 0
        %4475 = vmatpush1.bf16.msra.mxu0 0
        %4476 = vmatprep.subr.bf16.mxu0 0
        %4477 = vmatpush1.bf16.msra.mxu0 0
        %4478 = vmatprep.subr.bf16.mxu0 0
        %4479 = vmatpush1.bf16.msra.mxu0 0
        %4480 = vmatprep.subr.bf16.mxu0 0
        %4481 = vmatpush1.bf16.msra.mxu0 0
        %4482 = vmatprep.subr.bf16.mxu0 0
        %4483 = vmatpush1.bf16.msra.mxu0 0
        %4484 = vmatprep.subr.bf16.mxu0 0
        %4485 = vmatpush1.bf16.msra.mxu0 0
        %4486 = vmatprep.subr.bf16.mxu0 0
        %4487 = vmatpush1.bf16.msra.mxu0 0
        %4488 = vmatprep.mubr.bf16.mxu0 0
        %4489 = vmatmul.mubr.bf16.gmra.mrb[0].mxu0 %v4409
        %v4490 = vpop.f32.mrb[0].mxu0
        %v4491 = vadd.f32 0.0, %v4490
        %v4492 = vpop.f32.mrb[0].mxu0
        %v4493 = vpop.f32.mrb[0].mxu0
        %v4494 = vadd.f32 0.0, %v4493
        %v4495 = vpop.f32.mrb[0].mxu0
        %4496 = vmatprep.mubr.bf16.mxu0 0
        %4497 = vmatmul.mubr.bf16.gmra.mrb[0].mxu0 %v4412
        %v4498 = vpop.f32.mrb[0].mxu0
        %v4499 = vadd.f32 0.0, %v4498
        %v4500 = vpop.f32.mrb[0].mxu0
        %v4501 = vpop.f32.mrb[0].mxu0
        %v4502 = vadd.f32 0.0, %v4501
        %v4503 = vpop.f32.mrb[0].mxu0
        %4504 = vmatprep.mubr.bf16.mxu0 0
        %4505 = vmatmul.mubr.bf16.gmra.mrb[0].mxu0 %v4415
        %v4506 = vpop.f32.mrb[0].mxu0
        %v4507 = vadd.f32 0.0, %v4506
        %v4508 = vpop.f32.mrb[0].mxu0
        %v4509 = vpop.f32.mrb[0].mxu0
        %v4510 = vadd.f32 0.0, %v4509
        %v4511 = vpop.f32.mrb[0].mxu0
        %4512 = vmatprep.mubr.bf16.mxu0 0
        %4513 = vmatmul.mubr.bf16.gmra.mrb[0].mxu0 %v4418
        %v4514 = vpop.f32.mrb[0].mxu0
        %v4515 = vadd.f32 0.0, %v4514
        %v4516 = vpop.f32.mrb[0].mxu0
        %v4517 = vpop.f32.mrb[0].mxu0
        %v4518 = vadd.f32 0.0, %v4517
        %v4519 = vpop.f32.mrb[0].mxu0
        %4520 = vmatprep.mubr.bf16.mxu0 0
        %4521 = vmatmul.mubr.bf16.gmra.mrb[0].mxu0 %v4421
        %v4522 = vpop.f32.mrb[0].mxu0
        %v4523 = vadd.f32 0.0, %v4522
        %v4524 = vpop.f32.mrb[0].mxu0
        %v4525 = vpop.f32.mrb[0].mxu0
        %v4526 = vadd.f32 0.0, %v4525
        %v4527 = vpop.f32.mrb[0].mxu0
        %4528 = vmatprep.mubr.bf16.mxu0 0
        %4529 = vmatmul.mubr.bf16.gmra.mrb[0].mxu0 %v4424
        %v4530 = vpop.f32.mrb[0].mxu0
        %v4531 = vadd.f32 0.0, %v4530
        %v4532 = vpop.f32.mrb[0].mxu0
        %v4533 = vpop.f32.mrb[0].mxu0
        %v4534 = vadd.f32 0.0, %v4533
        %v4535 = vpop.f32.mrb[0].mxu0
        %4536 = vmatprep.mubr.bf16.mxu0 0
        %4537 = vmatmul.mubr.bf16.gmra.mrb[0].mxu0 %v4427
        %v4538 = vpop.f32.mrb[0].mxu0
        %v4539 = vadd.f32 0.0, %v4538
        %v4540 = vpop.f32.mrb[0].mxu0
        %v4541 = vpop.f32.mrb[0].mxu0
        %v4542 = vadd.f32 0.0, %v4541
        %v4543 = vpop.f32.mrb[0].mxu0
        %4544 = vmatprep.mubr.bf16.mxu0 0
        %4545 = vmatmul.mubr.bf16.gmra.mrb[0].mxu0 %v4430
        %v4546 = vpop.f32.mrb[0].mxu0
        %v4547 = vadd.f32 0.0, %v4546
        %v4548 = vpop.f32.mrb[0].mxu0
        %v4549 = vpop.f32.mrb[0].mxu0
        %v4550 = vadd.f32 0.0, %v4549
        %v4551 = vpop.f32.mrb[0].mxu0
        %4552 = vmatprep.mubr.bf16.mxu0 0
        %4553 = vmatmul.mubr.bf16.gmra.mrb[0].mxu0 %v4433
        %v4554 = vpop.f32.mrb[0].mxu0
        %v4555 = vadd.f32 0.0, %v4554
        %v4556 = vpop.f32.mrb[0].mxu0
        %v4557 = vpop.f32.mrb[0].mxu0
        %v4558 = vadd.f32 0.0, %v4557
        %v4559 = vpop.f32.mrb[0].mxu0
        %4560 = vmatprep.mubr.bf16.mxu0 0
        %4561 = vmatmul.mubr.bf16.gmra.mrb[0].mxu0 %v4436
        %v4562 = vpop.f32.mrb[0].mxu0
        %v4563 = vadd.f32 0.0, %v4562
        %v4564 = vpop.f32.mrb[0].mxu0
        %v4565 = vpop.f32.mrb[0].mxu0
        %v4566 = vadd.f32 0.0, %v4565
        %v4567 = vpop.f32.mrb[0].mxu0
        %4568 = vmatprep.mubr.bf16.mxu0 0
        %4569 = vmatmul.mubr.bf16.gmra.mrb[0].mxu0 %v4439
        %v4570 = vpop.f32.mrb[0].mxu0
        %v4571 = vadd.f32 0.0, %v4570
        %v4572 = vpop.f32.mrb[0].mxu0
        %v4573 = vpop.f32.mrb[0].mxu0
        %v4574 = vadd.f32 0.0, %v4573
        %v4575 = vpop.f32.mrb[0].mxu0
        %4576 = vmatprep.mubr.bf16.mxu0 0
        %4577 = vmatmul.mubr.bf16.gmra.mrb[0].mxu0 %v4442
        %v4578 = vpop.f32.mrb[0].mxu0
        %v4579 = vadd.f32 0.0, %v4578
        %v4580 = vpop.f32.mrb[0].mxu0
        %v4581 = vpop.f32.mrb[0].mxu0
        %v4582 = vadd.f32 0.0, %v4581
        %v4583 = vpop.f32.mrb[0].mxu0
        %4584 = vmatprep.mubr.bf16.mxu0 0
        %4585 = vmatmul.mubr.bf16.gmra.mrb[0].mxu0 %v4445
        %v4586 = vpop.f32.mrb[0].mxu0
        %v4587 = vadd.f32 0.0, %v4586
        %v4588 = vpop.f32.mrb[0].mxu0
        %v4589 = vpop.f32.mrb[0].mxu0
        %v4590 = vadd.f32 0.0, %v4589
        %v4591 = vpop.f32.mrb[0].mxu0
        %4592 = vmatprep.mubr.bf16.mxu0 0
        %4593 = vmatmul.mubr.bf16.gmra.mrb[0].mxu0 %v4448
        %v4594 = vpop.f32.mrb[0].mxu0
        %v4595 = vadd.f32 0.0, %v4594
        %v4596 = vpop.f32.mrb[0].mxu0
        %v4597 = vpop.f32.mrb[0].mxu0
        %v4598 = vadd.f32 0.0, %v4597
        %v4599 = vpop.f32.mrb[0].mxu0
        %4600 = vmatprep.mubr.bf16.mxu0 0
        %4601 = vmatmul.mubr.bf16.gmra.mrb[0].mxu0 %v4451
        %v4602 = vpop.f32.mrb[0].mxu0
        %v4603 = vadd.f32 0.0, %v4602
        %v4604 = vpop.f32.mrb[0].mxu0
        %v4605 = vpop.f32.mrb[0].mxu0
        %v4606 = vadd.f32 0.0, %v4605
        %v4607 = vpop.f32.mrb[0].mxu0
        %4608 = vmatprep.mubr.bf16.mxu0 0
        %4609 = vmatmul.mubr.bf16.gmra.mrb[0].mxu0 %v4454
        %v4610 = vpop.f32.mrb[0].mxu0
        %v4611 = vadd.f32 0.0, %v4610
        %v4612 = vpop.f32.mrb[0].mxu0
        %v4613 = vpop.f32.mrb[0].mxu0
        %v4614 = vadd.f32 0.0, %v4613
        %v4615 = vpop.f32.mrb[0].mxu0
        %4616 = vdwg.mxu0
        %v4617 = vadd.f32 %v4231, %v4491
        %v4618 = vadd.f32 %v4232, %v4494
        %v4619 = vadd.f32 %v4233, %v4499
        %v4620 = vadd.f32 %v4234, %v4502
        %v4621 = vadd.f32 %v4235, %v4507
        %v4622 = vadd.f32 %v4236, %v4510
        %v4623 = vadd.f32 %v4237, %v4515
        %v4624 = vadd.f32 %v4238, %v4518
        %v4625 = vadd.f32 %v4239, %v4523
        %v4626 = vadd.f32 %v4240, %v4526
        %v4627 = vadd.f32 %v4241, %v4531
        %v4628 = vadd.f32 %v4242, %v4534
        %v4629 = vadd.f32 %v4243, %v4539
        %v4630 = vadd.f32 %v4244, %v4542
        %v4631 = vadd.f32 %v4245, %v4547
        %v4632 = vadd.f32 %v4246, %v4550
        %v4633 = vadd.f32 %v4247, %v4555
        %v4634 = vadd.f32 %v4248, %v4558
        %v4635 = vadd.f32 %v4249, %v4563
        %v4636 = vadd.f32 %v4250, %v4566
        %v4637 = vadd.f32 %v4251, %v4571
        %v4638 = vadd.f32 %v4252, %v4574
        %v4639 = vadd.f32 %v4253, %v4579
        %v4640 = vadd.f32 %v4254, %v4582
        %v4641 = vadd.f32 %v4255, %v4587
        %v4642 = vadd.f32 %v4256, %v4590
        %v4643 = vadd.f32 %v4257, %v4595
        %v4644 = vadd.f32 %v4258, %v4598
        %v4645 = vadd.f32 %v4259, %v4603
        %v4646 = vadd.f32 %v4260, %v4606
        %v4647 = vadd.f32 %v4261, %v4611
        %v4648 = vadd.f32 %v4262, %v4614
        %v4649 = vld [vmem:[%s5] sm:$0x1]
        %v4651 = vlaneseq
        %v4652 = vshrl.u32 %v4651, 7
        %v4653 = vsub.s32 0, %v4652
        %v4654 = vrot.slane %v4649, %v4653
        %v4656 = vadd.f32 %v4617, %v4654
        %v4657 = vadd.f32 %v4618, %v4654
        %v4658 = vadd.f32 %v4619, %v4654
        %v4659 = vadd.f32 %v4620, %v4654
        %v4660 = vadd.f32 %v4621, %v4654
        %v4661 = vadd.f32 %v4622, %v4654
        %v4662 = vadd.f32 %v4623, %v4654
        %v4663 = vadd.f32 %v4624, %v4654
        %v4664 = vadd.f32 %v4625, %v4654
        %v4665 = vadd.f32 %v4626, %v4654
        %v4666 = vadd.f32 %v4627, %v4654
        %v4667 = vadd.f32 %v4628, %v4654
        %v4668 = vadd.f32 %v4629, %v4654
        %v4669 = vadd.f32 %v4630, %v4654
        %v4670 = vadd.f32 %v4631, %v4654
        %v4671 = vadd.f32 %v4632, %v4654
        %v4672 = vadd.f32 %v4633, %v4654
        %v4673 = vadd.f32 %v4634, %v4654
        %v4674 = vadd.f32 %v4635, %v4654
        %v4675 = vadd.f32 %v4636, %v4654
        %v4676 = vadd.f32 %v4637, %v4654
        %v4677 = vadd.f32 %v4638, %v4654
        %v4678 = vadd.f32 %v4639, %v4654
        %v4679 = vadd.f32 %v4640, %v4654
        %v4680 = vadd.f32 %v4641, %v4654
        %v4681 = vadd.f32 %v4642, %v4654
        %v4682 = vadd.f32 %v4643, %v4654
        %v4683 = vadd.f32 %v4644, %v4654
        %v4684 = vadd.f32 %v4645, %v4654
        %v4685 = vadd.f32 %v4646, %v4654
        %v4686 = vadd.f32 %v4647, %v4654
        %v4687 = vadd.f32 %v4648, %v4654
        %v4688 = vmax.f32 %v4656, 0.0
        %v4689 = vmax.f32 %v4657, 0.0
        %v4690 = vmax.f32 %v4658, 0.0
        %v4691 = vmax.f32 %v4659, 0.0
        %v4692 = vmax.f32 %v4660, 0.0
        %v4693 = vmax.f32 %v4661, 0.0
        %v4694 = vmax.f32 %v4662, 0.0
        %v4695 = vmax.f32 %v4663, 0.0
        %v4696 = vmax.f32 %v4664, 0.0
        %v4697 = vmax.f32 %v4665, 0.0
        %v4698 = vmax.f32 %v4666, 0.0
        %v4699 = vmax.f32 %v4667, 0.0
        %v4700 = vmax.f32 %v4668, 0.0
        %v4701 = vmax.f32 %v4669, 0.0
        %v4702 = vmax.f32 %v4670, 0.0
        %v4703 = vmax.f32 %v4671, 0.0
        %v4704 = vmax.f32 %v4672, 0.0
        %v4705 = vmax.f32 %v4673, 0.0
        %v4706 = vmax.f32 %v4674, 0.0
        %v4707 = vmax.f32 %v4675, 0.0
        %v4708 = vmax.f32 %v4676, 0.0
        %v4709 = vmax.f32 %v4677, 0.0
        %v4710 = vmax.f32 %v4678, 0.0
        %v4711 = vmax.f32 %v4679, 0.0
        %v4712 = vmax.f32 %v4680, 0.0
        %v4713 = vmax.f32 %v4681, 0.0
        %v4714 = vmax.f32 %v4682, 0.0
        %v4715 = vmax.f32 %v4683, 0.0
        %v4716 = vmax.f32 %v4684, 0.0
        %v4717 = vmax.f32 %v4685, 0.0
        %v4718 = vmax.f32 %v4686, 0.0
        %v4719 = vmax.f32 %v4687, 0.0
        %v4720 = vpack.c.bf16 %v4689, %v4688
        %v4721 = vpack.c.bf16 %v4691, %v4690
        %v4722 = vpack.c.bf16 %v4693, %v4692
        %v4723 = vpack.c.bf16 %v4695, %v4694
        %v4724 = vpack.c.bf16 %v4697, %v4696
        %v4725 = vpack.c.bf16 %v4699, %v4698
        %v4726 = vpack.c.bf16 %v4701, %v4700
        %v4727 = vpack.c.bf16 %v4703, %v4702
        %v4728 = vpack.c.bf16 %v4705, %v4704
        %v4729 = vpack.c.bf16 %v4707, %v4706
        %v4730 = vpack.c.bf16 %v4709, %v4708
        %v4731 = vpack.c.bf16 %v4711, %v4710
        %v4732 = vpack.c.bf16 %v4713, %v4712
        %v4733 = vpack.c.bf16 %v4715, %v4714
        %v4734 = vpack.c.bf16 %v4717, %v4716
        %v4735 = vpack.c.bf16 %v4719, %v4718
        %v4736 = vld [vmem:[%s13] sm:$0xf]
        %v4737 = vld [vmem:[%s13 + $0x4] sm:$0xf]
        %v4738 = vld [vmem:[%s13 + $0x8] sm:$0xf]
        %v4739 = vld [vmem:[%s13 + $0xc] sm:$0xf]
        %v4740 = vld [vmem:[%s13 + $0x10] sm:$0xf]
        %v4741 = vld [vmem:[%s13 + $0x14] sm:$0xf]
        %v4742 = vld [vmem:[%s13 + $0x18] sm:$0xf]
        %v4743 = vld [vmem:[%s13 + $0x1c] sm:$0xf]
        %v4744 = vld [vmem:[%s13 + $0x20] sm:$0xf]
        %v4745 = vld [vmem:[%s13 + $0x24] sm:$0xf]
        %v4746 = vld [vmem:[%s13 + $0x28] sm:$0xf]
        %v4747 = vld [vmem:[%s13 + $0x2c] sm:$0xf]
        %v4748 = vld [vmem:[%s13 + $0x30] sm:$0xf]
        %v4749 = vld [vmem:[%s13 + $0x34] sm:$0xf]
        %v4750 = vld [vmem:[%s13 + $0x38] sm:$0xf]
        %v4751 = vld [vmem:[%s13 + $0x3c] sm:$0xf]
        %v4768 = vunpack.c.l.b16 %v4736
        %v4769 = vunpack.c.l.b16 %v4737
        %v4770 = vunpack.c.l.b16 %v4738
        %v4771 = vunpack.c.l.b16 %v4739
        %v4772 = vunpack.c.l.b16 %v4740
        %v4773 = vunpack.c.l.b16 %v4741
        %v4774 = vunpack.c.l.b16 %v4742
        %v4775 = vunpack.c.l.b16 %v4743
        %v4776 = vunpack.c.l.b16 %v4744
        %v4777 = vunpack.c.l.b16 %v4745
        %v4778 = vunpack.c.l.b16 %v4746
        %v4779 = vunpack.c.l.b16 %v4747
        %v4780 = vunpack.c.l.b16 %v4748
        %v4781 = vunpack.c.l.b16 %v4749
        %v4782 = vunpack.c.l.b16 %v4750
        %v4783 = vunpack.c.l.b16 %v4751
        %v4784 = vpack.c.b16 %v4769, %v4768
        %v4785 = vpack.c.b16 %v4771, %v4770
        %v4786 = vpack.c.b16 %v4773, %v4772
        %v4787 = vpack.c.b16 %v4775, %v4774
        %v4788 = vpack.c.b16 %v4777, %v4776
        %v4789 = vpack.c.b16 %v4779, %v4778
        %v4790 = vpack.c.b16 %v4781, %v4780
        %v4791 = vpack.c.b16 %v4783, %v4782
        %4800 = vmatprep.subr.bf16.mxu0 0
        %4801 = vmatpush1.bf16.msra.mxu0 %v4784
        %4802 = vmatprep.subr.bf16.mxu0 0
        %4803 = vmatpush1.bf16.msra.mxu0 %v4785
        %4804 = vmatprep.subr.bf16.mxu0 0
        %4805 = vmatpush1.bf16.msra.mxu0 %v4786
        %4806 = vmatprep.subr.bf16.mxu0 0
        %4807 = vmatpush1.bf16.msra.mxu0 %v4787
        %4808 = vmatprep.subr.bf16.mxu0 0
        %4809 = vmatpush1.bf16.msra.mxu0 %v4788
        %4810 = vmatprep.subr.bf16.mxu0 0
        %4811 = vmatpush1.bf16.msra.mxu0 %v4789
        %4812 = vmatprep.subr.bf16.mxu0 0
        %4813 = vmatpush1.bf16.msra.mxu0 %v4790
        %4814 = vmatprep.subr.bf16.mxu0 0
        %4815 = vmatpush1.bf16.msra.mxu0 %v4791
        %4816 = vmatprep.subr.bf16.mxu0 0
        %4817 = vmatpush1.bf16.msra.mxu0 0
        %4818 = vmatprep.subr.bf16.mxu0 0
        %4819 = vmatpush1.bf16.msra.mxu0 0
        %4820 = vmatprep.subr.bf16.mxu0 0
        %4821 = vmatpush1.bf16.msra.mxu0 0
        %4822 = vmatprep.subr.bf16.mxu0 0
        %4823 = vmatpush1.bf16.msra.mxu0 0
        %4824 = vmatprep.subr.bf16.mxu0 0
        %4825 = vmatpush1.bf16.msra.mxu0 0
        %4826 = vmatprep.subr.bf16.mxu0 0
        %4827 = vmatpush1.bf16.msra.mxu0 0
        %4828 = vmatprep.subr.bf16.mxu0 0
        %4829 = vmatpush1.bf16.msra.mxu0 0
        %4830 = vmatprep.subr.bf16.mxu0 0
        %4831 = vmatpush1.bf16.msra.mxu0 0
        %4832 = vmatprep.mubr.bf16.mxu0 0
        %4833 = vmatmul.mubr.bf16.gmra.mrb[0].mxu0 %v4720
        %v4834 = vpop.f32.mrb[0].mxu0
        %v4835 = vadd.f32 0.0, %v4834
        %v4836 = vpop.f32.mrb[0].mxu0
        %v4837 = vpop.f32.mrb[0].mxu0
        %v4838 = vadd.f32 0.0, %v4837
        %v4839 = vpop.f32.mrb[0].mxu0
        %4840 = vmatprep.mubr.bf16.mxu0 0
        %4841 = vmatmul.mubr.bf16.gmra.mrb[0].mxu0 %v4721
        %v4842 = vpop.f32.mrb[0].mxu0
        %v4843 = vadd.f32 0.0, %v4842
        %v4844 = vpop.f32.mrb[0].mxu0
        %v4845 = vpop.f32.mrb[0].mxu0
        %v4846 = vadd.f32 0.0, %v4845
        %v4847 = vpop.f32.mrb[0].mxu0
        %4848 = vmatprep.mubr.bf16.mxu0 0
        %4849 = vmatmul.mubr.bf16.gmra.mrb[0].mxu0 %v4722
        %v4850 = vpop.f32.mrb[0].mxu0
        %v4851 = vadd.f32 0.0, %v4850
        %v4852 = vpop.f32.mrb[0].mxu0
        %v4853 = vpop.f32.mrb[0].mxu0
        %v4854 = vadd.f32 0.0, %v4853
        %v4855 = vpop.f32.mrb[0].mxu0
        %4856 = vmatprep.mubr.bf16.mxu0 0
        %4857 = vmatmul.mubr.bf16.gmra.mrb[0].mxu0 %v4723
        %v4858 = vpop.f32.mrb[0].mxu0
        %v4859 = vadd.f32 0.0, %v4858
        %v4860 = vpop.f32.mrb[0].mxu0
        %v4861 = vpop.f32.mrb[0].mxu0
        %v4862 = vadd.f32 0.0, %v4861
        %v4863 = vpop.f32.mrb[0].mxu0
        %4864 = vmatprep.mubr.bf16.mxu0 0
        %4865 = vmatmul.mubr.bf16.gmra.mrb[0].mxu0 %v4724
        %v4866 = vpop.f32.mrb[0].mxu0
        %v4867 = vadd.f32 0.0, %v4866
        %v4868 = vpop.f32.mrb[0].mxu0
        %v4869 = vpop.f32.mrb[0].mxu0
        %v4870 = vadd.f32 0.0, %v4869
        %v4871 = vpop.f32.mrb[0].mxu0
        %4872 = vmatprep.mubr.bf16.mxu0 0
        %4873 = vmatmul.mubr.bf16.gmra.mrb[0].mxu0 %v4725
        %v4874 = vpop.f32.mrb[0].mxu0
        %v4875 = vadd.f32 0.0, %v4874
        %v4876 = vpop.f32.mrb[0].mxu0
        %v4877 = vpop.f32.mrb[0].mxu0
        %v4878 = vadd.f32 0.0, %v4877
        %v4879 = vpop.f32.mrb[0].mxu0
        %4880 = vmatprep.mubr.bf16.mxu0 0
        %4881 = vmatmul.mubr.bf16.gmra.mrb[0].mxu0 %v4726
        %v4882 = vpop.f32.mrb[0].mxu0
        %v4883 = vadd.f32 0.0, %v4882
        %v4884 = vpop.f32.mrb[0].mxu0
        %v4885 = vpop.f32.mrb[0].mxu0
        %v4886 = vadd.f32 0.0, %v4885
        %v4887 = vpop.f32.mrb[0].mxu0
        %4888 = vmatprep.mubr.bf16.mxu0 0
        %4889 = vmatmul.mubr.bf16.gmra.mrb[0].mxu0 %v4727
        %v4890 = vpop.f32.mrb[0].mxu0
        %v4891 = vadd.f32 0.0, %v4890
        %v4892 = vpop.f32.mrb[0].mxu0
        %v4893 = vpop.f32.mrb[0].mxu0
        %v4894 = vadd.f32 0.0, %v4893
        %v4895 = vpop.f32.mrb[0].mxu0
        %4896 = vmatprep.mubr.bf16.mxu0 0
        %4897 = vmatmul.mubr.bf16.gmra.mrb[0].mxu0 %v4728
        %v4898 = vpop.f32.mrb[0].mxu0
        %v4899 = vadd.f32 0.0, %v4898
        %v4900 = vpop.f32.mrb[0].mxu0
        %v4901 = vpop.f32.mrb[0].mxu0
        %v4902 = vadd.f32 0.0, %v4901
        %v4903 = vpop.f32.mrb[0].mxu0
        %4904 = vmatprep.mubr.bf16.mxu0 0
        %4905 = vmatmul.mubr.bf16.gmra.mrb[0].mxu0 %v4729
        %v4906 = vpop.f32.mrb[0].mxu0
        %v4907 = vadd.f32 0.0, %v4906
        %v4908 = vpop.f32.mrb[0].mxu0
        %v4909 = vpop.f32.mrb[0].mxu0
        %v4910 = vadd.f32 0.0, %v4909
        %v4911 = vpop.f32.mrb[0].mxu0
        %4912 = vmatprep.mubr.bf16.mxu0 0
        %4913 = vmatmul.mubr.bf16.gmra.mrb[0].mxu0 %v4730
        %v4914 = vpop.f32.mrb[0].mxu0
        %v4915 = vadd.f32 0.0, %v4914
        %v4916 = vpop.f32.mrb[0].mxu0
        %v4917 = vpop.f32.mrb[0].mxu0
        %v4918 = vadd.f32 0.0, %v4917
        %v4919 = vpop.f32.mrb[0].mxu0
        %4920 = vmatprep.mubr.bf16.mxu0 0
        %4921 = vmatmul.mubr.bf16.gmra.mrb[0].mxu0 %v4731
        %v4922 = vpop.f32.mrb[0].mxu0
        %v4923 = vadd.f32 0.0, %v4922
        %v4924 = vpop.f32.mrb[0].mxu0
        %v4925 = vpop.f32.mrb[0].mxu0
        %v4926 = vadd.f32 0.0, %v4925
        %v4927 = vpop.f32.mrb[0].mxu0
        %4928 = vmatprep.mubr.bf16.mxu0 0
        %4929 = vmatmul.mubr.bf16.gmra.mrb[0].mxu0 %v4732
        %v4930 = vpop.f32.mrb[0].mxu0
        %v4931 = vadd.f32 0.0, %v4930
        %v4932 = vpop.f32.mrb[0].mxu0
        %v4933 = vpop.f32.mrb[0].mxu0
        %v4934 = vadd.f32 0.0, %v4933
        %v4935 = vpop.f32.mrb[0].mxu0
        %4936 = vmatprep.mubr.bf16.mxu0 0
        %4937 = vmatmul.mubr.bf16.gmra.mrb[0].mxu0 %v4733
        %v4938 = vpop.f32.mrb[0].mxu0
        %v4939 = vadd.f32 0.0, %v4938
        %v4940 = vpop.f32.mrb[0].mxu0
        %v4941 = vpop.f32.mrb[0].mxu0
        %v4942 = vadd.f32 0.0, %v4941
        %v4943 = vpop.f32.mrb[0].mxu0
        %4944 = vmatprep.mubr.bf16.mxu0 0
        %4945 = vmatmul.mubr.bf16.gmra.mrb[0].mxu0 %v4734
        %v4946 = vpop.f32.mrb[0].mxu0
        %v4947 = vadd.f32 0.0, %v4946
        %v4948 = vpop.f32.mrb[0].mxu0
        %v4949 = vpop.f32.mrb[0].mxu0
        %v4950 = vadd.f32 0.0, %v4949
        %v4951 = vpop.f32.mrb[0].mxu0
        %4952 = vmatprep.mubr.bf16.mxu0 0
        %4953 = vmatmul.mubr.bf16.gmra.mrb[0].mxu0 %v4735
        %v4954 = vpop.f32.mrb[0].mxu0
        %v4955 = vadd.f32 0.0, %v4954
        %v4956 = vpop.f32.mrb[0].mxu0
        %v4957 = vpop.f32.mrb[0].mxu0
        %v4958 = vadd.f32 0.0, %v4957
        %v4959 = vpop.f32.mrb[0].mxu0
        %4960 = vdwg.mxu0
        %v4977 = vunpack.c.l.b16 %v1168
        %v4978 = vunpack.c.l.b16 %v1169
        %v4979 = vunpack.c.l.b16 %v1170
        %v4980 = vunpack.c.l.b16 %v1171
        %v4981 = vunpack.c.l.b16 %v1172
        %v4982 = vunpack.c.l.b16 %v1173
        %v4983 = vunpack.c.l.b16 %v1174
        %v4984 = vunpack.c.l.b16 %v1175
        %v4985 = vunpack.c.l.b16 %v1176
        %v4986 = vunpack.c.l.b16 %v1177
        %v4987 = vunpack.c.l.b16 %v1178
        %v4988 = vunpack.c.l.b16 %v1179
        %v4989 = vunpack.c.l.b16 %v1180
        %v4990 = vunpack.c.l.b16 %v1181
        %v4991 = vunpack.c.l.b16 %v1182
        %v4992 = vunpack.c.l.b16 %v1183
        %v4993 = vpack.c.b16 %v4978, %v4977
        %v4994 = vpack.c.b16 %v4980, %v4979
        %v4995 = vpack.c.b16 %v4982, %v4981
        %v4996 = vpack.c.b16 %v4984, %v4983
        %v4997 = vpack.c.b16 %v4986, %v4985
        %v4998 = vpack.c.b16 %v4988, %v4987
        %v4999 = vpack.c.b16 %v4990, %v4989
        %v5000 = vpack.c.b16 %v4992, %v4991
        %5009 = vmatprep.subr.bf16.mxu0 0
        %5010 = vmatpush1.bf16.msra.mxu0 %v4993
        %5011 = vmatprep.subr.bf16.mxu0 0
        %5012 = vmatpush1.bf16.msra.mxu0 %v4994
        %5013 = vmatprep.subr.bf16.mxu0 0
        %5014 = vmatpush1.bf16.msra.mxu0 %v4995
        %5015 = vmatprep.subr.bf16.mxu0 0
        %5016 = vmatpush1.bf16.msra.mxu0 %v4996
        %5017 = vmatprep.subr.bf16.mxu0 0
        %5018 = vmatpush1.bf16.msra.mxu0 %v4997
        %5019 = vmatprep.subr.bf16.mxu0 0
        %5020 = vmatpush1.bf16.msra.mxu0 %v4998
        %5021 = vmatprep.subr.bf16.mxu0 0
        %5022 = vmatpush1.bf16.msra.mxu0 %v4999
        %5023 = vmatprep.subr.bf16.mxu0 0
        %5024 = vmatpush1.bf16.msra.mxu0 %v5000
        %5025 = vmatprep.subr.bf16.mxu0 0
        %5026 = vmatpush1.bf16.msra.mxu0 0
        %5027 = vmatprep.subr.bf16.mxu0 0
        %5028 = vmatpush1.bf16.msra.mxu0 0
        %5029 = vmatprep.subr.bf16.mxu0 0
        %5030 = vmatpush1.bf16.msra.mxu0 0
        %5031 = vmatprep.subr.bf16.mxu0 0
        %5032 = vmatpush1.bf16.msra.mxu0 0
        %5033 = vmatprep.subr.bf16.mxu0 0
        %5034 = vmatpush1.bf16.msra.mxu0 0
        %5035 = vmatprep.subr.bf16.mxu0 0
        %5036 = vmatpush1.bf16.msra.mxu0 0
        %5037 = vmatprep.subr.bf16.mxu0 0
        %5038 = vmatpush1.bf16.msra.mxu0 0
        %5039 = vmatprep.subr.bf16.mxu0 0
        %5040 = vmatpush1.bf16.msra.mxu0 0
        %5041 = vmatprep.mubr.bf16.mxu0 0
        %5042 = vmatmul.mubr.bf16.gmra.mrb[0].mxu0 %v1152
        %v5043 = vpop.f32.mrb[0].mxu0
        %v5044 = vadd.f32 %v4835, %v5043
        %v5045 = vpop.f32.mrb[0].mxu0
        %v5046 = vpop.f32.mrb[0].mxu0
        %v5047 = vadd.f32 %v4838, %v5046
        %v5048 = vpop.f32.mrb[0].mxu0
        %5049 = vmatprep.mubr.bf16.mxu0 0
        %5050 = vmatmul.mubr.bf16.gmra.mrb[0].mxu0 %v1153
        %v5051 = vpop.f32.mrb[0].mxu0
        %v5052 = vadd.f32 %v4843, %v5051
        %v5053 = vpop.f32.mrb[0].mxu0
        %v5054 = vpop.f32.mrb[0].mxu0
        %v5055 = vadd.f32 %v4846, %v5054
        %v5056 = vpop.f32.mrb[0].mxu0
        %5057 = vmatprep.mubr.bf16.mxu0 0
        %5058 = vmatmul.mubr.bf16.gmra.mrb[0].mxu0 %v1154
        %v5059 = vpop.f32.mrb[0].mxu0
        %v5060 = vadd.f32 %v4851, %v5059
        %v5061 = vpop.f32.mrb[0].mxu0
        %v5062 = vpop.f32.mrb[0].mxu0
        %v5063 = vadd.f32 %v4854, %v5062
        %v5064 = vpop.f32.mrb[0].mxu0
        %5065 = vmatprep.mubr.bf16.mxu0 0
        %5066 = vmatmul.mubr.bf16.gmra.mrb[0].mxu0 %v1155
        %v5067 = vpop.f32.mrb[0].mxu0
        %v5068 = vadd.f32 %v4859, %v5067
        %v5069 = vpop.f32.mrb[0].mxu0
        %v5070 = vpop.f32.mrb[0].mxu0
        %v5071 = vadd.f32 %v4862, %v5070
        %v5072 = vpop.f32.mrb[0].mxu0
        %5073 = vmatprep.mubr.bf16.mxu0 0
        %5074 = vmatmul.mubr.bf16.gmra.mrb[0].mxu0 %v1156
        %v5075 = vpop.f32.mrb[0].mxu0
        %v5076 = vadd.f32 %v4867, %v5075
        %v5077 = vpop.f32.mrb[0].mxu0
        %v5078 = vpop.f32.mrb[0].mxu0
        %v5079 = vadd.f32 %v4870, %v5078
        %v5080 = vpop.f32.mrb[0].mxu0
        %5081 = vmatprep.mubr.bf16.mxu0 0
        %5082 = vmatmul.mubr.bf16.gmra.mrb[0].mxu0 %v1157
        %v5083 = vpop.f32.mrb[0].mxu0
        %v5084 = vadd.f32 %v4875, %v5083
        %v5085 = vpop.f32.mrb[0].mxu0
        %v5086 = vpop.f32.mrb[0].mxu0
        %v5087 = vadd.f32 %v4878, %v5086
        %v5088 = vpop.f32.mrb[0].mxu0
        %5089 = vmatprep.mubr.bf16.mxu0 0
        %5090 = vmatmul.mubr.bf16.gmra.mrb[0].mxu0 %v1158
        %v5091 = vpop.f32.mrb[0].mxu0
        %v5092 = vadd.f32 %v4883, %v5091
        %v5093 = vpop.f32.mrb[0].mxu0
        %v5094 = vpop.f32.mrb[0].mxu0
        %v5095 = vadd.f32 %v4886, %v5094
        %v5096 = vpop.f32.mrb[0].mxu0
        %5097 = vmatprep.mubr.bf16.mxu0 0
        %5098 = vmatmul.mubr.bf16.gmra.mrb[0].mxu0 %v1159
        %v5099 = vpop.f32.mrb[0].mxu0
        %v5100 = vadd.f32 %v4891, %v5099
        %v5101 = vpop.f32.mrb[0].mxu0
        %v5102 = vpop.f32.mrb[0].mxu0
        %v5103 = vadd.f32 %v4894, %v5102
        %v5104 = vpop.f32.mrb[0].mxu0
        %5105 = vmatprep.mubr.bf16.mxu0 0
        %5106 = vmatmul.mubr.bf16.gmra.mrb[0].mxu0 %v1160
        %v5107 = vpop.f32.mrb[0].mxu0
        %v5108 = vadd.f32 %v4899, %v5107
        %v5109 = vpop.f32.mrb[0].mxu0
        %v5110 = vpop.f32.mrb[0].mxu0
        %v5111 = vadd.f32 %v4902, %v5110
        %v5112 = vpop.f32.mrb[0].mxu0
        %5113 = vmatprep.mubr.bf16.mxu0 0
        %5114 = vmatmul.mubr.bf16.gmra.mrb[0].mxu0 %v1161
        %v5115 = vpop.f32.mrb[0].mxu0
        %v5116 = vadd.f32 %v4907, %v5115
        %v5117 = vpop.f32.mrb[0].mxu0
        %v5118 = vpop.f32.mrb[0].mxu0
        %v5119 = vadd.f32 %v4910, %v5118
        %v5120 = vpop.f32.mrb[0].mxu0
        %5121 = vmatprep.mubr.bf16.mxu0 0
        %5122 = vmatmul.mubr.bf16.gmra.mrb[0].mxu0 %v1162
        %v5123 = vpop.f32.mrb[0].mxu0
        %v5124 = vadd.f32 %v4915, %v5123
        %v5125 = vpop.f32.mrb[0].mxu0
        %v5126 = vpop.f32.mrb[0].mxu0
        %v5127 = vadd.f32 %v4918, %v5126
        %v5128 = vpop.f32.mrb[0].mxu0
        %5129 = vmatprep.mubr.bf16.mxu0 0
        %5130 = vmatmul.mubr.bf16.gmra.mrb[0].mxu0 %v1163
        %v5131 = vpop.f32.mrb[0].mxu0
        %v5132 = vadd.f32 %v4923, %v5131
        %v5133 = vpop.f32.mrb[0].mxu0
        %v5134 = vpop.f32.mrb[0].mxu0
        %v5135 = vadd.f32 %v4926, %v5134
        %v5136 = vpop.f32.mrb[0].mxu0
        %5137 = vmatprep.mubr.bf16.mxu0 0
        %5138 = vmatmul.mubr.bf16.gmra.mrb[0].mxu0 %v1164
        %v5139 = vpop.f32.mrb[0].mxu0
        %v5140 = vadd.f32 %v4931, %v5139
        %v5141 = vpop.f32.mrb[0].mxu0
        %v5142 = vpop.f32.mrb[0].mxu0
        %v5143 = vadd.f32 %v4934, %v5142
        %v5144 = vpop.f32.mrb[0].mxu0
        %5145 = vmatprep.mubr.bf16.mxu0 0
        %5146 = vmatmul.mubr.bf16.gmra.mrb[0].mxu0 %v1165
        %v5147 = vpop.f32.mrb[0].mxu0
        %v5148 = vadd.f32 %v4939, %v5147
        %v5149 = vpop.f32.mrb[0].mxu0
        %v5150 = vpop.f32.mrb[0].mxu0
        %v5151 = vadd.f32 %v4942, %v5150
        %v5152 = vpop.f32.mrb[0].mxu0
        %5153 = vmatprep.mubr.bf16.mxu0 0
        %5154 = vmatmul.mubr.bf16.gmra.mrb[0].mxu0 %v1166
        %v5155 = vpop.f32.mrb[0].mxu0
        %v5156 = vadd.f32 %v4947, %v5155
        %v5157 = vpop.f32.mrb[0].mxu0
        %v5158 = vpop.f32.mrb[0].mxu0
        %v5159 = vadd.f32 %v4950, %v5158
        %v5160 = vpop.f32.mrb[0].mxu0
        %5161 = vmatprep.mubr.bf16.mxu0 0
        %5162 = vmatmul.mubr.bf16.gmra.mrb[0].mxu0 %v1167
        %v5163 = vpop.f32.mrb[0].mxu0
        %v5164 = vadd.f32 %v4955, %v5163
        %v5165 = vpop.f32.mrb[0].mxu0
        %v5166 = vpop.f32.mrb[0].mxu0
        %v5167 = vadd.f32 %v4958, %v5166
        %v5168 = vpop.f32.mrb[0].mxu0
        %5169 = vdwg.mxu0
        %s5170 = sadd.s32 %s631, 12
        %s5171 = smul.u32 %s5170, 13
        %s5172 = smul.addr %s5171, 4
        %s5173 = scalar_lea.vmem %s625, %s5172
        %v5174 = vld [vmem:[%s5173 + $0x4] sm:$0xc]
        %v5175 = vld [vmem:[%s5173 + $0x8] sm:$0xf]
        %v5176 = vld [vmem:[%s5173 + $0xc] sm:$0xf]
        %v5177 = vld [vmem:[%s5173 + $0x10] sm:$0xf]
        %v5178 = vld [vmem:[%s5173 + $0x14] sm:$0x3]
        %v5179 = vld [vmem:[%s5173 + $0x38] sm:$0xc]
        %v5180 = vld [vmem:[%s5173 + $0x3c] sm:$0xf]
        %v5181 = vld [vmem:[%s5173 + $0x40] sm:$0xf]
        %v5182 = vld [vmem:[%s5173 + $0x44] sm:$0xf]
        %v5183 = vld [vmem:[%s5173 + $0x48] sm:$0x3]
        %v5184 = vld [vmem:[%s5173 + $0x6c] sm:$0xc]
        %v5185 = vld [vmem:[%s5173 + $0x70] sm:$0xf]
        %v5186 = vld [vmem:[%s5173 + $0x74] sm:$0xf]
        %v5187 = vld [vmem:[%s5173 + $0x78] sm:$0xf]
        %v5188 = vld [vmem:[%s5173 + $0x7c] sm:$0x3]
        %v5189 = vld [vmem:[%s5173 + $0xa0] sm:$0xc]
        %v5190 = vld [vmem:[%s5173 + $0xa4] sm:$0xf]
        %v5191 = vld [vmem:[%s5173 + $0xa8] sm:$0xf]
        %v5192 = vld [vmem:[%s5173 + $0xac] sm:$0xf]
        %v5193 = vld [vmem:[%s5173 + $0xb0] sm:$0x3]
        %v5194 = vld [vmem:[%s5173 + $0xd4] sm:$0xc]
        %v5195 = vld [vmem:[%s5173 + $0xd8] sm:$0xf]
        %v5196 = vld [vmem:[%s5173 + $0xdc] sm:$0xf]
        %v5197 = vld [vmem:[%s5173 + $0xe0] sm:$0xf]
        %v5198 = vld [vmem:[%s5173 + $0xe4] sm:$0x3]
        %v5199 = vld [vmem:[%s5173 + $0x108] sm:$0xc]
        %v5200 = vld [vmem:[%s5173 + $0x10c] sm:$0xf]
        %v5201 = vld [vmem:[%s5173 + $0x110] sm:$0xf]
        %v5202 = vld [vmem:[%s5173 + $0x114] sm:$0xf]
        %v5203 = vld [vmem:[%s5173 + $0x118] sm:$0x3]
        %v5204 = vld [vmem:[%s5173 + $0x13c] sm:$0xc]
        %v5205 = vld [vmem:[%s5173 + $0x140] sm:$0xf]
        %v5206 = vld [vmem:[%s5173 + $0x144] sm:$0xf]
        %v5207 = vld [vmem:[%s5173 + $0x148] sm:$0xf]
        %v5208 = vld [vmem:[%s5173 + $0x14c] sm:$0x3]
        %v5209 = vld [vmem:[%s5173 + $0x170] sm:$0xc]
        %v5210 = vld [vmem:[%s5173 + $0x174] sm:$0xf]
        %v5211 = vld [vmem:[%s5173 + $0x178] sm:$0xf]
        %v5212 = vld [vmem:[%s5173 + $0x17c] sm:$0xf]
        %v5213 = vld [vmem:[%s5173 + $0x180] sm:$0x3]
        %v5254 = vrot.slane %v5174, 6
        %v5255 = vrot.slane %v5254, 4
        %v5256 = vrot.slane %v5175, 6
        %v5257 = vsel %vm718, %v5255, %v5256
        %v5258 = vrot.slane %v5256, 4
        %v5259 = vrot.slane %v5176, 6
        %v5260 = vsel %vm718, %v5258, %v5259
        %v5261 = vrot.slane %v5259, 4
        %v5262 = vrot.slane %v5177, 6
        %v5263 = vsel %vm718, %v5261, %v5262
        %v5264 = vrot.slane %v5262, 4
        %v5265 = vrot.slane %v5178, 6
        %v5266 = vsel %vm718, %v5264, %v5265
        %v5267 = vrot.slane %v5179, 6
        %v5268 = vrot.slane %v5267, 4
        %v5269 = vrot.slane %v5180, 6
        %v5270 = vsel %vm718, %v5268, %v5269
        %v5271 = vrot.slane %v5269, 4
        %v5272 = vrot.slane %v5181, 6
        %v5273 = vsel %vm718, %v5271, %v5272
        %v5274 = vrot.slane %v5272, 4
        %v5275 = vrot.slane %v5182, 6
        %v5276 = vsel %vm718, %v5274, %v5275
        %v5277 = vrot.slane %v5275, 4
        %v5278 = vrot.slane %v5183, 6
        %v5279 = vsel %vm718, %v5277, %v5278
        %v5280 = vrot.slane %v5184, 6
        %v5281 = vrot.slane %v5280, 4
        %v5282 = vrot.slane %v5185, 6
        %v5283 = vsel %vm718, %v5281, %v5282
        %v5284 = vrot.slane %v5282, 4
        %v5285 = vrot.slane %v5186, 6
        %v5286 = vsel %vm718, %v5284, %v5285
        %v5287 = vrot.slane %v5285, 4
        %v5288 = vrot.slane %v5187, 6
        %v5289 = vsel %vm718, %v5287, %v5288
        %v5290 = vrot.slane %v5288, 4
        %v5291 = vrot.slane %v5188, 6
        %v5292 = vsel %vm718, %v5290, %v5291
        %v5293 = vrot.slane %v5189, 6
        %v5294 = vrot.slane %v5293, 4
        %v5295 = vrot.slane %v5190, 6
        %v5296 = vsel %vm718, %v5294, %v5295
        %v5297 = vrot.slane %v5295, 4
        %v5298 = vrot.slane %v5191, 6
        %v5299 = vsel %vm718, %v5297, %v5298
        %v5300 = vrot.slane %v5298, 4
        %v5301 = vrot.slane %v5192, 6
        %v5302 = vsel %vm718, %v5300, %v5301
        %v5303 = vrot.slane %v5301, 4
        %v5304 = vrot.slane %v5193, 6
        %v5305 = vsel %vm718, %v5303, %v5304
        %v5306 = vrot.slane %v5194, 6
        %v5307 = vrot.slane %v5306, 4
        %v5308 = vrot.slane %v5195, 6
        %v5309 = vsel %vm718, %v5307, %v5308
        %v5310 = vrot.slane %v5308, 4
        %v5311 = vrot.slane %v5196, 6
        %v5312 = vsel %vm718, %v5310, %v5311
        %v5313 = vrot.slane %v5311, 4
        %v5314 = vrot.slane %v5197, 6
        %v5315 = vsel %vm718, %v5313, %v5314
        %v5316 = vrot.slane %v5314, 4
        %v5317 = vrot.slane %v5198, 6
        %v5318 = vsel %vm718, %v5316, %v5317
        %v5319 = vrot.slane %v5199, 6
        %v5320 = vrot.slane %v5319, 4
        %v5321 = vrot.slane %v5200, 6
        %v5322 = vsel %vm718, %v5320, %v5321
        %v5323 = vrot.slane %v5321, 4
        %v5324 = vrot.slane %v5201, 6
        %v5325 = vsel %vm718, %v5323, %v5324
        %v5326 = vrot.slane %v5324, 4
        %v5327 = vrot.slane %v5202, 6
        %v5328 = vsel %vm718, %v5326, %v5327
        %v5329 = vrot.slane %v5327, 4
        %v5330 = vrot.slane %v5203, 6
        %v5331 = vsel %vm718, %v5329, %v5330
        %v5332 = vrot.slane %v5204, 6
        %v5333 = vrot.slane %v5332, 4
        %v5334 = vrot.slane %v5205, 6
        %v5335 = vsel %vm718, %v5333, %v5334
        %v5336 = vrot.slane %v5334, 4
        %v5337 = vrot.slane %v5206, 6
        %v5338 = vsel %vm718, %v5336, %v5337
        %v5339 = vrot.slane %v5337, 4
        %v5340 = vrot.slane %v5207, 6
        %v5341 = vsel %vm718, %v5339, %v5340
        %v5342 = vrot.slane %v5340, 4
        %v5343 = vrot.slane %v5208, 6
        %v5344 = vsel %vm718, %v5342, %v5343
        %v5345 = vrot.slane %v5209, 6
        %v5346 = vrot.slane %v5345, 4
        %v5347 = vrot.slane %v5210, 6
        %v5348 = vsel %vm718, %v5346, %v5347
        %v5349 = vrot.slane %v5347, 4
        %v5350 = vrot.slane %v5211, 6
        %v5351 = vsel %vm718, %v5349, %v5350
        %v5352 = vrot.slane %v5350, 4
        %v5353 = vrot.slane %v5212, 6
        %v5354 = vsel %vm718, %v5352, %v5353
        %v5355 = vrot.slane %v5353, 4
        %v5356 = vrot.slane %v5213, 6
        %v5357 = vsel %vm718, %v5355, %v5356
        %v5358 = vld [vmem:[%s6] sm:$0xf]
        %v5359 = vld [vmem:[%s6 + $0x4] sm:$0xf]
        %v5360 = vld [vmem:[%s6 + $0x8] sm:$0xf]
        %v5361 = vld [vmem:[%s6 + $0xc] sm:$0xf]
        %v5362 = vld [vmem:[%s6 + $0x10] sm:$0xf]
        %v5363 = vld [vmem:[%s6 + $0x14] sm:$0xf]
        %v5364 = vld [vmem:[%s6 + $0x18] sm:$0xf]
        %v5365 = vld [vmem:[%s6 + $0x1c] sm:$0xf]
        %v5366 = vld [vmem:[%s5173 + $0x10] sm:$0xc]
        %v5367 = vld [vmem:[%s5173 + $0x14] sm:$0xf]
        %v5368 = vld [vmem:[%s5173 + $0x18] sm:$0xf]
        %v5369 = vld [vmem:[%s5173 + $0x1c] sm:$0xf]
        %v5370 = vld [vmem:[%s5173 + $0x20] sm:$0x3]
        %v5371 = vld [vmem:[%s5173 + $0x44] sm:$0xc]
        %v5372 = vld [vmem:[%s5173 + $0x48] sm:$0xf]
        %v5373 = vld [vmem:[%s5173 + $0x4c] sm:$0xf]
        %v5374 = vld [vmem:[%s5173 + $0x50] sm:$0xf]
        %v5375 = vld [vmem:[%s5173 + $0x54] sm:$0x3]
        %v5376 = vld [vmem:[%s5173 + $0x78] sm:$0xc]
        %v5377 = vld [vmem:[%s5173 + $0x7c] sm:$0xf]
        %v5378 = vld [vmem:[%s5173 + $0x80] sm:$0xf]
        %v5379 = vld [vmem:[%s5173 + $0x84] sm:$0xf]
        %v5380 = vld [vmem:[%s5173 + $0x88] sm:$0x3]
        %v5381 = vld [vmem:[%s5173 + $0xac] sm:$0xc]
        %v5382 = vld [vmem:[%s5173 + $0xb0] sm:$0xf]
        %v5383 = vld [vmem:[%s5173 + $0xb4] sm:$0xf]
        %v5384 = vld [vmem:[%s5173 + $0xb8] sm:$0xf]
        %v5385 = vld [vmem:[%s5173 + $0xbc] sm:$0x3]
        %v5386 = vld [vmem:[%s5173 + $0xe0] sm:$0xc]
        %v5387 = vld [vmem:[%s5173 + $0xe4] sm:$0xf]
        %v5388 = vld [vmem:[%s5173 + $0xe8] sm:$0xf]
        %v5389 = vld [vmem:[%s5173 + $0xec] sm:$0xf]
        %v5390 = vld [vmem:[%s5173 + $0xf0] sm:$0x3]
        %v5391 = vld [vmem:[%s5173 + $0x114] sm:$0xc]
        %v5392 = vld [vmem:[%s5173 + $0x118] sm:$0xf]
        %v5393 = vld [vmem:[%s5173 + $0x11c] sm:$0xf]
        %v5394 = vld [vmem:[%s5173 + $0x120] sm:$0xf]
        %v5395 = vld [vmem:[%s5173 + $0x124] sm:$0x3]
        %v5396 = vld [vmem:[%s5173 + $0x148] sm:$0xc]
        %v5397 = vld [vmem:[%s5173 + $0x14c] sm:$0xf]
        %v5398 = vld [vmem:[%s5173 + $0x150] sm:$0xf]
        %v5399 = vld [vmem:[%s5173 + $0x154] sm:$0xf]
        %v5400 = vld [vmem:[%s5173 + $0x158] sm:$0x3]
        %v5401 = vld [vmem:[%s5173 + $0x17c] sm:$0xc]
        %v5402 = vld [vmem:[%s5173 + $0x180] sm:$0xf]
        %v5403 = vld [vmem:[%s5173 + $0x184] sm:$0xf]
        %v5404 = vld [vmem:[%s5173 + $0x188] sm:$0xf]
        %v5405 = vld [vmem:[%s5173 + $0x18c] sm:$0x3]
        %v5446 = vrot.slane %v5366, 6
        %v5447 = vrot.slane %v5446, 4
        %v5448 = vrot.slane %v5367, 6
        %v5449 = vsel %vm718, %v5447, %v5448
        %v5450 = vrot.slane %v5448, 4
        %v5451 = vrot.slane %v5368, 6
        %v5452 = vsel %vm718, %v5450, %v5451
        %v5453 = vrot.slane %v5451, 4
        %v5454 = vrot.slane %v5369, 6
        %v5455 = vsel %vm718, %v5453, %v5454
        %v5456 = vrot.slane %v5454, 4
        %v5457 = vrot.slane %v5370, 6
        %v5458 = vsel %vm718, %v5456, %v5457
        %v5459 = vrot.slane %v5371, 6
        %v5460 = vrot.slane %v5459, 4
        %v5461 = vrot.slane %v5372, 6
        %v5462 = vsel %vm718, %v5460, %v5461
        %v5463 = vrot.slane %v5461, 4
        %v5464 = vrot.slane %v5373, 6
        %v5465 = vsel %vm718, %v5463, %v5464
        %v5466 = vrot.slane %v5464, 4
        %v5467 = vrot.slane %v5374, 6
        %v5468 = vsel %vm718, %v5466, %v5467
        %v5469 = vrot.slane %v5467, 4
        %v5470 = vrot.slane %v5375, 6
        %v5471 = vsel %vm718, %v5469, %v5470
        %v5472 = vrot.slane %v5376, 6
        %v5473 = vrot.slane %v5472, 4
        %v5474 = vrot.slane %v5377, 6
        %v5475 = vsel %vm718, %v5473, %v5474
        %v5476 = vrot.slane %v5474, 4
        %v5477 = vrot.slane %v5378, 6
        %v5478 = vsel %vm718, %v5476, %v5477
        %v5479 = vrot.slane %v5477, 4
        %v5480 = vrot.slane %v5379, 6
        %v5481 = vsel %vm718, %v5479, %v5480
        %v5482 = vrot.slane %v5480, 4
        %v5483 = vrot.slane %v5380, 6
        %v5484 = vsel %vm718, %v5482, %v5483
        %v5485 = vrot.slane %v5381, 6
        %v5486 = vrot.slane %v5485, 4
        %v5487 = vrot.slane %v5382, 6
        %v5488 = vsel %vm718, %v5486, %v5487
        %v5489 = vrot.slane %v5487, 4
        %v5490 = vrot.slane %v5383, 6
        %v5491 = vsel %vm718, %v5489, %v5490
        %v5492 = vrot.slane %v5490, 4
        %v5493 = vrot.slane %v5384, 6
        %v5494 = vsel %vm718, %v5492, %v5493
        %v5495 = vrot.slane %v5493, 4
        %v5496 = vrot.slane %v5385, 6
        %v5497 = vsel %vm718, %v5495, %v5496
        %v5498 = vrot.slane %v5386, 6
        %v5499 = vrot.slane %v5498, 4
        %v5500 = vrot.slane %v5387, 6
        %v5501 = vsel %vm718, %v5499, %v5500
        %v5502 = vrot.slane %v5500, 4
        %v5503 = vrot.slane %v5388, 6
        %v5504 = vsel %vm718, %v5502, %v5503
        %v5505 = vrot.slane %v5503, 4
        %v5506 = vrot.slane %v5389, 6
        %v5507 = vsel %vm718, %v5505, %v5506
        %v5508 = vrot.slane %v5506, 4
        %v5509 = vrot.slane %v5390, 6
        %v5510 = vsel %vm718, %v5508, %v5509
        %v5511 = vrot.slane %v5391, 6
        %v5512 = vrot.slane %v5511, 4
        %v5513 = vrot.slane %v5392, 6
        %v5514 = vsel %vm718, %v5512, %v5513
        %v5515 = vrot.slane %v5513, 4
        %v5516 = vrot.slane %v5393, 6
        %v5517 = vsel %vm718, %v5515, %v5516
        %v5518 = vrot.slane %v5516, 4
        %v5519 = vrot.slane %v5394, 6
        %v5520 = vsel %vm718, %v5518, %v5519
        %v5521 = vrot.slane %v5519, 4
        %v5522 = vrot.slane %v5395, 6
        %v5523 = vsel %vm718, %v5521, %v5522
        %v5524 = vrot.slane %v5396, 6
        %v5525 = vrot.slane %v5524, 4
        %v5526 = vrot.slane %v5397, 6
        %v5527 = vsel %vm718, %v5525, %v5526
        %v5528 = vrot.slane %v5526, 4
        %v5529 = vrot.slane %v5398, 6
        %v5530 = vsel %vm718, %v5528, %v5529
        %v5531 = vrot.slane %v5529, 4
        %v5532 = vrot.slane %v5399, 6
        %v5533 = vsel %vm718, %v5531, %v5532
        %v5534 = vrot.slane %v5532, 4
        %v5535 = vrot.slane %v5400, 6
        %v5536 = vsel %vm718, %v5534, %v5535
        %v5537 = vrot.slane %v5401, 6
        %v5538 = vrot.slane %v5537, 4
        %v5539 = vrot.slane %v5402, 6
        %v5540 = vsel %vm718, %v5538, %v5539
        %v5541 = vrot.slane %v5539, 4
        %v5542 = vrot.slane %v5403, 6
        %v5543 = vsel %vm718, %v5541, %v5542
        %v5544 = vrot.slane %v5542, 4
        %v5545 = vrot.slane %v5404, 6
        %v5546 = vsel %vm718, %v5544, %v5545
        %v5547 = vrot.slane %v5545, 4
        %v5548 = vrot.slane %v5405, 6
        %v5549 = vsel %vm718, %v5547, %v5548
        %s5550 = scalar_lea.vmem %s6, 32
        %v5551 = vld [vmem:[%s5550] sm:$0xf]
        %v5552 = vld [vmem:[%s5550 + $0x4] sm:$0xf]
        %v5553 = vld [vmem:[%s5550 + $0x8] sm:$0xf]
        %v5554 = vld [vmem:[%s5550 + $0xc] sm:$0xf]
        %v5555 = vld [vmem:[%s5550 + $0x10] sm:$0xf]
        %v5556 = vld [vmem:[%s5550 + $0x14] sm:$0xf]
        %v5557 = vld [vmem:[%s5550 + $0x18] sm:$0xf]
        %v5558 = vld [vmem:[%s5550 + $0x1c] sm:$0xf]
        %v5559 = vunpack.c.l.b16 %v5449
        %v5560 = vunpack.c.l.b16 %v5452
        %v5561 = vunpack.c.l.b16 %v5455
        %v5562 = vunpack.c.l.b16 %v5458
        %v5563 = vunpack.c.l.b16 %v5462
        %v5564 = vunpack.c.l.b16 %v5465
        %v5565 = vunpack.c.l.b16 %v5468
        %v5566 = vunpack.c.l.b16 %v5471
        %v5567 = vunpack.c.l.b16 %v5475
        %v5568 = vunpack.c.l.b16 %v5478
        %v5569 = vunpack.c.l.b16 %v5481
        %v5570 = vunpack.c.l.b16 %v5484
        %v5571 = vunpack.c.l.b16 %v5488
        %v5572 = vunpack.c.l.b16 %v5491
        %v5573 = vunpack.c.l.b16 %v5494
        %v5574 = vunpack.c.l.b16 %v5497
        %v5575 = vunpack.c.l.b16 %v5501
        %v5576 = vunpack.c.l.b16 %v5504
        %v5577 = vunpack.c.l.b16 %v5507
        %v5578 = vunpack.c.l.b16 %v5510
        %v5579 = vunpack.c.l.b16 %v5514
        %v5580 = vunpack.c.l.b16 %v5517
        %v5581 = vunpack.c.l.b16 %v5520
        %v5582 = vunpack.c.l.b16 %v5523
        %v5583 = vunpack.c.l.b16 %v5527
        %v5584 = vunpack.c.l.b16 %v5530
        %v5585 = vunpack.c.l.b16 %v5533
        %v5586 = vunpack.c.l.b16 %v5536
        %v5587 = vunpack.c.l.b16 %v5540
        %v5588 = vunpack.c.l.b16 %v5543
        %v5589 = vunpack.c.l.b16 %v5546
        %v5590 = vunpack.c.l.b16 %v5549
        %v5591 = vpack.c.b16 %v5560, %v5559
        %v5592 = vpack.c.b16 %v5562, %v5561
        %v5593 = vpack.c.b16 %v5564, %v5563
        %v5594 = vpack.c.b16 %v5566, %v5565
        %v5595 = vpack.c.b16 %v5568, %v5567
        %v5596 = vpack.c.b16 %v5570, %v5569
        %v5597 = vpack.c.b16 %v5572, %v5571
        %v5598 = vpack.c.b16 %v5574, %v5573
        %v5599 = vpack.c.b16 %v5576, %v5575
        %v5600 = vpack.c.b16 %v5578, %v5577
        %v5601 = vpack.c.b16 %v5580, %v5579
        %v5602 = vpack.c.b16 %v5582, %v5581
        %v5603 = vpack.c.b16 %v5584, %v5583
        %v5604 = vpack.c.b16 %v5586, %v5585
        %v5605 = vpack.c.b16 %v5588, %v5587
        %v5606 = vpack.c.b16 %v5590, %v5589
        %v5615 = vunpack.c.l.b16 %v5551
        %v5616 = vunpack.c.l.b16 %v5552
        %v5617 = vunpack.c.l.b16 %v5553
        %v5618 = vunpack.c.l.b16 %v5554
        %v5619 = vunpack.c.l.b16 %v5555
        %v5620 = vunpack.c.l.b16 %v5556
        %v5621 = vunpack.c.l.b16 %v5557
        %v5622 = vunpack.c.l.b16 %v5558
        %v5623 = vpack.c.b16 %v5616, %v5615
        %v5624 = vpack.c.b16 %v5618, %v5617
        %v5625 = vpack.c.b16 %v5620, %v5619
        %v5626 = vpack.c.b16 %v5622, %v5621
        %v5632 = vsel %vm910, %v5591, 0
        %v5635 = vsel %vm910, %v5592, 0
        %v5638 = vsel %vm910, %v5593, 0
        %v5641 = vsel %vm910, %v5594, 0
        %v5644 = vsel %vm910, %v5595, 0
        %v5647 = vsel %vm910, %v5596, 0
        %v5650 = vsel %vm910, %v5597, 0
        %v5653 = vsel %vm910, %v5598, 0
        %v5656 = vsel %vm910, %v5599, 0
        %v5659 = vsel %vm910, %v5600, 0
        %v5662 = vsel %vm910, %v5601, 0
        %v5665 = vsel %vm910, %v5602, 0
        %v5668 = vsel %vm910, %v5603, 0
        %v5671 = vsel %vm910, %v5604, 0
        %v5674 = vsel %vm910, %v5605, 0
        %v5677 = vsel %vm910, %v5606, 0
        %5679 = vmatprep.subr.bf16.mxu0 0
        %5680 = vmatpush1.bf16.msra.mxu0 %v5623
        %5681 = vmatprep.subr.bf16.mxu0 0
        %5682 = vmatpush1.bf16.msra.mxu0 %v5624
        %5683 = vmatprep.subr.bf16.mxu0 0
        %5684 = vmatpush1.bf16.msra.mxu0 %v5625
        %5685 = vmatprep.subr.bf16.mxu0 0
        %5686 = vmatpush1.bf16.msra.mxu0 %v5626
        %5687 = vmatprep.subr.bf16.mxu0 0
        %5688 = vmatpush1.bf16.msra.mxu0 0
        %5689 = vmatprep.subr.bf16.mxu0 0
        %5690 = vmatpush1.bf16.msra.mxu0 0
        %5691 = vmatprep.subr.bf16.mxu0 0
        %5692 = vmatpush1.bf16.msra.mxu0 0
        %5693 = vmatprep.subr.bf16.mxu0 0
        %5694 = vmatpush1.bf16.msra.mxu0 0
        %5695 = vmatprep.subr.bf16.mxu0 0
        %5696 = vmatpush1.bf16.msra.mxu0 0
        %5697 = vmatprep.subr.bf16.mxu0 0
        %5698 = vmatpush1.bf16.msra.mxu0 0
        %5699 = vmatprep.subr.bf16.mxu0 0
        %5700 = vmatpush1.bf16.msra.mxu0 0
        %5701 = vmatprep.subr.bf16.mxu0 0
        %5702 = vmatpush1.bf16.msra.mxu0 0
        %5703 = vmatprep.subr.bf16.mxu0 0
        %5704 = vmatpush1.bf16.msra.mxu0 0
        %5705 = vmatprep.subr.bf16.mxu0 0
        %5706 = vmatpush1.bf16.msra.mxu0 0
        %5707 = vmatprep.subr.bf16.mxu0 0
        %5708 = vmatpush1.bf16.msra.mxu0 0
        %5709 = vmatprep.subr.bf16.mxu0 0
        %5710 = vmatpush1.bf16.msra.mxu0 0
        %5711 = vmatprep.mubr.bf16.mxu0 0
        %5712 = vmatmul.mubr.bf16.gmra.mrb[0].mxu0 %v5632
        %v5713 = vpop.f32.mrb[0].mxu0
        %v5714 = vadd.f32 0.0, %v5713
        %v5715 = vpop.f32.mrb[0].mxu0
        %v5716 = vpop.f32.mrb[0].mxu0
        %v5717 = vadd.f32 0.0, %v5716
        %v5718 = vpop.f32.mrb[0].mxu0
        %5719 = vmatprep.mubr.bf16.mxu0 0
        %5720 = vmatmul.mubr.bf16.gmra.mrb[0].mxu0 %v5635
        %v5721 = vpop.f32.mrb[0].mxu0
        %v5722 = vadd.f32 0.0, %v5721
        %v5723 = vpop.f32.mrb[0].mxu0
        %v5724 = vpop.f32.mrb[0].mxu0
        %v5725 = vadd.f32 0.0, %v5724
        %v5726 = vpop.f32.mrb[0].mxu0
        %5727 = vmatprep.mubr.bf16.mxu0 0
        %5728 = vmatmul.mubr.bf16.gmra.mrb[0].mxu0 %v5638
        %v5729 = vpop.f32.mrb[0].mxu0
        %v5730 = vadd.f32 0.0, %v5729
        %v5731 = vpop.f32.mrb[0].mxu0
        %v5732 = vpop.f32.mrb[0].mxu0
        %v5733 = vadd.f32 0.0, %v5732
        %v5734 = vpop.f32.mrb[0].mxu0
        %5735 = vmatprep.mubr.bf16.mxu0 0
        %5736 = vmatmul.mubr.bf16.gmra.mrb[0].mxu0 %v5641
        %v5737 = vpop.f32.mrb[0].mxu0
        %v5738 = vadd.f32 0.0, %v5737
        %v5739 = vpop.f32.mrb[0].mxu0
        %v5740 = vpop.f32.mrb[0].mxu0
        %v5741 = vadd.f32 0.0, %v5740
        %v5742 = vpop.f32.mrb[0].mxu0
        %5743 = vmatprep.mubr.bf16.mxu0 0
        %5744 = vmatmul.mubr.bf16.gmra.mrb[0].mxu0 %v5644
        %v5745 = vpop.f32.mrb[0].mxu0
        %v5746 = vadd.f32 0.0, %v5745
        %v5747 = vpop.f32.mrb[0].mxu0
        %v5748 = vpop.f32.mrb[0].mxu0
        %v5749 = vadd.f32 0.0, %v5748
        %v5750 = vpop.f32.mrb[0].mxu0
        %5751 = vmatprep.mubr.bf16.mxu0 0
        %5752 = vmatmul.mubr.bf16.gmra.mrb[0].mxu0 %v5647
        %v5753 = vpop.f32.mrb[0].mxu0
        %v5754 = vadd.f32 0.0, %v5753
        %v5755 = vpop.f32.mrb[0].mxu0
        %v5756 = vpop.f32.mrb[0].mxu0
        %v5757 = vadd.f32 0.0, %v5756
        %v5758 = vpop.f32.mrb[0].mxu0
        %5759 = vmatprep.mubr.bf16.mxu0 0
        %5760 = vmatmul.mubr.bf16.gmra.mrb[0].mxu0 %v5650
        %v5761 = vpop.f32.mrb[0].mxu0
        %v5762 = vadd.f32 0.0, %v5761
        %v5763 = vpop.f32.mrb[0].mxu0
        %v5764 = vpop.f32.mrb[0].mxu0
        %v5765 = vadd.f32 0.0, %v5764
        %v5766 = vpop.f32.mrb[0].mxu0
        %5767 = vmatprep.mubr.bf16.mxu0 0
        %5768 = vmatmul.mubr.bf16.gmra.mrb[0].mxu0 %v5653
        %v5769 = vpop.f32.mrb[0].mxu0
        %v5770 = vadd.f32 0.0, %v5769
        %v5771 = vpop.f32.mrb[0].mxu0
        %v5772 = vpop.f32.mrb[0].mxu0
        %v5773 = vadd.f32 0.0, %v5772
        %v5774 = vpop.f32.mrb[0].mxu0
        %5775 = vmatprep.mubr.bf16.mxu0 0
        %5776 = vmatmul.mubr.bf16.gmra.mrb[0].mxu0 %v5656
        %v5777 = vpop.f32.mrb[0].mxu0
        %v5778 = vadd.f32 0.0, %v5777
        %v5779 = vpop.f32.mrb[0].mxu0
        %v5780 = vpop.f32.mrb[0].mxu0
        %v5781 = vadd.f32 0.0, %v5780
        %v5782 = vpop.f32.mrb[0].mxu0
        %5783 = vmatprep.mubr.bf16.mxu0 0
        %5784 = vmatmul.mubr.bf16.gmra.mrb[0].mxu0 %v5659
        %v5785 = vpop.f32.mrb[0].mxu0
        %v5786 = vadd.f32 0.0, %v5785
        %v5787 = vpop.f32.mrb[0].mxu0
        %v5788 = vpop.f32.mrb[0].mxu0
        %v5789 = vadd.f32 0.0, %v5788
        %v5790 = vpop.f32.mrb[0].mxu0
        %5791 = vmatprep.mubr.bf16.mxu0 0
        %5792 = vmatmul.mubr.bf16.gmra.mrb[0].mxu0 %v5662
        %v5793 = vpop.f32.mrb[0].mxu0
        %v5794 = vadd.f32 0.0, %v5793
        %v5795 = vpop.f32.mrb[0].mxu0
        %v5796 = vpop.f32.mrb[0].mxu0
        %v5797 = vadd.f32 0.0, %v5796
        %v5798 = vpop.f32.mrb[0].mxu0
        %5799 = vmatprep.mubr.bf16.mxu0 0
        %5800 = vmatmul.mubr.bf16.gmra.mrb[0].mxu0 %v5665
        %v5801 = vpop.f32.mrb[0].mxu0
        %v5802 = vadd.f32 0.0, %v5801
        %v5803 = vpop.f32.mrb[0].mxu0
        %v5804 = vpop.f32.mrb[0].mxu0
        %v5805 = vadd.f32 0.0, %v5804
        %v5806 = vpop.f32.mrb[0].mxu0
        %5807 = vmatprep.mubr.bf16.mxu0 0
        %5808 = vmatmul.mubr.bf16.gmra.mrb[0].mxu0 %v5668
        %v5809 = vpop.f32.mrb[0].mxu0
        %v5810 = vadd.f32 0.0, %v5809
        %v5811 = vpop.f32.mrb[0].mxu0
        %v5812 = vpop.f32.mrb[0].mxu0
        %v5813 = vadd.f32 0.0, %v5812
        %v5814 = vpop.f32.mrb[0].mxu0
        %5815 = vmatprep.mubr.bf16.mxu0 0
        %5816 = vmatmul.mubr.bf16.gmra.mrb[0].mxu0 %v5671
        %v5817 = vpop.f32.mrb[0].mxu0
        %v5818 = vadd.f32 0.0, %v5817
        %v5819 = vpop.f32.mrb[0].mxu0
        %v5820 = vpop.f32.mrb[0].mxu0
        %v5821 = vadd.f32 0.0, %v5820
        %v5822 = vpop.f32.mrb[0].mxu0
        %5823 = vmatprep.mubr.bf16.mxu0 0
        %5824 = vmatmul.mubr.bf16.gmra.mrb[0].mxu0 %v5674
        %v5825 = vpop.f32.mrb[0].mxu0
        %v5826 = vadd.f32 0.0, %v5825
        %v5827 = vpop.f32.mrb[0].mxu0
        %v5828 = vpop.f32.mrb[0].mxu0
        %v5829 = vadd.f32 0.0, %v5828
        %v5830 = vpop.f32.mrb[0].mxu0
        %5831 = vmatprep.mubr.bf16.mxu0 0
        %5832 = vmatmul.mubr.bf16.gmra.mrb[0].mxu0 %v5677
        %v5833 = vpop.f32.mrb[0].mxu0
        %v5834 = vadd.f32 0.0, %v5833
        %v5835 = vpop.f32.mrb[0].mxu0
        %v5836 = vpop.f32.mrb[0].mxu0
        %v5837 = vadd.f32 0.0, %v5836
        %v5838 = vpop.f32.mrb[0].mxu0
        %5839 = vdwg.mxu0
        %v5840 = vunpack.c.l.b16 %v5257
        %v5841 = vunpack.c.l.b16 %v5260
        %v5842 = vunpack.c.l.b16 %v5263
        %v5843 = vunpack.c.l.b16 %v5266
        %v5844 = vunpack.c.l.b16 %v5270
        %v5845 = vunpack.c.l.b16 %v5273
        %v5846 = vunpack.c.l.b16 %v5276
        %v5847 = vunpack.c.l.b16 %v5279
        %v5848 = vunpack.c.l.b16 %v5283
        %v5849 = vunpack.c.l.b16 %v5286
        %v5850 = vunpack.c.l.b16 %v5289
        %v5851 = vunpack.c.l.b16 %v5292
        %v5852 = vunpack.c.l.b16 %v5296
        %v5853 = vunpack.c.l.b16 %v5299
        %v5854 = vunpack.c.l.b16 %v5302
        %v5855 = vunpack.c.l.b16 %v5305
        %v5856 = vunpack.c.l.b16 %v5309
        %v5857 = vunpack.c.l.b16 %v5312
        %v5858 = vunpack.c.l.b16 %v5315
        %v5859 = vunpack.c.l.b16 %v5318
        %v5860 = vunpack.c.l.b16 %v5322
        %v5861 = vunpack.c.l.b16 %v5325
        %v5862 = vunpack.c.l.b16 %v5328
        %v5863 = vunpack.c.l.b16 %v5331
        %v5864 = vunpack.c.l.b16 %v5335
        %v5865 = vunpack.c.l.b16 %v5338
        %v5866 = vunpack.c.l.b16 %v5341
        %v5867 = vunpack.c.l.b16 %v5344
        %v5868 = vunpack.c.l.b16 %v5348
        %v5869 = vunpack.c.l.b16 %v5351
        %v5870 = vunpack.c.l.b16 %v5354
        %v5871 = vunpack.c.l.b16 %v5357
        %v5872 = vpack.c.b16 %v5841, %v5840
        %v5873 = vpack.c.b16 %v5843, %v5842
        %v5874 = vpack.c.b16 %v5845, %v5844
        %v5875 = vpack.c.b16 %v5847, %v5846
        %v5876 = vpack.c.b16 %v5849, %v5848
        %v5877 = vpack.c.b16 %v5851, %v5850
        %v5878 = vpack.c.b16 %v5853, %v5852
        %v5879 = vpack.c.b16 %v5855, %v5854
        %v5880 = vpack.c.b16 %v5857, %v5856
        %v5881 = vpack.c.b16 %v5859, %v5858
        %v5882 = vpack.c.b16 %v5861, %v5860
        %v5883 = vpack.c.b16 %v5863, %v5862
        %v5884 = vpack.c.b16 %v5865, %v5864
        %v5885 = vpack.c.b16 %v5867, %v5866
        %v5886 = vpack.c.b16 %v5869, %v5868
        %v5887 = vpack.c.b16 %v5871, %v5870
        %v5896 = vunpack.c.l.b16 %v5358
        %v5897 = vunpack.c.l.b16 %v5359
        %v5898 = vunpack.c.l.b16 %v5360
        %v5899 = vunpack.c.l.b16 %v5361
        %v5900 = vunpack.c.l.b16 %v5362
        %v5901 = vunpack.c.l.b16 %v5363
        %v5902 = vunpack.c.l.b16 %v5364
        %v5903 = vunpack.c.l.b16 %v5365
        %v5904 = vpack.c.b16 %v5897, %v5896
        %v5905 = vpack.c.b16 %v5899, %v5898
        %v5906 = vpack.c.b16 %v5901, %v5900
        %v5907 = vpack.c.b16 %v5903, %v5902
        %v5913 = vsel %vm910, %v5872, 0
        %v5916 = vsel %vm910, %v5873, 0
        %v5919 = vsel %vm910, %v5874, 0
        %v5922 = vsel %vm910, %v5875, 0
        %v5925 = vsel %vm910, %v5876, 0
        %v5928 = vsel %vm910, %v5877, 0
        %v5931 = vsel %vm910, %v5878, 0
        %v5934 = vsel %vm910, %v5879, 0
        %v5937 = vsel %vm910, %v5880, 0
        %v5940 = vsel %vm910, %v5881, 0
        %v5943 = vsel %vm910, %v5882, 0
        %v5946 = vsel %vm910, %v5883, 0
        %v5949 = vsel %vm910, %v5884, 0
        %v5952 = vsel %vm910, %v5885, 0
        %v5955 = vsel %vm910, %v5886, 0
        %v5958 = vsel %vm910, %v5887, 0
        %5960 = vmatprep.subr.bf16.mxu0 0
        %5961 = vmatpush1.bf16.msra.mxu0 %v5904
        %5962 = vmatprep.subr.bf16.mxu0 0
        %5963 = vmatpush1.bf16.msra.mxu0 %v5905
        %5964 = vmatprep.subr.bf16.mxu0 0
        %5965 = vmatpush1.bf16.msra.mxu0 %v5906
        %5966 = vmatprep.subr.bf16.mxu0 0
        %5967 = vmatpush1.bf16.msra.mxu0 %v5907
        %5968 = vmatprep.subr.bf16.mxu0 0
        %5969 = vmatpush1.bf16.msra.mxu0 0
        %5970 = vmatprep.subr.bf16.mxu0 0
        %5971 = vmatpush1.bf16.msra.mxu0 0
        %5972 = vmatprep.subr.bf16.mxu0 0
        %5973 = vmatpush1.bf16.msra.mxu0 0
        %5974 = vmatprep.subr.bf16.mxu0 0
        %5975 = vmatpush1.bf16.msra.mxu0 0
        %5976 = vmatprep.subr.bf16.mxu0 0
        %5977 = vmatpush1.bf16.msra.mxu0 0
        %5978 = vmatprep.subr.bf16.mxu0 0
        %5979 = vmatpush1.bf16.msra.mxu0 0
        %5980 = vmatprep.subr.bf16.mxu0 0
        %5981 = vmatpush1.bf16.msra.mxu0 0
        %5982 = vmatprep.subr.bf16.mxu0 0
        %5983 = vmatpush1.bf16.msra.mxu0 0
        %5984 = vmatprep.subr.bf16.mxu0 0
        %5985 = vmatpush1.bf16.msra.mxu0 0
        %5986 = vmatprep.subr.bf16.mxu0 0
        %5987 = vmatpush1.bf16.msra.mxu0 0
        %5988 = vmatprep.subr.bf16.mxu0 0
        %5989 = vmatpush1.bf16.msra.mxu0 0
        %5990 = vmatprep.subr.bf16.mxu0 0
        %5991 = vmatpush1.bf16.msra.mxu0 0
        %5992 = vmatprep.mubr.bf16.mxu0 0
        %5993 = vmatmul.mubr.bf16.gmra.mrb[0].mxu0 %v5913
        %v5994 = vpop.f32.mrb[0].mxu0
        %v5995 = vadd.f32 %v5714, %v5994
        %v5996 = vpop.f32.mrb[0].mxu0
        %v5997 = vpop.f32.mrb[0].mxu0
        %v5998 = vadd.f32 %v5717, %v5997
        %v5999 = vpop.f32.mrb[0].mxu0
        %6000 = vmatprep.mubr.bf16.mxu0 0
        %6001 = vmatmul.mubr.bf16.gmra.mrb[0].mxu0 %v5916
        %v6002 = vpop.f32.mrb[0].mxu0
        %v6003 = vadd.f32 %v5722, %v6002
        %v6004 = vpop.f32.mrb[0].mxu0
        %v6005 = vpop.f32.mrb[0].mxu0
        %v6006 = vadd.f32 %v5725, %v6005
        %v6007 = vpop.f32.mrb[0].mxu0
        %6008 = vmatprep.mubr.bf16.mxu0 0
        %6009 = vmatmul.mubr.bf16.gmra.mrb[0].mxu0 %v5919
        %v6010 = vpop.f32.mrb[0].mxu0
        %v6011 = vadd.f32 %v5730, %v6010
        %v6012 = vpop.f32.mrb[0].mxu0
        %v6013 = vpop.f32.mrb[0].mxu0
        %v6014 = vadd.f32 %v5733, %v6013
        %v6015 = vpop.f32.mrb[0].mxu0
        %6016 = vmatprep.mubr.bf16.mxu0 0
        %6017 = vmatmul.mubr.bf16.gmra.mrb[0].mxu0 %v5922
        %v6018 = vpop.f32.mrb[0].mxu0
        %v6019 = vadd.f32 %v5738, %v6018
        %v6020 = vpop.f32.mrb[0].mxu0
        %v6021 = vpop.f32.mrb[0].mxu0
        %v6022 = vadd.f32 %v5741, %v6021
        %v6023 = vpop.f32.mrb[0].mxu0
        %6024 = vmatprep.mubr.bf16.mxu0 0
        %6025 = vmatmul.mubr.bf16.gmra.mrb[0].mxu0 %v5925
        %v6026 = vpop.f32.mrb[0].mxu0
        %v6027 = vadd.f32 %v5746, %v6026
        %v6028 = vpop.f32.mrb[0].mxu0
        %v6029 = vpop.f32.mrb[0].mxu0
        %v6030 = vadd.f32 %v5749, %v6029
        %v6031 = vpop.f32.mrb[0].mxu0
        %6032 = vmatprep.mubr.bf16.mxu0 0
        %6033 = vmatmul.mubr.bf16.gmra.mrb[0].mxu0 %v5928
        %v6034 = vpop.f32.mrb[0].mxu0
        %v6035 = vadd.f32 %v5754, %v6034
        %v6036 = vpop.f32.mrb[0].mxu0
        %v6037 = vpop.f32.mrb[0].mxu0
        %v6038 = vadd.f32 %v5757, %v6037
        %v6039 = vpop.f32.mrb[0].mxu0
        %6040 = vmatprep.mubr.bf16.mxu0 0
        %6041 = vmatmul.mubr.bf16.gmra.mrb[0].mxu0 %v5931
        %v6042 = vpop.f32.mrb[0].mxu0
        %v6043 = vadd.f32 %v5762, %v6042
        %v6044 = vpop.f32.mrb[0].mxu0
        %v6045 = vpop.f32.mrb[0].mxu0
        %v6046 = vadd.f32 %v5765, %v6045
        %v6047 = vpop.f32.mrb[0].mxu0
        %6048 = vmatprep.mubr.bf16.mxu0 0
        %6049 = vmatmul.mubr.bf16.gmra.mrb[0].mxu0 %v5934
        %v6050 = vpop.f32.mrb[0].mxu0
        %v6051 = vadd.f32 %v5770, %v6050
        %v6052 = vpop.f32.mrb[0].mxu0
        %v6053 = vpop.f32.mrb[0].mxu0
        %v6054 = vadd.f32 %v5773, %v6053
        %v6055 = vpop.f32.mrb[0].mxu0
        %6056 = vmatprep.mubr.bf16.mxu0 0
        %6057 = vmatmul.mubr.bf16.gmra.mrb[0].mxu0 %v5937
        %v6058 = vpop.f32.mrb[0].mxu0
        %v6059 = vadd.f32 %v5778, %v6058
        %v6060 = vpop.f32.mrb[0].mxu0
        %v6061 = vpop.f32.mrb[0].mxu0
        %v6062 = vadd.f32 %v5781, %v6061
        %v6063 = vpop.f32.mrb[0].mxu0
        %6064 = vmatprep.mubr.bf16.mxu0 0
        %6065 = vmatmul.mubr.bf16.gmra.mrb[0].mxu0 %v5940
        %v6066 = vpop.f32.mrb[0].mxu0
        %v6067 = vadd.f32 %v5786, %v6066
        %v6068 = vpop.f32.mrb[0].mxu0
        %v6069 = vpop.f32.mrb[0].mxu0
        %v6070 = vadd.f32 %v5789, %v6069
        %v6071 = vpop.f32.mrb[0].mxu0
        %6072 = vmatprep.mubr.bf16.mxu0 0
        %6073 = vmatmul.mubr.bf16.gmra.mrb[0].mxu0 %v5943
        %v6074 = vpop.f32.mrb[0].mxu0
        %v6075 = vadd.f32 %v5794, %v6074
        %v6076 = vpop.f32.mrb[0].mxu0
        %v6077 = vpop.f32.mrb[0].mxu0
        %v6078 = vadd.f32 %v5797, %v6077
        %v6079 = vpop.f32.mrb[0].mxu0
        %6080 = vmatprep.mubr.bf16.mxu0 0
        %6081 = vmatmul.mubr.bf16.gmra.mrb[0].mxu0 %v5946
        %v6082 = vpop.f32.mrb[0].mxu0
        %v6083 = vadd.f32 %v5802, %v6082
        %v6084 = vpop.f32.mrb[0].mxu0
        %v6085 = vpop.f32.mrb[0].mxu0
        %v6086 = vadd.f32 %v5805, %v6085
        %v6087 = vpop.f32.mrb[0].mxu0
        %6088 = vmatprep.mubr.bf16.mxu0 0
        %6089 = vmatmul.mubr.bf16.gmra.mrb[0].mxu0 %v5949
        %v6090 = vpop.f32.mrb[0].mxu0
        %v6091 = vadd.f32 %v5810, %v6090
        %v6092 = vpop.f32.mrb[0].mxu0
        %v6093 = vpop.f32.mrb[0].mxu0
        %v6094 = vadd.f32 %v5813, %v6093
        %v6095 = vpop.f32.mrb[0].mxu0
        %6096 = vmatprep.mubr.bf16.mxu0 0
        %6097 = vmatmul.mubr.bf16.gmra.mrb[0].mxu0 %v5952
        %v6098 = vpop.f32.mrb[0].mxu0
        %v6099 = vadd.f32 %v5818, %v6098
        %v6100 = vpop.f32.mrb[0].mxu0
        %v6101 = vpop.f32.mrb[0].mxu0
        %v6102 = vadd.f32 %v5821, %v6101
        %v6103 = vpop.f32.mrb[0].mxu0
        %6104 = vmatprep.mubr.bf16.mxu0 0
        %6105 = vmatmul.mubr.bf16.gmra.mrb[0].mxu0 %v5955
        %v6106 = vpop.f32.mrb[0].mxu0
        %v6107 = vadd.f32 %v5826, %v6106
        %v6108 = vpop.f32.mrb[0].mxu0
        %v6109 = vpop.f32.mrb[0].mxu0
        %v6110 = vadd.f32 %v5829, %v6109
        %v6111 = vpop.f32.mrb[0].mxu0
        %6112 = vmatprep.mubr.bf16.mxu0 0
        %6113 = vmatmul.mubr.bf16.gmra.mrb[0].mxu0 %v5958
        %v6114 = vpop.f32.mrb[0].mxu0
        %v6115 = vadd.f32 %v5834, %v6114
        %v6116 = vpop.f32.mrb[0].mxu0
        %v6117 = vpop.f32.mrb[0].mxu0
        %v6118 = vadd.f32 %v5837, %v6117
        %v6119 = vpop.f32.mrb[0].mxu0
        %6120 = vdwg.mxu0
        %v6121 = vld [vmem:[%s5173 + $0x1c] sm:$0xc]
        %v6122 = vld [vmem:[%s5173 + $0x20] sm:$0xf]
        %v6123 = vld [vmem:[%s5173 + $0x24] sm:$0xf]
        %v6124 = vld [vmem:[%s5173 + $0x28] sm:$0xf]
        %v6125 = vld [vmem:[%s5173 + $0x2c] sm:$0x3]
        %v6126 = vld [vmem:[%s5173 + $0x50] sm:$0xc]
        %v6127 = vld [vmem:[%s5173 + $0x54] sm:$0xf]
        %v6128 = vld [vmem:[%s5173 + $0x58] sm:$0xf]
        %v6129 = vld [vmem:[%s5173 + $0x5c] sm:$0xf]
        %v6130 = vld [vmem:[%s5173 + $0x60] sm:$0x3]
        %v6131 = vld [vmem:[%s5173 + $0x84] sm:$0xc]
        %v6132 = vld [vmem:[%s5173 + $0x88] sm:$0xf]
        %v6133 = vld [vmem:[%s5173 + $0x8c] sm:$0xf]
        %v6134 = vld [vmem:[%s5173 + $0x90] sm:$0xf]
        %v6135 = vld [vmem:[%s5173 + $0x94] sm:$0x3]
        %v6136 = vld [vmem:[%s5173 + $0xb8] sm:$0xc]
        %v6137 = vld [vmem:[%s5173 + $0xbc] sm:$0xf]
        %v6138 = vld [vmem:[%s5173 + $0xc0] sm:$0xf]
        %v6139 = vld [vmem:[%s5173 + $0xc4] sm:$0xf]
        %v6140 = vld [vmem:[%s5173 + $0xc8] sm:$0x3]
        %v6141 = vld [vmem:[%s5173 + $0xec] sm:$0xc]
        %v6142 = vld [vmem:[%s5173 + $0xf0] sm:$0xf]
        %v6143 = vld [vmem:[%s5173 + $0xf4] sm:$0xf]
        %v6144 = vld [vmem:[%s5173 + $0xf8] sm:$0xf]
        %v6145 = vld [vmem:[%s5173 + $0xfc] sm:$0x3]
        %v6146 = vld [vmem:[%s5173 + $0x120] sm:$0xc]
        %v6147 = vld [vmem:[%s5173 + $0x124] sm:$0xf]
        %v6148 = vld [vmem:[%s5173 + $0x128] sm:$0xf]
        %v6149 = vld [vmem:[%s5173 + $0x12c] sm:$0xf]
        %v6150 = vld [vmem:[%s5173 + $0x130] sm:$0x3]
        %v6151 = vld [vmem:[%s5173 + $0x154] sm:$0xc]
        %v6152 = vld [vmem:[%s5173 + $0x158] sm:$0xf]
        %v6153 = vld [vmem:[%s5173 + $0x15c] sm:$0xf]
        %v6154 = vld [vmem:[%s5173 + $0x160] sm:$0xf]
        %v6155 = vld [vmem:[%s5173 + $0x164] sm:$0x3]
        %v6156 = vld [vmem:[%s5173 + $0x188] sm:$0xc]
        %v6157 = vld [vmem:[%s5173 + $0x18c] sm:$0xf]
        %v6158 = vld [vmem:[%s5173 + $0x190] sm:$0xf]
        %v6159 = vld [vmem:[%s5173 + $0x194] sm:$0xf]
        %v6160 = vld [vmem:[%s5173 + $0x198] sm:$0x3]
        %v6201 = vrot.slane %v6121, 6
        %v6202 = vrot.slane %v6201, 4
        %v6203 = vrot.slane %v6122, 6
        %v6204 = vsel %vm718, %v6202, %v6203
        %v6205 = vrot.slane %v6203, 4
        %v6206 = vrot.slane %v6123, 6
        %v6207 = vsel %vm718, %v6205, %v6206
        %v6208 = vrot.slane %v6206, 4
        %v6209 = vrot.slane %v6124, 6
        %v6210 = vsel %vm718, %v6208, %v6209
        %v6211 = vrot.slane %v6209, 4
        %v6212 = vrot.slane %v6125, 6
        %v6213 = vsel %vm718, %v6211, %v6212
        %v6214 = vrot.slane %v6126, 6
        %v6215 = vrot.slane %v6214, 4
        %v6216 = vrot.slane %v6127, 6
        %v6217 = vsel %vm718, %v6215, %v6216
        %v6218 = vrot.slane %v6216, 4
        %v6219 = vrot.slane %v6128, 6
        %v6220 = vsel %vm718, %v6218, %v6219
        %v6221 = vrot.slane %v6219, 4
        %v6222 = vrot.slane %v6129, 6
        %v6223 = vsel %vm718, %v6221, %v6222
        %v6224 = vrot.slane %v6222, 4
        %v6225 = vrot.slane %v6130, 6
        %v6226 = vsel %vm718, %v6224, %v6225
        %v6227 = vrot.slane %v6131, 6
        %v6228 = vrot.slane %v6227, 4
        %v6229 = vrot.slane %v6132, 6
        %v6230 = vsel %vm718, %v6228, %v6229
        %v6231 = vrot.slane %v6229, 4
        %v6232 = vrot.slane %v6133, 6
        %v6233 = vsel %vm718, %v6231, %v6232
        %v6234 = vrot.slane %v6232, 4
        %v6235 = vrot.slane %v6134, 6
        %v6236 = vsel %vm718, %v6234, %v6235
        %v6237 = vrot.slane %v6235, 4
        %v6238 = vrot.slane %v6135, 6
        %v6239 = vsel %vm718, %v6237, %v6238
        %v6240 = vrot.slane %v6136, 6
        %v6241 = vrot.slane %v6240, 4
        %v6242 = vrot.slane %v6137, 6
        %v6243 = vsel %vm718, %v6241, %v6242
        %v6244 = vrot.slane %v6242, 4
        %v6245 = vrot.slane %v6138, 6
        %v6246 = vsel %vm718, %v6244, %v6245
        %v6247 = vrot.slane %v6245, 4
        %v6248 = vrot.slane %v6139, 6
        %v6249 = vsel %vm718, %v6247, %v6248
        %v6250 = vrot.slane %v6248, 4
        %v6251 = vrot.slane %v6140, 6
        %v6252 = vsel %vm718, %v6250, %v6251
        %v6253 = vrot.slane %v6141, 6
        %v6254 = vrot.slane %v6253, 4
        %v6255 = vrot.slane %v6142, 6
        %v6256 = vsel %vm718, %v6254, %v6255
        %v6257 = vrot.slane %v6255, 4
        %v6258 = vrot.slane %v6143, 6
        %v6259 = vsel %vm718, %v6257, %v6258
        %v6260 = vrot.slane %v6258, 4
        %v6261 = vrot.slane %v6144, 6
        %v6262 = vsel %vm718, %v6260, %v6261
        %v6263 = vrot.slane %v6261, 4
        %v6264 = vrot.slane %v6145, 6
        %v6265 = vsel %vm718, %v6263, %v6264
        %v6266 = vrot.slane %v6146, 6
        %v6267 = vrot.slane %v6266, 4
        %v6268 = vrot.slane %v6147, 6
        %v6269 = vsel %vm718, %v6267, %v6268
        %v6270 = vrot.slane %v6268, 4
        %v6271 = vrot.slane %v6148, 6
        %v6272 = vsel %vm718, %v6270, %v6271
        %v6273 = vrot.slane %v6271, 4
        %v6274 = vrot.slane %v6149, 6
        %v6275 = vsel %vm718, %v6273, %v6274
        %v6276 = vrot.slane %v6274, 4
        %v6277 = vrot.slane %v6150, 6
        %v6278 = vsel %vm718, %v6276, %v6277
        %v6279 = vrot.slane %v6151, 6
        %v6280 = vrot.slane %v6279, 4
        %v6281 = vrot.slane %v6152, 6
        %v6282 = vsel %vm718, %v6280, %v6281
        %v6283 = vrot.slane %v6281, 4
        %v6284 = vrot.slane %v6153, 6
        %v6285 = vsel %vm718, %v6283, %v6284
        %v6286 = vrot.slane %v6284, 4
        %v6287 = vrot.slane %v6154, 6
        %v6288 = vsel %vm718, %v6286, %v6287
        %v6289 = vrot.slane %v6287, 4
        %v6290 = vrot.slane %v6155, 6
        %v6291 = vsel %vm718, %v6289, %v6290
        %v6292 = vrot.slane %v6156, 6
        %v6293 = vrot.slane %v6292, 4
        %v6294 = vrot.slane %v6157, 6
        %v6295 = vsel %vm718, %v6293, %v6294
        %v6296 = vrot.slane %v6294, 4
        %v6297 = vrot.slane %v6158, 6
        %v6298 = vsel %vm718, %v6296, %v6297
        %v6299 = vrot.slane %v6297, 4
        %v6300 = vrot.slane %v6159, 6
        %v6301 = vsel %vm718, %v6299, %v6300
        %v6302 = vrot.slane %v6300, 4
        %v6303 = vrot.slane %v6160, 6
        %v6304 = vsel %vm718, %v6302, %v6303
        %s6305 = scalar_lea.vmem %s6, 64
        %v6306 = vld [vmem:[%s6305] sm:$0xf]
        %v6307 = vld [vmem:[%s6305 + $0x4] sm:$0xf]
        %v6308 = vld [vmem:[%s6305 + $0x8] sm:$0xf]
        %v6309 = vld [vmem:[%s6305 + $0xc] sm:$0xf]
        %v6310 = vld [vmem:[%s6305 + $0x10] sm:$0xf]
        %v6311 = vld [vmem:[%s6305 + $0x14] sm:$0xf]
        %v6312 = vld [vmem:[%s6305 + $0x18] sm:$0xf]
        %v6313 = vld [vmem:[%s6305 + $0x1c] sm:$0xf]
        %v6314 = vunpack.c.l.b16 %v6204
        %v6315 = vunpack.c.l.b16 %v6207
        %v6316 = vunpack.c.l.b16 %v6210
        %v6317 = vunpack.c.l.b16 %v6213
        %v6318 = vunpack.c.l.b16 %v6217
        %v6319 = vunpack.c.l.b16 %v6220
        %v6320 = vunpack.c.l.b16 %v6223
        %v6321 = vunpack.c.l.b16 %v6226
        %v6322 = vunpack.c.l.b16 %v6230
        %v6323 = vunpack.c.l.b16 %v6233
        %v6324 = vunpack.c.l.b16 %v6236
        %v6325 = vunpack.c.l.b16 %v6239
        %v6326 = vunpack.c.l.b16 %v6243
        %v6327 = vunpack.c.l.b16 %v6246
        %v6328 = vunpack.c.l.b16 %v6249
        %v6329 = vunpack.c.l.b16 %v6252
        %v6330 = vunpack.c.l.b16 %v6256
        %v6331 = vunpack.c.l.b16 %v6259
        %v6332 = vunpack.c.l.b16 %v6262
        %v6333 = vunpack.c.l.b16 %v6265
        %v6334 = vunpack.c.l.b16 %v6269
        %v6335 = vunpack.c.l.b16 %v6272
        %v6336 = vunpack.c.l.b16 %v6275
        %v6337 = vunpack.c.l.b16 %v6278
        %v6338 = vunpack.c.l.b16 %v6282
        %v6339 = vunpack.c.l.b16 %v6285
        %v6340 = vunpack.c.l.b16 %v6288
        %v6341 = vunpack.c.l.b16 %v6291
        %v6342 = vunpack.c.l.b16 %v6295
        %v6343 = vunpack.c.l.b16 %v6298
        %v6344 = vunpack.c.l.b16 %v6301
        %v6345 = vunpack.c.l.b16 %v6304
        %v6346 = vpack.c.b16 %v6315, %v6314
        %v6347 = vpack.c.b16 %v6317, %v6316
        %v6348 = vpack.c.b16 %v6319, %v6318
        %v6349 = vpack.c.b16 %v6321, %v6320
        %v6350 = vpack.c.b16 %v6323, %v6322
        %v6351 = vpack.c.b16 %v6325, %v6324
        %v6352 = vpack.c.b16 %v6327, %v6326
        %v6353 = vpack.c.b16 %v6329, %v6328
        %v6354 = vpack.c.b16 %v6331, %v6330
        %v6355 = vpack.c.b16 %v6333, %v6332
        %v6356 = vpack.c.b16 %v6335, %v6334
        %v6357 = vpack.c.b16 %v6337, %v6336
        %v6358 = vpack.c.b16 %v6339, %v6338
        %v6359 = vpack.c.b16 %v6341, %v6340
        %v6360 = vpack.c.b16 %v6343, %v6342
        %v6361 = vpack.c.b16 %v6345, %v6344
        %v6370 = vunpack.c.l.b16 %v6306
        %v6371 = vunpack.c.l.b16 %v6307
        %v6372 = vunpack.c.l.b16 %v6308
        %v6373 = vunpack.c.l.b16 %v6309
        %v6374 = vunpack.c.l.b16 %v6310
        %v6375 = vunpack.c.l.b16 %v6311
        %v6376 = vunpack.c.l.b16 %v6312
        %v6377 = vunpack.c.l.b16 %v6313
        %v6378 = vpack.c.b16 %v6371, %v6370
        %v6379 = vpack.c.b16 %v6373, %v6372
        %v6380 = vpack.c.b16 %v6375, %v6374
        %v6381 = vpack.c.b16 %v6377, %v6376
        %v6387 = vsel %vm910, %v6346, 0
        %v6390 = vsel %vm910, %v6347, 0
        %v6393 = vsel %vm910, %v6348, 0
        %v6396 = vsel %vm910, %v6349, 0
        %v6399 = vsel %vm910, %v6350, 0
        %v6402 = vsel %vm910, %v6351, 0
        %v6405 = vsel %vm910, %v6352, 0
        %v6408 = vsel %vm910, %v6353, 0
        %v6411 = vsel %vm910, %v6354, 0
        %v6414 = vsel %vm910, %v6355, 0
        %v6417 = vsel %vm910, %v6356, 0
        %v6420 = vsel %vm910, %v6357, 0
        %v6423 = vsel %vm910, %v6358, 0
        %v6426 = vsel %vm910, %v6359, 0
        %v6429 = vsel %vm910, %v6360, 0
        %v6432 = vsel %vm910, %v6361, 0
        %6434 = vmatprep.subr.bf16.mxu0 0
        %6435 = vmatpush1.bf16.msra.mxu0 %v6378
        %6436 = vmatprep.subr.bf16.mxu0 0
        %6437 = vmatpush1.bf16.msra.mxu0 %v6379
        %6438 = vmatprep.subr.bf16.mxu0 0
        %6439 = vmatpush1.bf16.msra.mxu0 %v6380
        %6440 = vmatprep.subr.bf16.mxu0 0
        %6441 = vmatpush1.bf16.msra.mxu0 %v6381
        %6442 = vmatprep.subr.bf16.mxu0 0
        %6443 = vmatpush1.bf16.msra.mxu0 0
        %6444 = vmatprep.subr.bf16.mxu0 0
        %6445 = vmatpush1.bf16.msra.mxu0 0
        %6446 = vmatprep.subr.bf16.mxu0 0
        %6447 = vmatpush1.bf16.msra.mxu0 0
        %6448 = vmatprep.subr.bf16.mxu0 0
        %6449 = vmatpush1.bf16.msra.mxu0 0
        %6450 = vmatprep.subr.bf16.mxu0 0
        %6451 = vmatpush1.bf16.msra.mxu0 0
        %6452 = vmatprep.subr.bf16.mxu0 0
        %6453 = vmatpush1.bf16.msra.mxu0 0
        %6454 = vmatprep.subr.bf16.mxu0 0
        %6455 = vmatpush1.bf16.msra.mxu0 0
        %6456 = vmatprep.subr.bf16.mxu0 0
        %6457 = vmatpush1.bf16.msra.mxu0 0
        %6458 = vmatprep.subr.bf16.mxu0 0
        %6459 = vmatpush1.bf16.msra.mxu0 0
        %6460 = vmatprep.subr.bf16.mxu0 0
        %6461 = vmatpush1.bf16.msra.mxu0 0
        %6462 = vmatprep.subr.bf16.mxu0 0
        %6463 = vmatpush1.bf16.msra.mxu0 0
        %6464 = vmatprep.subr.bf16.mxu0 0
        %6465 = vmatpush1.bf16.msra.mxu0 0
        %6466 = vmatprep.mubr.bf16.mxu0 0
        %6467 = vmatmul.mubr.bf16.gmra.mrb[0].mxu0 %v6387
        %v6468 = vpop.f32.mrb[0].mxu0
        %v6469 = vadd.f32 0.0, %v6468
        %v6470 = vpop.f32.mrb[0].mxu0
        %v6471 = vpop.f32.mrb[0].mxu0
        %v6472 = vadd.f32 0.0, %v6471
        %v6473 = vpop.f32.mrb[0].mxu0
        %6474 = vmatprep.mubr.bf16.mxu0 0
        %6475 = vmatmul.mubr.bf16.gmra.mrb[0].mxu0 %v6390
        %v6476 = vpop.f32.mrb[0].mxu0
        %v6477 = vadd.f32 0.0, %v6476
        %v6478 = vpop.f32.mrb[0].mxu0
        %v6479 = vpop.f32.mrb[0].mxu0
        %v6480 = vadd.f32 0.0, %v6479
        %v6481 = vpop.f32.mrb[0].mxu0
        %6482 = vmatprep.mubr.bf16.mxu0 0
        %6483 = vmatmul.mubr.bf16.gmra.mrb[0].mxu0 %v6393
        %v6484 = vpop.f32.mrb[0].mxu0
        %v6485 = vadd.f32 0.0, %v6484
        %v6486 = vpop.f32.mrb[0].mxu0
        %v6487 = vpop.f32.mrb[0].mxu0
        %v6488 = vadd.f32 0.0, %v6487
        %v6489 = vpop.f32.mrb[0].mxu0
        %6490 = vmatprep.mubr.bf16.mxu0 0
        %6491 = vmatmul.mubr.bf16.gmra.mrb[0].mxu0 %v6396
        %v6492 = vpop.f32.mrb[0].mxu0
        %v6493 = vadd.f32 0.0, %v6492
        %v6494 = vpop.f32.mrb[0].mxu0
        %v6495 = vpop.f32.mrb[0].mxu0
        %v6496 = vadd.f32 0.0, %v6495
        %v6497 = vpop.f32.mrb[0].mxu0
        %6498 = vmatprep.mubr.bf16.mxu0 0
        %6499 = vmatmul.mubr.bf16.gmra.mrb[0].mxu0 %v6399
        %v6500 = vpop.f32.mrb[0].mxu0
        %v6501 = vadd.f32 0.0, %v6500
        %v6502 = vpop.f32.mrb[0].mxu0
        %v6503 = vpop.f32.mrb[0].mxu0
        %v6504 = vadd.f32 0.0, %v6503
        %v6505 = vpop.f32.mrb[0].mxu0
        %6506 = vmatprep.mubr.bf16.mxu0 0
        %6507 = vmatmul.mubr.bf16.gmra.mrb[0].mxu0 %v6402
        %v6508 = vpop.f32.mrb[0].mxu0
        %v6509 = vadd.f32 0.0, %v6508
        %v6510 = vpop.f32.mrb[0].mxu0
        %v6511 = vpop.f32.mrb[0].mxu0
        %v6512 = vadd.f32 0.0, %v6511
        %v6513 = vpop.f32.mrb[0].mxu0
        %6514 = vmatprep.mubr.bf16.mxu0 0
        %6515 = vmatmul.mubr.bf16.gmra.mrb[0].mxu0 %v6405
        %v6516 = vpop.f32.mrb[0].mxu0
        %v6517 = vadd.f32 0.0, %v6516
        %v6518 = vpop.f32.mrb[0].mxu0
        %v6519 = vpop.f32.mrb[0].mxu0
        %v6520 = vadd.f32 0.0, %v6519
        %v6521 = vpop.f32.mrb[0].mxu0
        %6522 = vmatprep.mubr.bf16.mxu0 0
        %6523 = vmatmul.mubr.bf16.gmra.mrb[0].mxu0 %v6408
        %v6524 = vpop.f32.mrb[0].mxu0
        %v6525 = vadd.f32 0.0, %v6524
        %v6526 = vpop.f32.mrb[0].mxu0
        %v6527 = vpop.f32.mrb[0].mxu0
        %v6528 = vadd.f32 0.0, %v6527
        %v6529 = vpop.f32.mrb[0].mxu0
        %6530 = vmatprep.mubr.bf16.mxu0 0
        %6531 = vmatmul.mubr.bf16.gmra.mrb[0].mxu0 %v6411
        %v6532 = vpop.f32.mrb[0].mxu0
        %v6533 = vadd.f32 0.0, %v6532
        %v6534 = vpop.f32.mrb[0].mxu0
        %v6535 = vpop.f32.mrb[0].mxu0
        %v6536 = vadd.f32 0.0, %v6535
        %v6537 = vpop.f32.mrb[0].mxu0
        %6538 = vmatprep.mubr.bf16.mxu0 0
        %6539 = vmatmul.mubr.bf16.gmra.mrb[0].mxu0 %v6414
        %v6540 = vpop.f32.mrb[0].mxu0
        %v6541 = vadd.f32 0.0, %v6540
        %v6542 = vpop.f32.mrb[0].mxu0
        %v6543 = vpop.f32.mrb[0].mxu0
        %v6544 = vadd.f32 0.0, %v6543
        %v6545 = vpop.f32.mrb[0].mxu0
        %6546 = vmatprep.mubr.bf16.mxu0 0
        %6547 = vmatmul.mubr.bf16.gmra.mrb[0].mxu0 %v6417
        %v6548 = vpop.f32.mrb[0].mxu0
        %v6549 = vadd.f32 0.0, %v6548
        %v6550 = vpop.f32.mrb[0].mxu0
        %v6551 = vpop.f32.mrb[0].mxu0
        %v6552 = vadd.f32 0.0, %v6551
        %v6553 = vpop.f32.mrb[0].mxu0
        %6554 = vmatprep.mubr.bf16.mxu0 0
        %6555 = vmatmul.mubr.bf16.gmra.mrb[0].mxu0 %v6420
        %v6556 = vpop.f32.mrb[0].mxu0
        %v6557 = vadd.f32 0.0, %v6556
        %v6558 = vpop.f32.mrb[0].mxu0
        %v6559 = vpop.f32.mrb[0].mxu0
        %v6560 = vadd.f32 0.0, %v6559
        %v6561 = vpop.f32.mrb[0].mxu0
        %6562 = vmatprep.mubr.bf16.mxu0 0
        %6563 = vmatmul.mubr.bf16.gmra.mrb[0].mxu0 %v6423
        %v6564 = vpop.f32.mrb[0].mxu0
        %v6565 = vadd.f32 0.0, %v6564
        %v6566 = vpop.f32.mrb[0].mxu0
        %v6567 = vpop.f32.mrb[0].mxu0
        %v6568 = vadd.f32 0.0, %v6567
        %v6569 = vpop.f32.mrb[0].mxu0
        %6570 = vmatprep.mubr.bf16.mxu0 0
        %6571 = vmatmul.mubr.bf16.gmra.mrb[0].mxu0 %v6426
        %v6572 = vpop.f32.mrb[0].mxu0
        %v6573 = vadd.f32 0.0, %v6572
        %v6574 = vpop.f32.mrb[0].mxu0
        %v6575 = vpop.f32.mrb[0].mxu0
        %v6576 = vadd.f32 0.0, %v6575
        %v6577 = vpop.f32.mrb[0].mxu0
        %6578 = vmatprep.mubr.bf16.mxu0 0
        %6579 = vmatmul.mubr.bf16.gmra.mrb[0].mxu0 %v6429
        %v6580 = vpop.f32.mrb[0].mxu0
        %v6581 = vadd.f32 0.0, %v6580
        %v6582 = vpop.f32.mrb[0].mxu0
        %v6583 = vpop.f32.mrb[0].mxu0
        %v6584 = vadd.f32 0.0, %v6583
        %v6585 = vpop.f32.mrb[0].mxu0
        %6586 = vmatprep.mubr.bf16.mxu0 0
        %6587 = vmatmul.mubr.bf16.gmra.mrb[0].mxu0 %v6432
        %v6588 = vpop.f32.mrb[0].mxu0
        %v6589 = vadd.f32 0.0, %v6588
        %v6590 = vpop.f32.mrb[0].mxu0
        %v6591 = vpop.f32.mrb[0].mxu0
        %v6592 = vadd.f32 0.0, %v6591
        %v6593 = vpop.f32.mrb[0].mxu0
        %6594 = vdwg.mxu0
        %v6595 = vadd.f32 %v5995, %v6469
        %v6596 = vadd.f32 %v5998, %v6472
        %v6597 = vadd.f32 %v6003, %v6477
        %v6598 = vadd.f32 %v6006, %v6480
        %v6599 = vadd.f32 %v6011, %v6485
        %v6600 = vadd.f32 %v6014, %v6488
        %v6601 = vadd.f32 %v6019, %v6493
        %v6602 = vadd.f32 %v6022, %v6496
        %v6603 = vadd.f32 %v6027, %v6501
        %v6604 = vadd.f32 %v6030, %v6504
        %v6605 = vadd.f32 %v6035, %v6509
        %v6606 = vadd.f32 %v6038, %v6512
        %v6607 = vadd.f32 %v6043, %v6517
        %v6608 = vadd.f32 %v6046, %v6520
        %v6609 = vadd.f32 %v6051, %v6525
        %v6610 = vadd.f32 %v6054, %v6528
        %v6611 = vadd.f32 %v6059, %v6533
        %v6612 = vadd.f32 %v6062, %v6536
        %v6613 = vadd.f32 %v6067, %v6541
        %v6614 = vadd.f32 %v6070, %v6544
        %v6615 = vadd.f32 %v6075, %v6549
        %v6616 = vadd.f32 %v6078, %v6552
        %v6617 = vadd.f32 %v6083, %v6557
        %v6618 = vadd.f32 %v6086, %v6560
        %v6619 = vadd.f32 %v6091, %v6565
        %v6620 = vadd.f32 %v6094, %v6568
        %v6621 = vadd.f32 %v6099, %v6573
        %v6622 = vadd.f32 %v6102, %v6576
        %v6623 = vadd.f32 %v6107, %v6581
        %v6624 = vadd.f32 %v6110, %v6584
        %v6625 = vadd.f32 %v6115, %v6589
        %v6626 = vadd.f32 %v6118, %v6592
        %v6627 = vld [vmem:[%s635 + $0x4] sm:$0xc]
        %v6628 = vld [vmem:[%s635 + $0x8] sm:$0xf]
        %v6629 = vld [vmem:[%s635 + $0xc] sm:$0xf]
        %v6630 = vld [vmem:[%s635 + $0x10] sm:$0xf]
        %v6631 = vld [vmem:[%s635 + $0x14] sm:$0x3]
        %v6632 = vld [vmem:[%s635 + $0x38] sm:$0xc]
        %v6633 = vld [vmem:[%s635 + $0x3c] sm:$0xf]
        %v6634 = vld [vmem:[%s635 + $0x40] sm:$0xf]
        %v6635 = vld [vmem:[%s635 + $0x44] sm:$0xf]
        %v6636 = vld [vmem:[%s635 + $0x48] sm:$0x3]
        %v6637 = vld [vmem:[%s635 + $0x6c] sm:$0xc]
        %v6638 = vld [vmem:[%s635 + $0x70] sm:$0xf]
        %v6639 = vld [vmem:[%s635 + $0x74] sm:$0xf]
        %v6640 = vld [vmem:[%s635 + $0x78] sm:$0xf]
        %v6641 = vld [vmem:[%s635 + $0x7c] sm:$0x3]
        %v6642 = vld [vmem:[%s635 + $0xa0] sm:$0xc]
        %v6643 = vld [vmem:[%s635 + $0xa4] sm:$0xf]
        %v6644 = vld [vmem:[%s635 + $0xa8] sm:$0xf]
        %v6645 = vld [vmem:[%s635 + $0xac] sm:$0xf]
        %v6646 = vld [vmem:[%s635 + $0xb0] sm:$0x3]
        %v6647 = vld [vmem:[%s635 + $0xd4] sm:$0xc]
        %v6648 = vld [vmem:[%s635 + $0xd8] sm:$0xf]
        %v6649 = vld [vmem:[%s635 + $0xdc] sm:$0xf]
        %v6650 = vld [vmem:[%s635 + $0xe0] sm:$0xf]
        %v6651 = vld [vmem:[%s635 + $0xe4] sm:$0x3]
        %v6652 = vld [vmem:[%s635 + $0x108] sm:$0xc]
        %v6653 = vld [vmem:[%s635 + $0x10c] sm:$0xf]
        %v6654 = vld [vmem:[%s635 + $0x110] sm:$0xf]
        %v6655 = vld [vmem:[%s635 + $0x114] sm:$0xf]
        %v6656 = vld [vmem:[%s635 + $0x118] sm:$0x3]
        %v6657 = vld [vmem:[%s635 + $0x13c] sm:$0xc]
        %v6658 = vld [vmem:[%s635 + $0x140] sm:$0xf]
        %v6659 = vld [vmem:[%s635 + $0x144] sm:$0xf]
        %v6660 = vld [vmem:[%s635 + $0x148] sm:$0xf]
        %v6661 = vld [vmem:[%s635 + $0x14c] sm:$0x3]
        %v6662 = vld [vmem:[%s635 + $0x170] sm:$0xc]
        %v6663 = vld [vmem:[%s635 + $0x174] sm:$0xf]
        %v6664 = vld [vmem:[%s635 + $0x178] sm:$0xf]
        %v6665 = vld [vmem:[%s635 + $0x17c] sm:$0xf]
        %v6666 = vld [vmem:[%s635 + $0x180] sm:$0x3]
        %v6707 = vrot.slane %v6627, 6
        %v6708 = vrot.slane %v6707, 4
        %v6709 = vrot.slane %v6628, 6
        %v6710 = vsel %vm718, %v6708, %v6709
        %v6711 = vrot.slane %v6709, 4
        %v6712 = vrot.slane %v6629, 6
        %v6713 = vsel %vm718, %v6711, %v6712
        %v6714 = vrot.slane %v6712, 4
        %v6715 = vrot.slane %v6630, 6
        %v6716 = vsel %vm718, %v6714, %v6715
        %v6717 = vrot.slane %v6715, 4
        %v6718 = vrot.slane %v6631, 6
        %v6719 = vsel %vm718, %v6717, %v6718
        %v6720 = vrot.slane %v6632, 6
        %v6721 = vrot.slane %v6720, 4
        %v6722 = vrot.slane %v6633, 6
        %v6723 = vsel %vm718, %v6721, %v6722
        %v6724 = vrot.slane %v6722, 4
        %v6725 = vrot.slane %v6634, 6
        %v6726 = vsel %vm718, %v6724, %v6725
        %v6727 = vrot.slane %v6725, 4
        %v6728 = vrot.slane %v6635, 6
        %v6729 = vsel %vm718, %v6727, %v6728
        %v6730 = vrot.slane %v6728, 4
        %v6731 = vrot.slane %v6636, 6
        %v6732 = vsel %vm718, %v6730, %v6731
        %v6733 = vrot.slane %v6637, 6
        %v6734 = vrot.slane %v6733, 4
        %v6735 = vrot.slane %v6638, 6
        %v6736 = vsel %vm718, %v6734, %v6735
        %v6737 = vrot.slane %v6735, 4
        %v6738 = vrot.slane %v6639, 6
        %v6739 = vsel %vm718, %v6737, %v6738
        %v6740 = vrot.slane %v6738, 4
        %v6741 = vrot.slane %v6640, 6
        %v6742 = vsel %vm718, %v6740, %v6741
        %v6743 = vrot.slane %v6741, 4
        %v6744 = vrot.slane %v6641, 6
        %v6745 = vsel %vm718, %v6743, %v6744
        %v6746 = vrot.slane %v6642, 6
        %v6747 = vrot.slane %v6746, 4
        %v6748 = vrot.slane %v6643, 6
        %v6749 = vsel %vm718, %v6747, %v6748
        %v6750 = vrot.slane %v6748, 4
        %v6751 = vrot.slane %v6644, 6
        %v6752 = vsel %vm718, %v6750, %v6751
        %v6753 = vrot.slane %v6751, 4
        %v6754 = vrot.slane %v6645, 6
        %v6755 = vsel %vm718, %v6753, %v6754
        %v6756 = vrot.slane %v6754, 4
        %v6757 = vrot.slane %v6646, 6
        %v6758 = vsel %vm718, %v6756, %v6757
        %v6759 = vrot.slane %v6647, 6
        %v6760 = vrot.slane %v6759, 4
        %v6761 = vrot.slane %v6648, 6
        %v6762 = vsel %vm718, %v6760, %v6761
        %v6763 = vrot.slane %v6761, 4
        %v6764 = vrot.slane %v6649, 6
        %v6765 = vsel %vm718, %v6763, %v6764
        %v6766 = vrot.slane %v6764, 4
        %v6767 = vrot.slane %v6650, 6
        %v6768 = vsel %vm718, %v6766, %v6767
        %v6769 = vrot.slane %v6767, 4
        %v6770 = vrot.slane %v6651, 6
        %v6771 = vsel %vm718, %v6769, %v6770
        %v6772 = vrot.slane %v6652, 6
        %v6773 = vrot.slane %v6772, 4
        %v6774 = vrot.slane %v6653, 6
        %v6775 = vsel %vm718, %v6773, %v6774
        %v6776 = vrot.slane %v6774, 4
        %v6777 = vrot.slane %v6654, 6
        %v6778 = vsel %vm718, %v6776, %v6777
        %v6779 = vrot.slane %v6777, 4
        %v6780 = vrot.slane %v6655, 6
        %v6781 = vsel %vm718, %v6779, %v6780
        %v6782 = vrot.slane %v6780, 4
        %v6783 = vrot.slane %v6656, 6
        %v6784 = vsel %vm718, %v6782, %v6783
        %v6785 = vrot.slane %v6657, 6
        %v6786 = vrot.slane %v6785, 4
        %v6787 = vrot.slane %v6658, 6
        %v6788 = vsel %vm718, %v6786, %v6787
        %v6789 = vrot.slane %v6787, 4
        %v6790 = vrot.slane %v6659, 6
        %v6791 = vsel %vm718, %v6789, %v6790
        %v6792 = vrot.slane %v6790, 4
        %v6793 = vrot.slane %v6660, 6
        %v6794 = vsel %vm718, %v6792, %v6793
        %v6795 = vrot.slane %v6793, 4
        %v6796 = vrot.slane %v6661, 6
        %v6797 = vsel %vm718, %v6795, %v6796
        %v6798 = vrot.slane %v6662, 6
        %v6799 = vrot.slane %v6798, 4
        %v6800 = vrot.slane %v6663, 6
        %v6801 = vsel %vm718, %v6799, %v6800
        %v6802 = vrot.slane %v6800, 4
        %v6803 = vrot.slane %v6664, 6
        %v6804 = vsel %vm718, %v6802, %v6803
        %v6805 = vrot.slane %v6803, 4
        %v6806 = vrot.slane %v6665, 6
        %v6807 = vsel %vm718, %v6805, %v6806
        %v6808 = vrot.slane %v6806, 4
        %v6809 = vrot.slane %v6666, 6
        %v6810 = vsel %vm718, %v6808, %v6809
        %s6811 = scalar_lea.vmem %s6, 96
        %v6812 = vld [vmem:[%s6811] sm:$0xf]
        %v6813 = vld [vmem:[%s6811 + $0x4] sm:$0xf]
        %v6814 = vld [vmem:[%s6811 + $0x8] sm:$0xf]
        %v6815 = vld [vmem:[%s6811 + $0xc] sm:$0xf]
        %v6816 = vld [vmem:[%s6811 + $0x10] sm:$0xf]
        %v6817 = vld [vmem:[%s6811 + $0x14] sm:$0xf]
        %v6818 = vld [vmem:[%s6811 + $0x18] sm:$0xf]
        %v6819 = vld [vmem:[%s6811 + $0x1c] sm:$0xf]
        %v6820 = vunpack.c.l.b16 %v6710
        %v6821 = vunpack.c.l.b16 %v6713
        %v6822 = vunpack.c.l.b16 %v6716
        %v6823 = vunpack.c.l.b16 %v6719
        %v6824 = vunpack.c.l.b16 %v6723
        %v6825 = vunpack.c.l.b16 %v6726
        %v6826 = vunpack.c.l.b16 %v6729
        %v6827 = vunpack.c.l.b16 %v6732
        %v6828 = vunpack.c.l.b16 %v6736
        %v6829 = vunpack.c.l.b16 %v6739
        %v6830 = vunpack.c.l.b16 %v6742
        %v6831 = vunpack.c.l.b16 %v6745
        %v6832 = vunpack.c.l.b16 %v6749
        %v6833 = vunpack.c.l.b16 %v6752
        %v6834 = vunpack.c.l.b16 %v6755
        %v6835 = vunpack.c.l.b16 %v6758
        %v6836 = vunpack.c.l.b16 %v6762
        %v6837 = vunpack.c.l.b16 %v6765
        %v6838 = vunpack.c.l.b16 %v6768
        %v6839 = vunpack.c.l.b16 %v6771
        %v6840 = vunpack.c.l.b16 %v6775
        %v6841 = vunpack.c.l.b16 %v6778
        %v6842 = vunpack.c.l.b16 %v6781
        %v6843 = vunpack.c.l.b16 %v6784
        %v6844 = vunpack.c.l.b16 %v6788
        %v6845 = vunpack.c.l.b16 %v6791
        %v6846 = vunpack.c.l.b16 %v6794
        %v6847 = vunpack.c.l.b16 %v6797
        %v6848 = vunpack.c.l.b16 %v6801
        %v6849 = vunpack.c.l.b16 %v6804
        %v6850 = vunpack.c.l.b16 %v6807
        %v6851 = vunpack.c.l.b16 %v6810
        %v6852 = vpack.c.b16 %v6821, %v6820
        %v6853 = vpack.c.b16 %v6823, %v6822
        %v6854 = vpack.c.b16 %v6825, %v6824
        %v6855 = vpack.c.b16 %v6827, %v6826
        %v6856 = vpack.c.b16 %v6829, %v6828
        %v6857 = vpack.c.b16 %v6831, %v6830
        %v6858 = vpack.c.b16 %v6833, %v6832
        %v6859 = vpack.c.b16 %v6835, %v6834
        %v6860 = vpack.c.b16 %v6837, %v6836
        %v6861 = vpack.c.b16 %v6839, %v6838
        %v6862 = vpack.c.b16 %v6841, %v6840
        %v6863 = vpack.c.b16 %v6843, %v6842
        %v6864 = vpack.c.b16 %v6845, %v6844
        %v6865 = vpack.c.b16 %v6847, %v6846
        %v6866 = vpack.c.b16 %v6849, %v6848
        %v6867 = vpack.c.b16 %v6851, %v6850
        %v6876 = vunpack.c.l.b16 %v6812
        %v6877 = vunpack.c.l.b16 %v6813
        %v6878 = vunpack.c.l.b16 %v6814
        %v6879 = vunpack.c.l.b16 %v6815
        %v6880 = vunpack.c.l.b16 %v6816
        %v6881 = vunpack.c.l.b16 %v6817
        %v6882 = vunpack.c.l.b16 %v6818
        %v6883 = vunpack.c.l.b16 %v6819
        %v6884 = vpack.c.b16 %v6877, %v6876
        %v6885 = vpack.c.b16 %v6879, %v6878
        %v6886 = vpack.c.b16 %v6881, %v6880
        %v6887 = vpack.c.b16 %v6883, %v6882
        %v6893 = vsel %vm910, %v6852, 0
        %v6896 = vsel %vm910, %v6853, 0
        %v6899 = vsel %vm910, %v6854, 0
        %v6902 = vsel %vm910, %v6855, 0
        %v6905 = vsel %vm910, %v6856, 0
        %v6908 = vsel %vm910, %v6857, 0
        %v6911 = vsel %vm910, %v6858, 0
        %v6914 = vsel %vm910, %v6859, 0
        %v6917 = vsel %vm910, %v6860, 0
        %v6920 = vsel %vm910, %v6861, 0
        %v6923 = vsel %vm910, %v6862, 0
        %v6926 = vsel %vm910, %v6863, 0
        %v6929 = vsel %vm910, %v6864, 0
        %v6932 = vsel %vm910, %v6865, 0
        %v6935 = vsel %vm910, %v6866, 0
        %v6938 = vsel %vm910, %v6867, 0
        %6940 = vmatprep.subr.bf16.mxu0 0
        %6941 = vmatpush1.bf16.msra.mxu0 %v6884
        %6942 = vmatprep.subr.bf16.mxu0 0
        %6943 = vmatpush1.bf16.msra.mxu0 %v6885
        %6944 = vmatprep.subr.bf16.mxu0 0
        %6945 = vmatpush1.bf16.msra.mxu0 %v6886
        %6946 = vmatprep.subr.bf16.mxu0 0
        %6947 = vmatpush1.bf16.msra.mxu0 %v6887
        %6948 = vmatprep.subr.bf16.mxu0 0
        %6949 = vmatpush1.bf16.msra.mxu0 0
        %6950 = vmatprep.subr.bf16.mxu0 0
        %6951 = vmatpush1.bf16.msra.mxu0 0
        %6952 = vmatprep.subr.bf16.mxu0 0
        %6953 = vmatpush1.bf16.msra.mxu0 0
        %6954 = vmatprep.subr.bf16.mxu0 0
        %6955 = vmatpush1.bf16.msra.mxu0 0
        %6956 = vmatprep.subr.bf16.mxu0 0
        %6957 = vmatpush1.bf16.msra.mxu0 0
        %6958 = vmatprep.subr.bf16.mxu0 0
        %6959 = vmatpush1.bf16.msra.mxu0 0
        %6960 = vmatprep.subr.bf16.mxu0 0
        %6961 = vmatpush1.bf16.msra.mxu0 0
        %6962 = vmatprep.subr.bf16.mxu0 0
        %6963 = vmatpush1.bf16.msra.mxu0 0
        %6964 = vmatprep.subr.bf16.mxu0 0
        %6965 = vmatpush1.bf16.msra.mxu0 0
        %6966 = vmatprep.subr.bf16.mxu0 0
        %6967 = vmatpush1.bf16.msra.mxu0 0
        %6968 = vmatprep.subr.bf16.mxu0 0
        %6969 = vmatpush1.bf16.msra.mxu0 0
        %6970 = vmatprep.subr.bf16.mxu0 0
        %6971 = vmatpush1.bf16.msra.mxu0 0
        %6972 = vmatprep.mubr.bf16.mxu0 0
        %6973 = vmatmul.mubr.bf16.gmra.mrb[0].mxu0 %v6893
        %v6974 = vpop.f32.mrb[0].mxu0
        %v6975 = vadd.f32 0.0, %v6974
        %v6976 = vpop.f32.mrb[0].mxu0
        %v6977 = vpop.f32.mrb[0].mxu0
        %v6978 = vadd.f32 0.0, %v6977
        %v6979 = vpop.f32.mrb[0].mxu0
        %6980 = vmatprep.mubr.bf16.mxu0 0
        %6981 = vmatmul.mubr.bf16.gmra.mrb[0].mxu0 %v6896
        %v6982 = vpop.f32.mrb[0].mxu0
        %v6983 = vadd.f32 0.0, %v6982
        %v6984 = vpop.f32.mrb[0].mxu0
        %v6985 = vpop.f32.mrb[0].mxu0
        %v6986 = vadd.f32 0.0, %v6985
        %v6987 = vpop.f32.mrb[0].mxu0
        %6988 = vmatprep.mubr.bf16.mxu0 0
        %6989 = vmatmul.mubr.bf16.gmra.mrb[0].mxu0 %v6899
        %v6990 = vpop.f32.mrb[0].mxu0
        %v6991 = vadd.f32 0.0, %v6990
        %v6992 = vpop.f32.mrb[0].mxu0
        %v6993 = vpop.f32.mrb[0].mxu0
        %v6994 = vadd.f32 0.0, %v6993
        %v6995 = vpop.f32.mrb[0].mxu0
        %6996 = vmatprep.mubr.bf16.mxu0 0
        %6997 = vmatmul.mubr.bf16.gmra.mrb[0].mxu0 %v6902
        %v6998 = vpop.f32.mrb[0].mxu0
        %v6999 = vadd.f32 0.0, %v6998
        %v7000 = vpop.f32.mrb[0].mxu0
        %v7001 = vpop.f32.mrb[0].mxu0
        %v7002 = vadd.f32 0.0, %v7001
        %v7003 = vpop.f32.mrb[0].mxu0
        %7004 = vmatprep.mubr.bf16.mxu0 0
        %7005 = vmatmul.mubr.bf16.gmra.mrb[0].mxu0 %v6905
        %v7006 = vpop.f32.mrb[0].mxu0
        %v7007 = vadd.f32 0.0, %v7006
        %v7008 = vpop.f32.mrb[0].mxu0
        %v7009 = vpop.f32.mrb[0].mxu0
        %v7010 = vadd.f32 0.0, %v7009
        %v7011 = vpop.f32.mrb[0].mxu0
        %7012 = vmatprep.mubr.bf16.mxu0 0
        %7013 = vmatmul.mubr.bf16.gmra.mrb[0].mxu0 %v6908
        %v7014 = vpop.f32.mrb[0].mxu0
        %v7015 = vadd.f32 0.0, %v7014
        %v7016 = vpop.f32.mrb[0].mxu0
        %v7017 = vpop.f32.mrb[0].mxu0
        %v7018 = vadd.f32 0.0, %v7017
        %v7019 = vpop.f32.mrb[0].mxu0
        %7020 = vmatprep.mubr.bf16.mxu0 0
        %7021 = vmatmul.mubr.bf16.gmra.mrb[0].mxu0 %v6911
        %v7022 = vpop.f32.mrb[0].mxu0
        %v7023 = vadd.f32 0.0, %v7022
        %v7024 = vpop.f32.mrb[0].mxu0
        %v7025 = vpop.f32.mrb[0].mxu0
        %v7026 = vadd.f32 0.0, %v7025
        %v7027 = vpop.f32.mrb[0].mxu0
        %7028 = vmatprep.mubr.bf16.mxu0 0
        %7029 = vmatmul.mubr.bf16.gmra.mrb[0].mxu0 %v6914
        %v7030 = vpop.f32.mrb[0].mxu0
        %v7031 = vadd.f32 0.0, %v7030
        %v7032 = vpop.f32.mrb[0].mxu0
        %v7033 = vpop.f32.mrb[0].mxu0
        %v7034 = vadd.f32 0.0, %v7033
        %v7035 = vpop.f32.mrb[0].mxu0
        %7036 = vmatprep.mubr.bf16.mxu0 0
        %7037 = vmatmul.mubr.bf16.gmra.mrb[0].mxu0 %v6917
        %v7038 = vpop.f32.mrb[0].mxu0
        %v7039 = vadd.f32 0.0, %v7038
        %v7040 = vpop.f32.mrb[0].mxu0
        %v7041 = vpop.f32.mrb[0].mxu0
        %v7042 = vadd.f32 0.0, %v7041
        %v7043 = vpop.f32.mrb[0].mxu0
        %7044 = vmatprep.mubr.bf16.mxu0 0
        %7045 = vmatmul.mubr.bf16.gmra.mrb[0].mxu0 %v6920
        %v7046 = vpop.f32.mrb[0].mxu0
        %v7047 = vadd.f32 0.0, %v7046
        %v7048 = vpop.f32.mrb[0].mxu0
        %v7049 = vpop.f32.mrb[0].mxu0
        %v7050 = vadd.f32 0.0, %v7049
        %v7051 = vpop.f32.mrb[0].mxu0
        %7052 = vmatprep.mubr.bf16.mxu0 0
        %7053 = vmatmul.mubr.bf16.gmra.mrb[0].mxu0 %v6923
        %v7054 = vpop.f32.mrb[0].mxu0
        %v7055 = vadd.f32 0.0, %v7054
        %v7056 = vpop.f32.mrb[0].mxu0
        %v7057 = vpop.f32.mrb[0].mxu0
        %v7058 = vadd.f32 0.0, %v7057
        %v7059 = vpop.f32.mrb[0].mxu0
        %7060 = vmatprep.mubr.bf16.mxu0 0
        %7061 = vmatmul.mubr.bf16.gmra.mrb[0].mxu0 %v6926
        %v7062 = vpop.f32.mrb[0].mxu0
        %v7063 = vadd.f32 0.0, %v7062
        %v7064 = vpop.f32.mrb[0].mxu0
        %v7065 = vpop.f32.mrb[0].mxu0
        %v7066 = vadd.f32 0.0, %v7065
        %v7067 = vpop.f32.mrb[0].mxu0
        %7068 = vmatprep.mubr.bf16.mxu0 0
        %7069 = vmatmul.mubr.bf16.gmra.mrb[0].mxu0 %v6929
        %v7070 = vpop.f32.mrb[0].mxu0
        %v7071 = vadd.f32 0.0, %v7070
        %v7072 = vpop.f32.mrb[0].mxu0
        %v7073 = vpop.f32.mrb[0].mxu0
        %v7074 = vadd.f32 0.0, %v7073
        %v7075 = vpop.f32.mrb[0].mxu0
        %7076 = vmatprep.mubr.bf16.mxu0 0
        %7077 = vmatmul.mubr.bf16.gmra.mrb[0].mxu0 %v6932
        %v7078 = vpop.f32.mrb[0].mxu0
        %v7079 = vadd.f32 0.0, %v7078
        %v7080 = vpop.f32.mrb[0].mxu0
        %v7081 = vpop.f32.mrb[0].mxu0
        %v7082 = vadd.f32 0.0, %v7081
        %v7083 = vpop.f32.mrb[0].mxu0
        %7084 = vmatprep.mubr.bf16.mxu0 0
        %7085 = vmatmul.mubr.bf16.gmra.mrb[0].mxu0 %v6935
        %v7086 = vpop.f32.mrb[0].mxu0
        %v7087 = vadd.f32 0.0, %v7086
        %v7088 = vpop.f32.mrb[0].mxu0
        %v7089 = vpop.f32.mrb[0].mxu0
        %v7090 = vadd.f32 0.0, %v7089
        %v7091 = vpop.f32.mrb[0].mxu0
        %7092 = vmatprep.mubr.bf16.mxu0 0
        %7093 = vmatmul.mubr.bf16.gmra.mrb[0].mxu0 %v6938
        %v7094 = vpop.f32.mrb[0].mxu0
        %v7095 = vadd.f32 0.0, %v7094
        %v7096 = vpop.f32.mrb[0].mxu0
        %v7097 = vpop.f32.mrb[0].mxu0
        %v7098 = vadd.f32 0.0, %v7097
        %v7099 = vpop.f32.mrb[0].mxu0
        %7100 = vdwg.mxu0
        %v7101 = vadd.f32 %v6595, %v6975
        %v7102 = vadd.f32 %v6596, %v6978
        %v7103 = vadd.f32 %v6597, %v6983
        %v7104 = vadd.f32 %v6598, %v6986
        %v7105 = vadd.f32 %v6599, %v6991
        %v7106 = vadd.f32 %v6600, %v6994
        %v7107 = vadd.f32 %v6601, %v6999
        %v7108 = vadd.f32 %v6602, %v7002
        %v7109 = vadd.f32 %v6603, %v7007
        %v7110 = vadd.f32 %v6604, %v7010
        %v7111 = vadd.f32 %v6605, %v7015
        %v7112 = vadd.f32 %v6606, %v7018
        %v7113 = vadd.f32 %v6607, %v7023
        %v7114 = vadd.f32 %v6608, %v7026
        %v7115 = vadd.f32 %v6609, %v7031
        %v7116 = vadd.f32 %v6610, %v7034
        %v7117 = vadd.f32 %v6611, %v7039
        %v7118 = vadd.f32 %v6612, %v7042
        %v7119 = vadd.f32 %v6613, %v7047
        %v7120 = vadd.f32 %v6614, %v7050
        %v7121 = vadd.f32 %v6615, %v7055
        %v7122 = vadd.f32 %v6616, %v7058
        %v7123 = vadd.f32 %v6617, %v7063
        %v7124 = vadd.f32 %v6618, %v7066
        %v7125 = vadd.f32 %v6619, %v7071
        %v7126 = vadd.f32 %v6620, %v7074
        %v7127 = vadd.f32 %v6621, %v7079
        %v7128 = vadd.f32 %v6622, %v7082
        %v7129 = vadd.f32 %v6623, %v7087
        %v7130 = vadd.f32 %v6624, %v7090
        %v7131 = vadd.f32 %v6625, %v7095
        %v7132 = vadd.f32 %v6626, %v7098
        %s7133 = scalar_lea.vmem %s6, 128
        %v7134 = vld [vmem:[%s7133] sm:$0xf]
        %v7135 = vld [vmem:[%s7133 + $0x4] sm:$0xf]
        %v7136 = vld [vmem:[%s7133 + $0x8] sm:$0xf]
        %v7137 = vld [vmem:[%s7133 + $0xc] sm:$0xf]
        %v7138 = vld [vmem:[%s7133 + $0x10] sm:$0xf]
        %v7139 = vld [vmem:[%s7133 + $0x14] sm:$0xf]
        %v7140 = vld [vmem:[%s7133 + $0x18] sm:$0xf]
        %v7141 = vld [vmem:[%s7133 + $0x1c] sm:$0xf]
        %v7150 = vunpack.c.l.b16 %v7134
        %v7151 = vunpack.c.l.b16 %v7135
        %v7152 = vunpack.c.l.b16 %v7136
        %v7153 = vunpack.c.l.b16 %v7137
        %v7154 = vunpack.c.l.b16 %v7138
        %v7155 = vunpack.c.l.b16 %v7139
        %v7156 = vunpack.c.l.b16 %v7140
        %v7157 = vunpack.c.l.b16 %v7141
        %v7158 = vpack.c.b16 %v7151, %v7150
        %v7159 = vpack.c.b16 %v7153, %v7152
        %v7160 = vpack.c.b16 %v7155, %v7154
        %v7161 = vpack.c.b16 %v7157, %v7156
        %7166 = vmatprep.subr.bf16.mxu0 0
        %7167 = vmatpush1.bf16.msra.mxu0 %v7158
        %7168 = vmatprep.subr.bf16.mxu0 0
        %7169 = vmatpush1.bf16.msra.mxu0 %v7159
        %7170 = vmatprep.subr.bf16.mxu0 0
        %7171 = vmatpush1.bf16.msra.mxu0 %v7160
        %7172 = vmatprep.subr.bf16.mxu0 0
        %7173 = vmatpush1.bf16.msra.mxu0 %v7161
        %7174 = vmatprep.subr.bf16.mxu0 0
        %7175 = vmatpush1.bf16.msra.mxu0 0
        %7176 = vmatprep.subr.bf16.mxu0 0
        %7177 = vmatpush1.bf16.msra.mxu0 0
        %7178 = vmatprep.subr.bf16.mxu0 0
        %7179 = vmatpush1.bf16.msra.mxu0 0
        %7180 = vmatprep.subr.bf16.mxu0 0
        %7181 = vmatpush1.bf16.msra.mxu0 0
        %7182 = vmatprep.subr.bf16.mxu0 0
        %7183 = vmatpush1.bf16.msra.mxu0 0
        %7184 = vmatprep.subr.bf16.mxu0 0
        %7185 = vmatpush1.bf16.msra.mxu0 0
        %7186 = vmatprep.subr.bf16.mxu0 0
        %7187 = vmatpush1.bf16.msra.mxu0 0
        %7188 = vmatprep.subr.bf16.mxu0 0
        %7189 = vmatpush1.bf16.msra.mxu0 0
        %7190 = vmatprep.subr.bf16.mxu0 0
        %7191 = vmatpush1.bf16.msra.mxu0 0
        %7192 = vmatprep.subr.bf16.mxu0 0
        %7193 = vmatpush1.bf16.msra.mxu0 0
        %7194 = vmatprep.subr.bf16.mxu0 0
        %7195 = vmatpush1.bf16.msra.mxu0 0
        %7196 = vmatprep.subr.bf16.mxu0 0
        %7197 = vmatpush1.bf16.msra.mxu0 0
        %7198 = vmatprep.mubr.bf16.mxu0 0
        %7199 = vmatmul.mubr.bf16.gmra.mrb[0].mxu0 %v912
        %v7200 = vpop.f32.mrb[0].mxu0
        %v7201 = vadd.f32 0.0, %v7200
        %v7202 = vpop.f32.mrb[0].mxu0
        %v7203 = vpop.f32.mrb[0].mxu0
        %v7204 = vadd.f32 0.0, %v7203
        %v7205 = vpop.f32.mrb[0].mxu0
        %7206 = vmatprep.mubr.bf16.mxu0 0
        %7207 = vmatmul.mubr.bf16.gmra.mrb[0].mxu0 %v915
        %v7208 = vpop.f32.mrb[0].mxu0
        %v7209 = vadd.f32 0.0, %v7208
        %v7210 = vpop.f32.mrb[0].mxu0
        %v7211 = vpop.f32.mrb[0].mxu0
        %v7212 = vadd.f32 0.0, %v7211
        %v7213 = vpop.f32.mrb[0].mxu0
        %7214 = vmatprep.mubr.bf16.mxu0 0
        %7215 = vmatmul.mubr.bf16.gmra.mrb[0].mxu0 %v918
        %v7216 = vpop.f32.mrb[0].mxu0
        %v7217 = vadd.f32 0.0, %v7216
        %v7218 = vpop.f32.mrb[0].mxu0
        %v7219 = vpop.f32.mrb[0].mxu0
        %v7220 = vadd.f32 0.0, %v7219
        %v7221 = vpop.f32.mrb[0].mxu0
        %7222 = vmatprep.mubr.bf16.mxu0 0
        %7223 = vmatmul.mubr.bf16.gmra.mrb[0].mxu0 %v921
        %v7224 = vpop.f32.mrb[0].mxu0
        %v7225 = vadd.f32 0.0, %v7224
        %v7226 = vpop.f32.mrb[0].mxu0
        %v7227 = vpop.f32.mrb[0].mxu0
        %v7228 = vadd.f32 0.0, %v7227
        %v7229 = vpop.f32.mrb[0].mxu0
        %7230 = vmatprep.mubr.bf16.mxu0 0
        %7231 = vmatmul.mubr.bf16.gmra.mrb[0].mxu0 %v924
        %v7232 = vpop.f32.mrb[0].mxu0
        %v7233 = vadd.f32 0.0, %v7232
        %v7234 = vpop.f32.mrb[0].mxu0
        %v7235 = vpop.f32.mrb[0].mxu0
        %v7236 = vadd.f32 0.0, %v7235
        %v7237 = vpop.f32.mrb[0].mxu0
        %7238 = vmatprep.mubr.bf16.mxu0 0
        %7239 = vmatmul.mubr.bf16.gmra.mrb[0].mxu0 %v927
        %v7240 = vpop.f32.mrb[0].mxu0
        %v7241 = vadd.f32 0.0, %v7240
        %v7242 = vpop.f32.mrb[0].mxu0
        %v7243 = vpop.f32.mrb[0].mxu0
        %v7244 = vadd.f32 0.0, %v7243
        %v7245 = vpop.f32.mrb[0].mxu0
        %7246 = vmatprep.mubr.bf16.mxu0 0
        %7247 = vmatmul.mubr.bf16.gmra.mrb[0].mxu0 %v930
        %v7248 = vpop.f32.mrb[0].mxu0
        %v7249 = vadd.f32 0.0, %v7248
        %v7250 = vpop.f32.mrb[0].mxu0
        %v7251 = vpop.f32.mrb[0].mxu0
        %v7252 = vadd.f32 0.0, %v7251
        %v7253 = vpop.f32.mrb[0].mxu0
        %7254 = vmatprep.mubr.bf16.mxu0 0
        %7255 = vmatmul.mubr.bf16.gmra.mrb[0].mxu0 %v933
        %v7256 = vpop.f32.mrb[0].mxu0
        %v7257 = vadd.f32 0.0, %v7256
        %v7258 = vpop.f32.mrb[0].mxu0
        %v7259 = vpop.f32.mrb[0].mxu0
        %v7260 = vadd.f32 0.0, %v7259
        %v7261 = vpop.f32.mrb[0].mxu0
        %7262 = vmatprep.mubr.bf16.mxu0 0
        %7263 = vmatmul.mubr.bf16.gmra.mrb[0].mxu0 %v936
        %v7264 = vpop.f32.mrb[0].mxu0
        %v7265 = vadd.f32 0.0, %v7264
        %v7266 = vpop.f32.mrb[0].mxu0
        %v7267 = vpop.f32.mrb[0].mxu0
        %v7268 = vadd.f32 0.0, %v7267
        %v7269 = vpop.f32.mrb[0].mxu0
        %7270 = vmatprep.mubr.bf16.mxu0 0
        %7271 = vmatmul.mubr.bf16.gmra.mrb[0].mxu0 %v939
        %v7272 = vpop.f32.mrb[0].mxu0
        %v7273 = vadd.f32 0.0, %v7272
        %v7274 = vpop.f32.mrb[0].mxu0
        %v7275 = vpop.f32.mrb[0].mxu0
        %v7276 = vadd.f32 0.0, %v7275
        %v7277 = vpop.f32.mrb[0].mxu0
        %7278 = vmatprep.mubr.bf16.mxu0 0
        %7279 = vmatmul.mubr.bf16.gmra.mrb[0].mxu0 %v942
        %v7280 = vpop.f32.mrb[0].mxu0
        %v7281 = vadd.f32 0.0, %v7280
        %v7282 = vpop.f32.mrb[0].mxu0
        %v7283 = vpop.f32.mrb[0].mxu0
        %v7284 = vadd.f32 0.0, %v7283
        %v7285 = vpop.f32.mrb[0].mxu0
        %7286 = vmatprep.mubr.bf16.mxu0 0
        %7287 = vmatmul.mubr.bf16.gmra.mrb[0].mxu0 %v945
        %v7288 = vpop.f32.mrb[0].mxu0
        %v7289 = vadd.f32 0.0, %v7288
        %v7290 = vpop.f32.mrb[0].mxu0
        %v7291 = vpop.f32.mrb[0].mxu0
        %v7292 = vadd.f32 0.0, %v7291
        %v7293 = vpop.f32.mrb[0].mxu0
        %7294 = vmatprep.mubr.bf16.mxu0 0
        %7295 = vmatmul.mubr.bf16.gmra.mrb[0].mxu0 %v948
        %v7296 = vpop.f32.mrb[0].mxu0
        %v7297 = vadd.f32 0.0, %v7296
        %v7298 = vpop.f32.mrb[0].mxu0
        %v7299 = vpop.f32.mrb[0].mxu0
        %v7300 = vadd.f32 0.0, %v7299
        %v7301 = vpop.f32.mrb[0].mxu0
        %7302 = vmatprep.mubr.bf16.mxu0 0
        %7303 = vmatmul.mubr.bf16.gmra.mrb[0].mxu0 %v951
        %v7304 = vpop.f32.mrb[0].mxu0
        %v7305 = vadd.f32 0.0, %v7304
        %v7306 = vpop.f32.mrb[0].mxu0
        %v7307 = vpop.f32.mrb[0].mxu0
        %v7308 = vadd.f32 0.0, %v7307
        %v7309 = vpop.f32.mrb[0].mxu0
        %7310 = vmatprep.mubr.bf16.mxu0 0
        %7311 = vmatmul.mubr.bf16.gmra.mrb[0].mxu0 %v954
        %v7312 = vpop.f32.mrb[0].mxu0
        %v7313 = vadd.f32 0.0, %v7312
        %v7314 = vpop.f32.mrb[0].mxu0
        %v7315 = vpop.f32.mrb[0].mxu0
        %v7316 = vadd.f32 0.0, %v7315
        %v7317 = vpop.f32.mrb[0].mxu0
        %7318 = vmatprep.mubr.bf16.mxu0 0
        %7319 = vmatmul.mubr.bf16.gmra.mrb[0].mxu0 %v957
        %v7320 = vpop.f32.mrb[0].mxu0
        %v7321 = vadd.f32 0.0, %v7320
        %v7322 = vpop.f32.mrb[0].mxu0
        %v7323 = vpop.f32.mrb[0].mxu0
        %v7324 = vadd.f32 0.0, %v7323
        %v7325 = vpop.f32.mrb[0].mxu0
        %7326 = vdwg.mxu0
        %v7327 = vadd.f32 %v7101, %v7201
        %v7328 = vadd.f32 %v7102, %v7204
        %v7329 = vadd.f32 %v7103, %v7209
        %v7330 = vadd.f32 %v7104, %v7212
        %v7331 = vadd.f32 %v7105, %v7217
        %v7332 = vadd.f32 %v7106, %v7220
        %v7333 = vadd.f32 %v7107, %v7225
        %v7334 = vadd.f32 %v7108, %v7228
        %v7335 = vadd.f32 %v7109, %v7233
        %v7336 = vadd.f32 %v7110, %v7236
        %v7337 = vadd.f32 %v7111, %v7241
        %v7338 = vadd.f32 %v7112, %v7244
        %v7339 = vadd.f32 %v7113, %v7249
        %v7340 = vadd.f32 %v7114, %v7252
        %v7341 = vadd.f32 %v7115, %v7257
        %v7342 = vadd.f32 %v7116, %v7260
        %v7343 = vadd.f32 %v7117, %v7265
        %v7344 = vadd.f32 %v7118, %v7268
        %v7345 = vadd.f32 %v7119, %v7273
        %v7346 = vadd.f32 %v7120, %v7276
        %v7347 = vadd.f32 %v7121, %v7281
        %v7348 = vadd.f32 %v7122, %v7284
        %v7349 = vadd.f32 %v7123, %v7289
        %v7350 = vadd.f32 %v7124, %v7292
        %v7351 = vadd.f32 %v7125, %v7297
        %v7352 = vadd.f32 %v7126, %v7300
        %v7353 = vadd.f32 %v7127, %v7305
        %v7354 = vadd.f32 %v7128, %v7308
        %v7355 = vadd.f32 %v7129, %v7313
        %v7356 = vadd.f32 %v7130, %v7316
        %v7357 = vadd.f32 %v7131, %v7321
        %v7358 = vadd.f32 %v7132, %v7324
        %v7359 = vld [vmem:[%s635 + $0x1c] sm:$0xc]
        %v7360 = vld [vmem:[%s635 + $0x20] sm:$0xf]
        %v7361 = vld [vmem:[%s635 + $0x24] sm:$0xf]
        %v7362 = vld [vmem:[%s635 + $0x28] sm:$0xf]
        %v7363 = vld [vmem:[%s635 + $0x2c] sm:$0x3]
        %v7364 = vld [vmem:[%s635 + $0x50] sm:$0xc]
        %v7365 = vld [vmem:[%s635 + $0x54] sm:$0xf]
        %v7366 = vld [vmem:[%s635 + $0x58] sm:$0xf]
        %v7367 = vld [vmem:[%s635 + $0x5c] sm:$0xf]
        %v7368 = vld [vmem:[%s635 + $0x60] sm:$0x3]
        %v7369 = vld [vmem:[%s635 + $0x84] sm:$0xc]
        %v7370 = vld [vmem:[%s635 + $0x88] sm:$0xf]
        %v7371 = vld [vmem:[%s635 + $0x8c] sm:$0xf]
        %v7372 = vld [vmem:[%s635 + $0x90] sm:$0xf]
        %v7373 = vld [vmem:[%s635 + $0x94] sm:$0x3]
        %v7374 = vld [vmem:[%s635 + $0xb8] sm:$0xc]
        %v7375 = vld [vmem:[%s635 + $0xbc] sm:$0xf]
        %v7376 = vld [vmem:[%s635 + $0xc0] sm:$0xf]
        %v7377 = vld [vmem:[%s635 + $0xc4] sm:$0xf]
        %v7378 = vld [vmem:[%s635 + $0xc8] sm:$0x3]
        %v7379 = vld [vmem:[%s635 + $0xec] sm:$0xc]
        %v7380 = vld [vmem:[%s635 + $0xf0] sm:$0xf]
        %v7381 = vld [vmem:[%s635 + $0xf4] sm:$0xf]
        %v7382 = vld [vmem:[%s635 + $0xf8] sm:$0xf]
        %v7383 = vld [vmem:[%s635 + $0xfc] sm:$0x3]
        %v7384 = vld [vmem:[%s635 + $0x120] sm:$0xc]
        %v7385 = vld [vmem:[%s635 + $0x124] sm:$0xf]
        %v7386 = vld [vmem:[%s635 + $0x128] sm:$0xf]
        %v7387 = vld [vmem:[%s635 + $0x12c] sm:$0xf]
        %v7388 = vld [vmem:[%s635 + $0x130] sm:$0x3]
        %v7389 = vld [vmem:[%s635 + $0x154] sm:$0xc]
        %v7390 = vld [vmem:[%s635 + $0x158] sm:$0xf]
        %v7391 = vld [vmem:[%s635 + $0x15c] sm:$0xf]
        %v7392 = vld [vmem:[%s635 + $0x160] sm:$0xf]
        %v7393 = vld [vmem:[%s635 + $0x164] sm:$0x3]
        %v7394 = vld [vmem:[%s635 + $0x188] sm:$0xc]
        %v7395 = vld [vmem:[%s635 + $0x18c] sm:$0xf]
        %v7396 = vld [vmem:[%s635 + $0x190] sm:$0xf]
        %v7397 = vld [vmem:[%s635 + $0x194] sm:$0xf]
        %v7398 = vld [vmem:[%s635 + $0x198] sm:$0x3]
        %v7439 = vrot.slane %v7359, 6
        %v7440 = vrot.slane %v7439, 4
        %v7441 = vrot.slane %v7360, 6
        %v7442 = vsel %vm718, %v7440, %v7441
        %v7443 = vrot.slane %v7441, 4
        %v7444 = vrot.slane %v7361, 6
        %v7445 = vsel %vm718, %v7443, %v7444
        %v7446 = vrot.slane %v7444, 4
        %v7447 = vrot.slane %v7362, 6
        %v7448 = vsel %vm718, %v7446, %v7447
        %v7449 = vrot.slane %v7447, 4
        %v7450 = vrot.slane %v7363, 6
        %v7451 = vsel %vm718, %v7449, %v7450
        %v7452 = vrot.slane %v7364, 6
        %v7453 = vrot.slane %v7452, 4
        %v7454 = vrot.slane %v7365, 6
        %v7455 = vsel %vm718, %v7453, %v7454
        %v7456 = vrot.slane %v7454, 4
        %v7457 = vrot.slane %v7366, 6
        %v7458 = vsel %vm718, %v7456, %v7457
        %v7459 = vrot.slane %v7457, 4
        %v7460 = vrot.slane %v7367, 6
        %v7461 = vsel %vm718, %v7459, %v7460
        %v7462 = vrot.slane %v7460, 4
        %v7463 = vrot.slane %v7368, 6
        %v7464 = vsel %vm718, %v7462, %v7463
        %v7465 = vrot.slane %v7369, 6
        %v7466 = vrot.slane %v7465, 4
        %v7467 = vrot.slane %v7370, 6
        %v7468 = vsel %vm718, %v7466, %v7467
        %v7469 = vrot.slane %v7467, 4
        %v7470 = vrot.slane %v7371, 6
        %v7471 = vsel %vm718, %v7469, %v7470
        %v7472 = vrot.slane %v7470, 4
        %v7473 = vrot.slane %v7372, 6
        %v7474 = vsel %vm718, %v7472, %v7473
        %v7475 = vrot.slane %v7473, 4
        %v7476 = vrot.slane %v7373, 6
        %v7477 = vsel %vm718, %v7475, %v7476
        %v7478 = vrot.slane %v7374, 6
        %v7479 = vrot.slane %v7478, 4
        %v7480 = vrot.slane %v7375, 6
        %v7481 = vsel %vm718, %v7479, %v7480
        %v7482 = vrot.slane %v7480, 4
        %v7483 = vrot.slane %v7376, 6
        %v7484 = vsel %vm718, %v7482, %v7483
        %v7485 = vrot.slane %v7483, 4
        %v7486 = vrot.slane %v7377, 6
        %v7487 = vsel %vm718, %v7485, %v7486
        %v7488 = vrot.slane %v7486, 4
        %v7489 = vrot.slane %v7378, 6
        %v7490 = vsel %vm718, %v7488, %v7489
        %v7491 = vrot.slane %v7379, 6
        %v7492 = vrot.slane %v7491, 4
        %v7493 = vrot.slane %v7380, 6
        %v7494 = vsel %vm718, %v7492, %v7493
        %v7495 = vrot.slane %v7493, 4
        %v7496 = vrot.slane %v7381, 6
        %v7497 = vsel %vm718, %v7495, %v7496
        %v7498 = vrot.slane %v7496, 4
        %v7499 = vrot.slane %v7382, 6
        %v7500 = vsel %vm718, %v7498, %v7499
        %v7501 = vrot.slane %v7499, 4
        %v7502 = vrot.slane %v7383, 6
        %v7503 = vsel %vm718, %v7501, %v7502
        %v7504 = vrot.slane %v7384, 6
        %v7505 = vrot.slane %v7504, 4
        %v7506 = vrot.slane %v7385, 6
        %v7507 = vsel %vm718, %v7505, %v7506
        %v7508 = vrot.slane %v7506, 4
        %v7509 = vrot.slane %v7386, 6
        %v7510 = vsel %vm718, %v7508, %v7509
        %v7511 = vrot.slane %v7509, 4
        %v7512 = vrot.slane %v7387, 6
        %v7513 = vsel %vm718, %v7511, %v7512
        %v7514 = vrot.slane %v7512, 4
        %v7515 = vrot.slane %v7388, 6
        %v7516 = vsel %vm718, %v7514, %v7515
        %v7517 = vrot.slane %v7389, 6
        %v7518 = vrot.slane %v7517, 4
        %v7519 = vrot.slane %v7390, 6
        %v7520 = vsel %vm718, %v7518, %v7519
        %v7521 = vrot.slane %v7519, 4
        %v7522 = vrot.slane %v7391, 6
        %v7523 = vsel %vm718, %v7521, %v7522
        %v7524 = vrot.slane %v7522, 4
        %v7525 = vrot.slane %v7392, 6
        %v7526 = vsel %vm718, %v7524, %v7525
        %v7527 = vrot.slane %v7525, 4
        %v7528 = vrot.slane %v7393, 6
        %v7529 = vsel %vm718, %v7527, %v7528
        %v7530 = vrot.slane %v7394, 6
        %v7531 = vrot.slane %v7530, 4
        %v7532 = vrot.slane %v7395, 6
        %v7533 = vsel %vm718, %v7531, %v7532
        %v7534 = vrot.slane %v7532, 4
        %v7535 = vrot.slane %v7396, 6
        %v7536 = vsel %vm718, %v7534, %v7535
        %v7537 = vrot.slane %v7535, 4
        %v7538 = vrot.slane %v7397, 6
        %v7539 = vsel %vm718, %v7537, %v7538
        %v7540 = vrot.slane %v7538, 4
        %v7541 = vrot.slane %v7398, 6
        %v7542 = vsel %vm718, %v7540, %v7541
        %s7543 = scalar_lea.vmem %s6, 160
        %v7544 = vld [vmem:[%s7543] sm:$0xf]
        %v7545 = vld [vmem:[%s7543 + $0x4] sm:$0xf]
        %v7546 = vld [vmem:[%s7543 + $0x8] sm:$0xf]
        %v7547 = vld [vmem:[%s7543 + $0xc] sm:$0xf]
        %v7548 = vld [vmem:[%s7543 + $0x10] sm:$0xf]
        %v7549 = vld [vmem:[%s7543 + $0x14] sm:$0xf]
        %v7550 = vld [vmem:[%s7543 + $0x18] sm:$0xf]
        %v7551 = vld [vmem:[%s7543 + $0x1c] sm:$0xf]
        %v7552 = vunpack.c.l.b16 %v7442
        %v7553 = vunpack.c.l.b16 %v7445
        %v7554 = vunpack.c.l.b16 %v7448
        %v7555 = vunpack.c.l.b16 %v7451
        %v7556 = vunpack.c.l.b16 %v7455
        %v7557 = vunpack.c.l.b16 %v7458
        %v7558 = vunpack.c.l.b16 %v7461
        %v7559 = vunpack.c.l.b16 %v7464
        %v7560 = vunpack.c.l.b16 %v7468
        %v7561 = vunpack.c.l.b16 %v7471
        %v7562 = vunpack.c.l.b16 %v7474
        %v7563 = vunpack.c.l.b16 %v7477
        %v7564 = vunpack.c.l.b16 %v7481
        %v7565 = vunpack.c.l.b16 %v7484
        %v7566 = vunpack.c.l.b16 %v7487
        %v7567 = vunpack.c.l.b16 %v7490
        %v7568 = vunpack.c.l.b16 %v7494
        %v7569 = vunpack.c.l.b16 %v7497
        %v7570 = vunpack.c.l.b16 %v7500
        %v7571 = vunpack.c.l.b16 %v7503
        %v7572 = vunpack.c.l.b16 %v7507
        %v7573 = vunpack.c.l.b16 %v7510
        %v7574 = vunpack.c.l.b16 %v7513
        %v7575 = vunpack.c.l.b16 %v7516
        %v7576 = vunpack.c.l.b16 %v7520
        %v7577 = vunpack.c.l.b16 %v7523
        %v7578 = vunpack.c.l.b16 %v7526
        %v7579 = vunpack.c.l.b16 %v7529
        %v7580 = vunpack.c.l.b16 %v7533
        %v7581 = vunpack.c.l.b16 %v7536
        %v7582 = vunpack.c.l.b16 %v7539
        %v7583 = vunpack.c.l.b16 %v7542
        %v7584 = vpack.c.b16 %v7553, %v7552
        %v7585 = vpack.c.b16 %v7555, %v7554
        %v7586 = vpack.c.b16 %v7557, %v7556
        %v7587 = vpack.c.b16 %v7559, %v7558
        %v7588 = vpack.c.b16 %v7561, %v7560
        %v7589 = vpack.c.b16 %v7563, %v7562
        %v7590 = vpack.c.b16 %v7565, %v7564
        %v7591 = vpack.c.b16 %v7567, %v7566
        %v7592 = vpack.c.b16 %v7569, %v7568
        %v7593 = vpack.c.b16 %v7571, %v7570
        %v7594 = vpack.c.b16 %v7573, %v7572
        %v7595 = vpack.c.b16 %v7575, %v7574
        %v7596 = vpack.c.b16 %v7577, %v7576
        %v7597 = vpack.c.b16 %v7579, %v7578
        %v7598 = vpack.c.b16 %v7581, %v7580
        %v7599 = vpack.c.b16 %v7583, %v7582
        %v7608 = vunpack.c.l.b16 %v7544
        %v7609 = vunpack.c.l.b16 %v7545
        %v7610 = vunpack.c.l.b16 %v7546
        %v7611 = vunpack.c.l.b16 %v7547
        %v7612 = vunpack.c.l.b16 %v7548
        %v7613 = vunpack.c.l.b16 %v7549
        %v7614 = vunpack.c.l.b16 %v7550
        %v7615 = vunpack.c.l.b16 %v7551
        %v7616 = vpack.c.b16 %v7609, %v7608
        %v7617 = vpack.c.b16 %v7611, %v7610
        %v7618 = vpack.c.b16 %v7613, %v7612
        %v7619 = vpack.c.b16 %v7615, %v7614
        %v7625 = vsel %vm910, %v7584, 0
        %v7628 = vsel %vm910, %v7585, 0
        %v7631 = vsel %vm910, %v7586, 0
        %v7634 = vsel %vm910, %v7587, 0
        %v7637 = vsel %vm910, %v7588, 0
        %v7640 = vsel %vm910, %v7589, 0
        %v7643 = vsel %vm910, %v7590, 0
        %v7646 = vsel %vm910, %v7591, 0
        %v7649 = vsel %vm910, %v7592, 0
        %v7652 = vsel %vm910, %v7593, 0
        %v7655 = vsel %vm910, %v7594, 0
        %v7658 = vsel %vm910, %v7595, 0
        %v7661 = vsel %vm910, %v7596, 0
        %v7664 = vsel %vm910, %v7597, 0
        %v7667 = vsel %vm910, %v7598, 0
        %v7670 = vsel %vm910, %v7599, 0
        %7672 = vmatprep.subr.bf16.mxu0 0
        %7673 = vmatpush1.bf16.msra.mxu0 %v7616
        %7674 = vmatprep.subr.bf16.mxu0 0
        %7675 = vmatpush1.bf16.msra.mxu0 %v7617
        %7676 = vmatprep.subr.bf16.mxu0 0
        %7677 = vmatpush1.bf16.msra.mxu0 %v7618
        %7678 = vmatprep.subr.bf16.mxu0 0
        %7679 = vmatpush1.bf16.msra.mxu0 %v7619
        %7680 = vmatprep.subr.bf16.mxu0 0
        %7681 = vmatpush1.bf16.msra.mxu0 0
        %7682 = vmatprep.subr.bf16.mxu0 0
        %7683 = vmatpush1.bf16.msra.mxu0 0
        %7684 = vmatprep.subr.bf16.mxu0 0
        %7685 = vmatpush1.bf16.msra.mxu0 0
        %7686 = vmatprep.subr.bf16.mxu0 0
        %7687 = vmatpush1.bf16.msra.mxu0 0
        %7688 = vmatprep.subr.bf16.mxu0 0
        %7689 = vmatpush1.bf16.msra.mxu0 0
        %7690 = vmatprep.subr.bf16.mxu0 0
        %7691 = vmatpush1.bf16.msra.mxu0 0
        %7692 = vmatprep.subr.bf16.mxu0 0
        %7693 = vmatpush1.bf16.msra.mxu0 0
        %7694 = vmatprep.subr.bf16.mxu0 0
        %7695 = vmatpush1.bf16.msra.mxu0 0
        %7696 = vmatprep.subr.bf16.mxu0 0
        %7697 = vmatpush1.bf16.msra.mxu0 0
        %7698 = vmatprep.subr.bf16.mxu0 0
        %7699 = vmatpush1.bf16.msra.mxu0 0
        %7700 = vmatprep.subr.bf16.mxu0 0
        %7701 = vmatpush1.bf16.msra.mxu0 0
        %7702 = vmatprep.subr.bf16.mxu0 0
        %7703 = vmatpush1.bf16.msra.mxu0 0
        %7704 = vmatprep.mubr.bf16.mxu0 0
        %7705 = vmatmul.mubr.bf16.gmra.mrb[0].mxu0 %v7625
        %v7706 = vpop.f32.mrb[0].mxu0
        %v7707 = vadd.f32 0.0, %v7706
        %v7708 = vpop.f32.mrb[0].mxu0
        %v7709 = vpop.f32.mrb[0].mxu0
        %v7710 = vadd.f32 0.0, %v7709
        %v7711 = vpop.f32.mrb[0].mxu0
        %7712 = vmatprep.mubr.bf16.mxu0 0
        %7713 = vmatmul.mubr.bf16.gmra.mrb[0].mxu0 %v7628
        %v7714 = vpop.f32.mrb[0].mxu0
        %v7715 = vadd.f32 0.0, %v7714
        %v7716 = vpop.f32.mrb[0].mxu0
        %v7717 = vpop.f32.mrb[0].mxu0
        %v7718 = vadd.f32 0.0, %v7717
        %v7719 = vpop.f32.mrb[0].mxu0
        %7720 = vmatprep.mubr.bf16.mxu0 0
        %7721 = vmatmul.mubr.bf16.gmra.mrb[0].mxu0 %v7631
        %v7722 = vpop.f32.mrb[0].mxu0
        %v7723 = vadd.f32 0.0, %v7722
        %v7724 = vpop.f32.mrb[0].mxu0
        %v7725 = vpop.f32.mrb[0].mxu0
        %v7726 = vadd.f32 0.0, %v7725
        %v7727 = vpop.f32.mrb[0].mxu0
        %7728 = vmatprep.mubr.bf16.mxu0 0
        %7729 = vmatmul.mubr.bf16.gmra.mrb[0].mxu0 %v7634
        %v7730 = vpop.f32.mrb[0].mxu0
        %v7731 = vadd.f32 0.0, %v7730
        %v7732 = vpop.f32.mrb[0].mxu0
        %v7733 = vpop.f32.mrb[0].mxu0
        %v7734 = vadd.f32 0.0, %v7733
        %v7735 = vpop.f32.mrb[0].mxu0
        %7736 = vmatprep.mubr.bf16.mxu0 0
        %7737 = vmatmul.mubr.bf16.gmra.mrb[0].mxu0 %v7637
        %v7738 = vpop.f32.mrb[0].mxu0
        %v7739 = vadd.f32 0.0, %v7738
        %v7740 = vpop.f32.mrb[0].mxu0
        %v7741 = vpop.f32.mrb[0].mxu0
        %v7742 = vadd.f32 0.0, %v7741
        %v7743 = vpop.f32.mrb[0].mxu0
        %7744 = vmatprep.mubr.bf16.mxu0 0
        %7745 = vmatmul.mubr.bf16.gmra.mrb[0].mxu0 %v7640
        %v7746 = vpop.f32.mrb[0].mxu0
        %v7747 = vadd.f32 0.0, %v7746
        %v7748 = vpop.f32.mrb[0].mxu0
        %v7749 = vpop.f32.mrb[0].mxu0
        %v7750 = vadd.f32 0.0, %v7749
        %v7751 = vpop.f32.mrb[0].mxu0
        %7752 = vmatprep.mubr.bf16.mxu0 0
        %7753 = vmatmul.mubr.bf16.gmra.mrb[0].mxu0 %v7643
        %v7754 = vpop.f32.mrb[0].mxu0
        %v7755 = vadd.f32 0.0, %v7754
        %v7756 = vpop.f32.mrb[0].mxu0
        %v7757 = vpop.f32.mrb[0].mxu0
        %v7758 = vadd.f32 0.0, %v7757
        %v7759 = vpop.f32.mrb[0].mxu0
        %7760 = vmatprep.mubr.bf16.mxu0 0
        %7761 = vmatmul.mubr.bf16.gmra.mrb[0].mxu0 %v7646
        %v7762 = vpop.f32.mrb[0].mxu0
        %v7763 = vadd.f32 0.0, %v7762
        %v7764 = vpop.f32.mrb[0].mxu0
        %v7765 = vpop.f32.mrb[0].mxu0
        %v7766 = vadd.f32 0.0, %v7765
        %v7767 = vpop.f32.mrb[0].mxu0
        %7768 = vmatprep.mubr.bf16.mxu0 0
        %7769 = vmatmul.mubr.bf16.gmra.mrb[0].mxu0 %v7649
        %v7770 = vpop.f32.mrb[0].mxu0
        %v7771 = vadd.f32 0.0, %v7770
        %v7772 = vpop.f32.mrb[0].mxu0
        %v7773 = vpop.f32.mrb[0].mxu0
        %v7774 = vadd.f32 0.0, %v7773
        %v7775 = vpop.f32.mrb[0].mxu0
        %7776 = vmatprep.mubr.bf16.mxu0 0
        %7777 = vmatmul.mubr.bf16.gmra.mrb[0].mxu0 %v7652
        %v7778 = vpop.f32.mrb[0].mxu0
        %v7779 = vadd.f32 0.0, %v7778
        %v7780 = vpop.f32.mrb[0].mxu0
        %v7781 = vpop.f32.mrb[0].mxu0
        %v7782 = vadd.f32 0.0, %v7781
        %v7783 = vpop.f32.mrb[0].mxu0
        %7784 = vmatprep.mubr.bf16.mxu0 0
        %7785 = vmatmul.mubr.bf16.gmra.mrb[0].mxu0 %v7655
        %v7786 = vpop.f32.mrb[0].mxu0
        %v7787 = vadd.f32 0.0, %v7786
        %v7788 = vpop.f32.mrb[0].mxu0
        %v7789 = vpop.f32.mrb[0].mxu0
        %v7790 = vadd.f32 0.0, %v7789
        %v7791 = vpop.f32.mrb[0].mxu0
        %7792 = vmatprep.mubr.bf16.mxu0 0
        %7793 = vmatmul.mubr.bf16.gmra.mrb[0].mxu0 %v7658
        %v7794 = vpop.f32.mrb[0].mxu0
        %v7795 = vadd.f32 0.0, %v7794
        %v7796 = vpop.f32.mrb[0].mxu0
        %v7797 = vpop.f32.mrb[0].mxu0
        %v7798 = vadd.f32 0.0, %v7797
        %v7799 = vpop.f32.mrb[0].mxu0
        %7800 = vmatprep.mubr.bf16.mxu0 0
        %7801 = vmatmul.mubr.bf16.gmra.mrb[0].mxu0 %v7661
        %v7802 = vpop.f32.mrb[0].mxu0
        %v7803 = vadd.f32 0.0, %v7802
        %v7804 = vpop.f32.mrb[0].mxu0
        %v7805 = vpop.f32.mrb[0].mxu0
        %v7806 = vadd.f32 0.0, %v7805
        %v7807 = vpop.f32.mrb[0].mxu0
        %7808 = vmatprep.mubr.bf16.mxu0 0
        %7809 = vmatmul.mubr.bf16.gmra.mrb[0].mxu0 %v7664
        %v7810 = vpop.f32.mrb[0].mxu0
        %v7811 = vadd.f32 0.0, %v7810
        %v7812 = vpop.f32.mrb[0].mxu0
        %v7813 = vpop.f32.mrb[0].mxu0
        %v7814 = vadd.f32 0.0, %v7813
        %v7815 = vpop.f32.mrb[0].mxu0
        %7816 = vmatprep.mubr.bf16.mxu0 0
        %7817 = vmatmul.mubr.bf16.gmra.mrb[0].mxu0 %v7667
        %v7818 = vpop.f32.mrb[0].mxu0
        %v7819 = vadd.f32 0.0, %v7818
        %v7820 = vpop.f32.mrb[0].mxu0
        %v7821 = vpop.f32.mrb[0].mxu0
        %v7822 = vadd.f32 0.0, %v7821
        %v7823 = vpop.f32.mrb[0].mxu0
        %7824 = vmatprep.mubr.bf16.mxu0 0
        %7825 = vmatmul.mubr.bf16.gmra.mrb[0].mxu0 %v7670
        %v7826 = vpop.f32.mrb[0].mxu0
        %v7827 = vadd.f32 0.0, %v7826
        %v7828 = vpop.f32.mrb[0].mxu0
        %v7829 = vpop.f32.mrb[0].mxu0
        %v7830 = vadd.f32 0.0, %v7829
        %v7831 = vpop.f32.mrb[0].mxu0
        %7832 = vdwg.mxu0
        %v7833 = vadd.f32 %v7327, %v7707
        %v7834 = vadd.f32 %v7328, %v7710
        %v7835 = vadd.f32 %v7329, %v7715
        %v7836 = vadd.f32 %v7330, %v7718
        %v7837 = vadd.f32 %v7331, %v7723
        %v7838 = vadd.f32 %v7332, %v7726
        %v7839 = vadd.f32 %v7333, %v7731
        %v7840 = vadd.f32 %v7334, %v7734
        %v7841 = vadd.f32 %v7335, %v7739
        %v7842 = vadd.f32 %v7336, %v7742
        %v7843 = vadd.f32 %v7337, %v7747
        %v7844 = vadd.f32 %v7338, %v7750
        %v7845 = vadd.f32 %v7339, %v7755
        %v7846 = vadd.f32 %v7340, %v7758
        %v7847 = vadd.f32 %v7341, %v7763
        %v7848 = vadd.f32 %v7342, %v7766
        %v7849 = vadd.f32 %v7343, %v7771
        %v7850 = vadd.f32 %v7344, %v7774
        %v7851 = vadd.f32 %v7345, %v7779
        %v7852 = vadd.f32 %v7346, %v7782
        %v7853 = vadd.f32 %v7347, %v7787
        %v7854 = vadd.f32 %v7348, %v7790
        %v7855 = vadd.f32 %v7349, %v7795
        %v7856 = vadd.f32 %v7350, %v7798
        %v7857 = vadd.f32 %v7351, %v7803
        %v7858 = vadd.f32 %v7352, %v7806
        %v7859 = vadd.f32 %v7353, %v7811
        %v7860 = vadd.f32 %v7354, %v7814
        %v7861 = vadd.f32 %v7355, %v7819
        %v7862 = vadd.f32 %v7356, %v7822
        %v7863 = vadd.f32 %v7357, %v7827
        %v7864 = vadd.f32 %v7358, %v7830
        %s7865 = sadd.s32 %s631, 60
        %s7866 = smul.u32 %s7865, 13
        %s7867 = smul.addr %s7866, 4
        %s7868 = scalar_lea.vmem %s625, %s7867
        %v7869 = vld [vmem:[%s7868 + $0x4] sm:$0xc]
        %v7870 = vld [vmem:[%s7868 + $0x8] sm:$0xf]
        %v7871 = vld [vmem:[%s7868 + $0xc] sm:$0xf]
        %v7872 = vld [vmem:[%s7868 + $0x10] sm:$0xf]
        %v7873 = vld [vmem:[%s7868 + $0x14] sm:$0x3]
        %v7874 = vld [vmem:[%s7868 + $0x38] sm:$0xc]
        %v7875 = vld [vmem:[%s7868 + $0x3c] sm:$0xf]
        %v7876 = vld [vmem:[%s7868 + $0x40] sm:$0xf]
        %v7877 = vld [vmem:[%s7868 + $0x44] sm:$0xf]
        %v7878 = vld [vmem:[%s7868 + $0x48] sm:$0x3]
        %v7879 = vld [vmem:[%s7868 + $0x6c] sm:$0xc]
        %v7880 = vld [vmem:[%s7868 + $0x70] sm:$0xf]
        %v7881 = vld [vmem:[%s7868 + $0x74] sm:$0xf]
        %v7882 = vld [vmem:[%s7868 + $0x78] sm:$0xf]
        %v7883 = vld [vmem:[%s7868 + $0x7c] sm:$0x3]
        %v7884 = vld [vmem:[%s7868 + $0xa0] sm:$0xc]
        %v7885 = vld [vmem:[%s7868 + $0xa4] sm:$0xf]
        %v7886 = vld [vmem:[%s7868 + $0xa8] sm:$0xf]
        %v7887 = vld [vmem:[%s7868 + $0xac] sm:$0xf]
        %v7888 = vld [vmem:[%s7868 + $0xb0] sm:$0x3]
        %v7889 = vld [vmem:[%s7868 + $0xd4] sm:$0xc]
        %v7890 = vld [vmem:[%s7868 + $0xd8] sm:$0xf]
        %v7891 = vld [vmem:[%s7868 + $0xdc] sm:$0xf]
        %v7892 = vld [vmem:[%s7868 + $0xe0] sm:$0xf]
        %v7893 = vld [vmem:[%s7868 + $0xe4] sm:$0x3]
        %v7894 = vld [vmem:[%s7868 + $0x108] sm:$0xc]
        %v7895 = vld [vmem:[%s7868 + $0x10c] sm:$0xf]
        %v7896 = vld [vmem:[%s7868 + $0x110] sm:$0xf]
        %v7897 = vld [vmem:[%s7868 + $0x114] sm:$0xf]
        %v7898 = vld [vmem:[%s7868 + $0x118] sm:$0x3]
        %v7899 = vld [vmem:[%s7868 + $0x13c] sm:$0xc]
        %v7900 = vld [vmem:[%s7868 + $0x140] sm:$0xf]
        %v7901 = vld [vmem:[%s7868 + $0x144] sm:$0xf]
        %v7902 = vld [vmem:[%s7868 + $0x148] sm:$0xf]
        %v7903 = vld [vmem:[%s7868 + $0x14c] sm:$0x3]
        %v7904 = vld [vmem:[%s7868 + $0x170] sm:$0xc]
        %v7905 = vld [vmem:[%s7868 + $0x174] sm:$0xf]
        %v7906 = vld [vmem:[%s7868 + $0x178] sm:$0xf]
        %v7907 = vld [vmem:[%s7868 + $0x17c] sm:$0xf]
        %v7908 = vld [vmem:[%s7868 + $0x180] sm:$0x3]
        %v7949 = vrot.slane %v7869, 6
        %v7950 = vrot.slane %v7949, 4
        %v7951 = vrot.slane %v7870, 6
        %v7952 = vsel %vm718, %v7950, %v7951
        %v7953 = vrot.slane %v7951, 4
        %v7954 = vrot.slane %v7871, 6
        %v7955 = vsel %vm718, %v7953, %v7954
        %v7956 = vrot.slane %v7954, 4
        %v7957 = vrot.slane %v7872, 6
        %v7958 = vsel %vm718, %v7956, %v7957
        %v7959 = vrot.slane %v7957, 4
        %v7960 = vrot.slane %v7873, 6
        %v7961 = vsel %vm718, %v7959, %v7960
        %v7962 = vrot.slane %v7874, 6
        %v7963 = vrot.slane %v7962, 4
        %v7964 = vrot.slane %v7875, 6
        %v7965 = vsel %vm718, %v7963, %v7964
        %v7966 = vrot.slane %v7964, 4
        %v7967 = vrot.slane %v7876, 6
        %v7968 = vsel %vm718, %v7966, %v7967
        %v7969 = vrot.slane %v7967, 4
        %v7970 = vrot.slane %v7877, 6
        %v7971 = vsel %vm718, %v7969, %v7970
        %v7972 = vrot.slane %v7970, 4
        %v7973 = vrot.slane %v7878, 6
        %v7974 = vsel %vm718, %v7972, %v7973
        %v7975 = vrot.slane %v7879, 6
        %v7976 = vrot.slane %v7975, 4
        %v7977 = vrot.slane %v7880, 6
        %v7978 = vsel %vm718, %v7976, %v7977
        %v7979 = vrot.slane %v7977, 4
        %v7980 = vrot.slane %v7881, 6
        %v7981 = vsel %vm718, %v7979, %v7980
        %v7982 = vrot.slane %v7980, 4
        %v7983 = vrot.slane %v7882, 6
        %v7984 = vsel %vm718, %v7982, %v7983
        %v7985 = vrot.slane %v7983, 4
        %v7986 = vrot.slane %v7883, 6
        %v7987 = vsel %vm718, %v7985, %v7986
        %v7988 = vrot.slane %v7884, 6
        %v7989 = vrot.slane %v7988, 4
        %v7990 = vrot.slane %v7885, 6
        %v7991 = vsel %vm718, %v7989, %v7990
        %v7992 = vrot.slane %v7990, 4
        %v7993 = vrot.slane %v7886, 6
        %v7994 = vsel %vm718, %v7992, %v7993
        %v7995 = vrot.slane %v7993, 4
        %v7996 = vrot.slane %v7887, 6
        %v7997 = vsel %vm718, %v7995, %v7996
        %v7998 = vrot.slane %v7996, 4
        %v7999 = vrot.slane %v7888, 6
        %v8000 = vsel %vm718, %v7998, %v7999
        %v8001 = vrot.slane %v7889, 6
        %v8002 = vrot.slane %v8001, 4
        %v8003 = vrot.slane %v7890, 6
        %v8004 = vsel %vm718, %v8002, %v8003
        %v8005 = vrot.slane %v8003, 4
        %v8006 = vrot.slane %v7891, 6
        %v8007 = vsel %vm718, %v8005, %v8006
        %v8008 = vrot.slane %v8006, 4
        %v8009 = vrot.slane %v7892, 6
        %v8010 = vsel %vm718, %v8008, %v8009
        %v8011 = vrot.slane %v8009, 4
        %v8012 = vrot.slane %v7893, 6
        %v8013 = vsel %vm718, %v8011, %v8012
        %v8014 = vrot.slane %v7894, 6
        %v8015 = vrot.slane %v8014, 4
        %v8016 = vrot.slane %v7895, 6
        %v8017 = vsel %vm718, %v8015, %v8016
        %v8018 = vrot.slane %v8016, 4
        %v8019 = vrot.slane %v7896, 6
        %v8020 = vsel %vm718, %v8018, %v8019
        %v8021 = vrot.slane %v8019, 4
        %v8022 = vrot.slane %v7897, 6
        %v8023 = vsel %vm718, %v8021, %v8022
        %v8024 = vrot.slane %v8022, 4
        %v8025 = vrot.slane %v7898, 6
        %v8026 = vsel %vm718, %v8024, %v8025
        %v8027 = vrot.slane %v7899, 6
        %v8028 = vrot.slane %v8027, 4
        %v8029 = vrot.slane %v7900, 6
        %v8030 = vsel %vm718, %v8028, %v8029
        %v8031 = vrot.slane %v8029, 4
        %v8032 = vrot.slane %v7901, 6
        %v8033 = vsel %vm718, %v8031, %v8032
        %v8034 = vrot.slane %v8032, 4
        %v8035 = vrot.slane %v7902, 6
        %v8036 = vsel %vm718, %v8034, %v8035
        %v8037 = vrot.slane %v8035, 4
        %v8038 = vrot.slane %v7903, 6
        %v8039 = vsel %vm718, %v8037, %v8038
        %v8040 = vrot.slane %v7904, 6
        %v8041 = vrot.slane %v8040, 4
        %v8042 = vrot.slane %v7905, 6
        %v8043 = vsel %vm718, %v8041, %v8042
        %v8044 = vrot.slane %v8042, 4
        %v8045 = vrot.slane %v7906, 6
        %v8046 = vsel %vm718, %v8044, %v8045
        %v8047 = vrot.slane %v8045, 4
        %v8048 = vrot.slane %v7907, 6
        %v8049 = vsel %vm718, %v8047, %v8048
        %v8050 = vrot.slane %v8048, 4
        %v8051 = vrot.slane %v7908, 6
        %v8052 = vsel %vm718, %v8050, %v8051
        %s8053 = scalar_lea.vmem %s6, 192
        %v8054 = vld [vmem:[%s8053] sm:$0xf]
        %v8055 = vld [vmem:[%s8053 + $0x4] sm:$0xf]
        %v8056 = vld [vmem:[%s8053 + $0x8] sm:$0xf]
        %v8057 = vld [vmem:[%s8053 + $0xc] sm:$0xf]
        %v8058 = vld [vmem:[%s8053 + $0x10] sm:$0xf]
        %v8059 = vld [vmem:[%s8053 + $0x14] sm:$0xf]
        %v8060 = vld [vmem:[%s8053 + $0x18] sm:$0xf]
        %v8061 = vld [vmem:[%s8053 + $0x1c] sm:$0xf]
        %v8062 = vunpack.c.l.b16 %v7952
        %v8063 = vunpack.c.l.b16 %v7955
        %v8064 = vunpack.c.l.b16 %v7958
        %v8065 = vunpack.c.l.b16 %v7961
        %v8066 = vunpack.c.l.b16 %v7965
        %v8067 = vunpack.c.l.b16 %v7968
        %v8068 = vunpack.c.l.b16 %v7971
        %v8069 = vunpack.c.l.b16 %v7974
        %v8070 = vunpack.c.l.b16 %v7978
        %v8071 = vunpack.c.l.b16 %v7981
        %v8072 = vunpack.c.l.b16 %v7984
        %v8073 = vunpack.c.l.b16 %v7987
        %v8074 = vunpack.c.l.b16 %v7991
        %v8075 = vunpack.c.l.b16 %v7994
        %v8076 = vunpack.c.l.b16 %v7997
        %v8077 = vunpack.c.l.b16 %v8000
        %v8078 = vunpack.c.l.b16 %v8004
        %v8079 = vunpack.c.l.b16 %v8007
        %v8080 = vunpack.c.l.b16 %v8010
        %v8081 = vunpack.c.l.b16 %v8013
        %v8082 = vunpack.c.l.b16 %v8017
        %v8083 = vunpack.c.l.b16 %v8020
        %v8084 = vunpack.c.l.b16 %v8023
        %v8085 = vunpack.c.l.b16 %v8026
        %v8086 = vunpack.c.l.b16 %v8030
        %v8087 = vunpack.c.l.b16 %v8033
        %v8088 = vunpack.c.l.b16 %v8036
        %v8089 = vunpack.c.l.b16 %v8039
        %v8090 = vunpack.c.l.b16 %v8043
        %v8091 = vunpack.c.l.b16 %v8046
        %v8092 = vunpack.c.l.b16 %v8049
        %v8093 = vunpack.c.l.b16 %v8052
        %v8094 = vpack.c.b16 %v8063, %v8062
        %v8095 = vpack.c.b16 %v8065, %v8064
        %v8096 = vpack.c.b16 %v8067, %v8066
        %v8097 = vpack.c.b16 %v8069, %v8068
        %v8098 = vpack.c.b16 %v8071, %v8070
        %v8099 = vpack.c.b16 %v8073, %v8072
        %v8100 = vpack.c.b16 %v8075, %v8074
        %v8101 = vpack.c.b16 %v8077, %v8076
        %v8102 = vpack.c.b16 %v8079, %v8078
        %v8103 = vpack.c.b16 %v8081, %v8080
        %v8104 = vpack.c.b16 %v8083, %v8082
        %v8105 = vpack.c.b16 %v8085, %v8084
        %v8106 = vpack.c.b16 %v8087, %v8086
        %v8107 = vpack.c.b16 %v8089, %v8088
        %v8108 = vpack.c.b16 %v8091, %v8090
        %v8109 = vpack.c.b16 %v8093, %v8092
        %v8118 = vunpack.c.l.b16 %v8054
        %v8119 = vunpack.c.l.b16 %v8055
        %v8120 = vunpack.c.l.b16 %v8056
        %v8121 = vunpack.c.l.b16 %v8057
        %v8122 = vunpack.c.l.b16 %v8058
        %v8123 = vunpack.c.l.b16 %v8059
        %v8124 = vunpack.c.l.b16 %v8060
        %v8125 = vunpack.c.l.b16 %v8061
        %v8126 = vpack.c.b16 %v8119, %v8118
        %v8127 = vpack.c.b16 %v8121, %v8120
        %v8128 = vpack.c.b16 %v8123, %v8122
        %v8129 = vpack.c.b16 %v8125, %v8124
        %v8135 = vsel %vm910, %v8094, 0
        %v8138 = vsel %vm910, %v8095, 0
        %v8141 = vsel %vm910, %v8096, 0
        %v8144 = vsel %vm910, %v8097, 0
        %v8147 = vsel %vm910, %v8098, 0
        %v8150 = vsel %vm910, %v8099, 0
        %v8153 = vsel %vm910, %v8100, 0
        %v8156 = vsel %vm910, %v8101, 0
        %v8159 = vsel %vm910, %v8102, 0
        %v8162 = vsel %vm910, %v8103, 0
        %v8165 = vsel %vm910, %v8104, 0
        %v8168 = vsel %vm910, %v8105, 0
        %v8171 = vsel %vm910, %v8106, 0
        %v8174 = vsel %vm910, %v8107, 0
        %v8177 = vsel %vm910, %v8108, 0
        %v8180 = vsel %vm910, %v8109, 0
        %8182 = vmatprep.subr.bf16.mxu0 0
        %8183 = vmatpush1.bf16.msra.mxu0 %v8126
        %8184 = vmatprep.subr.bf16.mxu0 0
        %8185 = vmatpush1.bf16.msra.mxu0 %v8127
        %8186 = vmatprep.subr.bf16.mxu0 0
        %8187 = vmatpush1.bf16.msra.mxu0 %v8128
        %8188 = vmatprep.subr.bf16.mxu0 0
        %8189 = vmatpush1.bf16.msra.mxu0 %v8129
        %8190 = vmatprep.subr.bf16.mxu0 0
        %8191 = vmatpush1.bf16.msra.mxu0 0
        %8192 = vmatprep.subr.bf16.mxu0 0
        %8193 = vmatpush1.bf16.msra.mxu0 0
        %8194 = vmatprep.subr.bf16.mxu0 0
        %8195 = vmatpush1.bf16.msra.mxu0 0
        %8196 = vmatprep.subr.bf16.mxu0 0
        %8197 = vmatpush1.bf16.msra.mxu0 0
        %8198 = vmatprep.subr.bf16.mxu0 0
        %8199 = vmatpush1.bf16.msra.mxu0 0
        %8200 = vmatprep.subr.bf16.mxu0 0
        %8201 = vmatpush1.bf16.msra.mxu0 0
        %8202 = vmatprep.subr.bf16.mxu0 0
        %8203 = vmatpush1.bf16.msra.mxu0 0
        %8204 = vmatprep.subr.bf16.mxu0 0
        %8205 = vmatpush1.bf16.msra.mxu0 0
        %8206 = vmatprep.subr.bf16.mxu0 0
        %8207 = vmatpush1.bf16.msra.mxu0 0
        %8208 = vmatprep.subr.bf16.mxu0 0
        %8209 = vmatpush1.bf16.msra.mxu0 0
        %8210 = vmatprep.subr.bf16.mxu0 0
        %8211 = vmatpush1.bf16.msra.mxu0 0
        %8212 = vmatprep.subr.bf16.mxu0 0
        %8213 = vmatpush1.bf16.msra.mxu0 0
        %8214 = vmatprep.mubr.bf16.mxu0 0
        %8215 = vmatmul.mubr.bf16.gmra.mrb[0].mxu0 %v8135
        %v8216 = vpop.f32.mrb[0].mxu0
        %v8217 = vadd.f32 0.0, %v8216
        %v8218 = vpop.f32.mrb[0].mxu0
        %v8219 = vpop.f32.mrb[0].mxu0
        %v8220 = vadd.f32 0.0, %v8219
        %v8221 = vpop.f32.mrb[0].mxu0
        %8222 = vmatprep.mubr.bf16.mxu0 0
        %8223 = vmatmul.mubr.bf16.gmra.mrb[0].mxu0 %v8138
        %v8224 = vpop.f32.mrb[0].mxu0
        %v8225 = vadd.f32 0.0, %v8224
        %v8226 = vpop.f32.mrb[0].mxu0
        %v8227 = vpop.f32.mrb[0].mxu0
        %v8228 = vadd.f32 0.0, %v8227
        %v8229 = vpop.f32.mrb[0].mxu0
        %8230 = vmatprep.mubr.bf16.mxu0 0
        %8231 = vmatmul.mubr.bf16.gmra.mrb[0].mxu0 %v8141
        %v8232 = vpop.f32.mrb[0].mxu0
        %v8233 = vadd.f32 0.0, %v8232
        %v8234 = vpop.f32.mrb[0].mxu0
        %v8235 = vpop.f32.mrb[0].mxu0
        %v8236 = vadd.f32 0.0, %v8235
        %v8237 = vpop.f32.mrb[0].mxu0
        %8238 = vmatprep.mubr.bf16.mxu0 0
        %8239 = vmatmul.mubr.bf16.gmra.mrb[0].mxu0 %v8144
        %v8240 = vpop.f32.mrb[0].mxu0
        %v8241 = vadd.f32 0.0, %v8240
        %v8242 = vpop.f32.mrb[0].mxu0
        %v8243 = vpop.f32.mrb[0].mxu0
        %v8244 = vadd.f32 0.0, %v8243
        %v8245 = vpop.f32.mrb[0].mxu0
        %8246 = vmatprep.mubr.bf16.mxu0 0
        %8247 = vmatmul.mubr.bf16.gmra.mrb[0].mxu0 %v8147
        %v8248 = vpop.f32.mrb[0].mxu0
        %v8249 = vadd.f32 0.0, %v8248
        %v8250 = vpop.f32.mrb[0].mxu0
        %v8251 = vpop.f32.mrb[0].mxu0
        %v8252 = vadd.f32 0.0, %v8251
        %v8253 = vpop.f32.mrb[0].mxu0
        %8254 = vmatprep.mubr.bf16.mxu0 0
        %8255 = vmatmul.mubr.bf16.gmra.mrb[0].mxu0 %v8150
        %v8256 = vpop.f32.mrb[0].mxu0
        %v8257 = vadd.f32 0.0, %v8256
        %v8258 = vpop.f32.mrb[0].mxu0
        %v8259 = vpop.f32.mrb[0].mxu0
        %v8260 = vadd.f32 0.0, %v8259
        %v8261 = vpop.f32.mrb[0].mxu0
        %8262 = vmatprep.mubr.bf16.mxu0 0
        %8263 = vmatmul.mubr.bf16.gmra.mrb[0].mxu0 %v8153
        %v8264 = vpop.f32.mrb[0].mxu0
        %v8265 = vadd.f32 0.0, %v8264
        %v8266 = vpop.f32.mrb[0].mxu0
        %v8267 = vpop.f32.mrb[0].mxu0
        %v8268 = vadd.f32 0.0, %v8267
        %v8269 = vpop.f32.mrb[0].mxu0
        %8270 = vmatprep.mubr.bf16.mxu0 0
        %8271 = vmatmul.mubr.bf16.gmra.mrb[0].mxu0 %v8156
        %v8272 = vpop.f32.mrb[0].mxu0
        %v8273 = vadd.f32 0.0, %v8272
        %v8274 = vpop.f32.mrb[0].mxu0
        %v8275 = vpop.f32.mrb[0].mxu0
        %v8276 = vadd.f32 0.0, %v8275
        %v8277 = vpop.f32.mrb[0].mxu0
        %8278 = vmatprep.mubr.bf16.mxu0 0
        %8279 = vmatmul.mubr.bf16.gmra.mrb[0].mxu0 %v8159
        %v8280 = vpop.f32.mrb[0].mxu0
        %v8281 = vadd.f32 0.0, %v8280
        %v8282 = vpop.f32.mrb[0].mxu0
        %v8283 = vpop.f32.mrb[0].mxu0
        %v8284 = vadd.f32 0.0, %v8283
        %v8285 = vpop.f32.mrb[0].mxu0
        %8286 = vmatprep.mubr.bf16.mxu0 0
        %8287 = vmatmul.mubr.bf16.gmra.mrb[0].mxu0 %v8162
        %v8288 = vpop.f32.mrb[0].mxu0
        %v8289 = vadd.f32 0.0, %v8288
        %v8290 = vpop.f32.mrb[0].mxu0
        %v8291 = vpop.f32.mrb[0].mxu0
        %v8292 = vadd.f32 0.0, %v8291
        %v8293 = vpop.f32.mrb[0].mxu0
        %8294 = vmatprep.mubr.bf16.mxu0 0
        %8295 = vmatmul.mubr.bf16.gmra.mrb[0].mxu0 %v8165
        %v8296 = vpop.f32.mrb[0].mxu0
        %v8297 = vadd.f32 0.0, %v8296
        %v8298 = vpop.f32.mrb[0].mxu0
        %v8299 = vpop.f32.mrb[0].mxu0
        %v8300 = vadd.f32 0.0, %v8299
        %v8301 = vpop.f32.mrb[0].mxu0
        %8302 = vmatprep.mubr.bf16.mxu0 0
        %8303 = vmatmul.mubr.bf16.gmra.mrb[0].mxu0 %v8168
        %v8304 = vpop.f32.mrb[0].mxu0
        %v8305 = vadd.f32 0.0, %v8304
        %v8306 = vpop.f32.mrb[0].mxu0
        %v8307 = vpop.f32.mrb[0].mxu0
        %v8308 = vadd.f32 0.0, %v8307
        %v8309 = vpop.f32.mrb[0].mxu0
        %8310 = vmatprep.mubr.bf16.mxu0 0
        %8311 = vmatmul.mubr.bf16.gmra.mrb[0].mxu0 %v8171
        %v8312 = vpop.f32.mrb[0].mxu0
        %v8313 = vadd.f32 0.0, %v8312
        %v8314 = vpop.f32.mrb[0].mxu0
        %v8315 = vpop.f32.mrb[0].mxu0
        %v8316 = vadd.f32 0.0, %v8315
        %v8317 = vpop.f32.mrb[0].mxu0
        %8318 = vmatprep.mubr.bf16.mxu0 0
        %8319 = vmatmul.mubr.bf16.gmra.mrb[0].mxu0 %v8174
        %v8320 = vpop.f32.mrb[0].mxu0
        %v8321 = vadd.f32 0.0, %v8320
        %v8322 = vpop.f32.mrb[0].mxu0
        %v8323 = vpop.f32.mrb[0].mxu0
        %v8324 = vadd.f32 0.0, %v8323
        %v8325 = vpop.f32.mrb[0].mxu0
        %8326 = vmatprep.mubr.bf16.mxu0 0
        %8327 = vmatmul.mubr.bf16.gmra.mrb[0].mxu0 %v8177
        %v8328 = vpop.f32.mrb[0].mxu0
        %v8329 = vadd.f32 0.0, %v8328
        %v8330 = vpop.f32.mrb[0].mxu0
        %v8331 = vpop.f32.mrb[0].mxu0
        %v8332 = vadd.f32 0.0, %v8331
        %v8333 = vpop.f32.mrb[0].mxu0
        %8334 = vmatprep.mubr.bf16.mxu0 0
        %8335 = vmatmul.mubr.bf16.gmra.mrb[0].mxu0 %v8180
        %v8336 = vpop.f32.mrb[0].mxu0
        %v8337 = vadd.f32 0.0, %v8336
        %v8338 = vpop.f32.mrb[0].mxu0
        %v8339 = vpop.f32.mrb[0].mxu0
        %v8340 = vadd.f32 0.0, %v8339
        %v8341 = vpop.f32.mrb[0].mxu0
        %8342 = vdwg.mxu0
        %v8343 = vadd.f32 %v7833, %v8217
        %v8344 = vadd.f32 %v7834, %v8220
        %v8345 = vadd.f32 %v7835, %v8225
        %v8346 = vadd.f32 %v7836, %v8228
        %v8347 = vadd.f32 %v7837, %v8233
        %v8348 = vadd.f32 %v7838, %v8236
        %v8349 = vadd.f32 %v7839, %v8241
        %v8350 = vadd.f32 %v7840, %v8244
        %v8351 = vadd.f32 %v7841, %v8249
        %v8352 = vadd.f32 %v7842, %v8252
        %v8353 = vadd.f32 %v7843, %v8257
        %v8354 = vadd.f32 %v7844, %v8260
        %v8355 = vadd.f32 %v7845, %v8265
        %v8356 = vadd.f32 %v7846, %v8268
        %v8357 = vadd.f32 %v7847, %v8273
        %v8358 = vadd.f32 %v7848, %v8276
        %v8359 = vadd.f32 %v7849, %v8281
        %v8360 = vadd.f32 %v7850, %v8284
        %v8361 = vadd.f32 %v7851, %v8289
        %v8362 = vadd.f32 %v7852, %v8292
        %v8363 = vadd.f32 %v7853, %v8297
        %v8364 = vadd.f32 %v7854, %v8300
        %v8365 = vadd.f32 %v7855, %v8305
        %v8366 = vadd.f32 %v7856, %v8308
        %v8367 = vadd.f32 %v7857, %v8313
        %v8368 = vadd.f32 %v7858, %v8316
        %v8369 = vadd.f32 %v7859, %v8321
        %v8370 = vadd.f32 %v7860, %v8324
        %v8371 = vadd.f32 %v7861, %v8329
        %v8372 = vadd.f32 %v7862, %v8332
        %v8373 = vadd.f32 %v7863, %v8337
        %v8374 = vadd.f32 %v7864, %v8340
        %v8375 = vld [vmem:[%s7868 + $0x10] sm:$0xc]
        %v8376 = vld [vmem:[%s7868 + $0x14] sm:$0xf]
        %v8377 = vld [vmem:[%s7868 + $0x18] sm:$0xf]
        %v8378 = vld [vmem:[%s7868 + $0x1c] sm:$0xf]
        %v8379 = vld [vmem:[%s7868 + $0x20] sm:$0x3]
        %v8380 = vld [vmem:[%s7868 + $0x44] sm:$0xc]
        %v8381 = vld [vmem:[%s7868 + $0x48] sm:$0xf]
        %v8382 = vld [vmem:[%s7868 + $0x4c] sm:$0xf]
        %v8383 = vld [vmem:[%s7868 + $0x50] sm:$0xf]
        %v8384 = vld [vmem:[%s7868 + $0x54] sm:$0x3]
        %v8385 = vld [vmem:[%s7868 + $0x78] sm:$0xc]
        %v8386 = vld [vmem:[%s7868 + $0x7c] sm:$0xf]
        %v8387 = vld [vmem:[%s7868 + $0x80] sm:$0xf]
        %v8388 = vld [vmem:[%s7868 + $0x84] sm:$0xf]
        %v8389 = vld [vmem:[%s7868 + $0x88] sm:$0x3]
        %v8390 = vld [vmem:[%s7868 + $0xac] sm:$0xc]
        %v8391 = vld [vmem:[%s7868 + $0xb0] sm:$0xf]
        %v8392 = vld [vmem:[%s7868 + $0xb4] sm:$0xf]
        %v8393 = vld [vmem:[%s7868 + $0xb8] sm:$0xf]
        %v8394 = vld [vmem:[%s7868 + $0xbc] sm:$0x3]
        %v8395 = vld [vmem:[%s7868 + $0xe0] sm:$0xc]
        %v8396 = vld [vmem:[%s7868 + $0xe4] sm:$0xf]
        %v8397 = vld [vmem:[%s7868 + $0xe8] sm:$0xf]
        %v8398 = vld [vmem:[%s7868 + $0xec] sm:$0xf]
        %v8399 = vld [vmem:[%s7868 + $0xf0] sm:$0x3]
        %v8400 = vld [vmem:[%s7868 + $0x114] sm:$0xc]
        %v8401 = vld [vmem:[%s7868 + $0x118] sm:$0xf]
        %v8402 = vld [vmem:[%s7868 + $0x11c] sm:$0xf]
        %v8403 = vld [vmem:[%s7868 + $0x120] sm:$0xf]
        %v8404 = vld [vmem:[%s7868 + $0x124] sm:$0x3]
        %v8405 = vld [vmem:[%s7868 + $0x148] sm:$0xc]
        %v8406 = vld [vmem:[%s7868 + $0x14c] sm:$0xf]
        %v8407 = vld [vmem:[%s7868 + $0x150] sm:$0xf]
        %v8408 = vld [vmem:[%s7868 + $0x154] sm:$0xf]
        %v8409 = vld [vmem:[%s7868 + $0x158] sm:$0x3]
        %v8410 = vld [vmem:[%s7868 + $0x17c] sm:$0xc]
        %v8411 = vld [vmem:[%s7868 + $0x180] sm:$0xf]
        %v8412 = vld [vmem:[%s7868 + $0x184] sm:$0xf]
        %v8413 = vld [vmem:[%s7868 + $0x188] sm:$0xf]
        %v8414 = vld [vmem:[%s7868 + $0x18c] sm:$0x3]
        %v8455 = vrot.slane %v8375, 6
        %v8456 = vrot.slane %v8455, 4
        %v8457 = vrot.slane %v8376, 6
        %v8458 = vsel %vm718, %v8456, %v8457
        %v8459 = vrot.slane %v8457, 4
        %v8460 = vrot.slane %v8377, 6
        %v8461 = vsel %vm718, %v8459, %v8460
        %v8462 = vrot.slane %v8460, 4
        %v8463 = vrot.slane %v8378, 6
        %v8464 = vsel %vm718, %v8462, %v8463
        %v8465 = vrot.slane %v8463, 4
        %v8466 = vrot.slane %v8379, 6
        %v8467 = vsel %vm718, %v8465, %v8466
        %v8468 = vrot.slane %v8380, 6
        %v8469 = vrot.slane %v8468, 4
        %v8470 = vrot.slane %v8381, 6
        %v8471 = vsel %vm718, %v8469, %v8470
        %v8472 = vrot.slane %v8470, 4
        %v8473 = vrot.slane %v8382, 6
        %v8474 = vsel %vm718, %v8472, %v8473
        %v8475 = vrot.slane %v8473, 4
        %v8476 = vrot.slane %v8383, 6
        %v8477 = vsel %vm718, %v8475, %v8476
        %v8478 = vrot.slane %v8476, 4
        %v8479 = vrot.slane %v8384, 6
        %v8480 = vsel %vm718, %v8478, %v8479
        %v8481 = vrot.slane %v8385, 6
        %v8482 = vrot.slane %v8481, 4
        %v8483 = vrot.slane %v8386, 6
        %v8484 = vsel %vm718, %v8482, %v8483
        %v8485 = vrot.slane %v8483, 4
        %v8486 = vrot.slane %v8387, 6
        %v8487 = vsel %vm718, %v8485, %v8486
        %v8488 = vrot.slane %v8486, 4
        %v8489 = vrot.slane %v8388, 6
        %v8490 = vsel %vm718, %v8488, %v8489
        %v8491 = vrot.slane %v8489, 4
        %v8492 = vrot.slane %v8389, 6
        %v8493 = vsel %vm718, %v8491, %v8492
        %v8494 = vrot.slane %v8390, 6
        %v8495 = vrot.slane %v8494, 4
        %v8496 = vrot.slane %v8391, 6
        %v8497 = vsel %vm718, %v8495, %v8496
        %v8498 = vrot.slane %v8496, 4
        %v8499 = vrot.slane %v8392, 6
        %v8500 = vsel %vm718, %v8498, %v8499
        %v8501 = vrot.slane %v8499, 4
        %v8502 = vrot.slane %v8393, 6
        %v8503 = vsel %vm718, %v8501, %v8502
        %v8504 = vrot.slane %v8502, 4
        %v8505 = vrot.slane %v8394, 6
        %v8506 = vsel %vm718, %v8504, %v8505
        %v8507 = vrot.slane %v8395, 6
        %v8508 = vrot.slane %v8507, 4
        %v8509 = vrot.slane %v8396, 6
        %v8510 = vsel %vm718, %v8508, %v8509
        %v8511 = vrot.slane %v8509, 4
        %v8512 = vrot.slane %v8397, 6
        %v8513 = vsel %vm718, %v8511, %v8512
        %v8514 = vrot.slane %v8512, 4
        %v8515 = vrot.slane %v8398, 6
        %v8516 = vsel %vm718, %v8514, %v8515
        %v8517 = vrot.slane %v8515, 4
        %v8518 = vrot.slane %v8399, 6
        %v8519 = vsel %vm718, %v8517, %v8518
        %v8520 = vrot.slane %v8400, 6
        %v8521 = vrot.slane %v8520, 4
        %v8522 = vrot.slane %v8401, 6
        %v8523 = vsel %vm718, %v8521, %v8522
        %v8524 = vrot.slane %v8522, 4
        %v8525 = vrot.slane %v8402, 6
        %v8526 = vsel %vm718, %v8524, %v8525
        %v8527 = vrot.slane %v8525, 4
        %v8528 = vrot.slane %v8403, 6
        %v8529 = vsel %vm718, %v8527, %v8528
        %v8530 = vrot.slane %v8528, 4
        %v8531 = vrot.slane %v8404, 6
        %v8532 = vsel %vm718, %v8530, %v8531
        %v8533 = vrot.slane %v8405, 6
        %v8534 = vrot.slane %v8533, 4
        %v8535 = vrot.slane %v8406, 6
        %v8536 = vsel %vm718, %v8534, %v8535
        %v8537 = vrot.slane %v8535, 4
        %v8538 = vrot.slane %v8407, 6
        %v8539 = vsel %vm718, %v8537, %v8538
        %v8540 = vrot.slane %v8538, 4
        %v8541 = vrot.slane %v8408, 6
        %v8542 = vsel %vm718, %v8540, %v8541
        %v8543 = vrot.slane %v8541, 4
        %v8544 = vrot.slane %v8409, 6
        %v8545 = vsel %vm718, %v8543, %v8544
        %v8546 = vrot.slane %v8410, 6
        %v8547 = vrot.slane %v8546, 4
        %v8548 = vrot.slane %v8411, 6
        %v8549 = vsel %vm718, %v8547, %v8548
        %v8550 = vrot.slane %v8548, 4
        %v8551 = vrot.slane %v8412, 6
        %v8552 = vsel %vm718, %v8550, %v8551
        %v8553 = vrot.slane %v8551, 4
        %v8554 = vrot.slane %v8413, 6
        %v8555 = vsel %vm718, %v8553, %v8554
        %v8556 = vrot.slane %v8554, 4
        %v8557 = vrot.slane %v8414, 6
        %v8558 = vsel %vm718, %v8556, %v8557
        %s8559 = scalar_lea.vmem %s6, 224
        %v8560 = vld [vmem:[%s8559] sm:$0xf]
        %v8561 = vld [vmem:[%s8559 + $0x4] sm:$0xf]
        %v8562 = vld [vmem:[%s8559 + $0x8] sm:$0xf]
        %v8563 = vld [vmem:[%s8559 + $0xc] sm:$0xf]
        %v8564 = vld [vmem:[%s8559 + $0x10] sm:$0xf]
        %v8565 = vld [vmem:[%s8559 + $0x14] sm:$0xf]
        %v8566 = vld [vmem:[%s8559 + $0x18] sm:$0xf]
        %v8567 = vld [vmem:[%s8559 + $0x1c] sm:$0xf]
        %v8568 = vunpack.c.l.b16 %v8458
        %v8569 = vunpack.c.l.b16 %v8461
        %v8570 = vunpack.c.l.b16 %v8464
        %v8571 = vunpack.c.l.b16 %v8467
        %v8572 = vunpack.c.l.b16 %v8471
        %v8573 = vunpack.c.l.b16 %v8474
        %v8574 = vunpack.c.l.b16 %v8477
        %v8575 = vunpack.c.l.b16 %v8480
        %v8576 = vunpack.c.l.b16 %v8484
        %v8577 = vunpack.c.l.b16 %v8487
        %v8578 = vunpack.c.l.b16 %v8490
        %v8579 = vunpack.c.l.b16 %v8493
        %v8580 = vunpack.c.l.b16 %v8497
        %v8581 = vunpack.c.l.b16 %v8500
        %v8582 = vunpack.c.l.b16 %v8503
        %v8583 = vunpack.c.l.b16 %v8506
        %v8584 = vunpack.c.l.b16 %v8510
        %v8585 = vunpack.c.l.b16 %v8513
        %v8586 = vunpack.c.l.b16 %v8516
        %v8587 = vunpack.c.l.b16 %v8519
        %v8588 = vunpack.c.l.b16 %v8523
        %v8589 = vunpack.c.l.b16 %v8526
        %v8590 = vunpack.c.l.b16 %v8529
        %v8591 = vunpack.c.l.b16 %v8532
        %v8592 = vunpack.c.l.b16 %v8536
        %v8593 = vunpack.c.l.b16 %v8539
        %v8594 = vunpack.c.l.b16 %v8542
        %v8595 = vunpack.c.l.b16 %v8545
        %v8596 = vunpack.c.l.b16 %v8549
        %v8597 = vunpack.c.l.b16 %v8552
        %v8598 = vunpack.c.l.b16 %v8555
        %v8599 = vunpack.c.l.b16 %v8558
        %v8600 = vpack.c.b16 %v8569, %v8568
        %v8601 = vpack.c.b16 %v8571, %v8570
        %v8602 = vpack.c.b16 %v8573, %v8572
        %v8603 = vpack.c.b16 %v8575, %v8574
        %v8604 = vpack.c.b16 %v8577, %v8576
        %v8605 = vpack.c.b16 %v8579, %v8578
        %v8606 = vpack.c.b16 %v8581, %v8580
        %v8607 = vpack.c.b16 %v8583, %v8582
        %v8608 = vpack.c.b16 %v8585, %v8584
        %v8609 = vpack.c.b16 %v8587, %v8586
        %v8610 = vpack.c.b16 %v8589, %v8588
        %v8611 = vpack.c.b16 %v8591, %v8590
        %v8612 = vpack.c.b16 %v8593, %v8592
        %v8613 = vpack.c.b16 %v8595, %v8594
        %v8614 = vpack.c.b16 %v8597, %v8596
        %v8615 = vpack.c.b16 %v8599, %v8598
        %v8624 = vunpack.c.l.b16 %v8560
        %v8625 = vunpack.c.l.b16 %v8561
        %v8626 = vunpack.c.l.b16 %v8562
        %v8627 = vunpack.c.l.b16 %v8563
        %v8628 = vunpack.c.l.b16 %v8564
        %v8629 = vunpack.c.l.b16 %v8565
        %v8630 = vunpack.c.l.b16 %v8566
        %v8631 = vunpack.c.l.b16 %v8567
        %v8632 = vpack.c.b16 %v8625, %v8624
        %v8633 = vpack.c.b16 %v8627, %v8626
        %v8634 = vpack.c.b16 %v8629, %v8628
        %v8635 = vpack.c.b16 %v8631, %v8630
        %v8641 = vsel %vm910, %v8600, 0
        %v8644 = vsel %vm910, %v8601, 0
        %v8647 = vsel %vm910, %v8602, 0
        %v8650 = vsel %vm910, %v8603, 0
        %v8653 = vsel %vm910, %v8604, 0
        %v8656 = vsel %vm910, %v8605, 0
        %v8659 = vsel %vm910, %v8606, 0
        %v8662 = vsel %vm910, %v8607, 0
        %v8665 = vsel %vm910, %v8608, 0
        %v8668 = vsel %vm910, %v8609, 0
        %v8671 = vsel %vm910, %v8610, 0
        %v8674 = vsel %vm910, %v8611, 0
        %v8677 = vsel %vm910, %v8612, 0
        %v8680 = vsel %vm910, %v8613, 0
        %v8683 = vsel %vm910, %v8614, 0
        %v8686 = vsel %vm910, %v8615, 0
        %8688 = vmatprep.subr.bf16.mxu0 0
        %8689 = vmatpush1.bf16.msra.mxu0 %v8632
        %8690 = vmatprep.subr.bf16.mxu0 0
        %8691 = vmatpush1.bf16.msra.mxu0 %v8633
        %8692 = vmatprep.subr.bf16.mxu0 0
        %8693 = vmatpush1.bf16.msra.mxu0 %v8634
        %8694 = vmatprep.subr.bf16.mxu0 0
        %8695 = vmatpush1.bf16.msra.mxu0 %v8635
        %8696 = vmatprep.subr.bf16.mxu0 0
        %8697 = vmatpush1.bf16.msra.mxu0 0
        %8698 = vmatprep.subr.bf16.mxu0 0
        %8699 = vmatpush1.bf16.msra.mxu0 0
        %8700 = vmatprep.subr.bf16.mxu0 0
        %8701 = vmatpush1.bf16.msra.mxu0 0
        %8702 = vmatprep.subr.bf16.mxu0 0
        %8703 = vmatpush1.bf16.msra.mxu0 0
        %8704 = vmatprep.subr.bf16.mxu0 0
        %8705 = vmatpush1.bf16.msra.mxu0 0
        %8706 = vmatprep.subr.bf16.mxu0 0
        %8707 = vmatpush1.bf16.msra.mxu0 0
        %8708 = vmatprep.subr.bf16.mxu0 0
        %8709 = vmatpush1.bf16.msra.mxu0 0
        %8710 = vmatprep.subr.bf16.mxu0 0
        %8711 = vmatpush1.bf16.msra.mxu0 0
        %8712 = vmatprep.subr.bf16.mxu0 0
        %8713 = vmatpush1.bf16.msra.mxu0 0
        %8714 = vmatprep.subr.bf16.mxu0 0
        %8715 = vmatpush1.bf16.msra.mxu0 0
        %8716 = vmatprep.subr.bf16.mxu0 0
        %8717 = vmatpush1.bf16.msra.mxu0 0
        %8718 = vmatprep.subr.bf16.mxu0 0
        %8719 = vmatpush1.bf16.msra.mxu0 0
        %8720 = vmatprep.mubr.bf16.mxu0 0
        %8721 = vmatmul.mubr.bf16.gmra.mrb[0].mxu0 %v8641
        %v8722 = vpop.f32.mrb[0].mxu0
        %v8723 = vadd.f32 0.0, %v8722
        %v8724 = vpop.f32.mrb[0].mxu0
        %v8725 = vpop.f32.mrb[0].mxu0
        %v8726 = vadd.f32 0.0, %v8725
        %v8727 = vpop.f32.mrb[0].mxu0
        %8728 = vmatprep.mubr.bf16.mxu0 0
        %8729 = vmatmul.mubr.bf16.gmra.mrb[0].mxu0 %v8644
        %v8730 = vpop.f32.mrb[0].mxu0
        %v8731 = vadd.f32 0.0, %v8730
        %v8732 = vpop.f32.mrb[0].mxu0
        %v8733 = vpop.f32.mrb[0].mxu0
        %v8734 = vadd.f32 0.0, %v8733
        %v8735 = vpop.f32.mrb[0].mxu0
        %8736 = vmatprep.mubr.bf16.mxu0 0
        %8737 = vmatmul.mubr.bf16.gmra.mrb[0].mxu0 %v8647
        %v8738 = vpop.f32.mrb[0].mxu0
        %v8739 = vadd.f32 0.0, %v8738
        %v8740 = vpop.f32.mrb[0].mxu0
        %v8741 = vpop.f32.mrb[0].mxu0
        %v8742 = vadd.f32 0.0, %v8741
        %v8743 = vpop.f32.mrb[0].mxu0
        %8744 = vmatprep.mubr.bf16.mxu0 0
        %8745 = vmatmul.mubr.bf16.gmra.mrb[0].mxu0 %v8650
        %v8746 = vpop.f32.mrb[0].mxu0
        %v8747 = vadd.f32 0.0, %v8746
        %v8748 = vpop.f32.mrb[0].mxu0
        %v8749 = vpop.f32.mrb[0].mxu0
        %v8750 = vadd.f32 0.0, %v8749
        %v8751 = vpop.f32.mrb[0].mxu0
        %8752 = vmatprep.mubr.bf16.mxu0 0
        %8753 = vmatmul.mubr.bf16.gmra.mrb[0].mxu0 %v8653
        %v8754 = vpop.f32.mrb[0].mxu0
        %v8755 = vadd.f32 0.0, %v8754
        %v8756 = vpop.f32.mrb[0].mxu0
        %v8757 = vpop.f32.mrb[0].mxu0
        %v8758 = vadd.f32 0.0, %v8757
        %v8759 = vpop.f32.mrb[0].mxu0
        %8760 = vmatprep.mubr.bf16.mxu0 0
        %8761 = vmatmul.mubr.bf16.gmra.mrb[0].mxu0 %v8656
        %v8762 = vpop.f32.mrb[0].mxu0
        %v8763 = vadd.f32 0.0, %v8762
        %v8764 = vpop.f32.mrb[0].mxu0
        %v8765 = vpop.f32.mrb[0].mxu0
        %v8766 = vadd.f32 0.0, %v8765
        %v8767 = vpop.f32.mrb[0].mxu0
        %8768 = vmatprep.mubr.bf16.mxu0 0
        %8769 = vmatmul.mubr.bf16.gmra.mrb[0].mxu0 %v8659
        %v8770 = vpop.f32.mrb[0].mxu0
        %v8771 = vadd.f32 0.0, %v8770
        %v8772 = vpop.f32.mrb[0].mxu0
        %v8773 = vpop.f32.mrb[0].mxu0
        %v8774 = vadd.f32 0.0, %v8773
        %v8775 = vpop.f32.mrb[0].mxu0
        %8776 = vmatprep.mubr.bf16.mxu0 0
        %8777 = vmatmul.mubr.bf16.gmra.mrb[0].mxu0 %v8662
        %v8778 = vpop.f32.mrb[0].mxu0
        %v8779 = vadd.f32 0.0, %v8778
        %v8780 = vpop.f32.mrb[0].mxu0
        %v8781 = vpop.f32.mrb[0].mxu0
        %v8782 = vadd.f32 0.0, %v8781
        %v8783 = vpop.f32.mrb[0].mxu0
        %8784 = vmatprep.mubr.bf16.mxu0 0
        %8785 = vmatmul.mubr.bf16.gmra.mrb[0].mxu0 %v8665
        %v8786 = vpop.f32.mrb[0].mxu0
        %v8787 = vadd.f32 0.0, %v8786
        %v8788 = vpop.f32.mrb[0].mxu0
        %v8789 = vpop.f32.mrb[0].mxu0
        %v8790 = vadd.f32 0.0, %v8789
        %v8791 = vpop.f32.mrb[0].mxu0
        %8792 = vmatprep.mubr.bf16.mxu0 0
        %8793 = vmatmul.mubr.bf16.gmra.mrb[0].mxu0 %v8668
        %v8794 = vpop.f32.mrb[0].mxu0
        %v8795 = vadd.f32 0.0, %v8794
        %v8796 = vpop.f32.mrb[0].mxu0
        %v8797 = vpop.f32.mrb[0].mxu0
        %v8798 = vadd.f32 0.0, %v8797
        %v8799 = vpop.f32.mrb[0].mxu0
        %8800 = vmatprep.mubr.bf16.mxu0 0
        %8801 = vmatmul.mubr.bf16.gmra.mrb[0].mxu0 %v8671
        %v8802 = vpop.f32.mrb[0].mxu0
        %v8803 = vadd.f32 0.0, %v8802
        %v8804 = vpop.f32.mrb[0].mxu0
        %v8805 = vpop.f32.mrb[0].mxu0
        %v8806 = vadd.f32 0.0, %v8805
        %v8807 = vpop.f32.mrb[0].mxu0
        %8808 = vmatprep.mubr.bf16.mxu0 0
        %8809 = vmatmul.mubr.bf16.gmra.mrb[0].mxu0 %v8674
        %v8810 = vpop.f32.mrb[0].mxu0
        %v8811 = vadd.f32 0.0, %v8810
        %v8812 = vpop.f32.mrb[0].mxu0
        %v8813 = vpop.f32.mrb[0].mxu0
        %v8814 = vadd.f32 0.0, %v8813
        %v8815 = vpop.f32.mrb[0].mxu0
        %8816 = vmatprep.mubr.bf16.mxu0 0
        %8817 = vmatmul.mubr.bf16.gmra.mrb[0].mxu0 %v8677
        %v8818 = vpop.f32.mrb[0].mxu0
        %v8819 = vadd.f32 0.0, %v8818
        %v8820 = vpop.f32.mrb[0].mxu0
        %v8821 = vpop.f32.mrb[0].mxu0
        %v8822 = vadd.f32 0.0, %v8821
        %v8823 = vpop.f32.mrb[0].mxu0
        %8824 = vmatprep.mubr.bf16.mxu0 0
        %8825 = vmatmul.mubr.bf16.gmra.mrb[0].mxu0 %v8680
        %v8826 = vpop.f32.mrb[0].mxu0
        %v8827 = vadd.f32 0.0, %v8826
        %v8828 = vpop.f32.mrb[0].mxu0
        %v8829 = vpop.f32.mrb[0].mxu0
        %v8830 = vadd.f32 0.0, %v8829
        %v8831 = vpop.f32.mrb[0].mxu0
        %8832 = vmatprep.mubr.bf16.mxu0 0
        %8833 = vmatmul.mubr.bf16.gmra.mrb[0].mxu0 %v8683
        %v8834 = vpop.f32.mrb[0].mxu0
        %v8835 = vadd.f32 0.0, %v8834
        %v8836 = vpop.f32.mrb[0].mxu0
        %v8837 = vpop.f32.mrb[0].mxu0
        %v8838 = vadd.f32 0.0, %v8837
        %v8839 = vpop.f32.mrb[0].mxu0
        %8840 = vmatprep.mubr.bf16.mxu0 0
        %8841 = vmatmul.mubr.bf16.gmra.mrb[0].mxu0 %v8686
        %v8842 = vpop.f32.mrb[0].mxu0
        %v8843 = vadd.f32 0.0, %v8842
        %v8844 = vpop.f32.mrb[0].mxu0
        %v8845 = vpop.f32.mrb[0].mxu0
        %v8846 = vadd.f32 0.0, %v8845
        %v8847 = vpop.f32.mrb[0].mxu0
        %8848 = vdwg.mxu0
        %v8849 = vadd.f32 %v8343, %v8723
        %v8850 = vadd.f32 %v8344, %v8726
        %v8851 = vadd.f32 %v8345, %v8731
        %v8852 = vadd.f32 %v8346, %v8734
        %v8853 = vadd.f32 %v8347, %v8739
        %v8854 = vadd.f32 %v8348, %v8742
        %v8855 = vadd.f32 %v8349, %v8747
        %v8856 = vadd.f32 %v8350, %v8750
        %v8857 = vadd.f32 %v8351, %v8755
        %v8858 = vadd.f32 %v8352, %v8758
        %v8859 = vadd.f32 %v8353, %v8763
        %v8860 = vadd.f32 %v8354, %v8766
        %v8861 = vadd.f32 %v8355, %v8771
        %v8862 = vadd.f32 %v8356, %v8774
        %v8863 = vadd.f32 %v8357, %v8779
        %v8864 = vadd.f32 %v8358, %v8782
        %v8865 = vadd.f32 %v8359, %v8787
        %v8866 = vadd.f32 %v8360, %v8790
        %v8867 = vadd.f32 %v8361, %v8795
        %v8868 = vadd.f32 %v8362, %v8798
        %v8869 = vadd.f32 %v8363, %v8803
        %v8870 = vadd.f32 %v8364, %v8806
        %v8871 = vadd.f32 %v8365, %v8811
        %v8872 = vadd.f32 %v8366, %v8814
        %v8873 = vadd.f32 %v8367, %v8819
        %v8874 = vadd.f32 %v8368, %v8822
        %v8875 = vadd.f32 %v8369, %v8827
        %v8876 = vadd.f32 %v8370, %v8830
        %v8877 = vadd.f32 %v8371, %v8835
        %v8878 = vadd.f32 %v8372, %v8838
        %v8879 = vadd.f32 %v8373, %v8843
        %v8880 = vadd.f32 %v8374, %v8846
        %v8881 = vld [vmem:[%s7868 + $0x1c] sm:$0xc]
        %v8882 = vld [vmem:[%s7868 + $0x20] sm:$0xf]
        %v8883 = vld [vmem:[%s7868 + $0x24] sm:$0xf]
        %v8884 = vld [vmem:[%s7868 + $0x28] sm:$0xf]
        %v8885 = vld [vmem:[%s7868 + $0x2c] sm:$0x3]
        %v8886 = vld [vmem:[%s7868 + $0x50] sm:$0xc]
        %v8887 = vld [vmem:[%s7868 + $0x54] sm:$0xf]
        %v8888 = vld [vmem:[%s7868 + $0x58] sm:$0xf]
        %v8889 = vld [vmem:[%s7868 + $0x5c] sm:$0xf]
        %v8890 = vld [vmem:[%s7868 + $0x60] sm:$0x3]
        %v8891 = vld [vmem:[%s7868 + $0x84] sm:$0xc]
        %v8892 = vld [vmem:[%s7868 + $0x88] sm:$0xf]
        %v8893 = vld [vmem:[%s7868 + $0x8c] sm:$0xf]
        %v8894 = vld [vmem:[%s7868 + $0x90] sm:$0xf]
        %v8895 = vld [vmem:[%s7868 + $0x94] sm:$0x3]
        %v8896 = vld [vmem:[%s7868 + $0xb8] sm:$0xc]
        %v8897 = vld [vmem:[%s7868 + $0xbc] sm:$0xf]
        %v8898 = vld [vmem:[%s7868 + $0xc0] sm:$0xf]
        %v8899 = vld [vmem:[%s7868 + $0xc4] sm:$0xf]
        %v8900 = vld [vmem:[%s7868 + $0xc8] sm:$0x3]
        %v8901 = vld [vmem:[%s7868 + $0xec] sm:$0xc]
        %v8902 = vld [vmem:[%s7868 + $0xf0] sm:$0xf]
        %v8903 = vld [vmem:[%s7868 + $0xf4] sm:$0xf]
        %v8904 = vld [vmem:[%s7868 + $0xf8] sm:$0xf]
        %v8905 = vld [vmem:[%s7868 + $0xfc] sm:$0x3]
        %v8906 = vld [vmem:[%s7868 + $0x120] sm:$0xc]
        %v8907 = vld [vmem:[%s7868 + $0x124] sm:$0xf]
        %v8908 = vld [vmem:[%s7868 + $0x128] sm:$0xf]
        %v8909 = vld [vmem:[%s7868 + $0x12c] sm:$0xf]
        %v8910 = vld [vmem:[%s7868 + $0x130] sm:$0x3]
        %v8911 = vld [vmem:[%s7868 + $0x154] sm:$0xc]
        %v8912 = vld [vmem:[%s7868 + $0x158] sm:$0xf]
        %v8913 = vld [vmem:[%s7868 + $0x15c] sm:$0xf]
        %v8914 = vld [vmem:[%s7868 + $0x160] sm:$0xf]
        %v8915 = vld [vmem:[%s7868 + $0x164] sm:$0x3]
        %v8916 = vld [vmem:[%s7868 + $0x188] sm:$0xc]
        %v8917 = vld [vmem:[%s7868 + $0x18c] sm:$0xf]
        %v8918 = vld [vmem:[%s7868 + $0x190] sm:$0xf]
        %v8919 = vld [vmem:[%s7868 + $0x194] sm:$0xf]
        %v8920 = vld [vmem:[%s7868 + $0x198] sm:$0x3]
        %v8961 = vrot.slane %v8881, 6
        %v8962 = vrot.slane %v8961, 4
        %v8963 = vrot.slane %v8882, 6
        %v8964 = vsel %vm718, %v8962, %v8963
        %v8965 = vrot.slane %v8963, 4
        %v8966 = vrot.slane %v8883, 6
        %v8967 = vsel %vm718, %v8965, %v8966
        %v8968 = vrot.slane %v8966, 4
        %v8969 = vrot.slane %v8884, 6
        %v8970 = vsel %vm718, %v8968, %v8969
        %v8971 = vrot.slane %v8969, 4
        %v8972 = vrot.slane %v8885, 6
        %v8973 = vsel %vm718, %v8971, %v8972
        %v8974 = vrot.slane %v8886, 6
        %v8975 = vrot.slane %v8974, 4
        %v8976 = vrot.slane %v8887, 6
        %v8977 = vsel %vm718, %v8975, %v8976
        %v8978 = vrot.slane %v8976, 4
        %v8979 = vrot.slane %v8888, 6
        %v8980 = vsel %vm718, %v8978, %v8979
        %v8981 = vrot.slane %v8979, 4
        %v8982 = vrot.slane %v8889, 6
        %v8983 = vsel %vm718, %v8981, %v8982
        %v8984 = vrot.slane %v8982, 4
        %v8985 = vrot.slane %v8890, 6
        %v8986 = vsel %vm718, %v8984, %v8985
        %v8987 = vrot.slane %v8891, 6
        %v8988 = vrot.slane %v8987, 4
        %v8989 = vrot.slane %v8892, 6
        %v8990 = vsel %vm718, %v8988, %v8989
        %v8991 = vrot.slane %v8989, 4
        %v8992 = vrot.slane %v8893, 6
        %v8993 = vsel %vm718, %v8991, %v8992
        %v8994 = vrot.slane %v8992, 4
        %v8995 = vrot.slane %v8894, 6
        %v8996 = vsel %vm718, %v8994, %v8995
        %v8997 = vrot.slane %v8995, 4
        %v8998 = vrot.slane %v8895, 6
        %v8999 = vsel %vm718, %v8997, %v8998
        %v9000 = vrot.slane %v8896, 6
        %v9001 = vrot.slane %v9000, 4
        %v9002 = vrot.slane %v8897, 6
        %v9003 = vsel %vm718, %v9001, %v9002
        %v9004 = vrot.slane %v9002, 4
        %v9005 = vrot.slane %v8898, 6
        %v9006 = vsel %vm718, %v9004, %v9005
        %v9007 = vrot.slane %v9005, 4
        %v9008 = vrot.slane %v8899, 6
        %v9009 = vsel %vm718, %v9007, %v9008
        %v9010 = vrot.slane %v9008, 4
        %v9011 = vrot.slane %v8900, 6
        %v9012 = vsel %vm718, %v9010, %v9011
        %v9013 = vrot.slane %v8901, 6
        %v9014 = vrot.slane %v9013, 4
        %v9015 = vrot.slane %v8902, 6
        %v9016 = vsel %vm718, %v9014, %v9015
        %v9017 = vrot.slane %v9015, 4
        %v9018 = vrot.slane %v8903, 6
        %v9019 = vsel %vm718, %v9017, %v9018
        %v9020 = vrot.slane %v9018, 4
        %v9021 = vrot.slane %v8904, 6
        %v9022 = vsel %vm718, %v9020, %v9021
        %v9023 = vrot.slane %v9021, 4
        %v9024 = vrot.slane %v8905, 6
        %v9025 = vsel %vm718, %v9023, %v9024
        %v9026 = vrot.slane %v8906, 6
        %v9027 = vrot.slane %v9026, 4
        %v9028 = vrot.slane %v8907, 6
        %v9029 = vsel %vm718, %v9027, %v9028
        %v9030 = vrot.slane %v9028, 4
        %v9031 = vrot.slane %v8908, 6
        %v9032 = vsel %vm718, %v9030, %v9031
        %v9033 = vrot.slane %v9031, 4
        %v9034 = vrot.slane %v8909, 6
        %v9035 = vsel %vm718, %v9033, %v9034
        %v9036 = vrot.slane %v9034, 4
        %v9037 = vrot.slane %v8910, 6
        %v9038 = vsel %vm718, %v9036, %v9037
        %v9039 = vrot.slane %v8911, 6
        %v9040 = vrot.slane %v9039, 4
        %v9041 = vrot.slane %v8912, 6
        %v9042 = vsel %vm718, %v9040, %v9041
        %v9043 = vrot.slane %v9041, 4
        %v9044 = vrot.slane %v8913, 6
        %v9045 = vsel %vm718, %v9043, %v9044
        %v9046 = vrot.slane %v9044, 4
        %v9047 = vrot.slane %v8914, 6
        %v9048 = vsel %vm718, %v9046, %v9047
        %v9049 = vrot.slane %v9047, 4
        %v9050 = vrot.slane %v8915, 6
        %v9051 = vsel %vm718, %v9049, %v9050
        %v9052 = vrot.slane %v8916, 6
        %v9053 = vrot.slane %v9052, 4
        %v9054 = vrot.slane %v8917, 6
        %v9055 = vsel %vm718, %v9053, %v9054
        %v9056 = vrot.slane %v9054, 4
        %v9057 = vrot.slane %v8918, 6
        %v9058 = vsel %vm718, %v9056, %v9057
        %v9059 = vrot.slane %v9057, 4
        %v9060 = vrot.slane %v8919, 6
        %v9061 = vsel %vm718, %v9059, %v9060
        %v9062 = vrot.slane %v9060, 4
        %v9063 = vrot.slane %v8920, 6
        %v9064 = vsel %vm718, %v9062, %v9063
        %s9065 = scalar_lea.vmem %s6, 256
        %v9066 = vld [vmem:[%s9065] sm:$0xf]
        %v9067 = vld [vmem:[%s9065 + $0x4] sm:$0xf]
        %v9068 = vld [vmem:[%s9065 + $0x8] sm:$0xf]
        %v9069 = vld [vmem:[%s9065 + $0xc] sm:$0xf]
        %v9070 = vld [vmem:[%s9065 + $0x10] sm:$0xf]
        %v9071 = vld [vmem:[%s9065 + $0x14] sm:$0xf]
        %v9072 = vld [vmem:[%s9065 + $0x18] sm:$0xf]
        %v9073 = vld [vmem:[%s9065 + $0x1c] sm:$0xf]
        %v9074 = vunpack.c.l.b16 %v8964
        %v9075 = vunpack.c.l.b16 %v8967
        %v9076 = vunpack.c.l.b16 %v8970
        %v9077 = vunpack.c.l.b16 %v8973
        %v9078 = vunpack.c.l.b16 %v8977
        %v9079 = vunpack.c.l.b16 %v8980
        %v9080 = vunpack.c.l.b16 %v8983
        %v9081 = vunpack.c.l.b16 %v8986
        %v9082 = vunpack.c.l.b16 %v8990
        %v9083 = vunpack.c.l.b16 %v8993
        %v9084 = vunpack.c.l.b16 %v8996
        %v9085 = vunpack.c.l.b16 %v8999
        %v9086 = vunpack.c.l.b16 %v9003
        %v9087 = vunpack.c.l.b16 %v9006
        %v9088 = vunpack.c.l.b16 %v9009
        %v9089 = vunpack.c.l.b16 %v9012
        %v9090 = vunpack.c.l.b16 %v9016
        %v9091 = vunpack.c.l.b16 %v9019
        %v9092 = vunpack.c.l.b16 %v9022
        %v9093 = vunpack.c.l.b16 %v9025
        %v9094 = vunpack.c.l.b16 %v9029
        %v9095 = vunpack.c.l.b16 %v9032
        %v9096 = vunpack.c.l.b16 %v9035
        %v9097 = vunpack.c.l.b16 %v9038
        %v9098 = vunpack.c.l.b16 %v9042
        %v9099 = vunpack.c.l.b16 %v9045
        %v9100 = vunpack.c.l.b16 %v9048
        %v9101 = vunpack.c.l.b16 %v9051
        %v9102 = vunpack.c.l.b16 %v9055
        %v9103 = vunpack.c.l.b16 %v9058
        %v9104 = vunpack.c.l.b16 %v9061
        %v9105 = vunpack.c.l.b16 %v9064
        %v9106 = vpack.c.b16 %v9075, %v9074
        %v9107 = vpack.c.b16 %v9077, %v9076
        %v9108 = vpack.c.b16 %v9079, %v9078
        %v9109 = vpack.c.b16 %v9081, %v9080
        %v9110 = vpack.c.b16 %v9083, %v9082
        %v9111 = vpack.c.b16 %v9085, %v9084
        %v9112 = vpack.c.b16 %v9087, %v9086
        %v9113 = vpack.c.b16 %v9089, %v9088
        %v9114 = vpack.c.b16 %v9091, %v9090
        %v9115 = vpack.c.b16 %v9093, %v9092
        %v9116 = vpack.c.b16 %v9095, %v9094
        %v9117 = vpack.c.b16 %v9097, %v9096
        %v9118 = vpack.c.b16 %v9099, %v9098
        %v9119 = vpack.c.b16 %v9101, %v9100
        %v9120 = vpack.c.b16 %v9103, %v9102
        %v9121 = vpack.c.b16 %v9105, %v9104
        %v9130 = vunpack.c.l.b16 %v9066
        %v9131 = vunpack.c.l.b16 %v9067
        %v9132 = vunpack.c.l.b16 %v9068
        %v9133 = vunpack.c.l.b16 %v9069
        %v9134 = vunpack.c.l.b16 %v9070
        %v9135 = vunpack.c.l.b16 %v9071
        %v9136 = vunpack.c.l.b16 %v9072
        %v9137 = vunpack.c.l.b16 %v9073
        %v9138 = vpack.c.b16 %v9131, %v9130
        %v9139 = vpack.c.b16 %v9133, %v9132
        %v9140 = vpack.c.b16 %v9135, %v9134
        %v9141 = vpack.c.b16 %v9137, %v9136
        %v9147 = vsel %vm910, %v9106, 0
        %v9150 = vsel %vm910, %v9107, 0
        %v9153 = vsel %vm910, %v9108, 0
        %v9156 = vsel %vm910, %v9109, 0
        %v9159 = vsel %vm910, %v9110, 0
        %v9162 = vsel %vm910, %v9111, 0
        %v9165 = vsel %vm910, %v9112, 0
        %v9168 = vsel %vm910, %v9113, 0
        %v9171 = vsel %vm910, %v9114, 0
        %v9174 = vsel %vm910, %v9115, 0
        %v9177 = vsel %vm910, %v9116, 0
        %v9180 = vsel %vm910, %v9117, 0
        %v9183 = vsel %vm910, %v9118, 0
        %v9186 = vsel %vm910, %v9119, 0
        %v9189 = vsel %vm910, %v9120, 0
        %v9192 = vsel %vm910, %v9121, 0
        %9194 = vmatprep.subr.bf16.mxu0 0
        %9195 = vmatpush1.bf16.msra.mxu0 %v9138
        %9196 = vmatprep.subr.bf16.mxu0 0
        %9197 = vmatpush1.bf16.msra.mxu0 %v9139
        %9198 = vmatprep.subr.bf16.mxu0 0
        %9199 = vmatpush1.bf16.msra.mxu0 %v9140
        %9200 = vmatprep.subr.bf16.mxu0 0
        %9201 = vmatpush1.bf16.msra.mxu0 %v9141
        %9202 = vmatprep.subr.bf16.mxu0 0
        %9203 = vmatpush1.bf16.msra.mxu0 0
        %9204 = vmatprep.subr.bf16.mxu0 0
        %9205 = vmatpush1.bf16.msra.mxu0 0
        %9206 = vmatprep.subr.bf16.mxu0 0
        %9207 = vmatpush1.bf16.msra.mxu0 0
        %9208 = vmatprep.subr.bf16.mxu0 0
        %9209 = vmatpush1.bf16.msra.mxu0 0
        %9210 = vmatprep.subr.bf16.mxu0 0
        %9211 = vmatpush1.bf16.msra.mxu0 0
        %9212 = vmatprep.subr.bf16.mxu0 0
        %9213 = vmatpush1.bf16.msra.mxu0 0
        %9214 = vmatprep.subr.bf16.mxu0 0
        %9215 = vmatpush1.bf16.msra.mxu0 0
        %9216 = vmatprep.subr.bf16.mxu0 0
        %9217 = vmatpush1.bf16.msra.mxu0 0
        %9218 = vmatprep.subr.bf16.mxu0 0
        %9219 = vmatpush1.bf16.msra.mxu0 0
        %9220 = vmatprep.subr.bf16.mxu0 0
        %9221 = vmatpush1.bf16.msra.mxu0 0
        %9222 = vmatprep.subr.bf16.mxu0 0
        %9223 = vmatpush1.bf16.msra.mxu0 0
        %9224 = vmatprep.subr.bf16.mxu0 0
        %9225 = vmatpush1.bf16.msra.mxu0 0
        %9226 = vmatprep.mubr.bf16.mxu0 0
        %9227 = vmatmul.mubr.bf16.gmra.mrb[0].mxu0 %v9147
        %v9228 = vpop.f32.mrb[0].mxu0
        %v9229 = vadd.f32 0.0, %v9228
        %v9230 = vpop.f32.mrb[0].mxu0
        %v9231 = vpop.f32.mrb[0].mxu0
        %v9232 = vadd.f32 0.0, %v9231
        %v9233 = vpop.f32.mrb[0].mxu0
        %9234 = vmatprep.mubr.bf16.mxu0 0
        %9235 = vmatmul.mubr.bf16.gmra.mrb[0].mxu0 %v9150
        %v9236 = vpop.f32.mrb[0].mxu0
        %v9237 = vadd.f32 0.0, %v9236
        %v9238 = vpop.f32.mrb[0].mxu0
        %v9239 = vpop.f32.mrb[0].mxu0
        %v9240 = vadd.f32 0.0, %v9239
        %v9241 = vpop.f32.mrb[0].mxu0
        %9242 = vmatprep.mubr.bf16.mxu0 0
        %9243 = vmatmul.mubr.bf16.gmra.mrb[0].mxu0 %v9153
        %v9244 = vpop.f32.mrb[0].mxu0
        %v9245 = vadd.f32 0.0, %v9244
        %v9246 = vpop.f32.mrb[0].mxu0
        %v9247 = vpop.f32.mrb[0].mxu0
        %v9248 = vadd.f32 0.0, %v9247
        %v9249 = vpop.f32.mrb[0].mxu0
        %9250 = vmatprep.mubr.bf16.mxu0 0
        %9251 = vmatmul.mubr.bf16.gmra.mrb[0].mxu0 %v9156
        %v9252 = vpop.f32.mrb[0].mxu0
        %v9253 = vadd.f32 0.0, %v9252
        %v9254 = vpop.f32.mrb[0].mxu0
        %v9255 = vpop.f32.mrb[0].mxu0
        %v9256 = vadd.f32 0.0, %v9255
        %v9257 = vpop.f32.mrb[0].mxu0
        %9258 = vmatprep.mubr.bf16.mxu0 0
        %9259 = vmatmul.mubr.bf16.gmra.mrb[0].mxu0 %v9159
        %v9260 = vpop.f32.mrb[0].mxu0
        %v9261 = vadd.f32 0.0, %v9260
        %v9262 = vpop.f32.mrb[0].mxu0
        %v9263 = vpop.f32.mrb[0].mxu0
        %v9264 = vadd.f32 0.0, %v9263
        %v9265 = vpop.f32.mrb[0].mxu0
        %9266 = vmatprep.mubr.bf16.mxu0 0
        %9267 = vmatmul.mubr.bf16.gmra.mrb[0].mxu0 %v9162
        %v9268 = vpop.f32.mrb[0].mxu0
        %v9269 = vadd.f32 0.0, %v9268
        %v9270 = vpop.f32.mrb[0].mxu0
        %v9271 = vpop.f32.mrb[0].mxu0
        %v9272 = vadd.f32 0.0, %v9271
        %v9273 = vpop.f32.mrb[0].mxu0
        %9274 = vmatprep.mubr.bf16.mxu0 0
        %9275 = vmatmul.mubr.bf16.gmra.mrb[0].mxu0 %v9165
        %v9276 = vpop.f32.mrb[0].mxu0
        %v9277 = vadd.f32 0.0, %v9276
        %v9278 = vpop.f32.mrb[0].mxu0
        %v9279 = vpop.f32.mrb[0].mxu0
        %v9280 = vadd.f32 0.0, %v9279
        %v9281 = vpop.f32.mrb[0].mxu0
        %9282 = vmatprep.mubr.bf16.mxu0 0
        %9283 = vmatmul.mubr.bf16.gmra.mrb[0].mxu0 %v9168
        %v9284 = vpop.f32.mrb[0].mxu0
        %v9285 = vadd.f32 0.0, %v9284
        %v9286 = vpop.f32.mrb[0].mxu0
        %v9287 = vpop.f32.mrb[0].mxu0
        %v9288 = vadd.f32 0.0, %v9287
        %v9289 = vpop.f32.mrb[0].mxu0
        %9290 = vmatprep.mubr.bf16.mxu0 0
        %9291 = vmatmul.mubr.bf16.gmra.mrb[0].mxu0 %v9171
        %v9292 = vpop.f32.mrb[0].mxu0
        %v9293 = vadd.f32 0.0, %v9292
        %v9294 = vpop.f32.mrb[0].mxu0
        %v9295 = vpop.f32.mrb[0].mxu0
        %v9296 = vadd.f32 0.0, %v9295
        %v9297 = vpop.f32.mrb[0].mxu0
        %9298 = vmatprep.mubr.bf16.mxu0 0
        %9299 = vmatmul.mubr.bf16.gmra.mrb[0].mxu0 %v9174
        %v9300 = vpop.f32.mrb[0].mxu0
        %v9301 = vadd.f32 0.0, %v9300
        %v9302 = vpop.f32.mrb[0].mxu0
        %v9303 = vpop.f32.mrb[0].mxu0
        %v9304 = vadd.f32 0.0, %v9303
        %v9305 = vpop.f32.mrb[0].mxu0
        %9306 = vmatprep.mubr.bf16.mxu0 0
        %9307 = vmatmul.mubr.bf16.gmra.mrb[0].mxu0 %v9177
        %v9308 = vpop.f32.mrb[0].mxu0
        %v9309 = vadd.f32 0.0, %v9308
        %v9310 = vpop.f32.mrb[0].mxu0
        %v9311 = vpop.f32.mrb[0].mxu0
        %v9312 = vadd.f32 0.0, %v9311
        %v9313 = vpop.f32.mrb[0].mxu0
        %9314 = vmatprep.mubr.bf16.mxu0 0
        %9315 = vmatmul.mubr.bf16.gmra.mrb[0].mxu0 %v9180
        %v9316 = vpop.f32.mrb[0].mxu0
        %v9317 = vadd.f32 0.0, %v9316
        %v9318 = vpop.f32.mrb[0].mxu0
        %v9319 = vpop.f32.mrb[0].mxu0
        %v9320 = vadd.f32 0.0, %v9319
        %v9321 = vpop.f32.mrb[0].mxu0
        %9322 = vmatprep.mubr.bf16.mxu0 0
        %9323 = vmatmul.mubr.bf16.gmra.mrb[0].mxu0 %v9183
        %v9324 = vpop.f32.mrb[0].mxu0
        %v9325 = vadd.f32 0.0, %v9324
        %v9326 = vpop.f32.mrb[0].mxu0
        %v9327 = vpop.f32.mrb[0].mxu0
        %v9328 = vadd.f32 0.0, %v9327
        %v9329 = vpop.f32.mrb[0].mxu0
        %9330 = vmatprep.mubr.bf16.mxu0 0
        %9331 = vmatmul.mubr.bf16.gmra.mrb[0].mxu0 %v9186
        %v9332 = vpop.f32.mrb[0].mxu0
        %v9333 = vadd.f32 0.0, %v9332
        %v9334 = vpop.f32.mrb[0].mxu0
        %v9335 = vpop.f32.mrb[0].mxu0
        %v9336 = vadd.f32 0.0, %v9335
        %v9337 = vpop.f32.mrb[0].mxu0
        %9338 = vmatprep.mubr.bf16.mxu0 0
        %9339 = vmatmul.mubr.bf16.gmra.mrb[0].mxu0 %v9189
        %v9340 = vpop.f32.mrb[0].mxu0
        %v9341 = vadd.f32 0.0, %v9340
        %v9342 = vpop.f32.mrb[0].mxu0
        %v9343 = vpop.f32.mrb[0].mxu0
        %v9344 = vadd.f32 0.0, %v9343
        %v9345 = vpop.f32.mrb[0].mxu0
        %9346 = vmatprep.mubr.bf16.mxu0 0
        %9347 = vmatmul.mubr.bf16.gmra.mrb[0].mxu0 %v9192
        %v9348 = vpop.f32.mrb[0].mxu0
        %v9349 = vadd.f32 0.0, %v9348
        %v9350 = vpop.f32.mrb[0].mxu0
        %v9351 = vpop.f32.mrb[0].mxu0
        %v9352 = vadd.f32 0.0, %v9351
        %v9353 = vpop.f32.mrb[0].mxu0
        %9354 = vdwg.mxu0
        %v9355 = vadd.f32 %v8849, %v9229
        %v9356 = vadd.f32 %v8850, %v9232
        %v9357 = vadd.f32 %v8851, %v9237
        %v9358 = vadd.f32 %v8852, %v9240
        %v9359 = vadd.f32 %v8853, %v9245
        %v9360 = vadd.f32 %v8854, %v9248
        %v9361 = vadd.f32 %v8855, %v9253
        %v9362 = vadd.f32 %v8856, %v9256
        %v9363 = vadd.f32 %v8857, %v9261
        %v9364 = vadd.f32 %v8858, %v9264
        %v9365 = vadd.f32 %v8859, %v9269
        %v9366 = vadd.f32 %v8860, %v9272
        %v9367 = vadd.f32 %v8861, %v9277
        %v9368 = vadd.f32 %v8862, %v9280
        %v9369 = vadd.f32 %v8863, %v9285
        %v9370 = vadd.f32 %v8864, %v9288
        %v9371 = vadd.f32 %v8865, %v9293
        %v9372 = vadd.f32 %v8866, %v9296
        %v9373 = vadd.f32 %v8867, %v9301
        %v9374 = vadd.f32 %v8868, %v9304
        %v9375 = vadd.f32 %v8869, %v9309
        %v9376 = vadd.f32 %v8870, %v9312
        %v9377 = vadd.f32 %v8871, %v9317
        %v9378 = vadd.f32 %v8872, %v9320
        %v9379 = vadd.f32 %v8873, %v9325
        %v9380 = vadd.f32 %v8874, %v9328
        %v9381 = vadd.f32 %v8875, %v9333
        %v9382 = vadd.f32 %v8876, %v9336
        %v9383 = vadd.f32 %v8877, %v9341
        %v9384 = vadd.f32 %v8878, %v9344
        %v9385 = vadd.f32 %v8879, %v9349
        %v9386 = vadd.f32 %v8880, %v9352
        %v9387 = vld [vmem:[%s7] sm:$0x1]
        %v9389 = vlaneseq
        %v9390 = vshrl.u32 %v9389, 7
        %v9391 = vsub.s32 0, %v9390
        %v9392 = vrot.slane %v9387, %v9391
        %v9394 = vadd.f32 %v9355, %v9392
        %v9395 = vadd.f32 %v9356, %v9392
        %v9396 = vadd.f32 %v9357, %v9392
        %v9397 = vadd.f32 %v9358, %v9392
        %v9398 = vadd.f32 %v9359, %v9392
        %v9399 = vadd.f32 %v9360, %v9392
        %v9400 = vadd.f32 %v9361, %v9392
        %v9401 = vadd.f32 %v9362, %v9392
        %v9402 = vadd.f32 %v9363, %v9392
        %v9403 = vadd.f32 %v9364, %v9392
        %v9404 = vadd.f32 %v9365, %v9392
        %v9405 = vadd.f32 %v9366, %v9392
        %v9406 = vadd.f32 %v9367, %v9392
        %v9407 = vadd.f32 %v9368, %v9392
        %v9408 = vadd.f32 %v9369, %v9392
        %v9409 = vadd.f32 %v9370, %v9392
        %v9410 = vadd.f32 %v9371, %v9392
        %v9411 = vadd.f32 %v9372, %v9392
        %v9412 = vadd.f32 %v9373, %v9392
        %v9413 = vadd.f32 %v9374, %v9392
        %v9414 = vadd.f32 %v9375, %v9392
        %v9415 = vadd.f32 %v9376, %v9392
        %v9416 = vadd.f32 %v9377, %v9392
        %v9417 = vadd.f32 %v9378, %v9392
        %v9418 = vadd.f32 %v9379, %v9392
        %v9419 = vadd.f32 %v9380, %v9392
        %v9420 = vadd.f32 %v9381, %v9392
        %v9421 = vadd.f32 %v9382, %v9392
        %v9422 = vadd.f32 %v9383, %v9392
        %v9423 = vadd.f32 %v9384, %v9392
        %v9424 = vadd.f32 %v9385, %v9392
        %v9425 = vadd.f32 %v9386, %v9392
        %v9426 = vmax.f32 %v9394, 0.0
        %v9427 = vmax.f32 %v9395, 0.0
        %v9428 = vmax.f32 %v9396, 0.0
        %v9429 = vmax.f32 %v9397, 0.0
        %v9430 = vmax.f32 %v9398, 0.0
        %v9431 = vmax.f32 %v9399, 0.0
        %v9432 = vmax.f32 %v9400, 0.0
        %v9433 = vmax.f32 %v9401, 0.0
        %v9434 = vmax.f32 %v9402, 0.0
        %v9435 = vmax.f32 %v9403, 0.0
        %v9436 = vmax.f32 %v9404, 0.0
        %v9437 = vmax.f32 %v9405, 0.0
        %v9438 = vmax.f32 %v9406, 0.0
        %v9439 = vmax.f32 %v9407, 0.0
        %v9440 = vmax.f32 %v9408, 0.0
        %v9441 = vmax.f32 %v9409, 0.0
        %v9442 = vmax.f32 %v9410, 0.0
        %v9443 = vmax.f32 %v9411, 0.0
        %v9444 = vmax.f32 %v9412, 0.0
        %v9445 = vmax.f32 %v9413, 0.0
        %v9446 = vmax.f32 %v9414, 0.0
        %v9447 = vmax.f32 %v9415, 0.0
        %v9448 = vmax.f32 %v9416, 0.0
        %v9449 = vmax.f32 %v9417, 0.0
        %v9450 = vmax.f32 %v9418, 0.0
        %v9451 = vmax.f32 %v9419, 0.0
        %v9452 = vmax.f32 %v9420, 0.0
        %v9453 = vmax.f32 %v9421, 0.0
        %v9454 = vmax.f32 %v9422, 0.0
        %v9455 = vmax.f32 %v9423, 0.0
        %v9456 = vmax.f32 %v9424, 0.0
        %v9457 = vmax.f32 %v9425, 0.0
        %v9458 = vpack.c.bf16 %v9427, %v9426
        %v9459 = vpack.c.bf16 %v9429, %v9428
        %v9460 = vpack.c.bf16 %v9431, %v9430
        %v9461 = vpack.c.bf16 %v9433, %v9432
        %v9462 = vpack.c.bf16 %v9435, %v9434
        %v9463 = vpack.c.bf16 %v9437, %v9436
        %v9464 = vpack.c.bf16 %v9439, %v9438
        %v9465 = vpack.c.bf16 %v9441, %v9440
        %v9466 = vpack.c.bf16 %v9443, %v9442
        %v9467 = vpack.c.bf16 %v9445, %v9444
        %v9468 = vpack.c.bf16 %v9447, %v9446
        %v9469 = vpack.c.bf16 %v9449, %v9448
        %v9470 = vpack.c.bf16 %v9451, %v9450
        %v9471 = vpack.c.bf16 %v9453, %v9452
        %v9472 = vpack.c.bf16 %v9455, %v9454
        %v9473 = vpack.c.bf16 %v9457, %v9456
        %v9474 = vld [vmem:[%s14] sm:$0xf]
        %v9475 = vld [vmem:[%s14 + $0x4] sm:$0xf]
        %v9476 = vld [vmem:[%s14 + $0x8] sm:$0xf]
        %v9477 = vld [vmem:[%s14 + $0xc] sm:$0xf]
        %v9478 = vld [vmem:[%s14 + $0x10] sm:$0xf]
        %v9479 = vld [vmem:[%s14 + $0x14] sm:$0xf]
        %v9480 = vld [vmem:[%s14 + $0x18] sm:$0xf]
        %v9481 = vld [vmem:[%s14 + $0x1c] sm:$0xf]
        %v9482 = vld [vmem:[%s14 + $0x20] sm:$0xf]
        %v9483 = vld [vmem:[%s14 + $0x24] sm:$0xf]
        %v9484 = vld [vmem:[%s14 + $0x28] sm:$0xf]
        %v9485 = vld [vmem:[%s14 + $0x2c] sm:$0xf]
        %v9486 = vld [vmem:[%s14 + $0x30] sm:$0xf]
        %v9487 = vld [vmem:[%s14 + $0x34] sm:$0xf]
        %v9488 = vld [vmem:[%s14 + $0x38] sm:$0xf]
        %v9489 = vld [vmem:[%s14 + $0x3c] sm:$0xf]
        %v9506 = vunpack.c.l.b16 %v9474
        %v9507 = vunpack.c.l.b16 %v9475
        %v9508 = vunpack.c.l.b16 %v9476
        %v9509 = vunpack.c.l.b16 %v9477
        %v9510 = vunpack.c.l.b16 %v9478
        %v9511 = vunpack.c.l.b16 %v9479
        %v9512 = vunpack.c.l.b16 %v9480
        %v9513 = vunpack.c.l.b16 %v9481
        %v9514 = vunpack.c.l.b16 %v9482
        %v9515 = vunpack.c.l.b16 %v9483
        %v9516 = vunpack.c.l.b16 %v9484
        %v9517 = vunpack.c.l.b16 %v9485
        %v9518 = vunpack.c.l.b16 %v9486
        %v9519 = vunpack.c.l.b16 %v9487
        %v9520 = vunpack.c.l.b16 %v9488
        %v9521 = vunpack.c.l.b16 %v9489
        %v9522 = vpack.c.b16 %v9507, %v9506
        %v9523 = vpack.c.b16 %v9509, %v9508
        %v9524 = vpack.c.b16 %v9511, %v9510
        %v9525 = vpack.c.b16 %v9513, %v9512
        %v9526 = vpack.c.b16 %v9515, %v9514
        %v9527 = vpack.c.b16 %v9517, %v9516
        %v9528 = vpack.c.b16 %v9519, %v9518
        %v9529 = vpack.c.b16 %v9521, %v9520
        %9538 = vmatprep.subr.bf16.mxu0 0
        %9539 = vmatpush1.bf16.msra.mxu0 %v9522
        %9540 = vmatprep.subr.bf16.mxu0 0
        %9541 = vmatpush1.bf16.msra.mxu0 %v9523
        %9542 = vmatprep.subr.bf16.mxu0 0
        %9543 = vmatpush1.bf16.msra.mxu0 %v9524
        %9544 = vmatprep.subr.bf16.mxu0 0
        %9545 = vmatpush1.bf16.msra.mxu0 %v9525
        %9546 = vmatprep.subr.bf16.mxu0 0
        %9547 = vmatpush1.bf16.msra.mxu0 %v9526
        %9548 = vmatprep.subr.bf16.mxu0 0
        %9549 = vmatpush1.bf16.msra.mxu0 %v9527
        %9550 = vmatprep.subr.bf16.mxu0 0
        %9551 = vmatpush1.bf16.msra.mxu0 %v9528
        %9552 = vmatprep.subr.bf16.mxu0 0
        %9553 = vmatpush1.bf16.msra.mxu0 %v9529
        %9554 = vmatprep.subr.bf16.mxu0 0
        %9555 = vmatpush1.bf16.msra.mxu0 0
        %9556 = vmatprep.subr.bf16.mxu0 0
        %9557 = vmatpush1.bf16.msra.mxu0 0
        %9558 = vmatprep.subr.bf16.mxu0 0
        %9559 = vmatpush1.bf16.msra.mxu0 0
        %9560 = vmatprep.subr.bf16.mxu0 0
        %9561 = vmatpush1.bf16.msra.mxu0 0
        %9562 = vmatprep.subr.bf16.mxu0 0
        %9563 = vmatpush1.bf16.msra.mxu0 0
        %9564 = vmatprep.subr.bf16.mxu0 0
        %9565 = vmatpush1.bf16.msra.mxu0 0
        %9566 = vmatprep.subr.bf16.mxu0 0
        %9567 = vmatpush1.bf16.msra.mxu0 0
        %9568 = vmatprep.subr.bf16.mxu0 0
        %9569 = vmatpush1.bf16.msra.mxu0 0
        %9570 = vmatprep.mubr.bf16.mxu0 0
        %9571 = vmatmul.mubr.bf16.gmra.mrb[0].mxu0 %v9458
        %v9572 = vpop.f32.mrb[0].mxu0
        %v9573 = vadd.f32 0.0, %v9572
        %v9574 = vpop.f32.mrb[0].mxu0
        %v9575 = vpop.f32.mrb[0].mxu0
        %v9576 = vadd.f32 0.0, %v9575
        %v9577 = vpop.f32.mrb[0].mxu0
        %9578 = vmatprep.mubr.bf16.mxu0 0
        %9579 = vmatmul.mubr.bf16.gmra.mrb[0].mxu0 %v9459
        %v9580 = vpop.f32.mrb[0].mxu0
        %v9581 = vadd.f32 0.0, %v9580
        %v9582 = vpop.f32.mrb[0].mxu0
        %v9583 = vpop.f32.mrb[0].mxu0
        %v9584 = vadd.f32 0.0, %v9583
        %v9585 = vpop.f32.mrb[0].mxu0
        %9586 = vmatprep.mubr.bf16.mxu0 0
        %9587 = vmatmul.mubr.bf16.gmra.mrb[0].mxu0 %v9460
        %v9588 = vpop.f32.mrb[0].mxu0
        %v9589 = vadd.f32 0.0, %v9588
        %v9590 = vpop.f32.mrb[0].mxu0
        %v9591 = vpop.f32.mrb[0].mxu0
        %v9592 = vadd.f32 0.0, %v9591
        %v9593 = vpop.f32.mrb[0].mxu0
        %9594 = vmatprep.mubr.bf16.mxu0 0
        %9595 = vmatmul.mubr.bf16.gmra.mrb[0].mxu0 %v9461
        %v9596 = vpop.f32.mrb[0].mxu0
        %v9597 = vadd.f32 0.0, %v9596
        %v9598 = vpop.f32.mrb[0].mxu0
        %v9599 = vpop.f32.mrb[0].mxu0
        %v9600 = vadd.f32 0.0, %v9599
        %v9601 = vpop.f32.mrb[0].mxu0
        %9602 = vmatprep.mubr.bf16.mxu0 0
        %9603 = vmatmul.mubr.bf16.gmra.mrb[0].mxu0 %v9462
        %v9604 = vpop.f32.mrb[0].mxu0
        %v9605 = vadd.f32 0.0, %v9604
        %v9606 = vpop.f32.mrb[0].mxu0
        %v9607 = vpop.f32.mrb[0].mxu0
        %v9608 = vadd.f32 0.0, %v9607
        %v9609 = vpop.f32.mrb[0].mxu0
        %9610 = vmatprep.mubr.bf16.mxu0 0
        %9611 = vmatmul.mubr.bf16.gmra.mrb[0].mxu0 %v9463
        %v9612 = vpop.f32.mrb[0].mxu0
        %v9613 = vadd.f32 0.0, %v9612
        %v9614 = vpop.f32.mrb[0].mxu0
        %v9615 = vpop.f32.mrb[0].mxu0
        %v9616 = vadd.f32 0.0, %v9615
        %v9617 = vpop.f32.mrb[0].mxu0
        %9618 = vmatprep.mubr.bf16.mxu0 0
        %9619 = vmatmul.mubr.bf16.gmra.mrb[0].mxu0 %v9464
        %v9620 = vpop.f32.mrb[0].mxu0
        %v9621 = vadd.f32 0.0, %v9620
        %v9622 = vpop.f32.mrb[0].mxu0
        %v9623 = vpop.f32.mrb[0].mxu0
        %v9624 = vadd.f32 0.0, %v9623
        %v9625 = vpop.f32.mrb[0].mxu0
        %9626 = vmatprep.mubr.bf16.mxu0 0
        %9627 = vmatmul.mubr.bf16.gmra.mrb[0].mxu0 %v9465
        %v9628 = vpop.f32.mrb[0].mxu0
        %v9629 = vadd.f32 0.0, %v9628
        %v9630 = vpop.f32.mrb[0].mxu0
        %v9631 = vpop.f32.mrb[0].mxu0
        %v9632 = vadd.f32 0.0, %v9631
        %v9633 = vpop.f32.mrb[0].mxu0
        %9634 = vmatprep.mubr.bf16.mxu0 0
        %9635 = vmatmul.mubr.bf16.gmra.mrb[0].mxu0 %v9466
        %v9636 = vpop.f32.mrb[0].mxu0
        %v9637 = vadd.f32 0.0, %v9636
        %v9638 = vpop.f32.mrb[0].mxu0
        %v9639 = vpop.f32.mrb[0].mxu0
        %v9640 = vadd.f32 0.0, %v9639
        %v9641 = vpop.f32.mrb[0].mxu0
        %9642 = vmatprep.mubr.bf16.mxu0 0
        %9643 = vmatmul.mubr.bf16.gmra.mrb[0].mxu0 %v9467
        %v9644 = vpop.f32.mrb[0].mxu0
        %v9645 = vadd.f32 0.0, %v9644
        %v9646 = vpop.f32.mrb[0].mxu0
        %v9647 = vpop.f32.mrb[0].mxu0
        %v9648 = vadd.f32 0.0, %v9647
        %v9649 = vpop.f32.mrb[0].mxu0
        %9650 = vmatprep.mubr.bf16.mxu0 0
        %9651 = vmatmul.mubr.bf16.gmra.mrb[0].mxu0 %v9468
        %v9652 = vpop.f32.mrb[0].mxu0
        %v9653 = vadd.f32 0.0, %v9652
        %v9654 = vpop.f32.mrb[0].mxu0
        %v9655 = vpop.f32.mrb[0].mxu0
        %v9656 = vadd.f32 0.0, %v9655
        %v9657 = vpop.f32.mrb[0].mxu0
        %9658 = vmatprep.mubr.bf16.mxu0 0
        %9659 = vmatmul.mubr.bf16.gmra.mrb[0].mxu0 %v9469
        %v9660 = vpop.f32.mrb[0].mxu0
        %v9661 = vadd.f32 0.0, %v9660
        %v9662 = vpop.f32.mrb[0].mxu0
        %v9663 = vpop.f32.mrb[0].mxu0
        %v9664 = vadd.f32 0.0, %v9663
        %v9665 = vpop.f32.mrb[0].mxu0
        %9666 = vmatprep.mubr.bf16.mxu0 0
        %9667 = vmatmul.mubr.bf16.gmra.mrb[0].mxu0 %v9470
        %v9668 = vpop.f32.mrb[0].mxu0
        %v9669 = vadd.f32 0.0, %v9668
        %v9670 = vpop.f32.mrb[0].mxu0
        %v9671 = vpop.f32.mrb[0].mxu0
        %v9672 = vadd.f32 0.0, %v9671
        %v9673 = vpop.f32.mrb[0].mxu0
        %9674 = vmatprep.mubr.bf16.mxu0 0
        %9675 = vmatmul.mubr.bf16.gmra.mrb[0].mxu0 %v9471
        %v9676 = vpop.f32.mrb[0].mxu0
        %v9677 = vadd.f32 0.0, %v9676
        %v9678 = vpop.f32.mrb[0].mxu0
        %v9679 = vpop.f32.mrb[0].mxu0
        %v9680 = vadd.f32 0.0, %v9679
        %v9681 = vpop.f32.mrb[0].mxu0
        %9682 = vmatprep.mubr.bf16.mxu0 0
        %9683 = vmatmul.mubr.bf16.gmra.mrb[0].mxu0 %v9472
        %v9684 = vpop.f32.mrb[0].mxu0
        %v9685 = vadd.f32 0.0, %v9684
        %v9686 = vpop.f32.mrb[0].mxu0
        %v9687 = vpop.f32.mrb[0].mxu0
        %v9688 = vadd.f32 0.0, %v9687
        %v9689 = vpop.f32.mrb[0].mxu0
        %9690 = vmatprep.mubr.bf16.mxu0 0
        %9691 = vmatmul.mubr.bf16.gmra.mrb[0].mxu0 %v9473
        %v9692 = vpop.f32.mrb[0].mxu0
        %v9693 = vadd.f32 0.0, %v9692
        %v9694 = vpop.f32.mrb[0].mxu0
        %v9695 = vpop.f32.mrb[0].mxu0
        %v9696 = vadd.f32 0.0, %v9695
        %v9697 = vpop.f32.mrb[0].mxu0
        %9698 = vdwg.mxu0
        %v9699 = vadd.f32 %v5044, %v9573
        %v9700 = vadd.f32 %v5047, %v9576
        %v9701 = vadd.f32 %v5052, %v9581
        %v9702 = vadd.f32 %v5055, %v9584
        %v9703 = vadd.f32 %v5060, %v9589
        %v9704 = vadd.f32 %v5063, %v9592
        %v9705 = vadd.f32 %v5068, %v9597
        %v9706 = vadd.f32 %v5071, %v9600
        %v9707 = vadd.f32 %v5076, %v9605
        %v9708 = vadd.f32 %v5079, %v9608
        %v9709 = vadd.f32 %v5084, %v9613
        %v9710 = vadd.f32 %v5087, %v9616
        %v9711 = vadd.f32 %v5092, %v9621
        %v9712 = vadd.f32 %v5095, %v9624
        %v9713 = vadd.f32 %v5100, %v9629
        %v9714 = vadd.f32 %v5103, %v9632
        %v9715 = vadd.f32 %v5108, %v9637
        %v9716 = vadd.f32 %v5111, %v9640
        %v9717 = vadd.f32 %v5116, %v9645
        %v9718 = vadd.f32 %v5119, %v9648
        %v9719 = vadd.f32 %v5124, %v9653
        %v9720 = vadd.f32 %v5127, %v9656
        %v9721 = vadd.f32 %v5132, %v9661
        %v9722 = vadd.f32 %v5135, %v9664
        %v9723 = vadd.f32 %v5140, %v9669
        %v9724 = vadd.f32 %v5143, %v9672
        %v9725 = vadd.f32 %v5148, %v9677
        %v9726 = vadd.f32 %v5151, %v9680
        %v9727 = vadd.f32 %v5156, %v9685
        %v9728 = vadd.f32 %v5159, %v9688
        %v9729 = vadd.f32 %v5164, %v9693
        %v9730 = vadd.f32 %v5167, %v9696
        %s9731 = scalar_lea.vmem %s8, 128
        %v9732 = vld [vmem:[%s9731] sm:$0xf]
        %v9733 = vld [vmem:[%s9731 + $0x4] sm:$0xf]
        %v9734 = vld [vmem:[%s9731 + $0x8] sm:$0xf]
        %v9735 = vld [vmem:[%s9731 + $0xc] sm:$0xf]
        %v9736 = vld [vmem:[%s9731 + $0x10] sm:$0xf]
        %v9737 = vld [vmem:[%s9731 + $0x14] sm:$0xf]
        %v9738 = vld [vmem:[%s9731 + $0x18] sm:$0xf]
        %v9739 = vld [vmem:[%s9731 + $0x1c] sm:$0xf]
        %v9740 = vld [vmem:[%s9] sm:$0x1]
        %v9742 = vlaneseq
        %v9743 = vshrl.u32 %v9742, 7
        %v9744 = vsub.s32 0, %v9743
        %v9745 = vrot.slane %v9740, %v9744
        %v9755 = vunpack.c.l.b16 %v9732
        %v9756 = vunpack.c.l.b16 %v9733
        %v9757 = vunpack.c.l.b16 %v9734
        %v9758 = vunpack.c.l.b16 %v9735
        %v9759 = vunpack.c.l.b16 %v9736
        %v9760 = vunpack.c.l.b16 %v9737
        %v9761 = vunpack.c.l.b16 %v9738
        %v9762 = vunpack.c.l.b16 %v9739
        %v9763 = vpack.c.b16 %v9756, %v9755
        %v9764 = vpack.c.b16 %v9758, %v9757
        %v9765 = vpack.c.b16 %v9760, %v9759
        %v9766 = vpack.c.b16 %v9762, %v9761
        %9771 = vmatprep.subr.bf16.mxu0 0
        %9772 = vmatpush1.bf16.msra.mxu0 %v9763
        %9773 = vmatprep.subr.bf16.mxu0 0
        %9774 = vmatpush1.bf16.msra.mxu0 %v9764
        %9775 = vmatprep.subr.bf16.mxu0 0
        %9776 = vmatpush1.bf16.msra.mxu0 %v9765
        %9777 = vmatprep.subr.bf16.mxu0 0
        %9778 = vmatpush1.bf16.msra.mxu0 %v9766
        %9779 = vmatprep.subr.bf16.mxu0 0
        %9780 = vmatpush1.bf16.msra.mxu0 0
        %9781 = vmatprep.subr.bf16.mxu0 0
        %9782 = vmatpush1.bf16.msra.mxu0 0
        %9783 = vmatprep.subr.bf16.mxu0 0
        %9784 = vmatpush1.bf16.msra.mxu0 0
        %9785 = vmatprep.subr.bf16.mxu0 0
        %9786 = vmatpush1.bf16.msra.mxu0 0
        %9787 = vmatprep.subr.bf16.mxu0 0
        %9788 = vmatpush1.bf16.msra.mxu0 0
        %9789 = vmatprep.subr.bf16.mxu0 0
        %9790 = vmatpush1.bf16.msra.mxu0 0
        %9791 = vmatprep.subr.bf16.mxu0 0
        %9792 = vmatpush1.bf16.msra.mxu0 0
        %9793 = vmatprep.subr.bf16.mxu0 0
        %9794 = vmatpush1.bf16.msra.mxu0 0
        %9795 = vmatprep.subr.bf16.mxu0 0
        %9796 = vmatpush1.bf16.msra.mxu0 0
        %9797 = vmatprep.subr.bf16.mxu0 0
        %9798 = vmatpush1.bf16.msra.mxu0 0
        %9799 = vmatprep.subr.bf16.mxu0 0
        %9800 = vmatpush1.bf16.msra.mxu0 0
        %9801 = vmatprep.subr.bf16.mxu0 0
        %9802 = vmatpush1.bf16.msra.mxu0 0
        %9803 = vmatprep.mubr.bf16.mxu0 0
        %9804 = vmatmul.mubr.bf16.gmra.mrb[0].mxu0 %v912
        %v9805 = vpop.f32.mrb[0].mxu0
        %v9806 = vadd.f32 %v9745, %v9805
        %v9807 = vpop.f32.mrb[0].mxu0
        %v9808 = vpop.f32.mrb[0].mxu0
        %v9809 = vadd.f32 %v9745, %v9808
        %v9810 = vpop.f32.mrb[0].mxu0
        %9811 = vmatprep.mubr.bf16.mxu0 0
        %9812 = vmatmul.mubr.bf16.gmra.mrb[0].mxu0 %v915
        %v9813 = vpop.f32.mrb[0].mxu0
        %v9814 = vadd.f32 %v9745, %v9813
        %v9815 = vpop.f32.mrb[0].mxu0
        %v9816 = vpop.f32.mrb[0].mxu0
        %v9817 = vadd.f32 %v9745, %v9816
        %v9818 = vpop.f32.mrb[0].mxu0
        %9819 = vmatprep.mubr.bf16.mxu0 0
        %9820 = vmatmul.mubr.bf16.gmra.mrb[0].mxu0 %v918
        %v9821 = vpop.f32.mrb[0].mxu0
        %v9822 = vadd.f32 %v9745, %v9821
        %v9823 = vpop.f32.mrb[0].mxu0
        %v9824 = vpop.f32.mrb[0].mxu0
        %v9825 = vadd.f32 %v9745, %v9824
        %v9826 = vpop.f32.mrb[0].mxu0
        %9827 = vmatprep.mubr.bf16.mxu0 0
        %9828 = vmatmul.mubr.bf16.gmra.mrb[0].mxu0 %v921
        %v9829 = vpop.f32.mrb[0].mxu0
        %v9830 = vadd.f32 %v9745, %v9829
        %v9831 = vpop.f32.mrb[0].mxu0
        %v9832 = vpop.f32.mrb[0].mxu0
        %v9833 = vadd.f32 %v9745, %v9832
        %v9834 = vpop.f32.mrb[0].mxu0
        %9835 = vmatprep.mubr.bf16.mxu0 0
        %9836 = vmatmul.mubr.bf16.gmra.mrb[0].mxu0 %v924
        %v9837 = vpop.f32.mrb[0].mxu0
        %v9838 = vadd.f32 %v9745, %v9837
        %v9839 = vpop.f32.mrb[0].mxu0
        %v9840 = vpop.f32.mrb[0].mxu0
        %v9841 = vadd.f32 %v9745, %v9840
        %v9842 = vpop.f32.mrb[0].mxu0
        %9843 = vmatprep.mubr.bf16.mxu0 0
        %9844 = vmatmul.mubr.bf16.gmra.mrb[0].mxu0 %v927
        %v9845 = vpop.f32.mrb[0].mxu0
        %v9846 = vadd.f32 %v9745, %v9845
        %v9847 = vpop.f32.mrb[0].mxu0
        %v9848 = vpop.f32.mrb[0].mxu0
        %v9849 = vadd.f32 %v9745, %v9848
        %v9850 = vpop.f32.mrb[0].mxu0
        %9851 = vmatprep.mubr.bf16.mxu0 0
        %9852 = vmatmul.mubr.bf16.gmra.mrb[0].mxu0 %v930
        %v9853 = vpop.f32.mrb[0].mxu0
        %v9854 = vadd.f32 %v9745, %v9853
        %v9855 = vpop.f32.mrb[0].mxu0
        %v9856 = vpop.f32.mrb[0].mxu0
        %v9857 = vadd.f32 %v9745, %v9856
        %v9858 = vpop.f32.mrb[0].mxu0
        %9859 = vmatprep.mubr.bf16.mxu0 0
        %9860 = vmatmul.mubr.bf16.gmra.mrb[0].mxu0 %v933
        %v9861 = vpop.f32.mrb[0].mxu0
        %v9862 = vadd.f32 %v9745, %v9861
        %v9863 = vpop.f32.mrb[0].mxu0
        %v9864 = vpop.f32.mrb[0].mxu0
        %v9865 = vadd.f32 %v9745, %v9864
        %v9866 = vpop.f32.mrb[0].mxu0
        %9867 = vmatprep.mubr.bf16.mxu0 0
        %9868 = vmatmul.mubr.bf16.gmra.mrb[0].mxu0 %v936
        %v9869 = vpop.f32.mrb[0].mxu0
        %v9870 = vadd.f32 %v9745, %v9869
        %v9871 = vpop.f32.mrb[0].mxu0
        %v9872 = vpop.f32.mrb[0].mxu0
        %v9873 = vadd.f32 %v9745, %v9872
        %v9874 = vpop.f32.mrb[0].mxu0
        %9875 = vmatprep.mubr.bf16.mxu0 0
        %9876 = vmatmul.mubr.bf16.gmra.mrb[0].mxu0 %v939
        %v9877 = vpop.f32.mrb[0].mxu0
        %v9878 = vadd.f32 %v9745, %v9877
        %v9879 = vpop.f32.mrb[0].mxu0
        %v9880 = vpop.f32.mrb[0].mxu0
        %v9881 = vadd.f32 %v9745, %v9880
        %v9882 = vpop.f32.mrb[0].mxu0
        %9883 = vmatprep.mubr.bf16.mxu0 0
        %9884 = vmatmul.mubr.bf16.gmra.mrb[0].mxu0 %v942
        %v9885 = vpop.f32.mrb[0].mxu0
        %v9886 = vadd.f32 %v9745, %v9885
        %v9887 = vpop.f32.mrb[0].mxu0
        %v9888 = vpop.f32.mrb[0].mxu0
        %v9889 = vadd.f32 %v9745, %v9888
        %v9890 = vpop.f32.mrb[0].mxu0
        %9891 = vmatprep.mubr.bf16.mxu0 0
        %9892 = vmatmul.mubr.bf16.gmra.mrb[0].mxu0 %v945
        %v9893 = vpop.f32.mrb[0].mxu0
        %v9894 = vadd.f32 %v9745, %v9893
        %v9895 = vpop.f32.mrb[0].mxu0
        %v9896 = vpop.f32.mrb[0].mxu0
        %v9897 = vadd.f32 %v9745, %v9896
        %v9898 = vpop.f32.mrb[0].mxu0
        %9899 = vmatprep.mubr.bf16.mxu0 0
        %9900 = vmatmul.mubr.bf16.gmra.mrb[0].mxu0 %v948
        %v9901 = vpop.f32.mrb[0].mxu0
        %v9902 = vadd.f32 %v9745, %v9901
        %v9903 = vpop.f32.mrb[0].mxu0
        %v9904 = vpop.f32.mrb[0].mxu0
        %v9905 = vadd.f32 %v9745, %v9904
        %v9906 = vpop.f32.mrb[0].mxu0
        %9907 = vmatprep.mubr.bf16.mxu0 0
        %9908 = vmatmul.mubr.bf16.gmra.mrb[0].mxu0 %v951
        %v9909 = vpop.f32.mrb[0].mxu0
        %v9910 = vadd.f32 %v9745, %v9909
        %v9911 = vpop.f32.mrb[0].mxu0
        %v9912 = vpop.f32.mrb[0].mxu0
        %v9913 = vadd.f32 %v9745, %v9912
        %v9914 = vpop.f32.mrb[0].mxu0
        %9915 = vmatprep.mubr.bf16.mxu0 0
        %9916 = vmatmul.mubr.bf16.gmra.mrb[0].mxu0 %v954
        %v9917 = vpop.f32.mrb[0].mxu0
        %v9918 = vadd.f32 %v9745, %v9917
        %v9919 = vpop.f32.mrb[0].mxu0
        %v9920 = vpop.f32.mrb[0].mxu0
        %v9921 = vadd.f32 %v9745, %v9920
        %v9922 = vpop.f32.mrb[0].mxu0
        %9923 = vmatprep.mubr.bf16.mxu0 0
        %9924 = vmatmul.mubr.bf16.gmra.mrb[0].mxu0 %v957
        %v9925 = vpop.f32.mrb[0].mxu0
        %v9926 = vadd.f32 %v9745, %v9925
        %v9927 = vpop.f32.mrb[0].mxu0
        %v9928 = vpop.f32.mrb[0].mxu0
        %v9929 = vadd.f32 %v9745, %v9928
        %v9930 = vpop.f32.mrb[0].mxu0
        %9931 = vdwg.mxu0
        %v9932 = vmax.f32 %v9806, 0.0
        %v9933 = vmax.f32 %v9809, 0.0
        %v9934 = vmax.f32 %v9814, 0.0
        %v9935 = vmax.f32 %v9817, 0.0
        %v9936 = vmax.f32 %v9822, 0.0
        %v9937 = vmax.f32 %v9825, 0.0
        %v9938 = vmax.f32 %v9830, 0.0
        %v9939 = vmax.f32 %v9833, 0.0
        %v9940 = vmax.f32 %v9838, 0.0
        %v9941 = vmax.f32 %v9841, 0.0
        %v9942 = vmax.f32 %v9846, 0.0
        %v9943 = vmax.f32 %v9849, 0.0
        %v9944 = vmax.f32 %v9854, 0.0
        %v9945 = vmax.f32 %v9857, 0.0
        %v9946 = vmax.f32 %v9862, 0.0
        %v9947 = vmax.f32 %v9865, 0.0
        %v9948 = vmax.f32 %v9870, 0.0
        %v9949 = vmax.f32 %v9873, 0.0
        %v9950 = vmax.f32 %v9878, 0.0
        %v9951 = vmax.f32 %v9881, 0.0
        %v9952 = vmax.f32 %v9886, 0.0
        %v9953 = vmax.f32 %v9889, 0.0
        %v9954 = vmax.f32 %v9894, 0.0
        %v9955 = vmax.f32 %v9897, 0.0
        %v9956 = vmax.f32 %v9902, 0.0
        %v9957 = vmax.f32 %v9905, 0.0
        %v9958 = vmax.f32 %v9910, 0.0
        %v9959 = vmax.f32 %v9913, 0.0
        %v9960 = vmax.f32 %v9918, 0.0
        %v9961 = vmax.f32 %v9921, 0.0
        %v9962 = vmax.f32 %v9926, 0.0
        %v9963 = vmax.f32 %v9929, 0.0
        %v9964 = vpack.c.bf16 %v9933, %v9932
        %v9965 = vpack.c.bf16 %v9935, %v9934
        %v9966 = vpack.c.bf16 %v9937, %v9936
        %v9967 = vpack.c.bf16 %v9939, %v9938
        %v9968 = vpack.c.bf16 %v9941, %v9940
        %v9969 = vpack.c.bf16 %v9943, %v9942
        %v9970 = vpack.c.bf16 %v9945, %v9944
        %v9971 = vpack.c.bf16 %v9947, %v9946
        %v9972 = vpack.c.bf16 %v9949, %v9948
        %v9973 = vpack.c.bf16 %v9951, %v9950
        %v9974 = vpack.c.bf16 %v9953, %v9952
        %v9975 = vpack.c.bf16 %v9955, %v9954
        %v9976 = vpack.c.bf16 %v9957, %v9956
        %v9977 = vpack.c.bf16 %v9959, %v9958
        %v9978 = vpack.c.bf16 %v9961, %v9960
        %v9979 = vpack.c.bf16 %v9963, %v9962
        %v9980 = vld [vmem:[%s15] sm:$0xf]
        %v9981 = vld [vmem:[%s15 + $0x4] sm:$0xf]
        %v9982 = vld [vmem:[%s15 + $0x8] sm:$0xf]
        %v9983 = vld [vmem:[%s15 + $0xc] sm:$0xf]
        %v9984 = vld [vmem:[%s15 + $0x10] sm:$0xf]
        %v9985 = vld [vmem:[%s15 + $0x14] sm:$0xf]
        %v9986 = vld [vmem:[%s15 + $0x18] sm:$0xf]
        %v9987 = vld [vmem:[%s15 + $0x1c] sm:$0xf]
        %v9988 = vld [vmem:[%s15 + $0x20] sm:$0xf]
        %v9989 = vld [vmem:[%s15 + $0x24] sm:$0xf]
        %v9990 = vld [vmem:[%s15 + $0x28] sm:$0xf]
        %v9991 = vld [vmem:[%s15 + $0x2c] sm:$0xf]
        %v9992 = vld [vmem:[%s15 + $0x30] sm:$0xf]
        %v9993 = vld [vmem:[%s15 + $0x34] sm:$0xf]
        %v9994 = vld [vmem:[%s15 + $0x38] sm:$0xf]
        %v9995 = vld [vmem:[%s15 + $0x3c] sm:$0xf]
        %v10012 = vunpack.c.l.b16 %v9980
        %v10013 = vunpack.c.l.b16 %v9981
        %v10014 = vunpack.c.l.b16 %v9982
        %v10015 = vunpack.c.l.b16 %v9983
        %v10016 = vunpack.c.l.b16 %v9984
        %v10017 = vunpack.c.l.b16 %v9985
        %v10018 = vunpack.c.l.b16 %v9986
        %v10019 = vunpack.c.l.b16 %v9987
        %v10020 = vunpack.c.l.b16 %v9988
        %v10021 = vunpack.c.l.b16 %v9989
        %v10022 = vunpack.c.l.b16 %v9990
        %v10023 = vunpack.c.l.b16 %v9991
        %v10024 = vunpack.c.l.b16 %v9992
        %v10025 = vunpack.c.l.b16 %v9993
        %v10026 = vunpack.c.l.b16 %v9994
        %v10027 = vunpack.c.l.b16 %v9995
        %v10028 = vpack.c.b16 %v10013, %v10012
        %v10029 = vpack.c.b16 %v10015, %v10014
        %v10030 = vpack.c.b16 %v10017, %v10016
        %v10031 = vpack.c.b16 %v10019, %v10018
        %v10032 = vpack.c.b16 %v10021, %v10020
        %v10033 = vpack.c.b16 %v10023, %v10022
        %v10034 = vpack.c.b16 %v10025, %v10024
        %v10035 = vpack.c.b16 %v10027, %v10026
        %10044 = vmatprep.subr.bf16.mxu0 0
        %10045 = vmatpush1.bf16.msra.mxu0 %v10028
        %10046 = vmatprep.subr.bf16.mxu0 0
        %10047 = vmatpush1.bf16.msra.mxu0 %v10029
        %10048 = vmatprep.subr.bf16.mxu0 0
        %10049 = vmatpush1.bf16.msra.mxu0 %v10030
        %10050 = vmatprep.subr.bf16.mxu0 0
        %10051 = vmatpush1.bf16.msra.mxu0 %v10031
        %10052 = vmatprep.subr.bf16.mxu0 0
        %10053 = vmatpush1.bf16.msra.mxu0 %v10032
        %10054 = vmatprep.subr.bf16.mxu0 0
        %10055 = vmatpush1.bf16.msra.mxu0 %v10033
        %10056 = vmatprep.subr.bf16.mxu0 0
        %10057 = vmatpush1.bf16.msra.mxu0 %v10034
        %10058 = vmatprep.subr.bf16.mxu0 0
        %10059 = vmatpush1.bf16.msra.mxu0 %v10035
        %10060 = vmatprep.subr.bf16.mxu0 0
        %10061 = vmatpush1.bf16.msra.mxu0 0
        %10062 = vmatprep.subr.bf16.mxu0 0
        %10063 = vmatpush1.bf16.msra.mxu0 0
        %10064 = vmatprep.subr.bf16.mxu0 0
        %10065 = vmatpush1.bf16.msra.mxu0 0
        %10066 = vmatprep.subr.bf16.mxu0 0
        %10067 = vmatpush1.bf16.msra.mxu0 0
        %10068 = vmatprep.subr.bf16.mxu0 0
        %10069 = vmatpush1.bf16.msra.mxu0 0
        %10070 = vmatprep.subr.bf16.mxu0 0
        %10071 = vmatpush1.bf16.msra.mxu0 0
        %10072 = vmatprep.subr.bf16.mxu0 0
        %10073 = vmatpush1.bf16.msra.mxu0 0
        %10074 = vmatprep.subr.bf16.mxu0 0
        %10075 = vmatpush1.bf16.msra.mxu0 0
        %10076 = vmatprep.mubr.bf16.mxu0 0
        %10077 = vmatmul.mubr.bf16.gmra.mrb[0].mxu0 %v9964
        %v10078 = vpop.f32.mrb[0].mxu0
        %v10079 = vadd.f32 0.0, %v10078
        %v10080 = vpop.f32.mrb[0].mxu0
        %v10081 = vpop.f32.mrb[0].mxu0
        %v10082 = vadd.f32 0.0, %v10081
        %v10083 = vpop.f32.mrb[0].mxu0
        %10084 = vmatprep.mubr.bf16.mxu0 0
        %10085 = vmatmul.mubr.bf16.gmra.mrb[0].mxu0 %v9965
        %v10086 = vpop.f32.mrb[0].mxu0
        %v10087 = vadd.f32 0.0, %v10086
        %v10088 = vpop.f32.mrb[0].mxu0
        %v10089 = vpop.f32.mrb[0].mxu0
        %v10090 = vadd.f32 0.0, %v10089
        %v10091 = vpop.f32.mrb[0].mxu0
        %10092 = vmatprep.mubr.bf16.mxu0 0
        %10093 = vmatmul.mubr.bf16.gmra.mrb[0].mxu0 %v9966
        %v10094 = vpop.f32.mrb[0].mxu0
        %v10095 = vadd.f32 0.0, %v10094
        %v10096 = vpop.f32.mrb[0].mxu0
        %v10097 = vpop.f32.mrb[0].mxu0
        %v10098 = vadd.f32 0.0, %v10097
        %v10099 = vpop.f32.mrb[0].mxu0
        %10100 = vmatprep.mubr.bf16.mxu0 0
        %10101 = vmatmul.mubr.bf16.gmra.mrb[0].mxu0 %v9967
        %v10102 = vpop.f32.mrb[0].mxu0
        %v10103 = vadd.f32 0.0, %v10102
        %v10104 = vpop.f32.mrb[0].mxu0
        %v10105 = vpop.f32.mrb[0].mxu0
        %v10106 = vadd.f32 0.0, %v10105
        %v10107 = vpop.f32.mrb[0].mxu0
        %10108 = vmatprep.mubr.bf16.mxu0 0
        %10109 = vmatmul.mubr.bf16.gmra.mrb[0].mxu0 %v9968
        %v10110 = vpop.f32.mrb[0].mxu0
        %v10111 = vadd.f32 0.0, %v10110
        %v10112 = vpop.f32.mrb[0].mxu0
        %v10113 = vpop.f32.mrb[0].mxu0
        %v10114 = vadd.f32 0.0, %v10113
        %v10115 = vpop.f32.mrb[0].mxu0
        %10116 = vmatprep.mubr.bf16.mxu0 0
        %10117 = vmatmul.mubr.bf16.gmra.mrb[0].mxu0 %v9969
        %v10118 = vpop.f32.mrb[0].mxu0
        %v10119 = vadd.f32 0.0, %v10118
        %v10120 = vpop.f32.mrb[0].mxu0
        %v10121 = vpop.f32.mrb[0].mxu0
        %v10122 = vadd.f32 0.0, %v10121
        %v10123 = vpop.f32.mrb[0].mxu0
        %10124 = vmatprep.mubr.bf16.mxu0 0
        %10125 = vmatmul.mubr.bf16.gmra.mrb[0].mxu0 %v9970
        %v10126 = vpop.f32.mrb[0].mxu0
        %v10127 = vadd.f32 0.0, %v10126
        %v10128 = vpop.f32.mrb[0].mxu0
        %v10129 = vpop.f32.mrb[0].mxu0
        %v10130 = vadd.f32 0.0, %v10129
        %v10131 = vpop.f32.mrb[0].mxu0
        %10132 = vmatprep.mubr.bf16.mxu0 0
        %10133 = vmatmul.mubr.bf16.gmra.mrb[0].mxu0 %v9971
        %v10134 = vpop.f32.mrb[0].mxu0
        %v10135 = vadd.f32 0.0, %v10134
        %v10136 = vpop.f32.mrb[0].mxu0
        %v10137 = vpop.f32.mrb[0].mxu0
        %v10138 = vadd.f32 0.0, %v10137
        %v10139 = vpop.f32.mrb[0].mxu0
        %10140 = vmatprep.mubr.bf16.mxu0 0
        %10141 = vmatmul.mubr.bf16.gmra.mrb[0].mxu0 %v9972
        %v10142 = vpop.f32.mrb[0].mxu0
        %v10143 = vadd.f32 0.0, %v10142
        %v10144 = vpop.f32.mrb[0].mxu0
        %v10145 = vpop.f32.mrb[0].mxu0
        %v10146 = vadd.f32 0.0, %v10145
        %v10147 = vpop.f32.mrb[0].mxu0
        %10148 = vmatprep.mubr.bf16.mxu0 0
        %10149 = vmatmul.mubr.bf16.gmra.mrb[0].mxu0 %v9973
        %v10150 = vpop.f32.mrb[0].mxu0
        %v10151 = vadd.f32 0.0, %v10150
        %v10152 = vpop.f32.mrb[0].mxu0
        %v10153 = vpop.f32.mrb[0].mxu0
        %v10154 = vadd.f32 0.0, %v10153
        %v10155 = vpop.f32.mrb[0].mxu0
        %10156 = vmatprep.mubr.bf16.mxu0 0
        %10157 = vmatmul.mubr.bf16.gmra.mrb[0].mxu0 %v9974
        %v10158 = vpop.f32.mrb[0].mxu0
        %v10159 = vadd.f32 0.0, %v10158
        %v10160 = vpop.f32.mrb[0].mxu0
        %v10161 = vpop.f32.mrb[0].mxu0
        %v10162 = vadd.f32 0.0, %v10161
        %v10163 = vpop.f32.mrb[0].mxu0
        %10164 = vmatprep.mubr.bf16.mxu0 0
        %10165 = vmatmul.mubr.bf16.gmra.mrb[0].mxu0 %v9975
        %v10166 = vpop.f32.mrb[0].mxu0
        %v10167 = vadd.f32 0.0, %v10166
        %v10168 = vpop.f32.mrb[0].mxu0
        %v10169 = vpop.f32.mrb[0].mxu0
        %v10170 = vadd.f32 0.0, %v10169
        %v10171 = vpop.f32.mrb[0].mxu0
        %10172 = vmatprep.mubr.bf16.mxu0 0
        %10173 = vmatmul.mubr.bf16.gmra.mrb[0].mxu0 %v9976
        %v10174 = vpop.f32.mrb[0].mxu0
        %v10175 = vadd.f32 0.0, %v10174
        %v10176 = vpop.f32.mrb[0].mxu0
        %v10177 = vpop.f32.mrb[0].mxu0
        %v10178 = vadd.f32 0.0, %v10177
        %v10179 = vpop.f32.mrb[0].mxu0
        %10180 = vmatprep.mubr.bf16.mxu0 0
        %10181 = vmatmul.mubr.bf16.gmra.mrb[0].mxu0 %v9977
        %v10182 = vpop.f32.mrb[0].mxu0
        %v10183 = vadd.f32 0.0, %v10182
        %v10184 = vpop.f32.mrb[0].mxu0
        %v10185 = vpop.f32.mrb[0].mxu0
        %v10186 = vadd.f32 0.0, %v10185
        %v10187 = vpop.f32.mrb[0].mxu0
        %10188 = vmatprep.mubr.bf16.mxu0 0
        %10189 = vmatmul.mubr.bf16.gmra.mrb[0].mxu0 %v9978
        %v10190 = vpop.f32.mrb[0].mxu0
        %v10191 = vadd.f32 0.0, %v10190
        %v10192 = vpop.f32.mrb[0].mxu0
        %v10193 = vpop.f32.mrb[0].mxu0
        %v10194 = vadd.f32 0.0, %v10193
        %v10195 = vpop.f32.mrb[0].mxu0
        %10196 = vmatprep.mubr.bf16.mxu0 0
        %10197 = vmatmul.mubr.bf16.gmra.mrb[0].mxu0 %v9979
        %v10198 = vpop.f32.mrb[0].mxu0
        %v10199 = vadd.f32 0.0, %v10198
        %v10200 = vpop.f32.mrb[0].mxu0
        %v10201 = vpop.f32.mrb[0].mxu0
        %v10202 = vadd.f32 0.0, %v10201
        %v10203 = vpop.f32.mrb[0].mxu0
        %10204 = vdwg.mxu0
        %v10205 = vadd.f32 %v9699, %v10079
        %v10206 = vadd.f32 %v9700, %v10082
        %v10207 = vadd.f32 %v9701, %v10087
        %v10208 = vadd.f32 %v9702, %v10090
        %v10209 = vadd.f32 %v9703, %v10095
        %v10210 = vadd.f32 %v9704, %v10098
        %v10211 = vadd.f32 %v9705, %v10103
        %v10212 = vadd.f32 %v9706, %v10106
        %v10213 = vadd.f32 %v9707, %v10111
        %v10214 = vadd.f32 %v9708, %v10114
        %v10215 = vadd.f32 %v9709, %v10119
        %v10216 = vadd.f32 %v9710, %v10122
        %v10217 = vadd.f32 %v9711, %v10127
        %v10218 = vadd.f32 %v9712, %v10130
        %v10219 = vadd.f32 %v9713, %v10135
        %v10220 = vadd.f32 %v9714, %v10138
        %v10221 = vadd.f32 %v9715, %v10143
        %v10222 = vadd.f32 %v9716, %v10146
        %v10223 = vadd.f32 %v9717, %v10151
        %v10224 = vadd.f32 %v9718, %v10154
        %v10225 = vadd.f32 %v9719, %v10159
        %v10226 = vadd.f32 %v9720, %v10162
        %v10227 = vadd.f32 %v9721, %v10167
        %v10228 = vadd.f32 %v9722, %v10170
        %v10229 = vadd.f32 %v9723, %v10175
        %v10230 = vadd.f32 %v9724, %v10178
        %v10231 = vadd.f32 %v9725, %v10183
        %v10232 = vadd.f32 %v9726, %v10186
        %v10233 = vadd.f32 %v9727, %v10191
        %v10234 = vadd.f32 %v9728, %v10194
        %v10235 = vadd.f32 %v9729, %v10199
        %v10236 = vadd.f32 %v9730, %v10202
        %v10237 = vld [vmem:[%s16] sm:$0x1]
        %v10239 = vlaneseq
        %v10240 = vshrl.u32 %v10239, 7
        %v10241 = vsub.s32 0, %v10240
        %v10242 = vrot.slane %v10237, %v10241
        %v10244 = vadd.f32 %v10205, %v10242
        %v10245 = vadd.f32 %v10206, %v10242
        %v10246 = vadd.f32 %v10207, %v10242
        %v10247 = vadd.f32 %v10208, %v10242
        %v10248 = vadd.f32 %v10209, %v10242
        %v10249 = vadd.f32 %v10210, %v10242
        %v10250 = vadd.f32 %v10211, %v10242
        %v10251 = vadd.f32 %v10212, %v10242
        %v10252 = vadd.f32 %v10213, %v10242
        %v10253 = vadd.f32 %v10214, %v10242
        %v10254 = vadd.f32 %v10215, %v10242
        %v10255 = vadd.f32 %v10216, %v10242
        %v10256 = vadd.f32 %v10217, %v10242
        %v10257 = vadd.f32 %v10218, %v10242
        %v10258 = vadd.f32 %v10219, %v10242
        %v10259 = vadd.f32 %v10220, %v10242
        %v10260 = vadd.f32 %v10221, %v10242
        %v10261 = vadd.f32 %v10222, %v10242
        %v10262 = vadd.f32 %v10223, %v10242
        %v10263 = vadd.f32 %v10224, %v10242
        %v10264 = vadd.f32 %v10225, %v10242
        %v10265 = vadd.f32 %v10226, %v10242
        %v10266 = vadd.f32 %v10227, %v10242
        %v10267 = vadd.f32 %v10228, %v10242
        %v10268 = vadd.f32 %v10229, %v10242
        %v10269 = vadd.f32 %v10230, %v10242
        %v10270 = vadd.f32 %v10231, %v10242
        %v10271 = vadd.f32 %v10232, %v10242
        %v10272 = vadd.f32 %v10233, %v10242
        %v10273 = vadd.f32 %v10234, %v10242
        %v10274 = vadd.f32 %v10235, %v10242
        %v10275 = vadd.f32 %v10236, %v10242
        %v10276 = vmax.f32 %v10244, 0.0
        %v10277 = vmax.f32 %v10245, 0.0
        %v10278 = vmax.f32 %v10246, 0.0
        %v10279 = vmax.f32 %v10247, 0.0
        %v10280 = vmax.f32 %v10248, 0.0
        %v10281 = vmax.f32 %v10249, 0.0
        %v10282 = vmax.f32 %v10250, 0.0
        %v10283 = vmax.f32 %v10251, 0.0
        %v10284 = vmax.f32 %v10252, 0.0
        %v10285 = vmax.f32 %v10253, 0.0
        %v10286 = vmax.f32 %v10254, 0.0
        %v10287 = vmax.f32 %v10255, 0.0
        %v10288 = vmax.f32 %v10256, 0.0
        %v10289 = vmax.f32 %v10257, 0.0
        %v10290 = vmax.f32 %v10258, 0.0
        %v10291 = vmax.f32 %v10259, 0.0
        %v10292 = vmax.f32 %v10260, 0.0
        %v10293 = vmax.f32 %v10261, 0.0
        %v10294 = vmax.f32 %v10262, 0.0
        %v10295 = vmax.f32 %v10263, 0.0
        %v10296 = vmax.f32 %v10264, 0.0
        %v10297 = vmax.f32 %v10265, 0.0
        %v10298 = vmax.f32 %v10266, 0.0
        %v10299 = vmax.f32 %v10267, 0.0
        %v10300 = vmax.f32 %v10268, 0.0
        %v10301 = vmax.f32 %v10269, 0.0
        %v10302 = vmax.f32 %v10270, 0.0
        %v10303 = vmax.f32 %v10271, 0.0
        %v10304 = vmax.f32 %v10272, 0.0
        %v10305 = vmax.f32 %v10273, 0.0
        %v10306 = vmax.f32 %v10274, 0.0
        %v10307 = vmax.f32 %v10275, 0.0
        %v10308 = vld [vmem:[%s628] sm:$0x1]
        %v10309 = vld [vmem:[%s10] sm:$0xf]
        %v10310 = vld [vmem:[%s10 + $0x4] sm:$0xf]
        %v10311 = vld [vmem:[%s10 + $0x8] sm:$0xf]
        %v10312 = vld [vmem:[%s10 + $0xc] sm:$0xf]
        %v10313 = vld [vmem:[%s10 + $0x10] sm:$0xf]
        %v10314 = vld [vmem:[%s10 + $0x14] sm:$0xf]
        %v10315 = vld [vmem:[%s10 + $0x18] sm:$0xf]
        %v10316 = vld [vmem:[%s10 + $0x1c] sm:$0xf]
        %v10317 = vld [vmem:[%s11] sm:$0x1]
        %v10326 = vunpack.c.l.b16 %v10309
        %v10327 = vunpack.c.l.b16 %v10310
        %v10328 = vunpack.c.l.b16 %v10311
        %v10329 = vunpack.c.l.b16 %v10312
        %v10330 = vunpack.c.l.b16 %v10313
        %v10331 = vunpack.c.l.b16 %v10314
        %v10332 = vunpack.c.l.b16 %v10315
        %v10333 = vunpack.c.l.b16 %v10316
        %v10334 = vpack.c.b16 %v10327, %v10326
        %v10335 = vpack.c.b16 %v10329, %v10328
        %v10336 = vpack.c.b16 %v10331, %v10330
        %v10337 = vpack.c.b16 %v10333, %v10332
        %v10343 = vsel %vm910, %v10308, 0
        %10345 = vmatprep.subr.bf16.mxu0 0
        %10346 = vmatpush1.bf16.msra.mxu0 %v10334
        %10347 = vmatprep.subr.bf16.mxu0 0
        %10348 = vmatpush1.bf16.msra.mxu0 %v10335
        %10349 = vmatprep.subr.bf16.mxu0 0
        %10350 = vmatpush1.bf16.msra.mxu0 %v10336
        %10351 = vmatprep.subr.bf16.mxu0 0
        %10352 = vmatpush1.bf16.msra.mxu0 %v10337
        %10353 = vmatprep.subr.bf16.mxu0 0
        %10354 = vmatpush1.bf16.msra.mxu0 0
        %10355 = vmatprep.subr.bf16.mxu0 0
        %10356 = vmatpush1.bf16.msra.mxu0 0
        %10357 = vmatprep.subr.bf16.mxu0 0
        %10358 = vmatpush1.bf16.msra.mxu0 0
        %10359 = vmatprep.subr.bf16.mxu0 0
        %10360 = vmatpush1.bf16.msra.mxu0 0
        %10361 = vmatprep.subr.bf16.mxu0 0
        %10362 = vmatpush1.bf16.msra.mxu0 0
        %10363 = vmatprep.subr.bf16.mxu0 0
        %10364 = vmatpush1.bf16.msra.mxu0 0
        %10365 = vmatprep.subr.bf16.mxu0 0
        %10366 = vmatpush1.bf16.msra.mxu0 0
        %10367 = vmatprep.subr.bf16.mxu0 0
        %10368 = vmatpush1.bf16.msra.mxu0 0
        %10369 = vmatprep.subr.bf16.mxu0 0
        %10370 = vmatpush1.bf16.msra.mxu0 0
        %10371 = vmatprep.subr.bf16.mxu0 0
        %10372 = vmatpush1.bf16.msra.mxu0 0
        %10373 = vmatprep.subr.bf16.mxu0 0
        %10374 = vmatpush1.bf16.msra.mxu0 0
        %10375 = vmatprep.subr.bf16.mxu0 0
        %10376 = vmatpush1.bf16.msra.mxu0 0
        %10377 = vmatprep.mubr.bf16.mxu0 0
        %10378 = vmatmul.mubr.bf16.gmra.mrb[0].mxu0 %v10343
        %v10379 = vpop.f32.mrb[0].mxu0
        %v10380 = vadd.f32 %v10317, %v10379
        %v10381 = vpop.f32.mrb[0].mxu0
        %v10382 = vpop.f32.mrb[0].mxu0
        %v10383 = vpop.f32.mrb[0].mxu0
        %10384 = vdwg.mxu0
        %v10385 = vmax.f32 %v10380, 0.0
        %v10386 = vpack.c.bf16 %v10385, %v10385
        %v10387 = vld [vmem:[%s17] sm:$0xf]
        %v10388 = vld [vmem:[%s17 + $0x4] sm:$0xf]
        %v10389 = vld [vmem:[%s17 + $0x8] sm:$0xf]
        %v10390 = vld [vmem:[%s17 + $0xc] sm:$0xf]
        %v10391 = vld [vmem:[%s17 + $0x10] sm:$0xf]
        %v10392 = vld [vmem:[%s17 + $0x14] sm:$0xf]
        %v10393 = vld [vmem:[%s17 + $0x18] sm:$0xf]
        %v10394 = vld [vmem:[%s17 + $0x1c] sm:$0xf]
        %v10395 = vld [vmem:[%s17 + $0x20] sm:$0xf]
        %v10396 = vld [vmem:[%s17 + $0x24] sm:$0xf]
        %v10397 = vld [vmem:[%s17 + $0x28] sm:$0xf]
        %v10398 = vld [vmem:[%s17 + $0x2c] sm:$0xf]
        %v10399 = vld [vmem:[%s17 + $0x30] sm:$0xf]
        %v10400 = vld [vmem:[%s17 + $0x34] sm:$0xf]
        %v10401 = vld [vmem:[%s17 + $0x38] sm:$0xf]
        %v10402 = vld [vmem:[%s17 + $0x3c] sm:$0xf]
        %v10403 = vld [vmem:[%s18] sm:$0x1]
        %v10420 = vunpack.c.l.b16 %v10387
        %v10421 = vunpack.c.l.b16 %v10388
        %v10422 = vunpack.c.l.b16 %v10389
        %v10423 = vunpack.c.l.b16 %v10390
        %v10424 = vunpack.c.l.b16 %v10391
        %v10425 = vunpack.c.l.b16 %v10392
        %v10426 = vunpack.c.l.b16 %v10393
        %v10427 = vunpack.c.l.b16 %v10394
        %v10428 = vunpack.c.l.b16 %v10395
        %v10429 = vunpack.c.l.b16 %v10396
        %v10430 = vunpack.c.l.b16 %v10397
        %v10431 = vunpack.c.l.b16 %v10398
        %v10432 = vunpack.c.l.b16 %v10399
        %v10433 = vunpack.c.l.b16 %v10400
        %v10434 = vunpack.c.l.b16 %v10401
        %v10435 = vunpack.c.l.b16 %v10402
        %v10436 = vpack.c.b16 %v10421, %v10420
        %v10437 = vpack.c.b16 %v10423, %v10422
        %v10438 = vpack.c.b16 %v10425, %v10424
        %v10439 = vpack.c.b16 %v10427, %v10426
        %v10440 = vpack.c.b16 %v10429, %v10428
        %v10441 = vpack.c.b16 %v10431, %v10430
        %v10442 = vpack.c.b16 %v10433, %v10432
        %v10443 = vpack.c.b16 %v10435, %v10434
        %10452 = vmatprep.subr.bf16.mxu0 0
        %10453 = vmatpush1.bf16.msra.mxu0 %v10436
        %10454 = vmatprep.subr.bf16.mxu0 0
        %10455 = vmatpush1.bf16.msra.mxu0 %v10437
        %10456 = vmatprep.subr.bf16.mxu0 0
        %10457 = vmatpush1.bf16.msra.mxu0 %v10438
        %10458 = vmatprep.subr.bf16.mxu0 0
        %10459 = vmatpush1.bf16.msra.mxu0 %v10439
        %10460 = vmatprep.subr.bf16.mxu0 0
        %10461 = vmatpush1.bf16.msra.mxu0 %v10440
        %10462 = vmatprep.subr.bf16.mxu0 0
        %10463 = vmatpush1.bf16.msra.mxu0 %v10441
        %10464 = vmatprep.subr.bf16.mxu0 0
        %10465 = vmatpush1.bf16.msra.mxu0 %v10442
        %10466 = vmatprep.subr.bf16.mxu0 0
        %10467 = vmatpush1.bf16.msra.mxu0 %v10443
        %10468 = vmatprep.subr.bf16.mxu0 0
        %10469 = vmatpush1.bf16.msra.mxu0 0
        %10470 = vmatprep.subr.bf16.mxu0 0
        %10471 = vmatpush1.bf16.msra.mxu0 0
        %10472 = vmatprep.subr.bf16.mxu0 0
        %10473 = vmatpush1.bf16.msra.mxu0 0
        %10474 = vmatprep.subr.bf16.mxu0 0
        %10475 = vmatpush1.bf16.msra.mxu0 0
        %10476 = vmatprep.subr.bf16.mxu0 0
        %10477 = vmatpush1.bf16.msra.mxu0 0
        %10478 = vmatprep.subr.bf16.mxu0 0
        %10479 = vmatpush1.bf16.msra.mxu0 0
        %10480 = vmatprep.subr.bf16.mxu0 0
        %10481 = vmatpush1.bf16.msra.mxu0 0
        %10482 = vmatprep.subr.bf16.mxu0 0
        %10483 = vmatpush1.bf16.msra.mxu0 0
        %10484 = vmatprep.mubr.bf16.mxu0 0
        %10485 = vmatmul.mubr.bf16.gmra.mrb[0].mxu0 %v10386
        %v10486 = vpop.f32.mrb[0].mxu0
        %v10487 = vadd.f32 %v10403, %v10486
        %v10488 = vpop.f32.mrb[0].mxu0
        %v10489 = vpop.f32.mrb[0].mxu0
        %v10490 = vpop.f32.mrb[0].mxu0
        %10491 = vdwg.mxu0
        %v10492 = vmax.f32 %v10487, 0.0
        %v10493 = vlaneseq
        %v10494 = vshrl.u32 %v10493, 7
        %v10495 = vsub.s32 0, %v10494
        %v10496 = vrot.slane %v10492, %v10495
        %v10497 = vadd.f32 %v10276, %v10496
        %v10498 = vadd.f32 %v10277, %v10496
        %v10499 = vadd.f32 %v10278, %v10496
        %v10500 = vadd.f32 %v10279, %v10496
        %v10501 = vadd.f32 %v10280, %v10496
        %v10502 = vadd.f32 %v10281, %v10496
        %v10503 = vadd.f32 %v10282, %v10496
        %v10504 = vadd.f32 %v10283, %v10496
        %v10505 = vadd.f32 %v10284, %v10496
        %v10506 = vadd.f32 %v10285, %v10496
        %v10507 = vadd.f32 %v10286, %v10496
        %v10508 = vadd.f32 %v10287, %v10496
        %v10509 = vadd.f32 %v10288, %v10496
        %v10510 = vadd.f32 %v10289, %v10496
        %v10511 = vadd.f32 %v10290, %v10496
        %v10512 = vadd.f32 %v10291, %v10496
        %v10513 = vadd.f32 %v10292, %v10496
        %v10514 = vadd.f32 %v10293, %v10496
        %v10515 = vadd.f32 %v10294, %v10496
        %v10516 = vadd.f32 %v10295, %v10496
        %v10517 = vadd.f32 %v10296, %v10496
        %v10518 = vadd.f32 %v10297, %v10496
        %v10519 = vadd.f32 %v10298, %v10496
        %v10520 = vadd.f32 %v10299, %v10496
        %v10521 = vadd.f32 %v10300, %v10496
        %v10522 = vadd.f32 %v10301, %v10496
        %v10523 = vadd.f32 %v10302, %v10496
        %v10524 = vadd.f32 %v10303, %v10496
        %v10525 = vadd.f32 %v10304, %v10496
        %v10526 = vadd.f32 %v10305, %v10496
        %v10527 = vadd.f32 %v10306, %v10496
        %v10528 = vadd.f32 %v10307, %v10496
        %10529 = vst [vmem:[%s620] sm:$0xff] %v10497
        %10530 = vst [vmem:[%s620 + $0x8] sm:$0xff] %v10498
        %10531 = vst [vmem:[%s620 + $0x10] sm:$0xff] %v10499
        %10532 = vst [vmem:[%s620 + $0x18] sm:$0xff] %v10500
        %10533 = vst [vmem:[%s620 + $0x20] sm:$0xff] %v10501
        %10534 = vst [vmem:[%s620 + $0x28] sm:$0xff] %v10502
        %10535 = vst [vmem:[%s620 + $0x30] sm:$0xff] %v10503
        %10536 = vst [vmem:[%s620 + $0x38] sm:$0xff] %v10504
        %10537 = vst [vmem:[%s620 + $0x40] sm:$0xff] %v10505
        %10538 = vst [vmem:[%s620 + $0x48] sm:$0xff] %v10506
        %10539 = vst [vmem:[%s620 + $0x50] sm:$0xff] %v10507
        %10540 = vst [vmem:[%s620 + $0x58] sm:$0xff] %v10508
        %10541 = vst [vmem:[%s620 + $0x60] sm:$0xff] %v10509
        %10542 = vst [vmem:[%s620 + $0x68] sm:$0xff] %v10510
        %10543 = vst [vmem:[%s620 + $0x70] sm:$0xff] %v10511
        %10544 = vst [vmem:[%s620 + $0x78] sm:$0xff] %v10512
        %10545 = vst [vmem:[%s620 + $0x80] sm:$0xff] %v10513
        %10546 = vst [vmem:[%s620 + $0x88] sm:$0xff] %v10514
        %10547 = vst [vmem:[%s620 + $0x90] sm:$0xff] %v10515
        %10548 = vst [vmem:[%s620 + $0x98] sm:$0xff] %v10516
        %10549 = vst [vmem:[%s620 + $0xa0] sm:$0xff] %v10517
        %10550 = vst [vmem:[%s620 + $0xa8] sm:$0xff] %v10518
        %10551 = vst [vmem:[%s620 + $0xb0] sm:$0xff] %v10519
        %10552 = vst [vmem:[%s620 + $0xb8] sm:$0xff] %v10520
        %10553 = vst [vmem:[%s620 + $0xc0] sm:$0xff] %v10521
        %10554 = vst [vmem:[%s620 + $0xc8] sm:$0xff] %v10522
        %10555 = vst [vmem:[%s620 + $0xd0] sm:$0xff] %v10523
        %10556 = vst [vmem:[%s620 + $0xd8] sm:$0xff] %v10524
        %10557 = vst [vmem:[%s620 + $0xe0] sm:$0xff] %v10525
        %10558 = vst [vmem:[%s620 + $0xe8] sm:$0xff] %v10526
        %10559 = vst [vmem:[%s620 + $0xf0] sm:$0xff] %v10527
        %10560 = vst [vmem:[%s620 + $0xf8] sm:$0xff] %v10528
        %s10561 = sand.u32 %s464, 1
        %s10562 = scalar_lea.sflag [#allocation3], %s10561
        %s10563 = sand.u32 %s464, 1
        %s10564 = smul.addr %s10563, 256
        %s10565 = scalar_lea.vmem [#allocation2], %s10564
        // Predicated region
        $region97: #{tpu_custom_call.1} parent=95 // pred_check
          %p10566 = pneg %p474
        $region98: #{tpu_custom_call.1} parent=95 // pred_check_branch
          %10568 = sbr.rel (%p10566) target = $region100
        $region99: #{tpu_custom_call.1} parent=95 // pred_region
          %s10569 = smul.u32 8, %s38
          %s10571 = ssub.s32 4096, 4096
          %10572 = vsyncadd %s10562, %s10571
          %s10573 = smul.addr %s10569, 4
          %s10574 = smul.addr %s37, 128
          %s10575 = sadd.s32 %s10573, %s10574
          %s10576 = smul.addr %s10575, 128
          %s10577 = scalar_lea.hbm %s19, %s10576
          %s10578 = sshll.u32 %s10565, 4
          %s10579 = int_to_ptr.vmem [resolvable:$true] %s10578
          %10584 = dma.vmem_to_hbm [thread:$0]  %s10579, 4096, %s10577, %s10562, 128, 128, 8
        $region100: #{tpu_custom_call.1} parent=95 // pred_fallthru
          _
      $region96: #{tpu_custom_call.1} parent=5 // pred_fallthru
        _
      %p10585 = scmp.le.s32.totalorder 2, %s28
      // Predicated region
      $region101: #{tpu_custom_call.1} parent=5 // pred_check
        %p10586 = pneg %p10585
      $region102: #{tpu_custom_call.1} parent=5 // pred_check_branch
        %10588 = sbr.rel (%p10586) target = $region104
      $region103: #{tpu_custom_call.1} parent=5 // pred_region
        %s10589 = ssub.s32 %s28, 2
        // Predicated region
        $region105: #{tpu_custom_call.1} parent=103 // pred_check
          %p10590 = pneg %p480
        $region106: #{tpu_custom_call.1} parent=103 // pred_check_branch
          %10592 = sbr.rel (%p10590) target = $region108
        $region107: #{tpu_custom_call.1} parent=103 // pred_region
          %s10593 = sand.u32 %s465, 1
          %s10594 = scalar_lea.sflag [#allocation3], %s10593
          %s10595 = sand.u32 %s465, 1
          %s10596 = smul.addr %s10595, 256
          %s10597 = scalar_lea.vmem [#allocation2], %s10596
          %10598 = dma.done %s10594, 4096
        $region108: #{tpu_custom_call.1} parent=103 // pred_fallthru
          _
      $region104: #{tpu_custom_call.1} parent=5 // pred_fallthru
        _
    $region6: #{tpu_custom_call.1} parent=1 // loop_footer
      %s32 = sadd.s32 1, %s28
    $region7: #{tpu_custom_call.1} parent=1 // loop_footer_branch
      %27 = sbr.rel target = $region3
    $region8: #{tpu_custom_call.1} parent=1 // loop_exit
      _
    %10599 = vsyncpa [#allocation3], 1
    %s10600 = scalar_lea.sflag [#allocation3], 1
    %10601 = vsyncpa %s10600, 1

</llo_original>
